<compile_context>
chip_gen: v6e
topology: v6e:2x2x1
jax: 0.10.0
libtpu: 0.0.40
codegen_flags: <defaults>
</compile_context>

<pallas_src>
import math

import jax
import jax.numpy as jnp
from jax.experimental import pallas as pl
from jax.experimental.pallas import tpu as pltpu

LANES = 128
BN_EPS = 1e-5


# ---------------------------------------------------------------------------
# In-kernel helpers.  Activations are channels-first 2-D: (C, M), M = B*H*W
# flattened row-major over (b, i, j).  M is the lane axis -> conv shifts are
# lane rolls and every store is lane-dense.
# ---------------------------------------------------------------------------

def _bn_relu_t(x, gamma, beta):
    """Training-mode BatchNorm (batch stats over the M axis) + ReLU, in f32."""
    mean = jnp.mean(x, axis=1, keepdims=True)
    cent = x - mean
    var = jnp.mean(cent * cent, axis=1, keepdims=True)
    y = cent * jax.lax.rsqrt(var + BN_EPS) * gamma + beta
    return jnp.maximum(y, 0.0)


def _conv3x3_s1_t(x, w_taps_ref, H, W):
    """3x3 / stride-1 / pad-1 convolution, fully in-kernel.

    x          : (Cin, M) f32, M = B*H*W (row-major b, i, j)
    w_taps_ref : (9, Cout, Cin) bf16 ref, tap order kh*3 + kw
    returns    : (Cout, M) f32

    Each tap is a lane roll of the whole slab, masked at image borders (the
    mask also kills every wrapped / cross-image row).  When M is smaller than
    one lane tile, the shift is done with a tiny iota-built selection matmul.
    """
    assert (H & (H - 1)) == 0 and (W & (W - 1)) == 0, "H, W must be powers of 2"
    _, M = x.shape
    cout = w_taps_ref.shape[1]
    lw = W.bit_length() - 1

    r = jax.lax.broadcasted_iota(jnp.int32, (1, M), 1)
    j = r & (W - 1)
    i = (r >> lw) & (H - 1)

    use_roll = (M % LANES == 0)
    if not use_roll:
        src = jax.lax.broadcasted_iota(jnp.int32, (M, M), 0)
        dst = jax.lax.broadcasted_iota(jnp.int32, (M, M), 1)

    acc = jnp.zeros((cout, M), jnp.float32)
    for t in range(9):
        di, dj = t // 3 - 1, t % 3 - 1
        o = di * W + dj
        if o == 0:
            tap = x
        else:
            valid = (i >= -di) & (i < H - di) & (j >= -dj) & (j < W - dj)
            if use_roll:
                tap = jnp.where(valid, pltpu.roll(x, (-o) % M, axis=1), 0.0)
            else:
                sel = ((src == dst + o) & valid).astype(jnp.float32)
                tap = jnp.dot(x, sel, preferred_element_type=jnp.float32)
        acc = acc + jnp.dot(w_taps_ref[t], tap.astype(jnp.bfloat16),
                            preferred_element_type=jnp.float32)
    return acc


# ---------------------------------------------------------------------------
# Fused block kernels (single whole-array VMEM block, no grid: required so the
# training-mode BN batch statistics are global).
# ---------------------------------------------------------------------------

def _make_stem_block1_kernel(H, W):
    """stem conv + BasicBlock1 (equalInOut, stride 1) + block2.bn1/ReLU epilogue."""
    def kernel(x_ref, ws_ref, g1_ref, b1_ref, w1_ref, g2_ref, b2_ref, w2_ref,
               gn_ref, bn_ref, act_ref):
        x = x_ref[...]                                      # (3, M) f32 image
        raw = _conv3x3_s1_t(x, ws_ref, H, W)                # stem conv -> (16, M)
        a = _bn_relu_t(raw, g1_ref[...], b1_ref[...])       # block1.bn1 + relu1
        h = _conv3x3_s1_t(a, w1_ref, H, W)                  # conv1 (stride 1)
        m = _bn_relu_t(h, g2_ref[...], b2_ref[...])         # bn2 + relu2 (drop_rate=0)
        o = _conv3x3_s1_t(m, w2_ref, H, W)                  # conv2 (mid stays in VMEM)
        raw_out = raw + o                                   # identity shortcut (equalInOut)
        # epilogue: NEXT consumer's bn1 + relu, emitted bf16 and lane-dense
        act_ref[...] = _bn_relu_t(raw_out, gn_ref[...],
                                  bn_ref[...]).astype(act_ref.dtype)
    return kernel


def _make_down_block_kernel(B, Ho, Wo, head):
    """Non-equalInOut BasicBlock (stride-2 conv1 from a pre-im2col'd patch,
    1x1 stride-2 shortcut).  `head=False`: next block's bn1/ReLU epilogue.
    `head=True`: final BN+ReLU + global avg-pool + FC epilogue."""
    Mo = B * Ho * Wo
    HW = Ho * Wo

    def trunk(pat_ref, w1_ref, sub_ref, wsc_ref, g2_ref, b2_ref, w2_ref):
        # conv1 (3x3 stride 2): one matmul over the packed-K im2col'd activation
        h = jnp.dot(w1_ref[...], pat_ref[...], preferred_element_type=jnp.float32)
        m = _bn_relu_t(h, g2_ref[...], b2_ref[...])          # bn2 + relu2
        o = _conv3x3_s1_t(m, w2_ref, Ho, Wo)                 # conv2, in-kernel im2col
        sh = jnp.dot(wsc_ref[...], sub_ref[...],
                     preferred_element_type=jnp.float32)     # 1x1 stride-2 shortcut
        return sh + o

    if not head:
        def kernel(pat_ref, w1_ref, sub_ref, wsc_ref, g2_ref, b2_ref, w2_ref,
                   gn_ref, bn_ref, act_ref):
            raw_out = trunk(pat_ref, w1_ref, sub_ref, wsc_ref,
                            g2_ref, b2_ref, w2_ref)
            act_ref[...] = _bn_relu_t(raw_out, gn_ref[...],
                                      bn_ref[...]).astype(act_ref.dtype)
        return kernel

    assert (HW & (HW - 1)) == 0
    lhw = HW.bit_length() - 1

    def kernel(pat_ref, w1_ref, sub_ref, wsc_ref, g2_ref, b2_ref, w2_ref,
               gf_ref, bf_ref, fcw_ref, fcb_ref, out_ref):
        raw_out = trunk(pat_ref, w1_ref, sub_ref, wsc_ref, g2_ref, b2_ref, w2_ref)
        y = _bn_relu_t(raw_out, gf_ref[...], bf_ref[...])    # network-level bn1 + relu
        # global average pool as a tiny (Mo, B) one-hot/HW matmul built from iota
        rows = jax.lax.broadcasted_iota(jnp.int32, (Mo, B), 0)
        cols = jax.lax.broadcasted_iota(jnp.int32, (Mo, B), 1)
        pool = jnp.where((rows >> lhw) == cols, 1.0 / HW, 0.0)
        pooled = jnp.dot(y, pool, preferred_element_type=jnp.float32)   # (cout, B)
        out_ref[...] = (jnp.dot(fcw_ref[...], pooled,
                                preferred_element_type=jnp.float32) + fcb_ref[...])
    return kernel


# ---------------------------------------------------------------------------
# pallas_call wrapper
# ---------------------------------------------------------------------------

def _pcall(kernel, out_shape, args):
    vmem = lambda: pl.BlockSpec(memory_space=pltpu.MemorySpace.VMEM)
    return pl.pallas_call(
        kernel,
        out_shape=out_shape,
        in_specs=[vmem() for _ in args],
        out_specs=vmem(),
        compiler_params=pltpu.CompilerParams(vmem_limit_bytes=32 * 1024 * 1024),
    )(*args)


# ---------------------------------------------------------------------------
# Parameter preparation (PyTorch-equivalent initialisation, kernel layouts)
# ---------------------------------------------------------------------------

def _prep_conv3x3_taps(key, cout, cin):
    """N(0, sqrt(2/(9*cout))) 3x3 conv as 9 per-tap (cout, cin) bf16 matrices."""
    std = math.sqrt(2.0 / (9.0 * cout))
    w = jax.random.normal(key, (cout, cin, 3, 3), jnp.float32) * std      # OIHW
    return jnp.transpose(w, (2, 3, 0, 1)).reshape(9, cout, cin).astype(jnp.bfloat16)


def _prep_conv3x3_flat(key, cout, cin):
    """Same init, laid out (cout, 9*cin) to multiply an im2col'd patch^T."""
    std = math.sqrt(2.0 / (9.0 * cout))
    w = jax.random.normal(key, (cout, cin, 3, 3), jnp.float32) * std
    return jnp.transpose(w, (0, 2, 3, 1)).reshape(cout, 9 * cin).astype(jnp.bfloat16)


def _prep_conv1x1(key, cout, cin):
    std = math.sqrt(2.0 / (1.0 * cout))
    w = jax.random.normal(key, (cout, cin, 1, 1), jnp.float32) * std
    return w[:, :, 0, 0].astype(jnp.bfloat16)                             # (cout, cin)


def init_wide_resnet(key, depth=10, num_classes=10, widen_factor=1,
                     input_n_channel=3):
    assert (depth - 4) % 6 == 0
    n = (depth - 4) // 6
    nch = [16, 16 * widen_factor, 32 * widen_factor, 64 * widen_factor]
    # TODO(synk): only the depth=10 (n=1) / widen_factor=1 configuration is
    # wired into the fused-kernel forward below.
    assert n == 1 and widen_factor == 1
    assert num_classes <= LANES
    ks = iter(jax.random.split(key, 16))
    bn = lambda c: (jnp.ones((c, 1), jnp.float32), jnp.zeros((c, 1), jnp.float32))

    params = {"nch": nch,
              "w_stem": _prep_conv3x3_taps(next(ks), nch[0], input_n_channel)}

    b1 = {}                                                  # 16 -> 16, stride 1
    b1["bn1_g"], b1["bn1_b"] = bn(nch[0])
    b1["w1"] = _prep_conv3x3_taps(next(ks), nch[1], nch[0])
    b1["bn2_g"], b1["bn2_b"] = bn(nch[1])
    b1["w2"] = _prep_conv3x3_taps(next(ks), nch[1], nch[1])

    b2 = {}                                                  # 16 -> 32, stride 2
    b2["bn1_g"], b2["bn1_b"] = bn(nch[1])
    b2["w1"] = _prep_conv3x3_flat(next(ks), nch[2], nch[1])
    b2["bn2_g"], b2["bn2_b"] = bn(nch[2])
    b2["w2"] = _prep_conv3x3_taps(next(ks), nch[2], nch[2])
    b2["wsc"] = _prep_conv1x1(next(ks), nch[2], nch[1])

    b3 = {}                                                  # 32 -> 64, stride 2
    b3["bn1_g"], b3["bn1_b"] = bn(nch[2])
    b3["w1"] = _prep_conv3x3_flat(next(ks), nch[3], nch[2])
    b3["bn2_g"], b3["bn2_b"] = bn(nch[3])
    b3["w2"] = _prep_conv3x3_taps(next(ks), nch[3], nch[3])
    b3["wsc"] = _prep_conv1x1(next(ks), nch[3], nch[2])

    params["block1"], params["block2"], params["block3"] = b1, b2, b3
    params["bnf_g"], params["bnf_b"] = bn(nch[3])

    bound = 1.0 / math.sqrt(nch[3])
    fc = jax.random.uniform(next(ks), (num_classes, nch[3]), jnp.float32,
                            minval=-bound, maxval=bound)
    params["fc_w"] = jnp.zeros((LANES, nch[3]), jnp.float32).at[:num_classes].set(fc)
    params["fc_b"] = jnp.zeros((LANES, 1), jnp.float32)      # bias zeroed in __init__
    return params


# ---------------------------------------------------------------------------
# XLA glue (runs fused inside the single jit around the 3 Pallas calls)
# ---------------------------------------------------------------------------

def _im2col_nhwc(x, k, stride):
    """(B,H,W,C) -> (B*Ho*Wo, k*k*C) patches, pad=(k-1)//2."""
    B, H, W, C = x.shape
    pad = (k - 1) // 2
    Ho = (H + 2 * pad - k) // stride + 1
    Wo = (W + 2 * pad - k) // stride + 1
    xp = jnp.pad(x, ((0, 0), (pad, pad), (pad, pad), (0, 0)))
    cols = [xp[:, i:i + stride * Ho:stride, j:j + stride * Wo:stride, :]
            for i in range(k) for j in range(k)]
    return jnp.concatenate(cols, axis=-1).reshape(B * Ho * Wo, k * k * C), (Ho, Wo)


# ---------------------------------------------------------------------------
# Forward pass (all_pred=False path of the PyTorch module)
# ---------------------------------------------------------------------------

def wide_resnet_forward(params, x_nchw, num_classes=10):
    B, C_img, H, W = x_nchw.shape
    nch = params["nch"]
    b1p, b2p, b3p = params["block1"], params["block2"], params["block3"]

    # channels-first 2-D slab (C, B*H*W), rows flattened row-major (b, i, j)
    x2 = jnp.transpose(x_nchw, (1, 0, 2, 3)).reshape(C_img, B * H * W)
    x2 = x2.astype(jnp.float32)

    # call 1: stem conv + block1 + block2.bn1/ReLU epilogue
    act1 = _pcall(
        _make_stem_block1_kernel(H, W),
        jax.ShapeDtypeStruct((nch[1], B * H * W), jnp.bfloat16),
        (x2, params["w_stem"], b1p["bn1_g"], b1p["bn1_b"], b1p["w1"],
         b1p["bn2_g"], b1p["bn2_b"], b1p["w2"], b2p["bn1_g"], b2p["bn1_b"]))

    # tiny XLA glue: stride-2 im2col + subsample for block2's conv1 / shortcut
    H2, W2 = H // 2, W // 2
    a1 = act1.T.reshape(B, H, W, nch[1])
    pat2, _ = _im2col_nhwc(a1, 3, 2)                          # (B*H2*W2, 9*16)
    sub2 = a1[:, ::2, ::2, :].reshape(B * H2 * W2, nch[1])

    # call 2: block2 + block3.bn1/ReLU epilogue
    act2 = _pcall(
        _make_down_block_kernel(B, H2, W2, head=False),
        jax.ShapeDtypeStruct((nch[2], B * H2 * W2), jnp.bfloat16),
        (pat2.T, b2p["w1"], sub2.T, b2p["wsc"], b2p["bn2_g"], b2p["bn2_b"],
         b2p["w2"], b3p["bn1_g"], b3p["bn1_b"]))

    H3, W3 = H2 // 2, W2 // 2
    a2 = act2.T.reshape(B, H2, W2, nch[2])
    pat3, _ = _im2col_nhwc(a2, 3, 2)                          # (B*H3*W3, 9*32)
    sub3 = a2[:, ::2, ::2, :].reshape(B * H3 * W3, nch[2])

    # call 3: block3 + final BN/ReLU + avg-pool + FC head
    out_t = _pcall(
        _make_down_block_kernel(B, H3, W3, head=True),
        jax.ShapeDtypeStruct((LANES, B), jnp.float32),
        (pat3.T, b3p["w1"], sub3.T, b3p["wsc"], b3p["bn2_g"], b3p["bn2_b"],
         b3p["w2"], params["bnf_g"], params["bnf_b"],
         params["fc_w"], params["fc_b"]))

    return out_t.T[:, :num_classes]


# ---------------------------------------------------------------------------
# Demo
# ---------------------------------------------------------------------------

if __name__ == "__main__":
    key = jax.random.PRNGKey(0)
    k_params, k_x = jax.random.split(key)
    params = init_wide_resnet(k_params, depth=10, num_classes=10,
                              widen_factor=1, input_n_channel=3)
    x = jax.random.normal(k_x, (2, 3, 16, 16), jnp.float32)   # NCHW like PyTorch

    fwd = jax.jit(lambda inp: wide_resnet_forward(params, inp, num_classes=10))
    logits = fwd(x)
    jax.block_until_ready(logits)
    assert logits.shape == (2, 10) and logits.dtype == jnp.float32
    assert bool(jnp.isfinite(logits).all())
    print("KERNEL_OK")
</pallas_src>

<mosaic_0001>
module attributes {stable_mosaic.version = 11 : i64} {
  func.func @kernel(%arg0: memref<3x512xf32, #tpu.memory_space<vmem>>, %arg1: memref<9x16x3xbf16, #tpu.memory_space<vmem>>, %arg2: memref<16x1xf32, #tpu.memory_space<vmem>>, %arg3: memref<16x1xf32, #tpu.memory_space<vmem>>, %arg4: memref<9x16x16xbf16, #tpu.memory_space<vmem>>, %arg5: memref<16x1xf32, #tpu.memory_space<vmem>>, %arg6: memref<16x1xf32, #tpu.memory_space<vmem>>, %arg7: memref<9x16x16xbf16, #tpu.memory_space<vmem>>, %arg8: memref<16x1xf32, #tpu.memory_space<vmem>>, %arg9: memref<16x1xf32, #tpu.memory_space<vmem>>, %arg10: memref<16x512xbf16, #tpu.memory_space<vmem>>) attributes {dimension_semantics = [], scalar_prefetch = 0 : i64, scratch_operands = 0 : i64, tpu.core_type = #tpu.core_type<tc>} {
    %c0 = arith.constant 0 : index
    %c0_0 = arith.constant 0 : index
    %0 = vector.load %arg0[%c0, %c0_0] : memref<3x512xf32, #tpu.memory_space<vmem>>, vector<3x512xf32>
    %1 = tpu.iota {dimensions = array<i32: 1>} : vector<1x512xi32>
    %c15_i32 = arith.constant 15 : i32
    %2 = vector.broadcast %c15_i32 : i32 to vector<1x512xi32>
    %3 = arith.andi %1, %2 : vector<1x512xi32>
    %c4_i32 = arith.constant 4 : i32
    %4 = vector.broadcast %c4_i32 : i32 to vector<1x512xi32>
    %5 = arith.shrsi %1, %4 : vector<1x512xi32>
    %c15_i32_1 = arith.constant 15 : i32
    %6 = vector.broadcast %c15_i32_1 : i32 to vector<1x512xi32>
    %7 = arith.andi %5, %6 : vector<1x512xi32>
    %cst = arith.constant 0.000000e+00 : f32
    %8 = vector.broadcast %cst : f32 to vector<16x512xf32>
    %c1_i32 = arith.constant 1 : i32
    %9 = vector.broadcast %c1_i32 : i32 to vector<1x512xi32>
    %10 = arith.cmpi sge, %7, %9 : vector<1x512xi32>
    %c17_i32 = arith.constant 17 : i32
    %11 = vector.broadcast %c17_i32 : i32 to vector<1x512xi32>
    %12 = arith.cmpi slt, %7, %11 : vector<1x512xi32>
    %13 = arith.andi %10, %12 : vector<1x512xi1>
    %c1_i32_2 = arith.constant 1 : i32
    %14 = vector.broadcast %c1_i32_2 : i32 to vector<1x512xi32>
    %15 = arith.cmpi sge, %3, %14 : vector<1x512xi32>
    %16 = arith.andi %13, %15 : vector<1x512xi1>
    %c17_i32_3 = arith.constant 17 : i32
    %17 = vector.broadcast %c17_i32_3 : i32 to vector<1x512xi32>
    %18 = arith.cmpi slt, %3, %17 : vector<1x512xi32>
    %19 = arith.andi %16, %18 : vector<1x512xi1>
    %c17_i32_4 = arith.constant 17 : i32
    %20 = tpu.dynamic_rotate %0 by %c17_i32_4 dim 1 : vector<3x512xf32>, i32 -> vector<3x512xf32>
    %cst_5 = arith.constant 0.000000e+00 : f32
    %21 = vector.shape_cast %19 : vector<1x512xi1> to vector<1x512xi1>
    %22 = vector.broadcast %21 : vector<1x512xi1> to vector<3x512xi1>
    %23 = vector.broadcast %cst_5 : f32 to vector<3x512xf32>
    %24 = arith.select %22, %20, %23 : vector<3x512xi1>, vector<3x512xf32>
    %c0_6 = arith.constant 0 : index
    %c0_7 = arith.constant 0 : index
    %c0_8 = arith.constant 0 : index
    %25 = vector.load %arg1[%c0_6, %c0_7, %c0_8] : memref<9x16x3xbf16, #tpu.memory_space<vmem>>, vector<1x16x3xbf16>
    %26 = vector.shape_cast %25 : vector<1x16x3xbf16> to vector<16x3xbf16>
    %27 = arith.truncf %24 : vector<3x512xf32> to vector<3x512xbf16>
    %cst_9 = arith.constant dense<0.000000e+00> : vector<16x512xf32>
    %28 = tpu.matmul %26, %27, %cst_9 {dimension_numbers = #tpu.dot_dimension_numbers<[1], [0], [0], [1], [0, 0, 1, 1], [], []>} : vector<16x3xbf16>, vector<3x512xbf16>, vector<16x512xf32> -> vector<16x512xf32>
    %29 = arith.addf %8, %28 : vector<16x512xf32>
    %c1_i32_10 = arith.constant 1 : i32
    %30 = vector.broadcast %c1_i32_10 : i32 to vector<1x512xi32>
    %31 = arith.cmpi sge, %7, %30 : vector<1x512xi32>
    %c17_i32_11 = arith.constant 17 : i32
    %32 = vector.broadcast %c17_i32_11 : i32 to vector<1x512xi32>
    %33 = arith.cmpi slt, %7, %32 : vector<1x512xi32>
    %34 = arith.andi %31, %33 : vector<1x512xi1>
    %c0_i32 = arith.constant 0 : i32
    %35 = vector.broadcast %c0_i32 : i32 to vector<1x512xi32>
    %36 = arith.cmpi sge, %3, %35 : vector<1x512xi32>
    %37 = arith.andi %34, %36 : vector<1x512xi1>
    %c16_i32 = arith.constant 16 : i32
    %38 = vector.broadcast %c16_i32 : i32 to vector<1x512xi32>
    %39 = arith.cmpi slt, %3, %38 : vector<1x512xi32>
    %40 = arith.andi %37, %39 : vector<1x512xi1>
    %c16_i32_12 = arith.constant 16 : i32
    %41 = tpu.dynamic_rotate %0 by %c16_i32_12 dim 1 : vector<3x512xf32>, i32 -> vector<3x512xf32>
    %cst_13 = arith.constant 0.000000e+00 : f32
    %42 = vector.shape_cast %40 : vector<1x512xi1> to vector<1x512xi1>
    %43 = vector.broadcast %42 : vector<1x512xi1> to vector<3x512xi1>
    %44 = vector.broadcast %cst_13 : f32 to vector<3x512xf32>
    %45 = arith.select %43, %41, %44 : vector<3x512xi1>, vector<3x512xf32>
    %c1 = arith.constant 1 : index
    %c0_14 = arith.constant 0 : index
    %c0_15 = arith.constant 0 : index
    %46 = vector.load %arg1[%c1, %c0_14, %c0_15] : memref<9x16x3xbf16, #tpu.memory_space<vmem>>, vector<1x16x3xbf16>
    %47 = vector.shape_cast %46 : vector<1x16x3xbf16> to vector<16x3xbf16>
    %48 = arith.truncf %45 : vector<3x512xf32> to vector<3x512xbf16>
    %cst_16 = arith.constant dense<0.000000e+00> : vector<16x512xf32>
    %49 = tpu.matmul %47, %48, %cst_16 {dimension_numbers = #tpu.dot_dimension_numbers<[1], [0], [0], [1], [0, 0, 1, 1], [], []>} : vector<16x3xbf16>, vector<3x512xbf16>, vector<16x512xf32> -> vector<16x512xf32>
    %50 = arith.addf %29, %49 : vector<16x512xf32>
    %c1_i32_17 = arith.constant 1 : i32
    %51 = vector.broadcast %c1_i32_17 : i32 to vector<1x512xi32>
    %52 = arith.cmpi sge, %7, %51 : vector<1x512xi32>
    %c17_i32_18 = arith.constant 17 : i32
    %53 = vector.broadcast %c17_i32_18 : i32 to vector<1x512xi32>
    %54 = arith.cmpi slt, %7, %53 : vector<1x512xi32>
    %55 = arith.andi %52, %54 : vector<1x512xi1>
    %c-1_i32 = arith.constant -1 : i32
    %56 = vector.broadcast %c-1_i32 : i32 to vector<1x512xi32>
    %57 = arith.cmpi sge, %3, %56 : vector<1x512xi32>
    %58 = arith.andi %55, %57 : vector<1x512xi1>
    %c15_i32_19 = arith.constant 15 : i32
    %59 = vector.broadcast %c15_i32_19 : i32 to vector<1x512xi32>
    %60 = arith.cmpi slt, %3, %59 : vector<1x512xi32>
    %61 = arith.andi %58, %60 : vector<1x512xi1>
    %c15_i32_20 = arith.constant 15 : i32
    %62 = tpu.dynamic_rotate %0 by %c15_i32_20 dim 1 : vector<3x512xf32>, i32 -> vector<3x512xf32>
    %cst_21 = arith.constant 0.000000e+00 : f32
    %63 = vector.shape_cast %61 : vector<1x512xi1> to vector<1x512xi1>
    %64 = vector.broadcast %63 : vector<1x512xi1> to vector<3x512xi1>
    %65 = vector.broadcast %cst_21 : f32 to vector<3x512xf32>
    %66 = arith.select %64, %62, %65 : vector<3x512xi1>, vector<3x512xf32>
    %c2 = arith.constant 2 : index
    %c0_22 = arith.constant 0 : index
    %c0_23 = arith.constant 0 : index
    %67 = vector.load %arg1[%c2, %c0_22, %c0_23] : memref<9x16x3xbf16, #tpu.memory_space<vmem>>, vector<1x16x3xbf16>
    %68 = vector.shape_cast %67 : vector<1x16x3xbf16> to vector<16x3xbf16>
    %69 = arith.truncf %66 : vector<3x512xf32> to vector<3x512xbf16>
    %cst_24 = arith.constant dense<0.000000e+00> : vector<16x512xf32>
    %70 = tpu.matmul %68, %69, %cst_24 {dimension_numbers = #tpu.dot_dimension_numbers<[1], [0], [0], [1], [0, 0, 1, 1], [], []>} : vector<16x3xbf16>, vector<3x512xbf16>, vector<16x512xf32> -> vector<16x512xf32>
    %71 = arith.addf %50, %70 : vector<16x512xf32>
    %c0_i32_25 = arith.constant 0 : i32
    %72 = vector.broadcast %c0_i32_25 : i32 to vector<1x512xi32>
    %73 = arith.cmpi sge, %7, %72 : vector<1x512xi32>
    %c16_i32_26 = arith.constant 16 : i32
    %74 = vector.broadcast %c16_i32_26 : i32 to vector<1x512xi32>
    %75 = arith.cmpi slt, %7, %74 : vector<1x512xi32>
    %76 = arith.andi %73, %75 : vector<1x512xi1>
    %c1_i32_27 = arith.constant 1 : i32
    %77 = vector.broadcast %c1_i32_27 : i32 to vector<1x512xi32>
    %78 = arith.cmpi sge, %3, %77 : vector<1x512xi32>
    %79 = arith.andi %76, %78 : vector<1x512xi1>
    %c17_i32_28 = arith.constant 17 : i32
    %80 = vector.broadcast %c17_i32_28 : i32 to vector<1x512xi32>
    %81 = arith.cmpi slt, %3, %80 : vector<1x512xi32>
    %82 = arith.andi %79, %81 : vector<1x512xi1>
    %c1_i32_29 = arith.constant 1 : i32
    %83 = tpu.dynamic_rotate %0 by %c1_i32_29 dim 1 : vector<3x512xf32>, i32 -> vector<3x512xf32>
    %cst_30 = arith.constant 0.000000e+00 : f32
    %84 = vector.shape_cast %82 : vector<1x512xi1> to vector<1x512xi1>
    %85 = vector.broadcast %84 : vector<1x512xi1> to vector<3x512xi1>
    %86 = vector.broadcast %cst_30 : f32 to vector<3x512xf32>
    %87 = arith.select %85, %83, %86 : vector<3x512xi1>, vector<3x512xf32>
    %c3 = arith.constant 3 : index
    %c0_31 = arith.constant 0 : index
    %c0_32 = arith.constant 0 : index
    %88 = vector.load %arg1[%c3, %c0_31, %c0_32] : memref<9x16x3xbf16, #tpu.memory_space<vmem>>, vector<1x16x3xbf16>
    %89 = vector.shape_cast %88 : vector<1x16x3xbf16> to vector<16x3xbf16>
    %90 = arith.truncf %87 : vector<3x512xf32> to vector<3x512xbf16>
    %cst_33 = arith.constant dense<0.000000e+00> : vector<16x512xf32>
    %91 = tpu.matmul %89, %90, %cst_33 {dimension_numbers = #tpu.dot_dimension_numbers<[1], [0], [0], [1], [0, 0, 1, 1], [], []>} : vector<16x3xbf16>, vector<3x512xbf16>, vector<16x512xf32> -> vector<16x512xf32>
    %92 = arith.addf %71, %91 : vector<16x512xf32>
    %c4 = arith.constant 4 : index
    %c0_34 = arith.constant 0 : index
    %c0_35 = arith.constant 0 : index
    %93 = vector.load %arg1[%c4, %c0_34, %c0_35] : memref<9x16x3xbf16, #tpu.memory_space<vmem>>, vector<1x16x3xbf16>
    %94 = vector.shape_cast %93 : vector<1x16x3xbf16> to vector<16x3xbf16>
    %95 = arith.truncf %0 : vector<3x512xf32> to vector<3x512xbf16>
    %cst_36 = arith.constant dense<0.000000e+00> : vector<16x512xf32>
    %96 = tpu.matmul %94, %95, %cst_36 {dimension_numbers = #tpu.dot_dimension_numbers<[1], [0], [0], [1], [0, 0, 1, 1], [], []>} : vector<16x3xbf16>, vector<3x512xbf16>, vector<16x512xf32> -> vector<16x512xf32>
    %97 = arith.addf %92, %96 : vector<16x512xf32>
    %c0_i32_37 = arith.constant 0 : i32
    %98 = vector.broadcast %c0_i32_37 : i32 to vector<1x512xi32>
    %99 = arith.cmpi sge, %7, %98 : vector<1x512xi32>
    %c16_i32_38 = arith.constant 16 : i32
    %100 = vector.broadcast %c16_i32_38 : i32 to vector<1x512xi32>
    %101 = arith.cmpi slt, %7, %100 : vector<1x512xi32>
    %102 = arith.andi %99, %101 : vector<1x512xi1>
    %c-1_i32_39 = arith.constant -1 : i32
    %103 = vector.broadcast %c-1_i32_39 : i32 to vector<1x512xi32>
    %104 = arith.cmpi sge, %3, %103 : vector<1x512xi32>
    %105 = arith.andi %102, %104 : vector<1x512xi1>
    %c15_i32_40 = arith.constant 15 : i32
    %106 = vector.broadcast %c15_i32_40 : i32 to vector<1x512xi32>
    %107 = arith.cmpi slt, %3, %106 : vector<1x512xi32>
    %108 = arith.andi %105, %107 : vector<1x512xi1>
    %c511_i32 = arith.constant 511 : i32
    %109 = tpu.dynamic_rotate %0 by %c511_i32 dim 1 : vector<3x512xf32>, i32 -> vector<3x512xf32>
    %cst_41 = arith.constant 0.000000e+00 : f32
    %110 = vector.shape_cast %108 : vector<1x512xi1> to vector<1x512xi1>
    %111 = vector.broadcast %110 : vector<1x512xi1> to vector<3x512xi1>
    %112 = vector.broadcast %cst_41 : f32 to vector<3x512xf32>
    %113 = arith.select %111, %109, %112 : vector<3x512xi1>, vector<3x512xf32>
    %c5 = arith.constant 5 : index
    %c0_42 = arith.constant 0 : index
    %c0_43 = arith.constant 0 : index
    %114 = vector.load %arg1[%c5, %c0_42, %c0_43] : memref<9x16x3xbf16, #tpu.memory_space<vmem>>, vector<1x16x3xbf16>
    %115 = vector.shape_cast %114 : vector<1x16x3xbf16> to vector<16x3xbf16>
    %116 = arith.truncf %113 : vector<3x512xf32> to vector<3x512xbf16>
    %cst_44 = arith.constant dense<0.000000e+00> : vector<16x512xf32>
    %117 = tpu.matmul %115, %116, %cst_44 {dimension_numbers = #tpu.dot_dimension_numbers<[1], [0], [0], [1], [0, 0, 1, 1], [], []>} : vector<16x3xbf16>, vector<3x512xbf16>, vector<16x512xf32> -> vector<16x512xf32>
    %118 = arith.addf %97, %117 : vector<16x512xf32>
    %c-1_i32_45 = arith.constant -1 : i32
    %119 = vector.broadcast %c-1_i32_45 : i32 to vector<1x512xi32>
    %120 = arith.cmpi sge, %7, %119 : vector<1x512xi32>
    %c15_i32_46 = arith.constant 15 : i32
    %121 = vector.broadcast %c15_i32_46 : i32 to vector<1x512xi32>
    %122 = arith.cmpi slt, %7, %121 : vector<1x512xi32>
    %123 = arith.andi %120, %122 : vector<1x512xi1>
    %c1_i32_47 = arith.constant 1 : i32
    %124 = vector.broadcast %c1_i32_47 : i32 to vector<1x512xi32>
    %125 = arith.cmpi sge, %3, %124 : vector<1x512xi32>
    %126 = arith.andi %123, %125 : vector<1x512xi1>
    %c17_i32_48 = arith.constant 17 : i32
    %127 = vector.broadcast %c17_i32_48 : i32 to vector<1x512xi32>
    %128 = arith.cmpi slt, %3, %127 : vector<1x512xi32>
    %129 = arith.andi %126, %128 : vector<1x512xi1>
    %c497_i32 = arith.constant 497 : i32
    %130 = tpu.dynamic_rotate %0 by %c497_i32 dim 1 : vector<3x512xf32>, i32 -> vector<3x512xf32>
    %cst_49 = arith.constant 0.000000e+00 : f32
    %131 = vector.shape_cast %129 : vector<1x512xi1> to vector<1x512xi1>
    %132 = vector.broadcast %131 : vector<1x512xi1> to vector<3x512xi1>
    %133 = vector.broadcast %cst_49 : f32 to vector<3x512xf32>
    %134 = arith.select %132, %130, %133 : vector<3x512xi1>, vector<3x512xf32>
    %c6 = arith.constant 6 : index
    %c0_50 = arith.constant 0 : index
    %c0_51 = arith.constant 0 : index
    %135 = vector.load %arg1[%c6, %c0_50, %c0_51] : memref<9x16x3xbf16, #tpu.memory_space<vmem>>, vector<1x16x3xbf16>
    %136 = vector.shape_cast %135 : vector<1x16x3xbf16> to vector<16x3xbf16>
    %137 = arith.truncf %134 : vector<3x512xf32> to vector<3x512xbf16>
    %cst_52 = arith.constant dense<0.000000e+00> : vector<16x512xf32>
    %138 = tpu.matmul %136, %137, %cst_52 {dimension_numbers = #tpu.dot_dimension_numbers<[1], [0], [0], [1], [0, 0, 1, 1], [], []>} : vector<16x3xbf16>, vector<3x512xbf16>, vector<16x512xf32> -> vector<16x512xf32>
    %139 = arith.addf %118, %138 : vector<16x512xf32>
    %c-1_i32_53 = arith.constant -1 : i32
    %140 = vector.broadcast %c-1_i32_53 : i32 to vector<1x512xi32>
    %141 = arith.cmpi sge, %7, %140 : vector<1x512xi32>
    %c15_i32_54 = arith.constant 15 : i32
    %142 = vector.broadcast %c15_i32_54 : i32 to vector<1x512xi32>
    %143 = arith.cmpi slt, %7, %142 : vector<1x512xi32>
    %144 = arith.andi %141, %143 : vector<1x512xi1>
    %c0_i32_55 = arith.constant 0 : i32
    %145 = vector.broadcast %c0_i32_55 : i32 to vector<1x512xi32>
    %146 = arith.cmpi sge, %3, %145 : vector<1x512xi32>
    %147 = arith.andi %144, %146 : vector<1x512xi1>
    %c16_i32_56 = arith.constant 16 : i32
    %148 = vector.broadcast %c16_i32_56 : i32 to vector<1x512xi32>
    %149 = arith.cmpi slt, %3, %148 : vector<1x512xi32>
    %150 = arith.andi %147, %149 : vector<1x512xi1>
    %c496_i32 = arith.constant 496 : i32
    %151 = tpu.dynamic_rotate %0 by %c496_i32 dim 1 : vector<3x512xf32>, i32 -> vector<3x512xf32>
    %cst_57 = arith.constant 0.000000e+00 : f32
    %152 = vector.shape_cast %150 : vector<1x512xi1> to vector<1x512xi1>
    %153 = vector.broadcast %152 : vector<1x512xi1> to vector<3x512xi1>
    %154 = vector.broadcast %cst_57 : f32 to vector<3x512xf32>
    %155 = arith.select %153, %151, %154 : vector<3x512xi1>, vector<3x512xf32>
    %c7 = arith.constant 7 : index
    %c0_58 = arith.constant 0 : index
    %c0_59 = arith.constant 0 : index
    %156 = vector.load %arg1[%c7, %c0_58, %c0_59] : memref<9x16x3xbf16, #tpu.memory_space<vmem>>, vector<1x16x3xbf16>
    %157 = vector.shape_cast %156 : vector<1x16x3xbf16> to vector<16x3xbf16>
    %158 = arith.truncf %155 : vector<3x512xf32> to vector<3x512xbf16>
    %cst_60 = arith.constant dense<0.000000e+00> : vector<16x512xf32>
    %159 = tpu.matmul %157, %158, %cst_60 {dimension_numbers = #tpu.dot_dimension_numbers<[1], [0], [0], [1], [0, 0, 1, 1], [], []>} : vector<16x3xbf16>, vector<3x512xbf16>, vector<16x512xf32> -> vector<16x512xf32>
    %160 = arith.addf %139, %159 : vector<16x512xf32>
    %c-1_i32_61 = arith.constant -1 : i32
    %161 = vector.broadcast %c-1_i32_61 : i32 to vector<1x512xi32>
    %162 = arith.cmpi sge, %7, %161 : vector<1x512xi32>
    %c15_i32_62 = arith.constant 15 : i32
    %163 = vector.broadcast %c15_i32_62 : i32 to vector<1x512xi32>
    %164 = arith.cmpi slt, %7, %163 : vector<1x512xi32>
    %165 = arith.andi %162, %164 : vector<1x512xi1>
    %c-1_i32_63 = arith.constant -1 : i32
    %166 = vector.broadcast %c-1_i32_63 : i32 to vector<1x512xi32>
    %167 = arith.cmpi sge, %3, %166 : vector<1x512xi32>
    %168 = arith.andi %165, %167 : vector<1x512xi1>
    %c15_i32_64 = arith.constant 15 : i32
    %169 = vector.broadcast %c15_i32_64 : i32 to vector<1x512xi32>
    %170 = arith.cmpi slt, %3, %169 : vector<1x512xi32>
    %171 = arith.andi %168, %170 : vector<1x512xi1>
    %c495_i32 = arith.constant 495 : i32
    %172 = tpu.dynamic_rotate %0 by %c495_i32 dim 1 : vector<3x512xf32>, i32 -> vector<3x512xf32>
    %cst_65 = arith.constant 0.000000e+00 : f32
    %173 = vector.shape_cast %171 : vector<1x512xi1> to vector<1x512xi1>
    %174 = vector.broadcast %173 : vector<1x512xi1> to vector<3x512xi1>
    %175 = vector.broadcast %cst_65 : f32 to vector<3x512xf32>
    %176 = arith.select %174, %172, %175 : vector<3x512xi1>, vector<3x512xf32>
    %c8 = arith.constant 8 : index
    %c0_66 = arith.constant 0 : index
    %c0_67 = arith.constant 0 : index
    %177 = vector.load %arg1[%c8, %c0_66, %c0_67] : memref<9x16x3xbf16, #tpu.memory_space<vmem>>, vector<1x16x3xbf16>
    %178 = vector.shape_cast %177 : vector<1x16x3xbf16> to vector<16x3xbf16>
    %179 = arith.truncf %176 : vector<3x512xf32> to vector<3x512xbf16>
    %cst_68 = arith.constant dense<0.000000e+00> : vector<16x512xf32>
    %180 = tpu.matmul %178, %179, %cst_68 {dimension_numbers = #tpu.dot_dimension_numbers<[1], [0], [0], [1], [0, 0, 1, 1], [], []>} : vector<16x3xbf16>, vector<3x512xbf16>, vector<16x512xf32> -> vector<16x512xf32>
    %181 = arith.addf %160, %180 : vector<16x512xf32>
    %c0_69 = arith.constant 0 : index
    %c0_70 = arith.constant 0 : index
    %182 = vector.load %arg2[%c0_69, %c0_70] : memref<16x1xf32, #tpu.memory_space<vmem>>, vector<16x1xf32>
    %c0_71 = arith.constant 0 : index
    %c0_72 = arith.constant 0 : index
    %183 = vector.load %arg3[%c0_71, %c0_72] : memref<16x1xf32, #tpu.memory_space<vmem>>, vector<16x1xf32>
    %cst_73 = arith.constant dense<0.000000e+00> : vector<16xf32>
    %184 = vector.multi_reduction <add>, %181, %cst_73 [1] : vector<16x512xf32> to vector<16xf32>
    %185 = vector.shape_cast %184 : vector<16xf32> to vector<16x1xf32>
    %cst_74 = arith.constant 5.120000e+02 : f32
    %186 = vector.broadcast %cst_74 : f32 to vector<16x1xf32>
    %187 = arith.divf %185, %186 : vector<16x1xf32>
    %188 = vector.broadcast %187 : vector<16x1xf32> to vector<16x512xf32>
    %189 = arith.subf %181, %188 : vector<16x512xf32>
    %190 = arith.mulf %189, %189 : vector<16x512xf32>
    %cst_75 = arith.constant dense<0.000000e+00> : vector<16xf32>
    %191 = vector.multi_reduction <add>, %190, %cst_75 [1] : vector<16x512xf32> to vector<16xf32>
    %192 = vector.shape_cast %191 : vector<16xf32> to vector<16x1xf32>
    %cst_76 = arith.constant 5.120000e+02 : f32
    %193 = vector.broadcast %cst_76 : f32 to vector<16x1xf32>
    %194 = arith.divf %192, %193 : vector<16x1xf32>
    %cst_77 = arith.constant 9.99999974E-6 : f32
    %195 = vector.broadcast %cst_77 : f32 to vector<16x1xf32>
    %196 = arith.addf %194, %195 : vector<16x1xf32>
    %197 = math.rsqrt %196 : vector<16x1xf32>
    %198 = vector.broadcast %197 : vector<16x1xf32> to vector<16x512xf32>
    %199 = arith.mulf %189, %198 : vector<16x512xf32>
    %200 = vector.broadcast %182 : vector<16x1xf32> to vector<16x512xf32>
    %201 = arith.mulf %199, %200 : vector<16x512xf32>
    %202 = vector.broadcast %183 : vector<16x1xf32> to vector<16x512xf32>
    %203 = arith.addf %201, %202 : vector<16x512xf32>
    %cst_78 = arith.constant 0.000000e+00 : f32
    %204 = vector.broadcast %cst_78 : f32 to vector<16x512xf32>
    %205 = arith.maximumf %203, %204 : vector<16x512xf32>
    %206 = tpu.iota {dimensions = array<i32: 1>} : vector<1x512xi32>
    %c15_i32_79 = arith.constant 15 : i32
    %207 = vector.broadcast %c15_i32_79 : i32 to vector<1x512xi32>
    %208 = arith.andi %206, %207 : vector<1x512xi32>
    %c4_i32_80 = arith.constant 4 : i32
    %209 = vector.broadcast %c4_i32_80 : i32 to vector<1x512xi32>
    %210 = arith.shrsi %206, %209 : vector<1x512xi32>
    %c15_i32_81 = arith.constant 15 : i32
    %211 = vector.broadcast %c15_i32_81 : i32 to vector<1x512xi32>
    %212 = arith.andi %210, %211 : vector<1x512xi32>
    %cst_82 = arith.constant 0.000000e+00 : f32
    %213 = vector.broadcast %cst_82 : f32 to vector<16x512xf32>
    %c1_i32_83 = arith.constant 1 : i32
    %214 = vector.broadcast %c1_i32_83 : i32 to vector<1x512xi32>
    %215 = arith.cmpi sge, %212, %214 : vector<1x512xi32>
    %c17_i32_84 = arith.constant 17 : i32
    %216 = vector.broadcast %c17_i32_84 : i32 to vector<1x512xi32>
    %217 = arith.cmpi slt, %212, %216 : vector<1x512xi32>
    %218 = arith.andi %215, %217 : vector<1x512xi1>
    %c1_i32_85 = arith.constant 1 : i32
    %219 = vector.broadcast %c1_i32_85 : i32 to vector<1x512xi32>
    %220 = arith.cmpi sge, %208, %219 : vector<1x512xi32>
    %221 = arith.andi %218, %220 : vector<1x512xi1>
    %c17_i32_86 = arith.constant 17 : i32
    %222 = vector.broadcast %c17_i32_86 : i32 to vector<1x512xi32>
    %223 = arith.cmpi slt, %208, %222 : vector<1x512xi32>
    %224 = arith.andi %221, %223 : vector<1x512xi1>
    %c17_i32_87 = arith.constant 17 : i32
    %225 = tpu.dynamic_rotate %205 by %c17_i32_87 dim 1 : vector<16x512xf32>, i32 -> vector<16x512xf32>
    %cst_88 = arith.constant 0.000000e+00 : f32
    %226 = vector.shape_cast %224 : vector<1x512xi1> to vector<1x512xi1>
    %227 = vector.broadcast %226 : vector<1x512xi1> to vector<16x512xi1>
    %228 = vector.broadcast %cst_88 : f32 to vector<16x512xf32>
    %229 = arith.select %227, %225, %228 : vector<16x512xi1>, vector<16x512xf32>
    %c0_89 = arith.constant 0 : index
    %c0_90 = arith.constant 0 : index
    %c0_91 = arith.constant 0 : index
    %230 = vector.load %arg4[%c0_89, %c0_90, %c0_91] : memref<9x16x16xbf16, #tpu.memory_space<vmem>>, vector<1x16x16xbf16>
    %231 = vector.shape_cast %230 : vector<1x16x16xbf16> to vector<16x16xbf16>
    %232 = arith.truncf %229 : vector<16x512xf32> to vector<16x512xbf16>
    %cst_92 = arith.constant dense<0.000000e+00> : vector<16x512xf32>
    %233 = tpu.matmul %231, %232, %cst_92 {dimension_numbers = #tpu.dot_dimension_numbers<[1], [0], [0], [1], [0, 0, 1, 1], [], []>} : vector<16x16xbf16>, vector<16x512xbf16>, vector<16x512xf32> -> vector<16x512xf32>
    %234 = arith.addf %213, %233 : vector<16x512xf32>
    %c1_i32_93 = arith.constant 1 : i32
    %235 = vector.broadcast %c1_i32_93 : i32 to vector<1x512xi32>
    %236 = arith.cmpi sge, %212, %235 : vector<1x512xi32>
    %c17_i32_94 = arith.constant 17 : i32
    %237 = vector.broadcast %c17_i32_94 : i32 to vector<1x512xi32>
    %238 = arith.cmpi slt, %212, %237 : vector<1x512xi32>
    %239 = arith.andi %236, %238 : vector<1x512xi1>
    %c0_i32_95 = arith.constant 0 : i32
    %240 = vector.broadcast %c0_i32_95 : i32 to vector<1x512xi32>
    %241 = arith.cmpi sge, %208, %240 : vector<1x512xi32>
    %242 = arith.andi %239, %241 : vector<1x512xi1>
    %c16_i32_96 = arith.constant 16 : i32
    %243 = vector.broadcast %c16_i32_96 : i32 to vector<1x512xi32>
    %244 = arith.cmpi slt, %208, %243 : vector<1x512xi32>
    %245 = arith.andi %242, %244 : vector<1x512xi1>
    %c16_i32_97 = arith.constant 16 : i32
    %246 = tpu.dynamic_rotate %205 by %c16_i32_97 dim 1 : vector<16x512xf32>, i32 -> vector<16x512xf32>
    %cst_98 = arith.constant 0.000000e+00 : f32
    %247 = vector.shape_cast %245 : vector<1x512xi1> to vector<1x512xi1>
    %248 = vector.broadcast %247 : vector<1x512xi1> to vector<16x512xi1>
    %249 = vector.broadcast %cst_98 : f32 to vector<16x512xf32>
    %250 = arith.select %248, %246, %249 : vector<16x512xi1>, vector<16x512xf32>
    %c1_99 = arith.constant 1 : index
    %c0_100 = arith.constant 0 : index
    %c0_101 = arith.constant 0 : index
    %251 = vector.load %arg4[%c1_99, %c0_100, %c0_101] : memref<9x16x16xbf16, #tpu.memory_space<vmem>>, vector<1x16x16xbf16>
    %252 = vector.shape_cast %251 : vector<1x16x16xbf16> to vector<16x16xbf16>
    %253 = arith.truncf %250 : vector<16x512xf32> to vector<16x512xbf16>
    %cst_102 = arith.constant dense<0.000000e+00> : vector<16x512xf32>
    %254 = tpu.matmul %252, %253, %cst_102 {dimension_numbers = #tpu.dot_dimension_numbers<[1], [0], [0], [1], [0, 0, 1, 1], [], []>} : vector<16x16xbf16>, vector<16x512xbf16>, vector<16x512xf32> -> vector<16x512xf32>
    %255 = arith.addf %234, %254 : vector<16x512xf32>
    %c1_i32_103 = arith.constant 1 : i32
    %256 = vector.broadcast %c1_i32_103 : i32 to vector<1x512xi32>
    %257 = arith.cmpi sge, %212, %256 : vector<1x512xi32>
    %c17_i32_104 = arith.constant 17 : i32
    %258 = vector.broadcast %c17_i32_104 : i32 to vector<1x512xi32>
    %259 = arith.cmpi slt, %212, %258 : vector<1x512xi32>
    %260 = arith.andi %257, %259 : vector<1x512xi1>
    %c-1_i32_105 = arith.constant -1 : i32
    %261 = vector.broadcast %c-1_i32_105 : i32 to vector<1x512xi32>
    %262 = arith.cmpi sge, %208, %261 : vector<1x512xi32>
    %263 = arith.andi %260, %262 : vector<1x512xi1>
    %c15_i32_106 = arith.constant 15 : i32
    %264 = vector.broadcast %c15_i32_106 : i32 to vector<1x512xi32>
    %265 = arith.cmpi slt, %208, %264 : vector<1x512xi32>
    %266 = arith.andi %263, %265 : vector<1x512xi1>
    %c15_i32_107 = arith.constant 15 : i32
    %267 = tpu.dynamic_rotate %205 by %c15_i32_107 dim 1 : vector<16x512xf32>, i32 -> vector<16x512xf32>
    %cst_108 = arith.constant 0.000000e+00 : f32
    %268 = vector.shape_cast %266 : vector<1x512xi1> to vector<1x512xi1>
    %269 = vector.broadcast %268 : vector<1x512xi1> to vector<16x512xi1>
    %270 = vector.broadcast %cst_108 : f32 to vector<16x512xf32>
    %271 = arith.select %269, %267, %270 : vector<16x512xi1>, vector<16x512xf32>
    %c2_109 = arith.constant 2 : index
    %c0_110 = arith.constant 0 : index
    %c0_111 = arith.constant 0 : index
    %272 = vector.load %arg4[%c2_109, %c0_110, %c0_111] : memref<9x16x16xbf16, #tpu.memory_space<vmem>>, vector<1x16x16xbf16>
    %273 = vector.shape_cast %272 : vector<1x16x16xbf16> to vector<16x16xbf16>
    %274 = arith.truncf %271 : vector<16x512xf32> to vector<16x512xbf16>
    %cst_112 = arith.constant dense<0.000000e+00> : vector<16x512xf32>
    %275 = tpu.matmul %273, %274, %cst_112 {dimension_numbers = #tpu.dot_dimension_numbers<[1], [0], [0], [1], [0, 0, 1, 1], [], []>} : vector<16x16xbf16>, vector<16x512xbf16>, vector<16x512xf32> -> vector<16x512xf32>
    %276 = arith.addf %255, %275 : vector<16x512xf32>
    %c0_i32_113 = arith.constant 0 : i32
    %277 = vector.broadcast %c0_i32_113 : i32 to vector<1x512xi32>
    %278 = arith.cmpi sge, %212, %277 : vector<1x512xi32>
    %c16_i32_114 = arith.constant 16 : i32
    %279 = vector.broadcast %c16_i32_114 : i32 to vector<1x512xi32>
    %280 = arith.cmpi slt, %212, %279 : vector<1x512xi32>
    %281 = arith.andi %278, %280 : vector<1x512xi1>
    %c1_i32_115 = arith.constant 1 : i32
    %282 = vector.broadcast %c1_i32_115 : i32 to vector<1x512xi32>
    %283 = arith.cmpi sge, %208, %282 : vector<1x512xi32>
    %284 = arith.andi %281, %283 : vector<1x512xi1>
    %c17_i32_116 = arith.constant 17 : i32
    %285 = vector.broadcast %c17_i32_116 : i32 to vector<1x512xi32>
    %286 = arith.cmpi slt, %208, %285 : vector<1x512xi32>
    %287 = arith.andi %284, %286 : vector<1x512xi1>
    %c1_i32_117 = arith.constant 1 : i32
    %288 = tpu.dynamic_rotate %205 by %c1_i32_117 dim 1 : vector<16x512xf32>, i32 -> vector<16x512xf32>
    %cst_118 = arith.constant 0.000000e+00 : f32
    %289 = vector.shape_cast %287 : vector<1x512xi1> to vector<1x512xi1>
    %290 = vector.broadcast %289 : vector<1x512xi1> to vector<16x512xi1>
    %291 = vector.broadcast %cst_118 : f32 to vector<16x512xf32>
    %292 = arith.select %290, %288, %291 : vector<16x512xi1>, vector<16x512xf32>
    %c3_119 = arith.constant 3 : index
    %c0_120 = arith.constant 0 : index
    %c0_121 = arith.constant 0 : index
    %293 = vector.load %arg4[%c3_119, %c0_120, %c0_121] : memref<9x16x16xbf16, #tpu.memory_space<vmem>>, vector<1x16x16xbf16>
    %294 = vector.shape_cast %293 : vector<1x16x16xbf16> to vector<16x16xbf16>
    %295 = arith.truncf %292 : vector<16x512xf32> to vector<16x512xbf16>
    %cst_122 = arith.constant dense<0.000000e+00> : vector<16x512xf32>
    %296 = tpu.matmul %294, %295, %cst_122 {dimension_numbers = #tpu.dot_dimension_numbers<[1], [0], [0], [1], [0, 0, 1, 1], [], []>} : vector<16x16xbf16>, vector<16x512xbf16>, vector<16x512xf32> -> vector<16x512xf32>
    %297 = arith.addf %276, %296 : vector<16x512xf32>
    %c4_123 = arith.constant 4 : index
    %c0_124 = arith.constant 0 : index
    %c0_125 = arith.constant 0 : index
    %298 = vector.load %arg4[%c4_123, %c0_124, %c0_125] : memref<9x16x16xbf16, #tpu.memory_space<vmem>>, vector<1x16x16xbf16>
    %299 = vector.shape_cast %298 : vector<1x16x16xbf16> to vector<16x16xbf16>
    %300 = arith.truncf %205 : vector<16x512xf32> to vector<16x512xbf16>
    %cst_126 = arith.constant dense<0.000000e+00> : vector<16x512xf32>
    %301 = tpu.matmul %299, %300, %cst_126 {dimension_numbers = #tpu.dot_dimension_numbers<[1], [0], [0], [1], [0, 0, 1, 1], [], []>} : vector<16x16xbf16>, vector<16x512xbf16>, vector<16x512xf32> -> vector<16x512xf32>
    %302 = arith.addf %297, %301 : vector<16x512xf32>
    %c0_i32_127 = arith.constant 0 : i32
    %303 = vector.broadcast %c0_i32_127 : i32 to vector<1x512xi32>
    %304 = arith.cmpi sge, %212, %303 : vector<1x512xi32>
    %c16_i32_128 = arith.constant 16 : i32
    %305 = vector.broadcast %c16_i32_128 : i32 to vector<1x512xi32>
    %306 = arith.cmpi slt, %212, %305 : vector<1x512xi32>
    %307 = arith.andi %304, %306 : vector<1x512xi1>
    %c-1_i32_129 = arith.constant -1 : i32
    %308 = vector.broadcast %c-1_i32_129 : i32 to vector<1x512xi32>
    %309 = arith.cmpi sge, %208, %308 : vector<1x512xi32>
    %310 = arith.andi %307, %309 : vector<1x512xi1>
    %c15_i32_130 = arith.constant 15 : i32
    %311 = vector.broadcast %c15_i32_130 : i32 to vector<1x512xi32>
    %312 = arith.cmpi slt, %208, %311 : vector<1x512xi32>
    %313 = arith.andi %310, %312 : vector<1x512xi1>
    %c511_i32_131 = arith.constant 511 : i32
    %314 = tpu.dynamic_rotate %205 by %c511_i32_131 dim 1 : vector<16x512xf32>, i32 -> vector<16x512xf32>
    %cst_132 = arith.constant 0.000000e+00 : f32
    %315 = vector.shape_cast %313 : vector<1x512xi1> to vector<1x512xi1>
    %316 = vector.broadcast %315 : vector<1x512xi1> to vector<16x512xi1>
    %317 = vector.broadcast %cst_132 : f32 to vector<16x512xf32>
    %318 = arith.select %316, %314, %317 : vector<16x512xi1>, vector<16x512xf32>
    %c5_133 = arith.constant 5 : index
    %c0_134 = arith.constant 0 : index
    %c0_135 = arith.constant 0 : index
    %319 = vector.load %arg4[%c5_133, %c0_134, %c0_135] : memref<9x16x16xbf16, #tpu.memory_space<vmem>>, vector<1x16x16xbf16>
    %320 = vector.shape_cast %319 : vector<1x16x16xbf16> to vector<16x16xbf16>
    %321 = arith.truncf %318 : vector<16x512xf32> to vector<16x512xbf16>
    %cst_136 = arith.constant dense<0.000000e+00> : vector<16x512xf32>
    %322 = tpu.matmul %320, %321, %cst_136 {dimension_numbers = #tpu.dot_dimension_numbers<[1], [0], [0], [1], [0, 0, 1, 1], [], []>} : vector<16x16xbf16>, vector<16x512xbf16>, vector<16x512xf32> -> vector<16x512xf32>
    %323 = arith.addf %302, %322 : vector<16x512xf32>
    %c-1_i32_137 = arith.constant -1 : i32
    %324 = vector.broadcast %c-1_i32_137 : i32 to vector<1x512xi32>
    %325 = arith.cmpi sge, %212, %324 : vector<1x512xi32>
    %c15_i32_138 = arith.constant 15 : i32
    %326 = vector.broadcast %c15_i32_138 : i32 to vector<1x512xi32>
    %327 = arith.cmpi slt, %212, %326 : vector<1x512xi32>
    %328 = arith.andi %325, %327 : vector<1x512xi1>
    %c1_i32_139 = arith.constant 1 : i32
    %329 = vector.broadcast %c1_i32_139 : i32 to vector<1x512xi32>
    %330 = arith.cmpi sge, %208, %329 : vector<1x512xi32>
    %331 = arith.andi %328, %330 : vector<1x512xi1>
    %c17_i32_140 = arith.constant 17 : i32
    %332 = vector.broadcast %c17_i32_140 : i32 to vector<1x512xi32>
    %333 = arith.cmpi slt, %208, %332 : vector<1x512xi32>
    %334 = arith.andi %331, %333 : vector<1x512xi1>
    %c497_i32_141 = arith.constant 497 : i32
    %335 = tpu.dynamic_rotate %205 by %c497_i32_141 dim 1 : vector<16x512xf32>, i32 -> vector<16x512xf32>
    %cst_142 = arith.constant 0.000000e+00 : f32
    %336 = vector.shape_cast %334 : vector<1x512xi1> to vector<1x512xi1>
    %337 = vector.broadcast %336 : vector<1x512xi1> to vector<16x512xi1>
    %338 = vector.broadcast %cst_142 : f32 to vector<16x512xf32>
    %339 = arith.select %337, %335, %338 : vector<16x512xi1>, vector<16x512xf32>
    %c6_143 = arith.constant 6 : index
    %c0_144 = arith.constant 0 : index
    %c0_145 = arith.constant 0 : index
    %340 = vector.load %arg4[%c6_143, %c0_144, %c0_145] : memref<9x16x16xbf16, #tpu.memory_space<vmem>>, vector<1x16x16xbf16>
    %341 = vector.shape_cast %340 : vector<1x16x16xbf16> to vector<16x16xbf16>
    %342 = arith.truncf %339 : vector<16x512xf32> to vector<16x512xbf16>
    %cst_146 = arith.constant dense<0.000000e+00> : vector<16x512xf32>
    %343 = tpu.matmul %341, %342, %cst_146 {dimension_numbers = #tpu.dot_dimension_numbers<[1], [0], [0], [1], [0, 0, 1, 1], [], []>} : vector<16x16xbf16>, vector<16x512xbf16>, vector<16x512xf32> -> vector<16x512xf32>
    %344 = arith.addf %323, %343 : vector<16x512xf32>
    %c-1_i32_147 = arith.constant -1 : i32
    %345 = vector.broadcast %c-1_i32_147 : i32 to vector<1x512xi32>
    %346 = arith.cmpi sge, %212, %345 : vector<1x512xi32>
    %c15_i32_148 = arith.constant 15 : i32
    %347 = vector.broadcast %c15_i32_148 : i32 to vector<1x512xi32>
    %348 = arith.cmpi slt, %212, %347 : vector<1x512xi32>
    %349 = arith.andi %346, %348 : vector<1x512xi1>
    %c0_i32_149 = arith.constant 0 : i32
    %350 = vector.broadcast %c0_i32_149 : i32 to vector<1x512xi32>
    %351 = arith.cmpi sge, %208, %350 : vector<1x512xi32>
    %352 = arith.andi %349, %351 : vector<1x512xi1>
    %c16_i32_150 = arith.constant 16 : i32
    %353 = vector.broadcast %c16_i32_150 : i32 to vector<1x512xi32>
    %354 = arith.cmpi slt, %208, %353 : vector<1x512xi32>
    %355 = arith.andi %352, %354 : vector<1x512xi1>
    %c496_i32_151 = arith.constant 496 : i32
    %356 = tpu.dynamic_rotate %205 by %c496_i32_151 dim 1 : vector<16x512xf32>, i32 -> vector<16x512xf32>
    %cst_152 = arith.constant 0.000000e+00 : f32
    %357 = vector.shape_cast %355 : vector<1x512xi1> to vector<1x512xi1>
    %358 = vector.broadcast %357 : vector<1x512xi1> to vector<16x512xi1>
    %359 = vector.broadcast %cst_152 : f32 to vector<16x512xf32>
    %360 = arith.select %358, %356, %359 : vector<16x512xi1>, vector<16x512xf32>
    %c7_153 = arith.constant 7 : index
    %c0_154 = arith.constant 0 : index
    %c0_155 = arith.constant 0 : index
    %361 = vector.load %arg4[%c7_153, %c0_154, %c0_155] : memref<9x16x16xbf16, #tpu.memory_space<vmem>>, vector<1x16x16xbf16>
    %362 = vector.shape_cast %361 : vector<1x16x16xbf16> to vector<16x16xbf16>
    %363 = arith.truncf %360 : vector<16x512xf32> to vector<16x512xbf16>
    %cst_156 = arith.constant dense<0.000000e+00> : vector<16x512xf32>
    %364 = tpu.matmul %362, %363, %cst_156 {dimension_numbers = #tpu.dot_dimension_numbers<[1], [0], [0], [1], [0, 0, 1, 1], [], []>} : vector<16x16xbf16>, vector<16x512xbf16>, vector<16x512xf32> -> vector<16x512xf32>
    %365 = arith.addf %344, %364 : vector<16x512xf32>
    %c-1_i32_157 = arith.constant -1 : i32
    %366 = vector.broadcast %c-1_i32_157 : i32 to vector<1x512xi32>
    %367 = arith.cmpi sge, %212, %366 : vector<1x512xi32>
    %c15_i32_158 = arith.constant 15 : i32
    %368 = vector.broadcast %c15_i32_158 : i32 to vector<1x512xi32>
    %369 = arith.cmpi slt, %212, %368 : vector<1x512xi32>
    %370 = arith.andi %367, %369 : vector<1x512xi1>
    %c-1_i32_159 = arith.constant -1 : i32
    %371 = vector.broadcast %c-1_i32_159 : i32 to vector<1x512xi32>
    %372 = arith.cmpi sge, %208, %371 : vector<1x512xi32>
    %373 = arith.andi %370, %372 : vector<1x512xi1>
    %c15_i32_160 = arith.constant 15 : i32
    %374 = vector.broadcast %c15_i32_160 : i32 to vector<1x512xi32>
    %375 = arith.cmpi slt, %208, %374 : vector<1x512xi32>
    %376 = arith.andi %373, %375 : vector<1x512xi1>
    %c495_i32_161 = arith.constant 495 : i32
    %377 = tpu.dynamic_rotate %205 by %c495_i32_161 dim 1 : vector<16x512xf32>, i32 -> vector<16x512xf32>
    %cst_162 = arith.constant 0.000000e+00 : f32
    %378 = vector.shape_cast %376 : vector<1x512xi1> to vector<1x512xi1>
    %379 = vector.broadcast %378 : vector<1x512xi1> to vector<16x512xi1>
    %380 = vector.broadcast %cst_162 : f32 to vector<16x512xf32>
    %381 = arith.select %379, %377, %380 : vector<16x512xi1>, vector<16x512xf32>
    %c8_163 = arith.constant 8 : index
    %c0_164 = arith.constant 0 : index
    %c0_165 = arith.constant 0 : index
    %382 = vector.load %arg4[%c8_163, %c0_164, %c0_165] : memref<9x16x16xbf16, #tpu.memory_space<vmem>>, vector<1x16x16xbf16>
    %383 = vector.shape_cast %382 : vector<1x16x16xbf16> to vector<16x16xbf16>
    %384 = arith.truncf %381 : vector<16x512xf32> to vector<16x512xbf16>
    %cst_166 = arith.constant dense<0.000000e+00> : vector<16x512xf32>
    %385 = tpu.matmul %383, %384, %cst_166 {dimension_numbers = #tpu.dot_dimension_numbers<[1], [0], [0], [1], [0, 0, 1, 1], [], []>} : vector<16x16xbf16>, vector<16x512xbf16>, vector<16x512xf32> -> vector<16x512xf32>
    %386 = arith.addf %365, %385 : vector<16x512xf32>
    %c0_167 = arith.constant 0 : index
    %c0_168 = arith.constant 0 : index
    %387 = vector.load %arg5[%c0_167, %c0_168] : memref<16x1xf32, #tpu.memory_space<vmem>>, vector<16x1xf32>
    %c0_169 = arith.constant 0 : index
    %c0_170 = arith.constant 0 : index
    %388 = vector.load %arg6[%c0_169, %c0_170] : memref<16x1xf32, #tpu.memory_space<vmem>>, vector<16x1xf32>
    %cst_171 = arith.constant dense<0.000000e+00> : vector<16xf32>
    %389 = vector.multi_reduction <add>, %386, %cst_171 [1] : vector<16x512xf32> to vector<16xf32>
    %390 = vector.shape_cast %389 : vector<16xf32> to vector<16x1xf32>
    %cst_172 = arith.constant 5.120000e+02 : f32
    %391 = vector.broadcast %cst_172 : f32 to vector<16x1xf32>
    %392 = arith.divf %390, %391 : vector<16x1xf32>
    %393 = vector.broadcast %392 : vector<16x1xf32> to vector<16x512xf32>
    %394 = arith.subf %386, %393 : vector<16x512xf32>
    %395 = arith.mulf %394, %394 : vector<16x512xf32>
    %cst_173 = arith.constant dense<0.000000e+00> : vector<16xf32>
    %396 = vector.multi_reduction <add>, %395, %cst_173 [1] : vector<16x512xf32> to vector<16xf32>
    %397 = vector.shape_cast %396 : vector<16xf32> to vector<16x1xf32>
    %cst_174 = arith.constant 5.120000e+02 : f32
    %398 = vector.broadcast %cst_174 : f32 to vector<16x1xf32>
    %399 = arith.divf %397, %398 : vector<16x1xf32>
    %cst_175 = arith.constant 9.99999974E-6 : f32
    %400 = vector.broadcast %cst_175 : f32 to vector<16x1xf32>
    %401 = arith.addf %399, %400 : vector<16x1xf32>
    %402 = math.rsqrt %401 : vector<16x1xf32>
    %403 = vector.broadcast %402 : vector<16x1xf32> to vector<16x512xf32>
    %404 = arith.mulf %394, %403 : vector<16x512xf32>
    %405 = vector.broadcast %387 : vector<16x1xf32> to vector<16x512xf32>
    %406 = arith.mulf %404, %405 : vector<16x512xf32>
    %407 = vector.broadcast %388 : vector<16x1xf32> to vector<16x512xf32>
    %408 = arith.addf %406, %407 : vector<16x512xf32>
    %cst_176 = arith.constant 0.000000e+00 : f32
    %409 = vector.broadcast %cst_176 : f32 to vector<16x512xf32>
    %410 = arith.maximumf %408, %409 : vector<16x512xf32>
    %411 = tpu.iota {dimensions = array<i32: 1>} : vector<1x512xi32>
    %c15_i32_177 = arith.constant 15 : i32
    %412 = vector.broadcast %c15_i32_177 : i32 to vector<1x512xi32>
    %413 = arith.andi %411, %412 : vector<1x512xi32>
    %c4_i32_178 = arith.constant 4 : i32
    %414 = vector.broadcast %c4_i32_178 : i32 to vector<1x512xi32>
    %415 = arith.shrsi %411, %414 : vector<1x512xi32>
    %c15_i32_179 = arith.constant 15 : i32
    %416 = vector.broadcast %c15_i32_179 : i32 to vector<1x512xi32>
    %417 = arith.andi %415, %416 : vector<1x512xi32>
    %cst_180 = arith.constant 0.000000e+00 : f32
    %418 = vector.broadcast %cst_180 : f32 to vector<16x512xf32>
    %c1_i32_181 = arith.constant 1 : i32
    %419 = vector.broadcast %c1_i32_181 : i32 to vector<1x512xi32>
    %420 = arith.cmpi sge, %417, %419 : vector<1x512xi32>
    %c17_i32_182 = arith.constant 17 : i32
    %421 = vector.broadcast %c17_i32_182 : i32 to vector<1x512xi32>
    %422 = arith.cmpi slt, %417, %421 : vector<1x512xi32>
    %423 = arith.andi %420, %422 : vector<1x512xi1>
    %c1_i32_183 = arith.constant 1 : i32
    %424 = vector.broadcast %c1_i32_183 : i32 to vector<1x512xi32>
    %425 = arith.cmpi sge, %413, %424 : vector<1x512xi32>
    %426 = arith.andi %423, %425 : vector<1x512xi1>
    %c17_i32_184 = arith.constant 17 : i32
    %427 = vector.broadcast %c17_i32_184 : i32 to vector<1x512xi32>
    %428 = arith.cmpi slt, %413, %427 : vector<1x512xi32>
    %429 = arith.andi %426, %428 : vector<1x512xi1>
    %c17_i32_185 = arith.constant 17 : i32
    %430 = tpu.dynamic_rotate %410 by %c17_i32_185 dim 1 : vector<16x512xf32>, i32 -> vector<16x512xf32>
    %cst_186 = arith.constant 0.000000e+00 : f32
    %431 = vector.shape_cast %429 : vector<1x512xi1> to vector<1x512xi1>
    %432 = vector.broadcast %431 : vector<1x512xi1> to vector<16x512xi1>
    %433 = vector.broadcast %cst_186 : f32 to vector<16x512xf32>
    %434 = arith.select %432, %430, %433 : vector<16x512xi1>, vector<16x512xf32>
    %c0_187 = arith.constant 0 : index
    %c0_188 = arith.constant 0 : index
    %c0_189 = arith.constant 0 : index
    %435 = vector.load %arg7[%c0_187, %c0_188, %c0_189] : memref<9x16x16xbf16, #tpu.memory_space<vmem>>, vector<1x16x16xbf16>
    %436 = vector.shape_cast %435 : vector<1x16x16xbf16> to vector<16x16xbf16>
    %437 = arith.truncf %434 : vector<16x512xf32> to vector<16x512xbf16>
    %cst_190 = arith.constant dense<0.000000e+00> : vector<16x512xf32>
    %438 = tpu.matmul %436, %437, %cst_190 {dimension_numbers = #tpu.dot_dimension_numbers<[1], [0], [0], [1], [0, 0, 1, 1], [], []>} : vector<16x16xbf16>, vector<16x512xbf16>, vector<16x512xf32> -> vector<16x512xf32>
    %439 = arith.addf %418, %438 : vector<16x512xf32>
    %c1_i32_191 = arith.constant 1 : i32
    %440 = vector.broadcast %c1_i32_191 : i32 to vector<1x512xi32>
    %441 = arith.cmpi sge, %417, %440 : vector<1x512xi32>
    %c17_i32_192 = arith.constant 17 : i32
    %442 = vector.broadcast %c17_i32_192 : i32 to vector<1x512xi32>
    %443 = arith.cmpi slt, %417, %442 : vector<1x512xi32>
    %444 = arith.andi %441, %443 : vector<1x512xi1>
    %c0_i32_193 = arith.constant 0 : i32
    %445 = vector.broadcast %c0_i32_193 : i32 to vector<1x512xi32>
    %446 = arith.cmpi sge, %413, %445 : vector<1x512xi32>
    %447 = arith.andi %444, %446 : vector<1x512xi1>
    %c16_i32_194 = arith.constant 16 : i32
    %448 = vector.broadcast %c16_i32_194 : i32 to vector<1x512xi32>
    %449 = arith.cmpi slt, %413, %448 : vector<1x512xi32>
    %450 = arith.andi %447, %449 : vector<1x512xi1>
    %c16_i32_195 = arith.constant 16 : i32
    %451 = tpu.dynamic_rotate %410 by %c16_i32_195 dim 1 : vector<16x512xf32>, i32 -> vector<16x512xf32>
    %cst_196 = arith.constant 0.000000e+00 : f32
    %452 = vector.shape_cast %450 : vector<1x512xi1> to vector<1x512xi1>
    %453 = vector.broadcast %452 : vector<1x512xi1> to vector<16x512xi1>
    %454 = vector.broadcast %cst_196 : f32 to vector<16x512xf32>
    %455 = arith.select %453, %451, %454 : vector<16x512xi1>, vector<16x512xf32>
    %c1_197 = arith.constant 1 : index
    %c0_198 = arith.constant 0 : index
    %c0_199 = arith.constant 0 : index
    %456 = vector.load %arg7[%c1_197, %c0_198, %c0_199] : memref<9x16x16xbf16, #tpu.memory_space<vmem>>, vector<1x16x16xbf16>
    %457 = vector.shape_cast %456 : vector<1x16x16xbf16> to vector<16x16xbf16>
    %458 = arith.truncf %455 : vector<16x512xf32> to vector<16x512xbf16>
    %cst_200 = arith.constant dense<0.000000e+00> : vector<16x512xf32>
    %459 = tpu.matmul %457, %458, %cst_200 {dimension_numbers = #tpu.dot_dimension_numbers<[1], [0], [0], [1], [0, 0, 1, 1], [], []>} : vector<16x16xbf16>, vector<16x512xbf16>, vector<16x512xf32> -> vector<16x512xf32>
    %460 = arith.addf %439, %459 : vector<16x512xf32>
    %c1_i32_201 = arith.constant 1 : i32
    %461 = vector.broadcast %c1_i32_201 : i32 to vector<1x512xi32>
    %462 = arith.cmpi sge, %417, %461 : vector<1x512xi32>
    %c17_i32_202 = arith.constant 17 : i32
    %463 = vector.broadcast %c17_i32_202 : i32 to vector<1x512xi32>
    %464 = arith.cmpi slt, %417, %463 : vector<1x512xi32>
    %465 = arith.andi %462, %464 : vector<1x512xi1>
    %c-1_i32_203 = arith.constant -1 : i32
    %466 = vector.broadcast %c-1_i32_203 : i32 to vector<1x512xi32>
    %467 = arith.cmpi sge, %413, %466 : vector<1x512xi32>
    %468 = arith.andi %465, %467 : vector<1x512xi1>
    %c15_i32_204 = arith.constant 15 : i32
    %469 = vector.broadcast %c15_i32_204 : i32 to vector<1x512xi32>
    %470 = arith.cmpi slt, %413, %469 : vector<1x512xi32>
    %471 = arith.andi %468, %470 : vector<1x512xi1>
    %c15_i32_205 = arith.constant 15 : i32
    %472 = tpu.dynamic_rotate %410 by %c15_i32_205 dim 1 : vector<16x512xf32>, i32 -> vector<16x512xf32>
    %cst_206 = arith.constant 0.000000e+00 : f32
    %473 = vector.shape_cast %471 : vector<1x512xi1> to vector<1x512xi1>
    %474 = vector.broadcast %473 : vector<1x512xi1> to vector<16x512xi1>
    %475 = vector.broadcast %cst_206 : f32 to vector<16x512xf32>
    %476 = arith.select %474, %472, %475 : vector<16x512xi1>, vector<16x512xf32>
    %c2_207 = arith.constant 2 : index
    %c0_208 = arith.constant 0 : index
    %c0_209 = arith.constant 0 : index
    %477 = vector.load %arg7[%c2_207, %c0_208, %c0_209] : memref<9x16x16xbf16, #tpu.memory_space<vmem>>, vector<1x16x16xbf16>
    %478 = vector.shape_cast %477 : vector<1x16x16xbf16> to vector<16x16xbf16>
    %479 = arith.truncf %476 : vector<16x512xf32> to vector<16x512xbf16>
    %cst_210 = arith.constant dense<0.000000e+00> : vector<16x512xf32>
    %480 = tpu.matmul %478, %479, %cst_210 {dimension_numbers = #tpu.dot_dimension_numbers<[1], [0], [0], [1], [0, 0, 1, 1], [], []>} : vector<16x16xbf16>, vector<16x512xbf16>, vector<16x512xf32> -> vector<16x512xf32>
    %481 = arith.addf %460, %480 : vector<16x512xf32>
    %c0_i32_211 = arith.constant 0 : i32
    %482 = vector.broadcast %c0_i32_211 : i32 to vector<1x512xi32>
    %483 = arith.cmpi sge, %417, %482 : vector<1x512xi32>
    %c16_i32_212 = arith.constant 16 : i32
    %484 = vector.broadcast %c16_i32_212 : i32 to vector<1x512xi32>
    %485 = arith.cmpi slt, %417, %484 : vector<1x512xi32>
    %486 = arith.andi %483, %485 : vector<1x512xi1>
    %c1_i32_213 = arith.constant 1 : i32
    %487 = vector.broadcast %c1_i32_213 : i32 to vector<1x512xi32>
    %488 = arith.cmpi sge, %413, %487 : vector<1x512xi32>
    %489 = arith.andi %486, %488 : vector<1x512xi1>
    %c17_i32_214 = arith.constant 17 : i32
    %490 = vector.broadcast %c17_i32_214 : i32 to vector<1x512xi32>
    %491 = arith.cmpi slt, %413, %490 : vector<1x512xi32>
    %492 = arith.andi %489, %491 : vector<1x512xi1>
    %c1_i32_215 = arith.constant 1 : i32
    %493 = tpu.dynamic_rotate %410 by %c1_i32_215 dim 1 : vector<16x512xf32>, i32 -> vector<16x512xf32>
    %cst_216 = arith.constant 0.000000e+00 : f32
    %494 = vector.shape_cast %492 : vector<1x512xi1> to vector<1x512xi1>
    %495 = vector.broadcast %494 : vector<1x512xi1> to vector<16x512xi1>
    %496 = vector.broadcast %cst_216 : f32 to vector<16x512xf32>
    %497 = arith.select %495, %493, %496 : vector<16x512xi1>, vector<16x512xf32>
    %c3_217 = arith.constant 3 : index
    %c0_218 = arith.constant 0 : index
    %c0_219 = arith.constant 0 : index
    %498 = vector.load %arg7[%c3_217, %c0_218, %c0_219] : memref<9x16x16xbf16, #tpu.memory_space<vmem>>, vector<1x16x16xbf16>
    %499 = vector.shape_cast %498 : vector<1x16x16xbf16> to vector<16x16xbf16>
    %500 = arith.truncf %497 : vector<16x512xf32> to vector<16x512xbf16>
    %cst_220 = arith.constant dense<0.000000e+00> : vector<16x512xf32>
    %501 = tpu.matmul %499, %500, %cst_220 {dimension_numbers = #tpu.dot_dimension_numbers<[1], [0], [0], [1], [0, 0, 1, 1], [], []>} : vector<16x16xbf16>, vector<16x512xbf16>, vector<16x512xf32> -> vector<16x512xf32>
    %502 = arith.addf %481, %501 : vector<16x512xf32>
    %c4_221 = arith.constant 4 : index
    %c0_222 = arith.constant 0 : index
    %c0_223 = arith.constant 0 : index
    %503 = vector.load %arg7[%c4_221, %c0_222, %c0_223] : memref<9x16x16xbf16, #tpu.memory_space<vmem>>, vector<1x16x16xbf16>
    %504 = vector.shape_cast %503 : vector<1x16x16xbf16> to vector<16x16xbf16>
    %505 = arith.truncf %410 : vector<16x512xf32> to vector<16x512xbf16>
    %cst_224 = arith.constant dense<0.000000e+00> : vector<16x512xf32>
    %506 = tpu.matmul %504, %505, %cst_224 {dimension_numbers = #tpu.dot_dimension_numbers<[1], [0], [0], [1], [0, 0, 1, 1], [], []>} : vector<16x16xbf16>, vector<16x512xbf16>, vector<16x512xf32> -> vector<16x512xf32>
    %507 = arith.addf %502, %506 : vector<16x512xf32>
    %c0_i32_225 = arith.constant 0 : i32
    %508 = vector.broadcast %c0_i32_225 : i32 to vector<1x512xi32>
    %509 = arith.cmpi sge, %417, %508 : vector<1x512xi32>
    %c16_i32_226 = arith.constant 16 : i32
    %510 = vector.broadcast %c16_i32_226 : i32 to vector<1x512xi32>
    %511 = arith.cmpi slt, %417, %510 : vector<1x512xi32>
    %512 = arith.andi %509, %511 : vector<1x512xi1>
    %c-1_i32_227 = arith.constant -1 : i32
    %513 = vector.broadcast %c-1_i32_227 : i32 to vector<1x512xi32>
    %514 = arith.cmpi sge, %413, %513 : vector<1x512xi32>
    %515 = arith.andi %512, %514 : vector<1x512xi1>
    %c15_i32_228 = arith.constant 15 : i32
    %516 = vector.broadcast %c15_i32_228 : i32 to vector<1x512xi32>
    %517 = arith.cmpi slt, %413, %516 : vector<1x512xi32>
    %518 = arith.andi %515, %517 : vector<1x512xi1>
    %c511_i32_229 = arith.constant 511 : i32
    %519 = tpu.dynamic_rotate %410 by %c511_i32_229 dim 1 : vector<16x512xf32>, i32 -> vector<16x512xf32>
    %cst_230 = arith.constant 0.000000e+00 : f32
    %520 = vector.shape_cast %518 : vector<1x512xi1> to vector<1x512xi1>
    %521 = vector.broadcast %520 : vector<1x512xi1> to vector<16x512xi1>
    %522 = vector.broadcast %cst_230 : f32 to vector<16x512xf32>
    %523 = arith.select %521, %519, %522 : vector<16x512xi1>, vector<16x512xf32>
    %c5_231 = arith.constant 5 : index
    %c0_232 = arith.constant 0 : index
    %c0_233 = arith.constant 0 : index
    %524 = vector.load %arg7[%c5_231, %c0_232, %c0_233] : memref<9x16x16xbf16, #tpu.memory_space<vmem>>, vector<1x16x16xbf16>
    %525 = vector.shape_cast %524 : vector<1x16x16xbf16> to vector<16x16xbf16>
    %526 = arith.truncf %523 : vector<16x512xf32> to vector<16x512xbf16>
    %cst_234 = arith.constant dense<0.000000e+00> : vector<16x512xf32>
    %527 = tpu.matmul %525, %526, %cst_234 {dimension_numbers = #tpu.dot_dimension_numbers<[1], [0], [0], [1], [0, 0, 1, 1], [], []>} : vector<16x16xbf16>, vector<16x512xbf16>, vector<16x512xf32> -> vector<16x512xf32>
    %528 = arith.addf %507, %527 : vector<16x512xf32>
    %c-1_i32_235 = arith.constant -1 : i32
    %529 = vector.broadcast %c-1_i32_235 : i32 to vector<1x512xi32>
    %530 = arith.cmpi sge, %417, %529 : vector<1x512xi32>
    %c15_i32_236 = arith.constant 15 : i32
    %531 = vector.broadcast %c15_i32_236 : i32 to vector<1x512xi32>
    %532 = arith.cmpi slt, %417, %531 : vector<1x512xi32>
    %533 = arith.andi %530, %532 : vector<1x512xi1>
    %c1_i32_237 = arith.constant 1 : i32
    %534 = vector.broadcast %c1_i32_237 : i32 to vector<1x512xi32>
    %535 = arith.cmpi sge, %413, %534 : vector<1x512xi32>
    %536 = arith.andi %533, %535 : vector<1x512xi1>
    %c17_i32_238 = arith.constant 17 : i32
    %537 = vector.broadcast %c17_i32_238 : i32 to vector<1x512xi32>
    %538 = arith.cmpi slt, %413, %537 : vector<1x512xi32>
    %539 = arith.andi %536, %538 : vector<1x512xi1>
    %c497_i32_239 = arith.constant 497 : i32
    %540 = tpu.dynamic_rotate %410 by %c497_i32_239 dim 1 : vector<16x512xf32>, i32 -> vector<16x512xf32>
    %cst_240 = arith.constant 0.000000e+00 : f32
    %541 = vector.shape_cast %539 : vector<1x512xi1> to vector<1x512xi1>
    %542 = vector.broadcast %541 : vector<1x512xi1> to vector<16x512xi1>
    %543 = vector.broadcast %cst_240 : f32 to vector<16x512xf32>
    %544 = arith.select %542, %540, %543 : vector<16x512xi1>, vector<16x512xf32>
    %c6_241 = arith.constant 6 : index
    %c0_242 = arith.constant 0 : index
    %c0_243 = arith.constant 0 : index
    %545 = vector.load %arg7[%c6_241, %c0_242, %c0_243] : memref<9x16x16xbf16, #tpu.memory_space<vmem>>, vector<1x16x16xbf16>
    %546 = vector.shape_cast %545 : vector<1x16x16xbf16> to vector<16x16xbf16>
    %547 = arith.truncf %544 : vector<16x512xf32> to vector<16x512xbf16>
    %cst_244 = arith.constant dense<0.000000e+00> : vector<16x512xf32>
    %548 = tpu.matmul %546, %547, %cst_244 {dimension_numbers = #tpu.dot_dimension_numbers<[1], [0], [0], [1], [0, 0, 1, 1], [], []>} : vector<16x16xbf16>, vector<16x512xbf16>, vector<16x512xf32> -> vector<16x512xf32>
    %549 = arith.addf %528, %548 : vector<16x512xf32>
    %c-1_i32_245 = arith.constant -1 : i32
    %550 = vector.broadcast %c-1_i32_245 : i32 to vector<1x512xi32>
    %551 = arith.cmpi sge, %417, %550 : vector<1x512xi32>
    %c15_i32_246 = arith.constant 15 : i32
    %552 = vector.broadcast %c15_i32_246 : i32 to vector<1x512xi32>
    %553 = arith.cmpi slt, %417, %552 : vector<1x512xi32>
    %554 = arith.andi %551, %553 : vector<1x512xi1>
    %c0_i32_247 = arith.constant 0 : i32
    %555 = vector.broadcast %c0_i32_247 : i32 to vector<1x512xi32>
    %556 = arith.cmpi sge, %413, %555 : vector<1x512xi32>
    %557 = arith.andi %554, %556 : vector<1x512xi1>
    %c16_i32_248 = arith.constant 16 : i32
    %558 = vector.broadcast %c16_i32_248 : i32 to vector<1x512xi32>
    %559 = arith.cmpi slt, %413, %558 : vector<1x512xi32>
    %560 = arith.andi %557, %559 : vector<1x512xi1>
    %c496_i32_249 = arith.constant 496 : i32
    %561 = tpu.dynamic_rotate %410 by %c496_i32_249 dim 1 : vector<16x512xf32>, i32 -> vector<16x512xf32>
    %cst_250 = arith.constant 0.000000e+00 : f32
    %562 = vector.shape_cast %560 : vector<1x512xi1> to vector<1x512xi1>
    %563 = vector.broadcast %562 : vector<1x512xi1> to vector<16x512xi1>
    %564 = vector.broadcast %cst_250 : f32 to vector<16x512xf32>
    %565 = arith.select %563, %561, %564 : vector<16x512xi1>, vector<16x512xf32>
    %c7_251 = arith.constant 7 : index
    %c0_252 = arith.constant 0 : index
    %c0_253 = arith.constant 0 : index
    %566 = vector.load %arg7[%c7_251, %c0_252, %c0_253] : memref<9x16x16xbf16, #tpu.memory_space<vmem>>, vector<1x16x16xbf16>
    %567 = vector.shape_cast %566 : vector<1x16x16xbf16> to vector<16x16xbf16>
    %568 = arith.truncf %565 : vector<16x512xf32> to vector<16x512xbf16>
    %cst_254 = arith.constant dense<0.000000e+00> : vector<16x512xf32>
    %569 = tpu.matmul %567, %568, %cst_254 {dimension_numbers = #tpu.dot_dimension_numbers<[1], [0], [0], [1], [0, 0, 1, 1], [], []>} : vector<16x16xbf16>, vector<16x512xbf16>, vector<16x512xf32> -> vector<16x512xf32>
    %570 = arith.addf %549, %569 : vector<16x512xf32>
    %c-1_i32_255 = arith.constant -1 : i32
    %571 = vector.broadcast %c-1_i32_255 : i32 to vector<1x512xi32>
    %572 = arith.cmpi sge, %417, %571 : vector<1x512xi32>
    %c15_i32_256 = arith.constant 15 : i32
    %573 = vector.broadcast %c15_i32_256 : i32 to vector<1x512xi32>
    %574 = arith.cmpi slt, %417, %573 : vector<1x512xi32>
    %575 = arith.andi %572, %574 : vector<1x512xi1>
    %c-1_i32_257 = arith.constant -1 : i32
    %576 = vector.broadcast %c-1_i32_257 : i32 to vector<1x512xi32>
    %577 = arith.cmpi sge, %413, %576 : vector<1x512xi32>
    %578 = arith.andi %575, %577 : vector<1x512xi1>
    %c15_i32_258 = arith.constant 15 : i32
    %579 = vector.broadcast %c15_i32_258 : i32 to vector<1x512xi32>
    %580 = arith.cmpi slt, %413, %579 : vector<1x512xi32>
    %581 = arith.andi %578, %580 : vector<1x512xi1>
    %c495_i32_259 = arith.constant 495 : i32
    %582 = tpu.dynamic_rotate %410 by %c495_i32_259 dim 1 : vector<16x512xf32>, i32 -> vector<16x512xf32>
    %cst_260 = arith.constant 0.000000e+00 : f32
    %583 = vector.shape_cast %581 : vector<1x512xi1> to vector<1x512xi1>
    %584 = vector.broadcast %583 : vector<1x512xi1> to vector<16x512xi1>
    %585 = vector.broadcast %cst_260 : f32 to vector<16x512xf32>
    %586 = arith.select %584, %582, %585 : vector<16x512xi1>, vector<16x512xf32>
    %c8_261 = arith.constant 8 : index
    %c0_262 = arith.constant 0 : index
    %c0_263 = arith.constant 0 : index
    %587 = vector.load %arg7[%c8_261, %c0_262, %c0_263] : memref<9x16x16xbf16, #tpu.memory_space<vmem>>, vector<1x16x16xbf16>
    %588 = vector.shape_cast %587 : vector<1x16x16xbf16> to vector<16x16xbf16>
    %589 = arith.truncf %586 : vector<16x512xf32> to vector<16x512xbf16>
    %cst_264 = arith.constant dense<0.000000e+00> : vector<16x512xf32>
    %590 = tpu.matmul %588, %589, %cst_264 {dimension_numbers = #tpu.dot_dimension_numbers<[1], [0], [0], [1], [0, 0, 1, 1], [], []>} : vector<16x16xbf16>, vector<16x512xbf16>, vector<16x512xf32> -> vector<16x512xf32>
    %591 = arith.addf %570, %590 : vector<16x512xf32>
    %592 = arith.addf %181, %591 : vector<16x512xf32>
    %c0_265 = arith.constant 0 : index
    %c0_266 = arith.constant 0 : index
    %593 = vector.load %arg8[%c0_265, %c0_266] : memref<16x1xf32, #tpu.memory_space<vmem>>, vector<16x1xf32>
    %c0_267 = arith.constant 0 : index
    %c0_268 = arith.constant 0 : index
    %594 = vector.load %arg9[%c0_267, %c0_268] : memref<16x1xf32, #tpu.memory_space<vmem>>, vector<16x1xf32>
    %cst_269 = arith.constant dense<0.000000e+00> : vector<16xf32>
    %595 = vector.multi_reduction <add>, %592, %cst_269 [1] : vector<16x512xf32> to vector<16xf32>
    %596 = vector.shape_cast %595 : vector<16xf32> to vector<16x1xf32>
    %cst_270 = arith.constant 5.120000e+02 : f32
    %597 = vector.broadcast %cst_270 : f32 to vector<16x1xf32>
    %598 = arith.divf %596, %597 : vector<16x1xf32>
    %599 = vector.broadcast %598 : vector<16x1xf32> to vector<16x512xf32>
    %600 = arith.subf %592, %599 : vector<16x512xf32>
    %601 = arith.mulf %600, %600 : vector<16x512xf32>
    %cst_271 = arith.constant dense<0.000000e+00> : vector<16xf32>
    %602 = vector.multi_reduction <add>, %601, %cst_271 [1] : vector<16x512xf32> to vector<16xf32>
    %603 = vector.shape_cast %602 : vector<16xf32> to vector<16x1xf32>
    %cst_272 = arith.constant 5.120000e+02 : f32
    %604 = vector.broadcast %cst_272 : f32 to vector<16x1xf32>
    %605 = arith.divf %603, %604 : vector<16x1xf32>
    %cst_273 = arith.constant 9.99999974E-6 : f32
    %606 = vector.broadcast %cst_273 : f32 to vector<16x1xf32>
    %607 = arith.addf %605, %606 : vector<16x1xf32>
    %608 = math.rsqrt %607 : vector<16x1xf32>
    %609 = vector.broadcast %608 : vector<16x1xf32> to vector<16x512xf32>
    %610 = arith.mulf %600, %609 : vector<16x512xf32>
    %611 = vector.broadcast %593 : vector<16x1xf32> to vector<16x512xf32>
    %612 = arith.mulf %610, %611 : vector<16x512xf32>
    %613 = vector.broadcast %594 : vector<16x1xf32> to vector<16x512xf32>
    %614 = arith.addf %612, %613 : vector<16x512xf32>
    %cst_274 = arith.constant 0.000000e+00 : f32
    %615 = vector.broadcast %cst_274 : f32 to vector<16x512xf32>
    %616 = arith.maximumf %614, %615 : vector<16x512xf32>
    %617 = arith.truncf %616 : vector<16x512xf32> to vector<16x512xbf16>
    %c0_275 = arith.constant 0 : index
    %c0_276 = arith.constant 0 : index
    %618 = vector.load %arg10[%c0_275, %c0_276] : memref<16x512xbf16, #tpu.memory_space<vmem>>, vector<16x512xbf16>
    tpu.vector_store %arg10[%c0_275, %c0_276], %617 {strides = array<i32>} : memref<16x512xbf16, #tpu.memory_space<vmem>>, vector<16x512xbf16>,
    return
  }
}

module attributes {stable_mosaic.version = 11 : i64} {
  func.func @kernel(%arg0: memref<144x128xbf16, #tpu.memory_space<vmem>>, %arg1: memref<32x144xbf16, #tpu.memory_space<vmem>>, %arg2: memref<16x128xbf16, #tpu.memory_space<vmem>>, %arg3: memref<32x16xbf16, #tpu.memory_space<vmem>>, %arg4: memref<32x1xf32, #tpu.memory_space<vmem>>, %arg5: memref<32x1xf32, #tpu.memory_space<vmem>>, %arg6: memref<9x32x32xbf16, #tpu.memory_space<vmem>>, %arg7: memref<32x1xf32, #tpu.memory_space<vmem>>, %arg8: memref<32x1xf32, #tpu.memory_space<vmem>>, %arg9: memref<32x128xbf16, #tpu.memory_space<vmem>>) attributes {dimension_semantics = [], scalar_prefetch = 0 : i64, scratch_operands = 0 : i64, tpu.core_type = #tpu.core_type<tc>} {
    %c0 = arith.constant 0 : index
    %c0_0 = arith.constant 0 : index
    %0 = vector.load %arg1[%c0, %c0_0] : memref<32x144xbf16, #tpu.memory_space<vmem>>, vector<32x144xbf16>
    %c0_1 = arith.constant 0 : index
    %c0_2 = arith.constant 0 : index
    %1 = vector.load %arg0[%c0_1, %c0_2] : memref<144x128xbf16, #tpu.memory_space<vmem>>, vector<144x128xbf16>
    %cst = arith.constant dense<0.000000e+00> : vector<32x128xf32>
    %2 = tpu.matmul %0, %1, %cst {dimension_numbers = #tpu.dot_dimension_numbers<[1], [0], [0], [1], [0, 0, 1, 1], [], []>} : vector<32x144xbf16>, vector<144x128xbf16>, vector<32x128xf32> -> vector<32x128xf32>
    %c0_3 = arith.constant 0 : index
    %c0_4 = arith.constant 0 : index
    %3 = vector.load %arg4[%c0_3, %c0_4] : memref<32x1xf32, #tpu.memory_space<vmem>>, vector<32x1xf32>
    %c0_5 = arith.constant 0 : index
    %c0_6 = arith.constant 0 : index
    %4 = vector.load %arg5[%c0_5, %c0_6] : memref<32x1xf32, #tpu.memory_space<vmem>>, vector<32x1xf32>
    %cst_7 = arith.constant dense<0.000000e+00> : vector<32xf32>
    %5 = vector.multi_reduction <add>, %2, %cst_7 [1] : vector<32x128xf32> to vector<32xf32>
    %6 = vector.shape_cast %5 : vector<32xf32> to vector<32x1xf32>
    %cst_8 = arith.constant 1.280000e+02 : f32
    %7 = vector.broadcast %cst_8 : f32 to vector<32x1xf32>
    %8 = arith.divf %6, %7 : vector<32x1xf32>
    %9 = vector.broadcast %8 : vector<32x1xf32> to vector<32x128xf32>
    %10 = arith.subf %2, %9 : vector<32x128xf32>
    %11 = arith.mulf %10, %10 : vector<32x128xf32>
    %cst_9 = arith.constant dense<0.000000e+00> : vector<32xf32>
    %12 = vector.multi_reduction <add>, %11, %cst_9 [1] : vector<32x128xf32> to vector<32xf32>
    %13 = vector.shape_cast %12 : vector<32xf32> to vector<32x1xf32>
    %cst_10 = arith.constant 1.280000e+02 : f32
    %14 = vector.broadcast %cst_10 : f32 to vector<32x1xf32>
    %15 = arith.divf %13, %14 : vector<32x1xf32>
    %cst_11 = arith.constant 9.99999974E-6 : f32
    %16 = vector.broadcast %cst_11 : f32 to vector<32x1xf32>
    %17 = arith.addf %15, %16 : vector<32x1xf32>
    %18 = math.rsqrt %17 : vector<32x1xf32>
    %19 = vector.broadcast %18 : vector<32x1xf32> to vector<32x128xf32>
    %20 = arith.mulf %10, %19 : vector<32x128xf32>
    %21 = vector.broadcast %3 : vector<32x1xf32> to vector<32x128xf32>
    %22 = arith.mulf %20, %21 : vector<32x128xf32>
    %23 = vector.broadcast %4 : vector<32x1xf32> to vector<32x128xf32>
    %24 = arith.addf %22, %23 : vector<32x128xf32>
    %cst_12 = arith.constant 0.000000e+00 : f32
    %25 = vector.broadcast %cst_12 : f32 to vector<32x128xf32>
    %26 = arith.maximumf %24, %25 : vector<32x128xf32>
    %27 = tpu.iota {dimensions = array<i32: 1>} : vector<1x128xi32>
    %c7_i32 = arith.constant 7 : i32
    %28 = vector.broadcast %c7_i32 : i32 to vector<1x128xi32>
    %29 = arith.andi %27, %28 : vector<1x128xi32>
    %c3_i32 = arith.constant 3 : i32
    %30 = vector.broadcast %c3_i32 : i32 to vector<1x128xi32>
    %31 = arith.shrsi %27, %30 : vector<1x128xi32>
    %c7_i32_13 = arith.constant 7 : i32
    %32 = vector.broadcast %c7_i32_13 : i32 to vector<1x128xi32>
    %33 = arith.andi %31, %32 : vector<1x128xi32>
    %cst_14 = arith.constant 0.000000e+00 : f32
    %34 = vector.broadcast %cst_14 : f32 to vector<32x128xf32>
    %c1_i32 = arith.constant 1 : i32
    %35 = vector.broadcast %c1_i32 : i32 to vector<1x128xi32>
    %36 = arith.cmpi sge, %33, %35 : vector<1x128xi32>
    %c9_i32 = arith.constant 9 : i32
    %37 = vector.broadcast %c9_i32 : i32 to vector<1x128xi32>
    %38 = arith.cmpi slt, %33, %37 : vector<1x128xi32>
    %39 = arith.andi %36, %38 : vector<1x128xi1>
    %c1_i32_15 = arith.constant 1 : i32
    %40 = vector.broadcast %c1_i32_15 : i32 to vector<1x128xi32>
    %41 = arith.cmpi sge, %29, %40 : vector<1x128xi32>
    %42 = arith.andi %39, %41 : vector<1x128xi1>
    %c9_i32_16 = arith.constant 9 : i32
    %43 = vector.broadcast %c9_i32_16 : i32 to vector<1x128xi32>
    %44 = arith.cmpi slt, %29, %43 : vector<1x128xi32>
    %45 = arith.andi %42, %44 : vector<1x128xi1>
    %c9_i32_17 = arith.constant 9 : i32
    %46 = tpu.dynamic_rotate %26 by %c9_i32_17 dim 1 : vector<32x128xf32>, i32 -> vector<32x128xf32>
    %cst_18 = arith.constant 0.000000e+00 : f32
    %47 = vector.shape_cast %45 : vector<1x128xi1> to vector<1x128xi1>
    %48 = vector.broadcast %47 : vector<1x128xi1> to vector<32x128xi1>
    %49 = vector.broadcast %cst_18 : f32 to vector<32x128xf32>
    %50 = arith.select %48, %46, %49 : vector<32x128xi1>, vector<32x128xf32>
    %c0_19 = arith.constant 0 : index
    %c0_20 = arith.constant 0 : index
    %c0_21 = arith.constant 0 : index
    %51 = vector.load %arg6[%c0_19, %c0_20, %c0_21] : memref<9x32x32xbf16, #tpu.memory_space<vmem>>, vector<1x32x32xbf16>
    %52 = vector.shape_cast %51 : vector<1x32x32xbf16> to vector<32x32xbf16>
    %53 = arith.truncf %50 : vector<32x128xf32> to vector<32x128xbf16>
    %cst_22 = arith.constant dense<0.000000e+00> : vector<32x128xf32>
    %54 = tpu.matmul %52, %53, %cst_22 {dimension_numbers = #tpu.dot_dimension_numbers<[1], [0], [0], [1], [0, 0, 1, 1], [], []>} : vector<32x32xbf16>, vector<32x128xbf16>, vector<32x128xf32> -> vector<32x128xf32>
    %55 = arith.addf %34, %54 : vector<32x128xf32>
    %c1_i32_23 = arith.constant 1 : i32
    %56 = vector.broadcast %c1_i32_23 : i32 to vector<1x128xi32>
    %57 = arith.cmpi sge, %33, %56 : vector<1x128xi32>
    %c9_i32_24 = arith.constant 9 : i32
    %58 = vector.broadcast %c9_i32_24 : i32 to vector<1x128xi32>
    %59 = arith.cmpi slt, %33, %58 : vector<1x128xi32>
    %60 = arith.andi %57, %59 : vector<1x128xi1>
    %c0_i32 = arith.constant 0 : i32
    %61 = vector.broadcast %c0_i32 : i32 to vector<1x128xi32>
    %62 = arith.cmpi sge, %29, %61 : vector<1x128xi32>
    %63 = arith.andi %60, %62 : vector<1x128xi1>
    %c8_i32 = arith.constant 8 : i32
    %64 = vector.broadcast %c8_i32 : i32 to vector<1x128xi32>
    %65 = arith.cmpi slt, %29, %64 : vector<1x128xi32>
    %66 = arith.andi %63, %65 : vector<1x128xi1>
    %c8_i32_25 = arith.constant 8 : i32
    %67 = tpu.dynamic_rotate %26 by %c8_i32_25 dim 1 : vector<32x128xf32>, i32 -> vector<32x128xf32>
    %cst_26 = arith.constant 0.000000e+00 : f32
    %68 = vector.shape_cast %66 : vector<1x128xi1> to vector<1x128xi1>
    %69 = vector.broadcast %68 : vector<1x128xi1> to vector<32x128xi1>
    %70 = vector.broadcast %cst_26 : f32 to vector<32x128xf32>
    %71 = arith.select %69, %67, %70 : vector<32x128xi1>, vector<32x128xf32>
    %c1 = arith.constant 1 : index
    %c0_27 = arith.constant 0 : index
    %c0_28 = arith.constant 0 : index
    %72 = vector.load %arg6[%c1, %c0_27, %c0_28] : memref<9x32x32xbf16, #tpu.memory_space<vmem>>, vector<1x32x32xbf16>
    %73 = vector.shape_cast %72 : vector<1x32x32xbf16> to vector<32x32xbf16>
    %74 = arith.truncf %71 : vector<32x128xf32> to vector<32x128xbf16>
    %cst_29 = arith.constant dense<0.000000e+00> : vector<32x128xf32>
    %75 = tpu.matmul %73, %74, %cst_29 {dimension_numbers = #tpu.dot_dimension_numbers<[1], [0], [0], [1], [0, 0, 1, 1], [], []>} : vector<32x32xbf16>, vector<32x128xbf16>, vector<32x128xf32> -> vector<32x128xf32>
    %76 = arith.addf %55, %75 : vector<32x128xf32>
    %c1_i32_30 = arith.constant 1 : i32
    %77 = vector.broadcast %c1_i32_30 : i32 to vector<1x128xi32>
    %78 = arith.cmpi sge, %33, %77 : vector<1x128xi32>
    %c9_i32_31 = arith.constant 9 : i32
    %79 = vector.broadcast %c9_i32_31 : i32 to vector<1x128xi32>
    %80 = arith.cmpi slt, %33, %79 : vector<1x128xi32>
    %81 = arith.andi %78, %80 : vector<1x128xi1>
    %c-1_i32 = arith.constant -1 : i32
    %82 = vector.broadcast %c-1_i32 : i32 to vector<1x128xi32>
    %83 = arith.cmpi sge, %29, %82 : vector<1x128xi32>
    %84 = arith.andi %81, %83 : vector<1x128xi1>
    %c7_i32_32 = arith.constant 7 : i32
    %85 = vector.broadcast %c7_i32_32 : i32 to vector<1x128xi32>
    %86 = arith.cmpi slt, %29, %85 : vector<1x128xi32>
    %87 = arith.andi %84, %86 : vector<1x128xi1>
    %c7_i32_33 = arith.constant 7 : i32
    %88 = tpu.dynamic_rotate %26 by %c7_i32_33 dim 1 : vector<32x128xf32>, i32 -> vector<32x128xf32>
    %cst_34 = arith.constant 0.000000e+00 : f32
    %89 = vector.shape_cast %87 : vector<1x128xi1> to vector<1x128xi1>
    %90 = vector.broadcast %89 : vector<1x128xi1> to vector<32x128xi1>
    %91 = vector.broadcast %cst_34 : f32 to vector<32x128xf32>
    %92 = arith.select %90, %88, %91 : vector<32x128xi1>, vector<32x128xf32>
    %c2 = arith.constant 2 : index
    %c0_35 = arith.constant 0 : index
    %c0_36 = arith.constant 0 : index
    %93 = vector.load %arg6[%c2, %c0_35, %c0_36] : memref<9x32x32xbf16, #tpu.memory_space<vmem>>, vector<1x32x32xbf16>
    %94 = vector.shape_cast %93 : vector<1x32x32xbf16> to vector<32x32xbf16>
    %95 = arith.truncf %92 : vector<32x128xf32> to vector<32x128xbf16>
    %cst_37 = arith.constant dense<0.000000e+00> : vector<32x128xf32>
    %96 = tpu.matmul %94, %95, %cst_37 {dimension_numbers = #tpu.dot_dimension_numbers<[1], [0], [0], [1], [0, 0, 1, 1], [], []>} : vector<32x32xbf16>, vector<32x128xbf16>, vector<32x128xf32> -> vector<32x128xf32>
    %97 = arith.addf %76, %96 : vector<32x128xf32>
    %c0_i32_38 = arith.constant 0 : i32
    %98 = vector.broadcast %c0_i32_38 : i32 to vector<1x128xi32>
    %99 = arith.cmpi sge, %33, %98 : vector<1x128xi32>
    %c8_i32_39 = arith.constant 8 : i32
    %100 = vector.broadcast %c8_i32_39 : i32 to vector<1x128xi32>
    %101 = arith.cmpi slt, %33, %100 : vector<1x128xi32>
    %102 = arith.andi %99, %101 : vector<1x128xi1>
    %c1_i32_40 = arith.constant 1 : i32
    %103 = vector.broadcast %c1_i32_40 : i32 to vector<1x128xi32>
    %104 = arith.cmpi sge, %29, %103 : vector<1x128xi32>
    %105 = arith.andi %102, %104 : vector<1x128xi1>
    %c9_i32_41 = arith.constant 9 : i32
    %106 = vector.broadcast %c9_i32_41 : i32 to vector<1x128xi32>
    %107 = arith.cmpi slt, %29, %106 : vector<1x128xi32>
    %108 = arith.andi %105, %107 : vector<1x128xi1>
    %c1_i32_42 = arith.constant 1 : i32
    %109 = tpu.dynamic_rotate %26 by %c1_i32_42 dim 1 : vector<32x128xf32>, i32 -> vector<32x128xf32>
    %cst_43 = arith.constant 0.000000e+00 : f32
    %110 = vector.shape_cast %108 : vector<1x128xi1> to vector<1x128xi1>
    %111 = vector.broadcast %110 : vector<1x128xi1> to vector<32x128xi1>
    %112 = vector.broadcast %cst_43 : f32 to vector<32x128xf32>
    %113 = arith.select %111, %109, %112 : vector<32x128xi1>, vector<32x128xf32>
    %c3 = arith.constant 3 : index
    %c0_44 = arith.constant 0 : index
    %c0_45 = arith.constant 0 : index
    %114 = vector.load %arg6[%c3, %c0_44, %c0_45] : memref<9x32x32xbf16, #tpu.memory_space<vmem>>, vector<1x32x32xbf16>
    %115 = vector.shape_cast %114 : vector<1x32x32xbf16> to vector<32x32xbf16>
    %116 = arith.truncf %113 : vector<32x128xf32> to vector<32x128xbf16>
    %cst_46 = arith.constant dense<0.000000e+00> : vector<32x128xf32>
    %117 = tpu.matmul %115, %116, %cst_46 {dimension_numbers = #tpu.dot_dimension_numbers<[1], [0], [0], [1], [0, 0, 1, 1], [], []>} : vector<32x32xbf16>, vector<32x128xbf16>, vector<32x128xf32> -> vector<32x128xf32>
    %118 = arith.addf %97, %117 : vector<32x128xf32>
    %c4 = arith.constant 4 : index
    %c0_47 = arith.constant 0 : index
    %c0_48 = arith.constant 0 : index
    %119 = vector.load %arg6[%c4, %c0_47, %c0_48] : memref<9x32x32xbf16, #tpu.memory_space<vmem>>, vector<1x32x32xbf16>
    %120 = vector.shape_cast %119 : vector<1x32x32xbf16> to vector<32x32xbf16>
    %121 = arith.truncf %26 : vector<32x128xf32> to vector<32x128xbf16>
    %cst_49 = arith.constant dense<0.000000e+00> : vector<32x128xf32>
    %122 = tpu.matmul %120, %121, %cst_49 {dimension_numbers = #tpu.dot_dimension_numbers<[1], [0], [0], [1], [0, 0, 1, 1], [], []>} : vector<32x32xbf16>, vector<32x128xbf16>, vector<32x128xf32> -> vector<32x128xf32>
    %123 = arith.addf %118, %122 : vector<32x128xf32>
    %c0_i32_50 = arith.constant 0 : i32
    %124 = vector.broadcast %c0_i32_50 : i32 to vector<1x128xi32>
    %125 = arith.cmpi sge, %33, %124 : vector<1x128xi32>
    %c8_i32_51 = arith.constant 8 : i32
    %126 = vector.broadcast %c8_i32_51 : i32 to vector<1x128xi32>
    %127 = arith.cmpi slt, %33, %126 : vector<1x128xi32>
    %128 = arith.andi %125, %127 : vector<1x128xi1>
    %c-1_i32_52 = arith.constant -1 : i32
    %129 = vector.broadcast %c-1_i32_52 : i32 to vector<1x128xi32>
    %130 = arith.cmpi sge, %29, %129 : vector<1x128xi32>
    %131 = arith.andi %128, %130 : vector<1x128xi1>
    %c7_i32_53 = arith.constant 7 : i32
    %132 = vector.broadcast %c7_i32_53 : i32 to vector<1x128xi32>
    %133 = arith.cmpi slt, %29, %132 : vector<1x128xi32>
    %134 = arith.andi %131, %133 : vector<1x128xi1>
    %c127_i32 = arith.constant 127 : i32
    %135 = tpu.dynamic_rotate %26 by %c127_i32 dim 1 : vector<32x128xf32>, i32 -> vector<32x128xf32>
    %cst_54 = arith.constant 0.000000e+00 : f32
    %136 = vector.shape_cast %134 : vector<1x128xi1> to vector<1x128xi1>
    %137 = vector.broadcast %136 : vector<1x128xi1> to vector<32x128xi1>
    %138 = vector.broadcast %cst_54 : f32 to vector<32x128xf32>
    %139 = arith.select %137, %135, %138 : vector<32x128xi1>, vector<32x128xf32>
    %c5 = arith.constant 5 : index
    %c0_55 = arith.constant 0 : index
    %c0_56 = arith.constant 0 : index
    %140 = vector.load %arg6[%c5, %c0_55, %c0_56] : memref<9x32x32xbf16, #tpu.memory_space<vmem>>, vector<1x32x32xbf16>
    %141 = vector.shape_cast %140 : vector<1x32x32xbf16> to vector<32x32xbf16>
    %142 = arith.truncf %139 : vector<32x128xf32> to vector<32x128xbf16>
    %cst_57 = arith.constant dense<0.000000e+00> : vector<32x128xf32>
    %143 = tpu.matmul %141, %142, %cst_57 {dimension_numbers = #tpu.dot_dimension_numbers<[1], [0], [0], [1], [0, 0, 1, 1], [], []>} : vector<32x32xbf16>, vector<32x128xbf16>, vector<32x128xf32> -> vector<32x128xf32>
    %144 = arith.addf %123, %143 : vector<32x128xf32>
    %c-1_i32_58 = arith.constant -1 : i32
    %145 = vector.broadcast %c-1_i32_58 : i32 to vector<1x128xi32>
    %146 = arith.cmpi sge, %33, %145 : vector<1x128xi32>
    %c7_i32_59 = arith.constant 7 : i32
    %147 = vector.broadcast %c7_i32_59 : i32 to vector<1x128xi32>
    %148 = arith.cmpi slt, %33, %147 : vector<1x128xi32>
    %149 = arith.andi %146, %148 : vector<1x128xi1>
    %c1_i32_60 = arith.constant 1 : i32
    %150 = vector.broadcast %c1_i32_60 : i32 to vector<1x128xi32>
    %151 = arith.cmpi sge, %29, %150 : vector<1x128xi32>
    %152 = arith.andi %149, %151 : vector<1x128xi1>
    %c9_i32_61 = arith.constant 9 : i32
    %153 = vector.broadcast %c9_i32_61 : i32 to vector<1x128xi32>
    %154 = arith.cmpi slt, %29, %153 : vector<1x128xi32>
    %155 = arith.andi %152, %154 : vector<1x128xi1>
    %c121_i32 = arith.constant 121 : i32
    %156 = tpu.dynamic_rotate %26 by %c121_i32 dim 1 : vector<32x128xf32>, i32 -> vector<32x128xf32>
    %cst_62 = arith.constant 0.000000e+00 : f32
    %157 = vector.shape_cast %155 : vector<1x128xi1> to vector<1x128xi1>
    %158 = vector.broadcast %157 : vector<1x128xi1> to vector<32x128xi1>
    %159 = vector.broadcast %cst_62 : f32 to vector<32x128xf32>
    %160 = arith.select %158, %156, %159 : vector<32x128xi1>, vector<32x128xf32>
    %c6 = arith.constant 6 : index
    %c0_63 = arith.constant 0 : index
    %c0_64 = arith.constant 0 : index
    %161 = vector.load %arg6[%c6, %c0_63, %c0_64] : memref<9x32x32xbf16, #tpu.memory_space<vmem>>, vector<1x32x32xbf16>
    %162 = vector.shape_cast %161 : vector<1x32x32xbf16> to vector<32x32xbf16>
    %163 = arith.truncf %160 : vector<32x128xf32> to vector<32x128xbf16>
    %cst_65 = arith.constant dense<0.000000e+00> : vector<32x128xf32>
    %164 = tpu.matmul %162, %163, %cst_65 {dimension_numbers = #tpu.dot_dimension_numbers<[1], [0], [0], [1], [0, 0, 1, 1], [], []>} : vector<32x32xbf16>, vector<32x128xbf16>, vector<32x128xf32> -> vector<32x128xf32>
    %165 = arith.addf %144, %164 : vector<32x128xf32>
    %c-1_i32_66 = arith.constant -1 : i32
    %166 = vector.broadcast %c-1_i32_66 : i32 to vector<1x128xi32>
    %167 = arith.cmpi sge, %33, %166 : vector<1x128xi32>
    %c7_i32_67 = arith.constant 7 : i32
    %168 = vector.broadcast %c7_i32_67 : i32 to vector<1x128xi32>
    %169 = arith.cmpi slt, %33, %168 : vector<1x128xi32>
    %170 = arith.andi %167, %169 : vector<1x128xi1>
    %c0_i32_68 = arith.constant 0 : i32
    %171 = vector.broadcast %c0_i32_68 : i32 to vector<1x128xi32>
    %172 = arith.cmpi sge, %29, %171 : vector<1x128xi32>
    %173 = arith.andi %170, %172 : vector<1x128xi1>
    %c8_i32_69 = arith.constant 8 : i32
    %174 = vector.broadcast %c8_i32_69 : i32 to vector<1x128xi32>
    %175 = arith.cmpi slt, %29, %174 : vector<1x128xi32>
    %176 = arith.andi %173, %175 : vector<1x128xi1>
    %c120_i32 = arith.constant 120 : i32
    %177 = tpu.dynamic_rotate %26 by %c120_i32 dim 1 : vector<32x128xf32>, i32 -> vector<32x128xf32>
    %cst_70 = arith.constant 0.000000e+00 : f32
    %178 = vector.shape_cast %176 : vector<1x128xi1> to vector<1x128xi1>
    %179 = vector.broadcast %178 : vector<1x128xi1> to vector<32x128xi1>
    %180 = vector.broadcast %cst_70 : f32 to vector<32x128xf32>
    %181 = arith.select %179, %177, %180 : vector<32x128xi1>, vector<32x128xf32>
    %c7 = arith.constant 7 : index
    %c0_71 = arith.constant 0 : index
    %c0_72 = arith.constant 0 : index
    %182 = vector.load %arg6[%c7, %c0_71, %c0_72] : memref<9x32x32xbf16, #tpu.memory_space<vmem>>, vector<1x32x32xbf16>
    %183 = vector.shape_cast %182 : vector<1x32x32xbf16> to vector<32x32xbf16>
    %184 = arith.truncf %181 : vector<32x128xf32> to vector<32x128xbf16>
    %cst_73 = arith.constant dense<0.000000e+00> : vector<32x128xf32>
    %185 = tpu.matmul %183, %184, %cst_73 {dimension_numbers = #tpu.dot_dimension_numbers<[1], [0], [0], [1], [0, 0, 1, 1], [], []>} : vector<32x32xbf16>, vector<32x128xbf16>, vector<32x128xf32> -> vector<32x128xf32>
    %186 = arith.addf %165, %185 : vector<32x128xf32>
    %c-1_i32_74 = arith.constant -1 : i32
    %187 = vector.broadcast %c-1_i32_74 : i32 to vector<1x128xi32>
    %188 = arith.cmpi sge, %33, %187 : vector<1x128xi32>
    %c7_i32_75 = arith.constant 7 : i32
    %189 = vector.broadcast %c7_i32_75 : i32 to vector<1x128xi32>
    %190 = arith.cmpi slt, %33, %189 : vector<1x128xi32>
    %191 = arith.andi %188, %190 : vector<1x128xi1>
    %c-1_i32_76 = arith.constant -1 : i32
    %192 = vector.broadcast %c-1_i32_76 : i32 to vector<1x128xi32>
    %193 = arith.cmpi sge, %29, %192 : vector<1x128xi32>
    %194 = arith.andi %191, %193 : vector<1x128xi1>
    %c7_i32_77 = arith.constant 7 : i32
    %195 = vector.broadcast %c7_i32_77 : i32 to vector<1x128xi32>
    %196 = arith.cmpi slt, %29, %195 : vector<1x128xi32>
    %197 = arith.andi %194, %196 : vector<1x128xi1>
    %c119_i32 = arith.constant 119 : i32
    %198 = tpu.dynamic_rotate %26 by %c119_i32 dim 1 : vector<32x128xf32>, i32 -> vector<32x128xf32>
    %cst_78 = arith.constant 0.000000e+00 : f32
    %199 = vector.shape_cast %197 : vector<1x128xi1> to vector<1x128xi1>
    %200 = vector.broadcast %199 : vector<1x128xi1> to vector<32x128xi1>
    %201 = vector.broadcast %cst_78 : f32 to vector<32x128xf32>
    %202 = arith.select %200, %198, %201 : vector<32x128xi1>, vector<32x128xf32>
    %c8 = arith.constant 8 : index
    %c0_79 = arith.constant 0 : index
    %c0_80 = arith.constant 0 : index
    %203 = vector.load %arg6[%c8, %c0_79, %c0_80] : memref<9x32x32xbf16, #tpu.memory_space<vmem>>, vector<1x32x32xbf16>
    %204 = vector.shape_cast %203 : vector<1x32x32xbf16> to vector<32x32xbf16>
    %205 = arith.truncf %202 : vector<32x128xf32> to vector<32x128xbf16>
    %cst_81 = arith.constant dense<0.000000e+00> : vector<32x128xf32>
    %206 = tpu.matmul %204, %205, %cst_81 {dimension_numbers = #tpu.dot_dimension_numbers<[1], [0], [0], [1], [0, 0, 1, 1], [], []>} : vector<32x32xbf16>, vector<32x128xbf16>, vector<32x128xf32> -> vector<32x128xf32>
    %207 = arith.addf %186, %206 : vector<32x128xf32>
    %c0_82 = arith.constant 0 : index
    %c0_83 = arith.constant 0 : index
    %208 = vector.load %arg3[%c0_82, %c0_83] : memref<32x16xbf16, #tpu.memory_space<vmem>>, vector<32x16xbf16>
    %c0_84 = arith.constant 0 : index
    %c0_85 = arith.constant 0 : index
    %209 = vector.load %arg2[%c0_84, %c0_85] : memref<16x128xbf16, #tpu.memory_space<vmem>>, vector<16x128xbf16>
    %cst_86 = arith.constant dense<0.000000e+00> : vector<32x128xf32>
    %210 = tpu.matmul %208, %209, %cst_86 {dimension_numbers = #tpu.dot_dimension_numbers<[1], [0], [0], [1], [0, 0, 1, 1], [], []>} : vector<32x16xbf16>, vector<16x128xbf16>, vector<32x128xf32> -> vector<32x128xf32>
    %211 = arith.addf %210, %207 : vector<32x128xf32>
    %c0_87 = arith.constant 0 : index
    %c0_88 = arith.constant 0 : index
    %212 = vector.load %arg7[%c0_87, %c0_88] : memref<32x1xf32, #tpu.memory_space<vmem>>, vector<32x1xf32>
    %c0_89 = arith.constant 0 : index
    %c0_90 = arith.constant 0 : index
    %213 = vector.load %arg8[%c0_89, %c0_90] : memref<32x1xf32, #tpu.memory_space<vmem>>, vector<32x1xf32>
    %cst_91 = arith.constant dense<0.000000e+00> : vector<32xf32>
    %214 = vector.multi_reduction <add>, %211, %cst_91 [1] : vector<32x128xf32> to vector<32xf32>
    %215 = vector.shape_cast %214 : vector<32xf32> to vector<32x1xf32>
    %cst_92 = arith.constant 1.280000e+02 : f32
    %216 = vector.broadcast %cst_92 : f32 to vector<32x1xf32>
    %217 = arith.divf %215, %216 : vector<32x1xf32>
    %218 = vector.broadcast %217 : vector<32x1xf32> to vector<32x128xf32>
    %219 = arith.subf %211, %218 : vector<32x128xf32>
    %220 = arith.mulf %219, %219 : vector<32x128xf32>
    %cst_93 = arith.constant dense<0.000000e+00> : vector<32xf32>
    %221 = vector.multi_reduction <add>, %220, %cst_93 [1] : vector<32x128xf32> to vector<32xf32>
    %222 = vector.shape_cast %221 : vector<32xf32> to vector<32x1xf32>
    %cst_94 = arith.constant 1.280000e+02 : f32
    %223 = vector.broadcast %cst_94 : f32 to vector<32x1xf32>
    %224 = arith.divf %222, %223 : vector<32x1xf32>
    %cst_95 = arith.constant 9.99999974E-6 : f32
    %225 = vector.broadcast %cst_95 : f32 to vector<32x1xf32>
    %226 = arith.addf %224, %225 : vector<32x1xf32>
    %227 = math.rsqrt %226 : vector<32x1xf32>
    %228 = vector.broadcast %227 : vector<32x1xf32> to vector<32x128xf32>
    %229 = arith.mulf %219, %228 : vector<32x128xf32>
    %230 = vector.broadcast %212 : vector<32x1xf32> to vector<32x128xf32>
    %231 = arith.mulf %229, %230 : vector<32x128xf32>
    %232 = vector.broadcast %213 : vector<32x1xf32> to vector<32x128xf32>
    %233 = arith.addf %231, %232 : vector<32x128xf32>
    %cst_96 = arith.constant 0.000000e+00 : f32
    %234 = vector.broadcast %cst_96 : f32 to vector<32x128xf32>
    %235 = arith.maximumf %233, %234 : vector<32x128xf32>
    %236 = arith.truncf %235 : vector<32x128xf32> to vector<32x128xbf16>
    %c0_97 = arith.constant 0 : index
    %c0_98 = arith.constant 0 : index
    %237 = vector.load %arg9[%c0_97, %c0_98] : memref<32x128xbf16, #tpu.memory_space<vmem>>, vector<32x128xbf16>
    tpu.vector_store %arg9[%c0_97, %c0_98], %236 {strides = array<i32>} : memref<32x128xbf16, #tpu.memory_space<vmem>>, vector<32x128xbf16>,
    return
  }
}

module attributes {stable_mosaic.version = 11 : i64} {
  func.func @kernel(%arg0: memref<288x32xbf16, #tpu.memory_space<vmem>>, %arg1: memref<64x288xbf16, #tpu.memory_space<vmem>>, %arg2: memref<32x32xbf16, #tpu.memory_space<vmem>>, %arg3: memref<64x32xbf16, #tpu.memory_space<vmem>>, %arg4: memref<64x1xf32, #tpu.memory_space<vmem>>, %arg5: memref<64x1xf32, #tpu.memory_space<vmem>>, %arg6: memref<9x64x64xbf16, #tpu.memory_space<vmem>>, %arg7: memref<64x1xf32, #tpu.memory_space<vmem>>, %arg8: memref<64x1xf32, #tpu.memory_space<vmem>>, %arg9: memref<128x64xf32, #tpu.memory_space<vmem>>, %arg10: memref<128x1xf32, #tpu.memory_space<vmem>>, %arg11: memref<128x2xf32, #tpu.memory_space<vmem>>) attributes {dimension_semantics = [], scalar_prefetch = 0 : i64, scratch_operands = 0 : i64, tpu.core_type = #tpu.core_type<tc>} {
    %c0 = arith.constant 0 : index
    %c0_0 = arith.constant 0 : index
    %0 = vector.load %arg1[%c0, %c0_0] : memref<64x288xbf16, #tpu.memory_space<vmem>>, vector<64x288xbf16>
    %c0_1 = arith.constant 0 : index
    %c0_2 = arith.constant 0 : index
    %1 = vector.load %arg0[%c0_1, %c0_2] : memref<288x32xbf16, #tpu.memory_space<vmem>>, vector<288x32xbf16>
    %cst = arith.constant dense<0.000000e+00> : vector<64x32xf32>
    %2 = tpu.matmul %0, %1, %cst {dimension_numbers = #tpu.dot_dimension_numbers<[1], [0], [0], [1], [0, 0, 1, 1], [], []>} : vector<64x288xbf16>, vector<288x32xbf16>, vector<64x32xf32> -> vector<64x32xf32>
    %c0_3 = arith.constant 0 : index
    %c0_4 = arith.constant 0 : index
    %3 = vector.load %arg4[%c0_3, %c0_4] : memref<64x1xf32, #tpu.memory_space<vmem>>, vector<64x1xf32>
    %c0_5 = arith.constant 0 : index
    %c0_6 = arith.constant 0 : index
    %4 = vector.load %arg5[%c0_5, %c0_6] : memref<64x1xf32, #tpu.memory_space<vmem>>, vector<64x1xf32>
    %cst_7 = arith.constant dense<0.000000e+00> : vector<64xf32>
    %5 = vector.multi_reduction <add>, %2, %cst_7 [1] : vector<64x32xf32> to vector<64xf32>
    %6 = vector.shape_cast %5 : vector<64xf32> to vector<64x1xf32>
    %cst_8 = arith.constant 3.200000e+01 : f32
    %7 = vector.broadcast %cst_8 : f32 to vector<64x1xf32>
    %8 = arith.divf %6, %7 : vector<64x1xf32>
    %9 = vector.broadcast %8 : vector<64x1xf32> to vector<64x32xf32>
    %10 = arith.subf %2, %9 : vector<64x32xf32>
    %11 = arith.mulf %10, %10 : vector<64x32xf32>
    %cst_9 = arith.constant dense<0.000000e+00> : vector<64xf32>
    %12 = vector.multi_reduction <add>, %11, %cst_9 [1] : vector<64x32xf32> to vector<64xf32>
    %13 = vector.shape_cast %12 : vector<64xf32> to vector<64x1xf32>
    %cst_10 = arith.constant 3.200000e+01 : f32
    %14 = vector.broadcast %cst_10 : f32 to vector<64x1xf32>
    %15 = arith.divf %13, %14 : vector<64x1xf32>
    %cst_11 = arith.constant 9.99999974E-6 : f32
    %16 = vector.broadcast %cst_11 : f32 to vector<64x1xf32>
    %17 = arith.addf %15, %16 : vector<64x1xf32>
    %18 = math.rsqrt %17 : vector<64x1xf32>
    %19 = vector.broadcast %18 : vector<64x1xf32> to vector<64x32xf32>
    %20 = arith.mulf %10, %19 : vector<64x32xf32>
    %21 = vector.broadcast %3 : vector<64x1xf32> to vector<64x32xf32>
    %22 = arith.mulf %20, %21 : vector<64x32xf32>
    %23 = vector.broadcast %4 : vector<64x1xf32> to vector<64x32xf32>
    %24 = arith.addf %22, %23 : vector<64x32xf32>
    %cst_12 = arith.constant 0.000000e+00 : f32
    %25 = vector.broadcast %cst_12 : f32 to vector<64x32xf32>
    %26 = arith.maximumf %24, %25 : vector<64x32xf32>
    %27 = tpu.iota {dimensions = array<i32: 1>} : vector<1x32xi32>
    %c3_i32 = arith.constant 3 : i32
    %28 = vector.broadcast %c3_i32 : i32 to vector<1x32xi32>
    %29 = arith.andi %27, %28 : vector<1x32xi32>
    %c2_i32 = arith.constant 2 : i32
    %30 = vector.broadcast %c2_i32 : i32 to vector<1x32xi32>
    %31 = arith.shrsi %27, %30 : vector<1x32xi32>
    %c3_i32_13 = arith.constant 3 : i32
    %32 = vector.broadcast %c3_i32_13 : i32 to vector<1x32xi32>
    %33 = arith.andi %31, %32 : vector<1x32xi32>
    %34 = tpu.iota {dimensions = array<i32: 0>} : vector<32x32xi32>
    %35 = tpu.iota {dimensions = array<i32: 1>} : vector<32x32xi32>
    %cst_14 = arith.constant 0.000000e+00 : f32
    %36 = vector.broadcast %cst_14 : f32 to vector<64x32xf32>
    %c1_i32 = arith.constant 1 : i32
    %37 = vector.broadcast %c1_i32 : i32 to vector<1x32xi32>
    %38 = arith.cmpi sge, %33, %37 : vector<1x32xi32>
    %c5_i32 = arith.constant 5 : i32
    %39 = vector.broadcast %c5_i32 : i32 to vector<1x32xi32>
    %40 = arith.cmpi slt, %33, %39 : vector<1x32xi32>
    %41 = arith.andi %38, %40 : vector<1x32xi1>
    %c1_i32_15 = arith.constant 1 : i32
    %42 = vector.broadcast %c1_i32_15 : i32 to vector<1x32xi32>
    %43 = arith.cmpi sge, %29, %42 : vector<1x32xi32>
    %44 = arith.andi %41, %43 : vector<1x32xi1>
    %c5_i32_16 = arith.constant 5 : i32
    %45 = vector.broadcast %c5_i32_16 : i32 to vector<1x32xi32>
    %46 = arith.cmpi slt, %29, %45 : vector<1x32xi32>
    %47 = arith.andi %44, %46 : vector<1x32xi1>
    %c-5_i32 = arith.constant -5 : i32
    %48 = vector.broadcast %c-5_i32 : i32 to vector<32x32xi32>
    %49 = arith.addi %35, %48 : vector<32x32xi32>
    %50 = arith.cmpi eq, %34, %49 : vector<32x32xi32>
    %51 = vector.broadcast %47 : vector<1x32xi1> to vector<32x32xi1>
    %52 = arith.andi %50, %51 : vector<32x32xi1>
    %53 = arith.extui %52 : vector<32x32xi1> to vector<32x32xi32>
    %54 = arith.sitofp %53 : vector<32x32xi32> to vector<32x32xf32>
    %cst_17 = arith.constant dense<0.000000e+00> : vector<64x32xf32>
    %55 = tpu.matmul %26, %54, %cst_17 {dimension_numbers = #tpu.dot_dimension_numbers<[1], [0], [0], [1], [0, 0, 1, 1], [], []>} : vector<64x32xf32>, vector<32x32xf32>, vector<64x32xf32> -> vector<64x32xf32>
    %c0_18 = arith.constant 0 : index
    %c0_19 = arith.constant 0 : index
    %c0_20 = arith.constant 0 : index
    %56 = vector.load %arg6[%c0_18, %c0_19, %c0_20] : memref<9x64x64xbf16, #tpu.memory_space<vmem>>, vector<1x64x64xbf16>
    %57 = vector.shape_cast %56 : vector<1x64x64xbf16> to vector<64x64xbf16>
    %58 = arith.truncf %55 : vector<64x32xf32> to vector<64x32xbf16>
    %cst_21 = arith.constant dense<0.000000e+00> : vector<64x32xf32>
    %59 = tpu.matmul %57, %58, %cst_21 {dimension_numbers = #tpu.dot_dimension_numbers<[1], [0], [0], [1], [0, 0, 1, 1], [], []>} : vector<64x64xbf16>, vector<64x32xbf16>, vector<64x32xf32> -> vector<64x32xf32>
    %60 = arith.addf %36, %59 : vector<64x32xf32>
    %c1_i32_22 = arith.constant 1 : i32
    %61 = vector.broadcast %c1_i32_22 : i32 to vector<1x32xi32>
    %62 = arith.cmpi sge, %33, %61 : vector<1x32xi32>
    %c5_i32_23 = arith.constant 5 : i32
    %63 = vector.broadcast %c5_i32_23 : i32 to vector<1x32xi32>
    %64 = arith.cmpi slt, %33, %63 : vector<1x32xi32>
    %65 = arith.andi %62, %64 : vector<1x32xi1>
    %c0_i32 = arith.constant 0 : i32
    %66 = vector.broadcast %c0_i32 : i32 to vector<1x32xi32>
    %67 = arith.cmpi sge, %29, %66 : vector<1x32xi32>
    %68 = arith.andi %65, %67 : vector<1x32xi1>
    %c4_i32 = arith.constant 4 : i32
    %69 = vector.broadcast %c4_i32 : i32 to vector<1x32xi32>
    %70 = arith.cmpi slt, %29, %69 : vector<1x32xi32>
    %71 = arith.andi %68, %70 : vector<1x32xi1>
    %c-4_i32 = arith.constant -4 : i32
    %72 = vector.broadcast %c-4_i32 : i32 to vector<32x32xi32>
    %73 = arith.addi %35, %72 : vector<32x32xi32>
    %74 = arith.cmpi eq, %34, %73 : vector<32x32xi32>
    %75 = vector.broadcast %71 : vector<1x32xi1> to vector<32x32xi1>
    %76 = arith.andi %74, %75 : vector<32x32xi1>
    %77 = arith.extui %76 : vector<32x32xi1> to vector<32x32xi32>
    %78 = arith.sitofp %77 : vector<32x32xi32> to vector<32x32xf32>
    %cst_24 = arith.constant dense<0.000000e+00> : vector<64x32xf32>
    %79 = tpu.matmul %26, %78, %cst_24 {dimension_numbers = #tpu.dot_dimension_numbers<[1], [0], [0], [1], [0, 0, 1, 1], [], []>} : vector<64x32xf32>, vector<32x32xf32>, vector<64x32xf32> -> vector<64x32xf32>
    %c1 = arith.constant 1 : index
    %c0_25 = arith.constant 0 : index
    %c0_26 = arith.constant 0 : index
    %80 = vector.load %arg6[%c1, %c0_25, %c0_26] : memref<9x64x64xbf16, #tpu.memory_space<vmem>>, vector<1x64x64xbf16>
    %81 = vector.shape_cast %80 : vector<1x64x64xbf16> to vector<64x64xbf16>
    %82 = arith.truncf %79 : vector<64x32xf32> to vector<64x32xbf16>
    %cst_27 = arith.constant dense<0.000000e+00> : vector<64x32xf32>
    %83 = tpu.matmul %81, %82, %cst_27 {dimension_numbers = #tpu.dot_dimension_numbers<[1], [0], [0], [1], [0, 0, 1, 1], [], []>} : vector<64x64xbf16>, vector<64x32xbf16>, vector<64x32xf32> -> vector<64x32xf32>
    %84 = arith.addf %60, %83 : vector<64x32xf32>
    %c1_i32_28 = arith.constant 1 : i32
    %85 = vector.broadcast %c1_i32_28 : i32 to vector<1x32xi32>
    %86 = arith.cmpi sge, %33, %85 : vector<1x32xi32>
    %c5_i32_29 = arith.constant 5 : i32
    %87 = vector.broadcast %c5_i32_29 : i32 to vector<1x32xi32>
    %88 = arith.cmpi slt, %33, %87 : vector<1x32xi32>
    %89 = arith.andi %86, %88 : vector<1x32xi1>
    %c-1_i32 = arith.constant -1 : i32
    %90 = vector.broadcast %c-1_i32 : i32 to vector<1x32xi32>
    %91 = arith.cmpi sge, %29, %90 : vector<1x32xi32>
    %92 = arith.andi %89, %91 : vector<1x32xi1>
    %c3_i32_30 = arith.constant 3 : i32
    %93 = vector.broadcast %c3_i32_30 : i32 to vector<1x32xi32>
    %94 = arith.cmpi slt, %29, %93 : vector<1x32xi32>
    %95 = arith.andi %92, %94 : vector<1x32xi1>
    %c-3_i32 = arith.constant -3 : i32
    %96 = vector.broadcast %c-3_i32 : i32 to vector<32x32xi32>
    %97 = arith.addi %35, %96 : vector<32x32xi32>
    %98 = arith.cmpi eq, %34, %97 : vector<32x32xi32>
    %99 = vector.broadcast %95 : vector<1x32xi1> to vector<32x32xi1>
    %100 = arith.andi %98, %99 : vector<32x32xi1>
    %101 = arith.extui %100 : vector<32x32xi1> to vector<32x32xi32>
    %102 = arith.sitofp %101 : vector<32x32xi32> to vector<32x32xf32>
    %cst_31 = arith.constant dense<0.000000e+00> : vector<64x32xf32>
    %103 = tpu.matmul %26, %102, %cst_31 {dimension_numbers = #tpu.dot_dimension_numbers<[1], [0], [0], [1], [0, 0, 1, 1], [], []>} : vector<64x32xf32>, vector<32x32xf32>, vector<64x32xf32> -> vector<64x32xf32>
    %c2 = arith.constant 2 : index
    %c0_32 = arith.constant 0 : index
    %c0_33 = arith.constant 0 : index
    %104 = vector.load %arg6[%c2, %c0_32, %c0_33] : memref<9x64x64xbf16, #tpu.memory_space<vmem>>, vector<1x64x64xbf16>
    %105 = vector.shape_cast %104 : vector<1x64x64xbf16> to vector<64x64xbf16>
    %106 = arith.truncf %103 : vector<64x32xf32> to vector<64x32xbf16>
    %cst_34 = arith.constant dense<0.000000e+00> : vector<64x32xf32>
    %107 = tpu.matmul %105, %106, %cst_34 {dimension_numbers = #tpu.dot_dimension_numbers<[1], [0], [0], [1], [0, 0, 1, 1], [], []>} : vector<64x64xbf16>, vector<64x32xbf16>, vector<64x32xf32> -> vector<64x32xf32>
    %108 = arith.addf %84, %107 : vector<64x32xf32>
    %c0_i32_35 = arith.constant 0 : i32
    %109 = vector.broadcast %c0_i32_35 : i32 to vector<1x32xi32>
    %110 = arith.cmpi sge, %33, %109 : vector<1x32xi32>
    %c4_i32_36 = arith.constant 4 : i32
    %111 = vector.broadcast %c4_i32_36 : i32 to vector<1x32xi32>
    %112 = arith.cmpi slt, %33, %111 : vector<1x32xi32>
    %113 = arith.andi %110, %112 : vector<1x32xi1>
    %c1_i32_37 = arith.constant 1 : i32
    %114 = vector.broadcast %c1_i32_37 : i32 to vector<1x32xi32>
    %115 = arith.cmpi sge, %29, %114 : vector<1x32xi32>
    %116 = arith.andi %113, %115 : vector<1x32xi1>
    %c5_i32_38 = arith.constant 5 : i32
    %117 = vector.broadcast %c5_i32_38 : i32 to vector<1x32xi32>
    %118 = arith.cmpi slt, %29, %117 : vector<1x32xi32>
    %119 = arith.andi %116, %118 : vector<1x32xi1>
    %c-1_i32_39 = arith.constant -1 : i32
    %120 = vector.broadcast %c-1_i32_39 : i32 to vector<32x32xi32>
    %121 = arith.addi %35, %120 : vector<32x32xi32>
    %122 = arith.cmpi eq, %34, %121 : vector<32x32xi32>
    %123 = vector.broadcast %119 : vector<1x32xi1> to vector<32x32xi1>
    %124 = arith.andi %122, %123 : vector<32x32xi1>
    %125 = arith.extui %124 : vector<32x32xi1> to vector<32x32xi32>
    %126 = arith.sitofp %125 : vector<32x32xi32> to vector<32x32xf32>
    %cst_40 = arith.constant dense<0.000000e+00> : vector<64x32xf32>
    %127 = tpu.matmul %26, %126, %cst_40 {dimension_numbers = #tpu.dot_dimension_numbers<[1], [0], [0], [1], [0, 0, 1, 1], [], []>} : vector<64x32xf32>, vector<32x32xf32>, vector<64x32xf32> -> vector<64x32xf32>
    %c3 = arith.constant 3 : index
    %c0_41 = arith.constant 0 : index
    %c0_42 = arith.constant 0 : index
    %128 = vector.load %arg6[%c3, %c0_41, %c0_42] : memref<9x64x64xbf16, #tpu.memory_space<vmem>>, vector<1x64x64xbf16>
    %129 = vector.shape_cast %128 : vector<1x64x64xbf16> to vector<64x64xbf16>
    %130 = arith.truncf %127 : vector<64x32xf32> to vector<64x32xbf16>
    %cst_43 = arith.constant dense<0.000000e+00> : vector<64x32xf32>
    %131 = tpu.matmul %129, %130, %cst_43 {dimension_numbers = #tpu.dot_dimension_numbers<[1], [0], [0], [1], [0, 0, 1, 1], [], []>} : vector<64x64xbf16>, vector<64x32xbf16>, vector<64x32xf32> -> vector<64x32xf32>
    %132 = arith.addf %108, %131 : vector<64x32xf32>
    %c4 = arith.constant 4 : index
    %c0_44 = arith.constant 0 : index
    %c0_45 = arith.constant 0 : index
    %133 = vector.load %arg6[%c4, %c0_44, %c0_45] : memref<9x64x64xbf16, #tpu.memory_space<vmem>>, vector<1x64x64xbf16>
    %134 = vector.shape_cast %133 : vector<1x64x64xbf16> to vector<64x64xbf16>
    %135 = arith.truncf %26 : vector<64x32xf32> to vector<64x32xbf16>
    %cst_46 = arith.constant dense<0.000000e+00> : vector<64x32xf32>
    %136 = tpu.matmul %134, %135, %cst_46 {dimension_numbers = #tpu.dot_dimension_numbers<[1], [0], [0], [1], [0, 0, 1, 1], [], []>} : vector<64x64xbf16>, vector<64x32xbf16>, vector<64x32xf32> -> vector<64x32xf32>
    %137 = arith.addf %132, %136 : vector<64x32xf32>
    %c0_i32_47 = arith.constant 0 : i32
    %138 = vector.broadcast %c0_i32_47 : i32 to vector<1x32xi32>
    %139 = arith.cmpi sge, %33, %138 : vector<1x32xi32>
    %c4_i32_48 = arith.constant 4 : i32
    %140 = vector.broadcast %c4_i32_48 : i32 to vector<1x32xi32>
    %141 = arith.cmpi slt, %33, %140 : vector<1x32xi32>
    %142 = arith.andi %139, %141 : vector<1x32xi1>
    %c-1_i32_49 = arith.constant -1 : i32
    %143 = vector.broadcast %c-1_i32_49 : i32 to vector<1x32xi32>
    %144 = arith.cmpi sge, %29, %143 : vector<1x32xi32>
    %145 = arith.andi %142, %144 : vector<1x32xi1>
    %c3_i32_50 = arith.constant 3 : i32
    %146 = vector.broadcast %c3_i32_50 : i32 to vector<1x32xi32>
    %147 = arith.cmpi slt, %29, %146 : vector<1x32xi32>
    %148 = arith.andi %145, %147 : vector<1x32xi1>
    %c1_i32_51 = arith.constant 1 : i32
    %149 = vector.broadcast %c1_i32_51 : i32 to vector<32x32xi32>
    %150 = arith.addi %35, %149 : vector<32x32xi32>
    %151 = arith.cmpi eq, %34, %150 : vector<32x32xi32>
    %152 = vector.broadcast %148 : vector<1x32xi1> to vector<32x32xi1>
    %153 = arith.andi %151, %152 : vector<32x32xi1>
    %154 = arith.extui %153 : vector<32x32xi1> to vector<32x32xi32>
    %155 = arith.sitofp %154 : vector<32x32xi32> to vector<32x32xf32>
    %cst_52 = arith.constant dense<0.000000e+00> : vector<64x32xf32>
    %156 = tpu.matmul %26, %155, %cst_52 {dimension_numbers = #tpu.dot_dimension_numbers<[1], [0], [0], [1], [0, 0, 1, 1], [], []>} : vector<64x32xf32>, vector<32x32xf32>, vector<64x32xf32> -> vector<64x32xf32>
    %c5 = arith.constant 5 : index
    %c0_53 = arith.constant 0 : index
    %c0_54 = arith.constant 0 : index
    %157 = vector.load %arg6[%c5, %c0_53, %c0_54] : memref<9x64x64xbf16, #tpu.memory_space<vmem>>, vector<1x64x64xbf16>
    %158 = vector.shape_cast %157 : vector<1x64x64xbf16> to vector<64x64xbf16>
    %159 = arith.truncf %156 : vector<64x32xf32> to vector<64x32xbf16>
    %cst_55 = arith.constant dense<0.000000e+00> : vector<64x32xf32>
    %160 = tpu.matmul %158, %159, %cst_55 {dimension_numbers = #tpu.dot_dimension_numbers<[1], [0], [0], [1], [0, 0, 1, 1], [], []>} : vector<64x64xbf16>, vector<64x32xbf16>, vector<64x32xf32> -> vector<64x32xf32>
    %161 = arith.addf %137, %160 : vector<64x32xf32>
    %c-1_i32_56 = arith.constant -1 : i32
    %162 = vector.broadcast %c-1_i32_56 : i32 to vector<1x32xi32>
    %163 = arith.cmpi sge, %33, %162 : vector<1x32xi32>
    %c3_i32_57 = arith.constant 3 : i32
    %164 = vector.broadcast %c3_i32_57 : i32 to vector<1x32xi32>
    %165 = arith.cmpi slt, %33, %164 : vector<1x32xi32>
    %166 = arith.andi %163, %165 : vector<1x32xi1>
    %c1_i32_58 = arith.constant 1 : i32
    %167 = vector.broadcast %c1_i32_58 : i32 to vector<1x32xi32>
    %168 = arith.cmpi sge, %29, %167 : vector<1x32xi32>
    %169 = arith.andi %166, %168 : vector<1x32xi1>
    %c5_i32_59 = arith.constant 5 : i32
    %170 = vector.broadcast %c5_i32_59 : i32 to vector<1x32xi32>
    %171 = arith.cmpi slt, %29, %170 : vector<1x32xi32>
    %172 = arith.andi %169, %171 : vector<1x32xi1>
    %c3_i32_60 = arith.constant 3 : i32
    %173 = vector.broadcast %c3_i32_60 : i32 to vector<32x32xi32>
    %174 = arith.addi %35, %173 : vector<32x32xi32>
    %175 = arith.cmpi eq, %34, %174 : vector<32x32xi32>
    %176 = vector.broadcast %172 : vector<1x32xi1> to vector<32x32xi1>
    %177 = arith.andi %175, %176 : vector<32x32xi1>
    %178 = arith.extui %177 : vector<32x32xi1> to vector<32x32xi32>
    %179 = arith.sitofp %178 : vector<32x32xi32> to vector<32x32xf32>
    %cst_61 = arith.constant dense<0.000000e+00> : vector<64x32xf32>
    %180 = tpu.matmul %26, %179, %cst_61 {dimension_numbers = #tpu.dot_dimension_numbers<[1], [0], [0], [1], [0, 0, 1, 1], [], []>} : vector<64x32xf32>, vector<32x32xf32>, vector<64x32xf32> -> vector<64x32xf32>
    %c6 = arith.constant 6 : index
    %c0_62 = arith.constant 0 : index
    %c0_63 = arith.constant 0 : index
    %181 = vector.load %arg6[%c6, %c0_62, %c0_63] : memref<9x64x64xbf16, #tpu.memory_space<vmem>>, vector<1x64x64xbf16>
    %182 = vector.shape_cast %181 : vector<1x64x64xbf16> to vector<64x64xbf16>
    %183 = arith.truncf %180 : vector<64x32xf32> to vector<64x32xbf16>
    %cst_64 = arith.constant dense<0.000000e+00> : vector<64x32xf32>
    %184 = tpu.matmul %182, %183, %cst_64 {dimension_numbers = #tpu.dot_dimension_numbers<[1], [0], [0], [1], [0, 0, 1, 1], [], []>} : vector<64x64xbf16>, vector<64x32xbf16>, vector<64x32xf32> -> vector<64x32xf32>
    %185 = arith.addf %161, %184 : vector<64x32xf32>
    %c-1_i32_65 = arith.constant -1 : i32
    %186 = vector.broadcast %c-1_i32_65 : i32 to vector<1x32xi32>
    %187 = arith.cmpi sge, %33, %186 : vector<1x32xi32>
    %c3_i32_66 = arith.constant 3 : i32
    %188 = vector.broadcast %c3_i32_66 : i32 to vector<1x32xi32>
    %189 = arith.cmpi slt, %33, %188 : vector<1x32xi32>
    %190 = arith.andi %187, %189 : vector<1x32xi1>
    %c0_i32_67 = arith.constant 0 : i32
    %191 = vector.broadcast %c0_i32_67 : i32 to vector<1x32xi32>
    %192 = arith.cmpi sge, %29, %191 : vector<1x32xi32>
    %193 = arith.andi %190, %192 : vector<1x32xi1>
    %c4_i32_68 = arith.constant 4 : i32
    %194 = vector.broadcast %c4_i32_68 : i32 to vector<1x32xi32>
    %195 = arith.cmpi slt, %29, %194 : vector<1x32xi32>
    %196 = arith.andi %193, %195 : vector<1x32xi1>
    %c4_i32_69 = arith.constant 4 : i32
    %197 = vector.broadcast %c4_i32_69 : i32 to vector<32x32xi32>
    %198 = arith.addi %35, %197 : vector<32x32xi32>
    %199 = arith.cmpi eq, %34, %198 : vector<32x32xi32>
    %200 = vector.broadcast %196 : vector<1x32xi1> to vector<32x32xi1>
    %201 = arith.andi %199, %200 : vector<32x32xi1>
    %202 = arith.extui %201 : vector<32x32xi1> to vector<32x32xi32>
    %203 = arith.sitofp %202 : vector<32x32xi32> to vector<32x32xf32>
    %cst_70 = arith.constant dense<0.000000e+00> : vector<64x32xf32>
    %204 = tpu.matmul %26, %203, %cst_70 {dimension_numbers = #tpu.dot_dimension_numbers<[1], [0], [0], [1], [0, 0, 1, 1], [], []>} : vector<64x32xf32>, vector<32x32xf32>, vector<64x32xf32> -> vector<64x32xf32>
    %c7 = arith.constant 7 : index
    %c0_71 = arith.constant 0 : index
    %c0_72 = arith.constant 0 : index
    %205 = vector.load %arg6[%c7, %c0_71, %c0_72] : memref<9x64x64xbf16, #tpu.memory_space<vmem>>, vector<1x64x64xbf16>
    %206 = vector.shape_cast %205 : vector<1x64x64xbf16> to vector<64x64xbf16>
    %207 = arith.truncf %204 : vector<64x32xf32> to vector<64x32xbf16>
    %cst_73 = arith.constant dense<0.000000e+00> : vector<64x32xf32>
    %208 = tpu.matmul %206, %207, %cst_73 {dimension_numbers = #tpu.dot_dimension_numbers<[1], [0], [0], [1], [0, 0, 1, 1], [], []>} : vector<64x64xbf16>, vector<64x32xbf16>, vector<64x32xf32> -> vector<64x32xf32>
    %209 = arith.addf %185, %208 : vector<64x32xf32>
    %c-1_i32_74 = arith.constant -1 : i32
    %210 = vector.broadcast %c-1_i32_74 : i32 to vector<1x32xi32>
    %211 = arith.cmpi sge, %33, %210 : vector<1x32xi32>
    %c3_i32_75 = arith.constant 3 : i32
    %212 = vector.broadcast %c3_i32_75 : i32 to vector<1x32xi32>
    %213 = arith.cmpi slt, %33, %212 : vector<1x32xi32>
    %214 = arith.andi %211, %213 : vector<1x32xi1>
    %c-1_i32_76 = arith.constant -1 : i32
    %215 = vector.broadcast %c-1_i32_76 : i32 to vector<1x32xi32>
    %216 = arith.cmpi sge, %29, %215 : vector<1x32xi32>
    %217 = arith.andi %214, %216 : vector<1x32xi1>
    %c3_i32_77 = arith.constant 3 : i32
    %218 = vector.broadcast %c3_i32_77 : i32 to vector<1x32xi32>
    %219 = arith.cmpi slt, %29, %218 : vector<1x32xi32>
    %220 = arith.andi %217, %219 : vector<1x32xi1>
    %c5_i32_78 = arith.constant 5 : i32
    %221 = vector.broadcast %c5_i32_78 : i32 to vector<32x32xi32>
    %222 = arith.addi %35, %221 : vector<32x32xi32>
    %223 = arith.cmpi eq, %34, %222 : vector<32x32xi32>
    %224 = vector.broadcast %220 : vector<1x32xi1> to vector<32x32xi1>
    %225 = arith.andi %223, %224 : vector<32x32xi1>
    %226 = arith.extui %225 : vector<32x32xi1> to vector<32x32xi32>
    %227 = arith.sitofp %226 : vector<32x32xi32> to vector<32x32xf32>
    %cst_79 = arith.constant dense<0.000000e+00> : vector<64x32xf32>
    %228 = tpu.matmul %26, %227, %cst_79 {dimension_numbers = #tpu.dot_dimension_numbers<[1], [0], [0], [1], [0, 0, 1, 1], [], []>} : vector<64x32xf32>, vector<32x32xf32>, vector<64x32xf32> -> vector<64x32xf32>
    %c8 = arith.constant 8 : index
    %c0_80 = arith.constant 0 : index
    %c0_81 = arith.constant 0 : index
    %229 = vector.load %arg6[%c8, %c0_80, %c0_81] : memref<9x64x64xbf16, #tpu.memory_space<vmem>>, vector<1x64x64xbf16>
    %230 = vector.shape_cast %229 : vector<1x64x64xbf16> to vector<64x64xbf16>
    %231 = arith.truncf %228 : vector<64x32xf32> to vector<64x32xbf16>
    %cst_82 = arith.constant dense<0.000000e+00> : vector<64x32xf32>
    %232 = tpu.matmul %230, %231, %cst_82 {dimension_numbers = #tpu.dot_dimension_numbers<[1], [0], [0], [1], [0, 0, 1, 1], [], []>} : vector<64x64xbf16>, vector<64x32xbf16>, vector<64x32xf32> -> vector<64x32xf32>
    %233 = arith.addf %209, %232 : vector<64x32xf32>
    %c0_83 = arith.constant 0 : index
    %c0_84 = arith.constant 0 : index
    %234 = vector.load %arg3[%c0_83, %c0_84] : memref<64x32xbf16, #tpu.memory_space<vmem>>, vector<64x32xbf16>
    %c0_85 = arith.constant 0 : index
    %c0_86 = arith.constant 0 : index
    %235 = vector.load %arg2[%c0_85, %c0_86] : memref<32x32xbf16, #tpu.memory_space<vmem>>, vector<32x32xbf16>
    %cst_87 = arith.constant dense<0.000000e+00> : vector<64x32xf32>
    %236 = tpu.matmul %234, %235, %cst_87 {dimension_numbers = #tpu.dot_dimension_numbers<[1], [0], [0], [1], [0, 0, 1, 1], [], []>} : vector<64x32xbf16>, vector<32x32xbf16>, vector<64x32xf32> -> vector<64x32xf32>
    %237 = arith.addf %236, %233 : vector<64x32xf32>
    %c0_88 = arith.constant 0 : index
    %c0_89 = arith.constant 0 : index
    %238 = vector.load %arg7[%c0_88, %c0_89] : memref<64x1xf32, #tpu.memory_space<vmem>>, vector<64x1xf32>
    %c0_90 = arith.constant 0 : index
    %c0_91 = arith.constant 0 : index
    %239 = vector.load %arg8[%c0_90, %c0_91] : memref<64x1xf32, #tpu.memory_space<vmem>>, vector<64x1xf32>
    %cst_92 = arith.constant dense<0.000000e+00> : vector<64xf32>
    %240 = vector.multi_reduction <add>, %237, %cst_92 [1] : vector<64x32xf32> to vector<64xf32>
    %241 = vector.shape_cast %240 : vector<64xf32> to vector<64x1xf32>
    %cst_93 = arith.constant 3.200000e+01 : f32
    %242 = vector.broadcast %cst_93 : f32 to vector<64x1xf32>
    %243 = arith.divf %241, %242 : vector<64x1xf32>
    %244 = vector.broadcast %243 : vector<64x1xf32> to vector<64x32xf32>
    %245 = arith.subf %237, %244 : vector<64x32xf32>
    %246 = arith.mulf %245, %245 : vector<64x32xf32>
    %cst_94 = arith.constant dense<0.000000e+00> : vector<64xf32>
    %247 = vector.multi_reduction <add>, %246, %cst_94 [1] : vector<64x32xf32> to vector<64xf32>
    %248 = vector.shape_cast %247 : vector<64xf32> to vector<64x1xf32>
    %cst_95 = arith.constant 3.200000e+01 : f32
    %249 = vector.broadcast %cst_95 : f32 to vector<64x1xf32>
    %250 = arith.divf %248, %249 : vector<64x1xf32>
    %cst_96 = arith.constant 9.99999974E-6 : f32
    %251 = vector.broadcast %cst_96 : f32 to vector<64x1xf32>
    %252 = arith.addf %250, %251 : vector<64x1xf32>
    %253 = math.rsqrt %252 : vector<64x1xf32>
    %254 = vector.broadcast %253 : vector<64x1xf32> to vector<64x32xf32>
    %255 = arith.mulf %245, %254 : vector<64x32xf32>
    %256 = vector.broadcast %238 : vector<64x1xf32> to vector<64x32xf32>
    %257 = arith.mulf %255, %256 : vector<64x32xf32>
    %258 = vector.broadcast %239 : vector<64x1xf32> to vector<64x32xf32>
    %259 = arith.addf %257, %258 : vector<64x32xf32>
    %cst_97 = arith.constant 0.000000e+00 : f32
    %260 = vector.broadcast %cst_97 : f32 to vector<64x32xf32>
    %261 = arith.maximumf %259, %260 : vector<64x32xf32>
    %262 = tpu.iota {dimensions = array<i32: 0>} : vector<32x2xi32>
    %263 = tpu.iota {dimensions = array<i32: 1>} : vector<32x2xi32>
    %c4_i32_98 = arith.constant 4 : i32
    %264 = vector.broadcast %c4_i32_98 : i32 to vector<32x2xi32>
    %265 = arith.shrsi %262, %264 : vector<32x2xi32>
    %266 = arith.cmpi eq, %265, %263 : vector<32x2xi32>
    %cst_99 = arith.constant 6.250000e-02 : f32
    %cst_100 = arith.constant 0.000000e+00 : f32
    %267 = vector.broadcast %cst_99 : f32 to vector<32x2xf32>
    %268 = vector.broadcast %cst_100 : f32 to vector<32x2xf32>
    %269 = arith.select %266, %267, %268 : vector<32x2xi1>, vector<32x2xf32>
    %cst_101 = arith.constant dense<0.000000e+00> : vector<64x2xf32>
    %270 = tpu.matmul %261, %269, %cst_101 {dimension_numbers = #tpu.dot_dimension_numbers<[1], [0], [0], [1], [0, 0, 1, 1], [], []>} : vector<64x32xf32>, vector<32x2xf32>, vector<64x2xf32> -> vector<64x2xf32>
    %c0_102 = arith.constant 0 : index
    %c0_103 = arith.constant 0 : index
    %271 = vector.load %arg9[%c0_102, %c0_103] : memref<128x64xf32, #tpu.memory_space<vmem>>, vector<128x64xf32>
    %cst_104 = arith.constant dense<0.000000e+00> : vector<128x2xf32>
    %272 = tpu.matmul %271, %270, %cst_104 {dimension_numbers = #tpu.dot_dimension_numbers<[1], [0], [0], [1], [0, 0, 1, 1], [], []>} : vector<128x64xf32>, vector<64x2xf32>, vector<128x2xf32> -> vector<128x2xf32>
    %c0_105 = arith.constant 0 : index
    %c0_106 = arith.constant 0 : index
    %273 = vector.load %arg10[%c0_105, %c0_106] : memref<128x1xf32, #tpu.memory_space<vmem>>, vector<128x1xf32>
    %274 = vector.broadcast %273 : vector<128x1xf32> to vector<128x2xf32>
    %275 = arith.addf %272, %274 : vector<128x2xf32>
    %c0_107 = arith.constant 0 : index
    %c0_108 = arith.constant 0 : index
    %276 = vector.load %arg11[%c0_107, %c0_108] : memref<128x2xf32, #tpu.memory_space<vmem>>, vector<128x2xf32>
    tpu.vector_store %arg11[%c0_107, %c0_108], %275 {strides = array<i32>} : memref<128x2xf32, #tpu.memory_space<vmem>>, vector<128x2xf32>,
    return
  }
}

</mosaic_0001>

<llo_original>
// kernel: _lambda_.4
$region0: #{_lambda_.4}
  #allocation0 [shape = 'u32[]', space=smem, size = 0x4, offset = 0x4, fixed_abs, tag = 'smem constant byte address 0x4 - core index']
  #allocation1 [shape = 'u32[144,128]{1,0:T(1,128)}', space=vmem, size = 0x12000, scoped, tag = 'internal scratch']
  %s0 = inlined_call_operand.vmem [shape: bf16[144,128], index: 0, kind: input, shape index: {}]
  %s1 = inlined_call_operand.vmem [shape: bf16[32,144], index: 1, kind: input, shape index: {}]
  %s2 = inlined_call_operand.vmem [shape: bf16[16,128], index: 2, kind: input, shape index: {}]
  %s3 = inlined_call_operand.vmem [shape: bf16[32,16], index: 3, kind: input, shape index: {}]
  %s4 = inlined_call_operand.vmem [shape: f32[32,1], index: 4, kind: input, shape index: {}, may-alias: {4,7}]
  %s5 = inlined_call_operand.vmem [shape: f32[32,1], index: 5, kind: input, shape index: {}, may-alias: {5,8}]
  %s6 = inlined_call_operand.vmem [shape: bf16[9,32,32], index: 6, kind: input, shape index: {}]
  %s7 = inlined_call_operand.vmem [shape: f32[32,1], index: 7, kind: input, shape index: {}, may-alias: {4,7}]
  %s8 = inlined_call_operand.vmem [shape: f32[32,1], index: 8, kind: input, shape index: {}, may-alias: {5,8}]
  %s9 = inlined_call_operand.vmem [shape: bf16[32,128], index: 9, kind: output, shape index: {}]
  %s10 = sld [smem:[#allocation0]]
  $region46: #{_lambda_.4} parent=0
    _
  %s12 = ssub.s32 1, %s10
  %s13 = scalar_select 0, %s12, %s10
  // Predicated region
  $region2: #{_lambda_.4} parent=0 // pred_check
    _
  $region3: #{_lambda_.4} parent=0 // pred_check_branch
    %15 = sbr.rel (0) target = $region5
  $region4: #{_lambda_.4} parent=0 // pred_region
    _
  $region5: #{_lambda_.4} parent=0 // pred_fallthru
    _
  // Predicated region
  $region6: #{_lambda_.4} parent=0 // pred_check
    _
  $region7: #{_lambda_.4} parent=0 // pred_check_branch
    %17 = sbr.rel (0) target = $region9
  $region8: #{_lambda_.4} parent=0 // pred_region
    _
  $region9: #{_lambda_.4} parent=0 // pred_fallthru
    _
  // Predicated region
  $region10: #{_lambda_.4} parent=0 // pred_check
    _
  $region11: #{_lambda_.4} parent=0 // pred_check_branch
    %19 = sbr.rel (0) target = $region13
  $region12: #{_lambda_.4} parent=0 // pred_region
    _
  $region13: #{_lambda_.4} parent=0 // pred_fallthru
    _
  // Predicated region
  $region14: #{_lambda_.4} parent=0 // pred_check
    _
  $region15: #{_lambda_.4} parent=0 // pred_check_branch
    %21 = sbr.rel (0) target = $region17
  $region16: #{_lambda_.4} parent=0 // pred_region
    _
  $region17: #{_lambda_.4} parent=0 // pred_fallthru
    _
  // Predicated region
  $region18: #{_lambda_.4} parent=0 // pred_check
    _
  $region19: #{_lambda_.4} parent=0 // pred_check_branch
    %23 = sbr.rel (0) target = $region21
  $region20: #{_lambda_.4} parent=0 // pred_region
    _
  $region21: #{_lambda_.4} parent=0 // pred_fallthru
    _
  // Predicated region
  $region22: #{_lambda_.4} parent=0 // pred_check
    _
  $region23: #{_lambda_.4} parent=0 // pred_check_branch
    %25 = sbr.rel (0) target = $region25
  $region24: #{_lambda_.4} parent=0 // pred_region
    _
  $region25: #{_lambda_.4} parent=0 // pred_fallthru
    _
  // Predicated region
  $region26: #{_lambda_.4} parent=0 // pred_check
    _
  $region27: #{_lambda_.4} parent=0 // pred_check_branch
    %27 = sbr.rel (0) target = $region29
  $region28: #{_lambda_.4} parent=0 // pred_region
    _
  $region29: #{_lambda_.4} parent=0 // pred_fallthru
    _
  // Predicated region
  $region30: #{_lambda_.4} parent=0 // pred_check
    _
  $region31: #{_lambda_.4} parent=0 // pred_check_branch
    %29 = sbr.rel (0) target = $region33
  $region32: #{_lambda_.4} parent=0 // pred_region
    _
  $region33: #{_lambda_.4} parent=0 // pred_fallthru
    _
  // Predicated region
  $region34: #{_lambda_.4} parent=0 // pred_check
    _
  $region35: #{_lambda_.4} parent=0 // pred_check_branch
    %31 = sbr.rel (0) target = $region37
  $region36: #{_lambda_.4} parent=0 // pred_region
    _
  $region37: #{_lambda_.4} parent=0 // pred_fallthru
    _
  %v33 = vld [vmem:[%s1] sm:$0xff]
  %v34 = vld [vmem:[%s1 + $0x8] sm:$0xff]
  %v35 = vld [vmem:[%s1 + $0x10] sm:$0xff]
  %v36 = vld [vmem:[%s1 + $0x18] sm:$0xff]
  %v37 = vld [vmem:[%s0] sm:$0xf]
  %v38 = vld [vmem:[%s0 + $0x4] sm:$0xf]
  %v39 = vld [vmem:[%s0 + $0x8] sm:$0xf]
  %v40 = vld [vmem:[%s0 + $0xc] sm:$0xf]
  %v41 = vld [vmem:[%s0 + $0x10] sm:$0xf]
  %v42 = vld [vmem:[%s0 + $0x14] sm:$0xf]
  %v43 = vld [vmem:[%s0 + $0x18] sm:$0xf]
  %v44 = vld [vmem:[%s0 + $0x1c] sm:$0xf]
  %v45 = vld [vmem:[%s0 + $0x20] sm:$0xf]
  %v46 = vld [vmem:[%s0 + $0x24] sm:$0xf]
  %v47 = vld [vmem:[%s0 + $0x28] sm:$0xf]
  %v48 = vld [vmem:[%s0 + $0x2c] sm:$0xf]
  %v49 = vld [vmem:[%s0 + $0x30] sm:$0xf]
  %v50 = vld [vmem:[%s0 + $0x34] sm:$0xf]
  %v51 = vld [vmem:[%s0 + $0x38] sm:$0xf]
  %v52 = vld [vmem:[%s0 + $0x3c] sm:$0xf]
  %v53 = vld [vmem:[%s0 + $0x40] sm:$0xf]
  %v54 = vld [vmem:[%s0 + $0x44] sm:$0xf]
  %v59 = vunpack.c.l.b16 %v33
  %v60 = vunpack.c.h.b16 %v33
  %v61 = vunpack.c.l.b16 %v34
  %v62 = vunpack.c.h.b16 %v34
  %v63 = vunpack.c.l.b16 %v35
  %v64 = vunpack.c.h.b16 %v35
  %v65 = vunpack.c.l.b16 %v36
  %v66 = vunpack.c.h.b16 %v36
  %v67 = vpack.c.b16 %v61, %v59
  %v68 = vpack.c.b16 %v62, %v60
  %v69 = vpack.c.b16 %v65, %v63
  %v70 = vpack.c.b16 %v66, %v64
  %v91 = vunpack.c.l.b16 %v37
  %v92 = vunpack.c.l.b16 %v38
  %v93 = vunpack.c.l.b16 %v39
  %v94 = vunpack.c.l.b16 %v40
  %v95 = vunpack.c.l.b16 %v41
  %v96 = vunpack.c.l.b16 %v42
  %v97 = vunpack.c.l.b16 %v43
  %v98 = vunpack.c.l.b16 %v44
  %v99 = vunpack.c.l.b16 %v45
  %v100 = vunpack.c.l.b16 %v46
  %v101 = vunpack.c.l.b16 %v47
  %v102 = vunpack.c.l.b16 %v48
  %v103 = vunpack.c.l.b16 %v49
  %v104 = vunpack.c.l.b16 %v50
  %v105 = vunpack.c.l.b16 %v51
  %v106 = vunpack.c.l.b16 %v52
  %v107 = vunpack.c.l.b16 %v53
  %v108 = vunpack.c.l.b16 %v54
  %v109 = vpack.c.b16 %v92, %v91
  %v110 = vpack.c.b16 %v94, %v93
  %v111 = vpack.c.b16 %v96, %v95
  %v112 = vpack.c.b16 %v98, %v97
  %v113 = vpack.c.b16 %v100, %v99
  %v114 = vpack.c.b16 %v102, %v101
  %v115 = vpack.c.b16 %v104, %v103
  %v116 = vpack.c.b16 %v106, %v105
  %v117 = vpack.c.b16 %v108, %v107
  %vm127 = vcmask 130048
  %v129 = vsel %vm127, %v68, 0
  %v132 = vsel %vm127, %v70, 0
  %134 = vmatprep.subr.bf16.mxu0 0
  %135 = vmatpush1.bf16.msra.mxu0 %v116
  %136 = vmatprep.subr.bf16.mxu0 0
  %137 = vmatpush1.bf16.msra.mxu0 %v115
  %138 = vmatprep.subr.bf16.mxu0 0
  %139 = vmatpush1.bf16.msra.mxu0 %v114
  %140 = vmatprep.subr.bf16.mxu0 0
  %141 = vmatpush1.bf16.msra.mxu0 %v113
  %142 = vmatprep.subr.bf16.mxu0 0
  %143 = vmatpush1.bf16.msra.mxu0 %v112
  %144 = vmatprep.subr.bf16.mxu0 0
  %145 = vmatpush1.bf16.msra.mxu0 %v111
  %146 = vmatprep.subr.bf16.mxu0 0
  %147 = vmatpush1.bf16.msra.mxu0 %v110
  %148 = vmatprep.subr.bf16.mxu0 0
  %149 = vmatpush1.bf16.msra.mxu0 %v109
  %150 = vmatprep.subr.bf16.mxu0 0
  %151 = vmatpush2.bf16.msra.mxu0 0
  %152 = vmatprep.subr.bf16.mxu0 0
  %153 = vmatpush2.bf16.msra.mxu0 0
  %154 = vmatprep.subr.bf16.mxu0 0
  %155 = vmatpush2.bf16.msra.mxu0 0
  %156 = vmatprep.subr.bf16.mxu0 0
  %157 = vmatpush2.bf16.msra.mxu0 0
  %158 = vmatprep.subr.bf16.mxu0 0
  %159 = vmatpush2.bf16.msra.mxu0 0
  %160 = vmatprep.subr.bf16.mxu0 0
  %161 = vmatpush2.bf16.msra.mxu0 0
  %162 = vmatprep.subr.bf16.mxu0 0
  %163 = vmatpush2.bf16.msra.mxu0 0
  %164 = vmatprep.subr.bf16.mxu0 0
  %165 = vmatpush2.bf16.msra.mxu0 %v117
  %166 = vmatprep.mubr.bf16.mxu0 %v129
  %167 = vmatmul.mubr.bf16.gmra.mxu0 %v67
  %v168 = vpop.f32.mrf.mxu0
  %v169 = vadd.f32 0.0, %v168
  %v170 = vpop.f32.mrf.mxu0
  %v171 = vpop.f32.mrf.mxu0
  %v172 = vadd.f32 0.0, %v171
  %v173 = vpop.f32.mrf.mxu0
  %174 = vmatprep.mubr.bf16.mxu0 %v132
  %175 = vmatmul.mubr.bf16.gmra.mxu0 %v69
  %v176 = vpop.f32.mrf.mxu0
  %v177 = vadd.f32 0.0, %v176
  %v178 = vpop.f32.mrf.mxu0
  %v179 = vpop.f32.mrf.mxu0
  %v180 = vadd.f32 0.0, %v179
  %v181 = vpop.f32.mrf.mxu0
  %182 = vdwg.mxu0
  %v183 = vld [vmem:[%s4] sm:$0xff]
  %v184 = vld [vmem:[%s4 + $0x8] sm:$0xff]
  %v185 = vld [vmem:[%s4 + $0x10] sm:$0xff]
  %v186 = vld [vmem:[%s4 + $0x18] sm:$0xff]
  %v187 = vld [vmem:[%s5] sm:$0xff]
  %v188 = vld [vmem:[%s5 + $0x8] sm:$0xff]
  %v189 = vld [vmem:[%s5 + $0x10] sm:$0xff]
  %v190 = vld [vmem:[%s5 + $0x18] sm:$0xff]
  %191 = vadd.xlane.f32.xlu0 %v169
  %v192 = vpop.xlane.xlu0 %191
  %193 = vadd.xlane.f32.xlu0 %v172
  %v194 = vpop.xlane.xlu0 %193
  %195 = vadd.xlane.f32.xlu0 %v177
  %v196 = vpop.xlane.xlu0 %195
  %197 = vadd.xlane.f32.xlu0 %v180
  %v198 = vpop.xlane.xlu0 %197
  %v199 = vrcp.pop 128.0
  %v200 = vmul.f32 %v192, %v199
  %v201 = vmul.f32 %v194, %v199
  %v202 = vmul.f32 %v196, %v199
  %v203 = vmul.f32 %v198, %v199
  %v204 = vsub.f32 %v169, %v200
  %v205 = vsub.f32 %v172, %v201
  %v206 = vsub.f32 %v177, %v202
  %v207 = vsub.f32 %v180, %v203
  %v208 = vmul.f32 %v204, %v204
  %v209 = vmul.f32 %v205, %v205
  %v210 = vmul.f32 %v206, %v206
  %v211 = vmul.f32 %v207, %v207
  %212 = vadd.xlane.f32.xlu0 %v208
  %v213 = vpop.xlane.xlu0 %212
  %214 = vadd.xlane.f32.xlu0 %v209
  %v215 = vpop.xlane.xlu0 %214
  %216 = vadd.xlane.f32.xlu0 %v210
  %v217 = vpop.xlane.xlu0 %216
  %218 = vadd.xlane.f32.xlu0 %v211
  %v219 = vpop.xlane.xlu0 %218
  %v220 = vmul.f32 %v213, %v199
  %v221 = vmul.f32 %v215, %v199
  %v222 = vmul.f32 %v217, %v199
  %v223 = vmul.f32 %v219, %v199
  %v224 = vadd.f32 %v220, 1e-05
  %v225 = vadd.f32 %v221, 1e-05
  %v226 = vadd.f32 %v222, 1e-05
  %v227 = vadd.f32 %v223, 1e-05
  %v228 = vrsqrt.pop %v224
  %v229 = vrsqrt.pop %v225
  %v230 = vrsqrt.pop %v226
  %v231 = vrsqrt.pop %v227
  %v232 = vmul.f32 %v204, %v228
  %v233 = vmul.f32 %v205, %v229
  %v234 = vmul.f32 %v206, %v230
  %v235 = vmul.f32 %v207, %v231
  %237 = vset.pattern.permute.xlu0 0
  %238 = vperm.xlu0 %237, %v183
  %v239 = vpop.permute.xlu0 %238
  %242 = vset.pattern.permute.xlu0 0
  %243 = vperm.xlu0 %242, %v184
  %v244 = vpop.permute.xlu0 %243
  %247 = vset.pattern.permute.xlu0 0
  %248 = vperm.xlu0 %247, %v185
  %v249 = vpop.permute.xlu0 %248
  %252 = vset.pattern.permute.xlu0 0
  %253 = vperm.xlu0 %252, %v186
  %v254 = vpop.permute.xlu0 %253
  %v256 = vmul.f32 %v232, %v239
  %v257 = vmul.f32 %v233, %v244
  %v258 = vmul.f32 %v234, %v249
  %v259 = vmul.f32 %v235, %v254
  %261 = vset.pattern.permute.xlu0 0
  %262 = vperm.xlu0 %261, %v187
  %v263 = vpop.permute.xlu0 %262
  %266 = vset.pattern.permute.xlu0 0
  %267 = vperm.xlu0 %266, %v188
  %v268 = vpop.permute.xlu0 %267
  %271 = vset.pattern.permute.xlu0 0
  %272 = vperm.xlu0 %271, %v189
  %v273 = vpop.permute.xlu0 %272
  %276 = vset.pattern.permute.xlu0 0
  %277 = vperm.xlu0 %276, %v190
  %v278 = vpop.permute.xlu0 %277
  %v280 = vadd.f32 %v256, %v263
  %v281 = vadd.f32 %v257, %v268
  %v282 = vadd.f32 %v258, %v273
  %v283 = vadd.f32 %v259, %v278
  %v284 = vmax.f32 %v280, 0.0
  %v285 = vmax.f32 %v281, 0.0
  %v286 = vmax.f32 %v282, 0.0
  %v287 = vmax.f32 %v283, 0.0
  %v288 = vlaneseq
  %v289 = vand.u32 %v288, 127
  %v290 = vand.u32 %v289, 7
  %v291 = vshra.s32 %v289, 3
  %v292 = vand.u32 %v291, 7
  %vm293 = vcmp.ge.s32.totalorder %v292, 1
  %vm294 = vcmp.lt.s32.totalorder %v292, 9
  %vm295 = vmand %vm293, %vm294
  %vm296 = vcmp.ge.s32.totalorder %v290, 1
  %vm297 = vmand %vm295, %vm296
  %vm298 = vcmp.lt.s32.totalorder %v290, 9
  %vm299 = vmand %vm297, %vm298
  %300 = vrot.lane.b32.xlu0 %v284, 9
  %v301 = vpop.permute.xlu0 %300
  %302 = vrot.lane.b32.xlu0 %v285, 9
  %v303 = vpop.permute.xlu0 %302
  %304 = vrot.lane.b32.xlu0 %v286, 9
  %v305 = vpop.permute.xlu0 %304
  %306 = vrot.lane.b32.xlu0 %v287, 9
  %v307 = vpop.permute.xlu0 %306
  %v308 = vsel %vm299, 1, 0
  %vm309 = vcmp.eq.s32.totalorder %v308, 1
  %v310 = vsel %vm309, %v301, 0.0
  %v311 = vsel %vm309, %v303, 0.0
  %v312 = vsel %vm309, %v305, 0.0
  %v313 = vsel %vm309, %v307, 0.0
  %v314 = vld [vmem:[%s6] sm:$0xf]
  %v315 = vld [vmem:[%s6 + $0x4] sm:$0xf]
  %v316 = vld [vmem:[%s6 + $0x8] sm:$0xf]
  %v317 = vld [vmem:[%s6 + $0xc] sm:$0xf]
  %v318 = vpack.c.bf16 %v311, %v310
  %v319 = vpack.c.bf16 %v313, %v312
  %vm320 = vcmp.ge.s32.totalorder %v290, 0
  %vm321 = vmand %vm295, %vm320
  %vm322 = vcmp.lt.s32.totalorder %v290, 8
  %vm323 = vmand %vm321, %vm322
  %324 = vrot.lane.b32.xlu0 %v284, 8
  %v325 = vpop.permute.xlu0 %324
  %326 = vrot.lane.b32.xlu0 %v285, 8
  %v327 = vpop.permute.xlu0 %326
  %328 = vrot.lane.b32.xlu0 %v286, 8
  %v329 = vpop.permute.xlu0 %328
  %330 = vrot.lane.b32.xlu0 %v287, 8
  %v331 = vpop.permute.xlu0 %330
  %v332 = vsel %vm323, 1, 0
  %vm333 = vcmp.eq.s32.totalorder %v332, 1
  %v334 = vsel %vm333, %v325, 0.0
  %v335 = vsel %vm333, %v327, 0.0
  %v336 = vsel %vm333, %v329, 0.0
  %v337 = vsel %vm333, %v331, 0.0
  %s338 = scalar_lea.vmem %s6, 16
  %v339 = vld [vmem:[%s338] sm:$0xf]
  %v340 = vld [vmem:[%s338 + $0x4] sm:$0xf]
  %v341 = vld [vmem:[%s338 + $0x8] sm:$0xf]
  %v342 = vld [vmem:[%s338 + $0xc] sm:$0xf]
  %v343 = vpack.c.bf16 %v335, %v334
  %v344 = vpack.c.bf16 %v337, %v336
  %v349 = vunpack.c.l.b16 %v339
  %v350 = vunpack.c.l.b16 %v340
  %v351 = vunpack.c.l.b16 %v341
  %v352 = vunpack.c.l.b16 %v342
  %v353 = vpack.c.b16 %v350, %v349
  %v354 = vpack.c.b16 %v352, %v351
  %vm355 = vcmask 261120
  %v357 = vsel %vm355, %v353, 0
  %v360 = vsel %vm355, %v354, 0
  %362 = vmatprep.subr.bf16.mxu0 0
  %363 = vmatpush1.bf16.msra.mxu0 0
  %364 = vmatprep.subr.bf16.mxu0 0
  %365 = vmatpush1.bf16.msra.mxu0 0
  %366 = vmatprep.subr.bf16.mxu0 0
  %367 = vmatpush1.bf16.msra.mxu0 0
  %368 = vmatprep.subr.bf16.mxu0 0
  %369 = vmatpush1.bf16.msra.mxu0 0
  %370 = vmatprep.subr.bf16.mxu0 0
  %371 = vmatpush1.bf16.msra.mxu0 0
  %372 = vmatprep.subr.bf16.mxu0 0
  %373 = vmatpush1.bf16.msra.mxu0 0
  %374 = vmatprep.subr.bf16.mxu0 0
  %375 = vmatpush1.bf16.msra.mxu0 %v344
  %376 = vmatprep.subr.bf16.mxu0 0
  %377 = vmatpush1.bf16.msra.mxu0 %v343
  %378 = vmatprep.subr.bf16.mxu0 0
  %379 = vmatpush2.bf16.msra.mxu0 0
  %380 = vmatprep.subr.bf16.mxu0 0
  %381 = vmatpush2.bf16.msra.mxu0 0
  %382 = vmatprep.subr.bf16.mxu0 0
  %383 = vmatpush2.bf16.msra.mxu0 0
  %384 = vmatprep.subr.bf16.mxu0 0
  %385 = vmatpush2.bf16.msra.mxu0 0
  %386 = vmatprep.subr.bf16.mxu0 0
  %387 = vmatpush2.bf16.msra.mxu0 0
  %388 = vmatprep.subr.bf16.mxu0 0
  %389 = vmatpush2.bf16.msra.mxu0 0
  %390 = vmatprep.subr.bf16.mxu0 0
  %391 = vmatpush2.bf16.msra.mxu0 0
  %392 = vmatprep.subr.bf16.mxu0 0
  %393 = vmatpush2.bf16.msra.mxu0 0
  %394 = vmatprep.mubr.bf16.mxu0 0
  %395 = vmatmul.mubr.bf16.gmra.mxu0 %v357
  %v396 = vpop.f32.mrf.mxu0
  %v397 = vadd.f32 0.0, %v396
  %v398 = vpop.f32.mrf.mxu0
  %v399 = vpop.f32.mrf.mxu0
  %v400 = vadd.f32 0.0, %v399
  %v401 = vpop.f32.mrf.mxu0
  %402 = vmatprep.mubr.bf16.mxu0 0
  %403 = vmatmul.mubr.bf16.gmra.mxu0 %v360
  %v404 = vpop.f32.mrf.mxu0
  %v405 = vadd.f32 0.0, %v404
  %v406 = vpop.f32.mrf.mxu0
  %v407 = vpop.f32.mrf.mxu0
  %v408 = vadd.f32 0.0, %v407
  %v409 = vpop.f32.mrf.mxu0
  %410 = vdwg.mxu0
  %v415 = vunpack.c.l.b16 %v314
  %v416 = vunpack.c.l.b16 %v315
  %v417 = vunpack.c.l.b16 %v316
  %v418 = vunpack.c.l.b16 %v317
  %v419 = vpack.c.b16 %v416, %v415
  %v420 = vpack.c.b16 %v418, %v417
  %v422 = vsel %vm355, %v419, 0
  %v425 = vsel %vm355, %v420, 0
  %427 = vmatprep.subr.bf16.mxu0 0
  %428 = vmatpush1.bf16.msra.mxu0 0
  %429 = vmatprep.subr.bf16.mxu0 0
  %430 = vmatpush1.bf16.msra.mxu0 0
  %431 = vmatprep.subr.bf16.mxu0 0
  %432 = vmatpush1.bf16.msra.mxu0 0
  %433 = vmatprep.subr.bf16.mxu0 0
  %434 = vmatpush1.bf16.msra.mxu0 0
  %435 = vmatprep.subr.bf16.mxu0 0
  %436 = vmatpush1.bf16.msra.mxu0 0
  %437 = vmatprep.subr.bf16.mxu0 0
  %438 = vmatpush1.bf16.msra.mxu0 0
  %439 = vmatprep.subr.bf16.mxu0 0
  %440 = vmatpush1.bf16.msra.mxu0 %v319
  %441 = vmatprep.subr.bf16.mxu0 0
  %442 = vmatpush1.bf16.msra.mxu0 %v318
  %443 = vmatprep.subr.bf16.mxu0 0
  %444 = vmatpush2.bf16.msra.mxu0 0
  %445 = vmatprep.subr.bf16.mxu0 0
  %446 = vmatpush2.bf16.msra.mxu0 0
  %447 = vmatprep.subr.bf16.mxu0 0
  %448 = vmatpush2.bf16.msra.mxu0 0
  %449 = vmatprep.subr.bf16.mxu0 0
  %450 = vmatpush2.bf16.msra.mxu0 0
  %451 = vmatprep.subr.bf16.mxu0 0
  %452 = vmatpush2.bf16.msra.mxu0 0
  %453 = vmatprep.subr.bf16.mxu0 0
  %454 = vmatpush2.bf16.msra.mxu0 0
  %455 = vmatprep.subr.bf16.mxu0 0
  %456 = vmatpush2.bf16.msra.mxu0 0
  %457 = vmatprep.subr.bf16.mxu0 0
  %458 = vmatpush2.bf16.msra.mxu0 0
  %459 = vmatprep.mubr.bf16.mxu0 0
  %460 = vmatmul.mubr.bf16.gmra.mxu0 %v422
  %v461 = vpop.f32.mrf.mxu0
  %v462 = vadd.f32 %v397, %v461
  %v463 = vpop.f32.mrf.mxu0
  %v464 = vpop.f32.mrf.mxu0
  %v465 = vadd.f32 %v400, %v464
  %v466 = vpop.f32.mrf.mxu0
  %467 = vmatprep.mubr.bf16.mxu0 0
  %468 = vmatmul.mubr.bf16.gmra.mxu0 %v425
  %v469 = vpop.f32.mrf.mxu0
  %v470 = vadd.f32 %v405, %v469
  %v471 = vpop.f32.mrf.mxu0
  %v472 = vpop.f32.mrf.mxu0
  %v473 = vadd.f32 %v408, %v472
  %v474 = vpop.f32.mrf.mxu0
  %475 = vdwg.mxu0
  %vm476 = vcmp.ge.s32.totalorder %v290, 4294967295
  %vm477 = vmand %vm295, %vm476
  %vm478 = vcmp.lt.s32.totalorder %v290, 7
  %vm479 = vmand %vm477, %vm478
  %480 = vrot.lane.b32.xlu0 %v284, 7
  %v481 = vpop.permute.xlu0 %480
  %482 = vrot.lane.b32.xlu0 %v285, 7
  %v483 = vpop.permute.xlu0 %482
  %484 = vrot.lane.b32.xlu0 %v286, 7
  %v485 = vpop.permute.xlu0 %484
  %486 = vrot.lane.b32.xlu0 %v287, 7
  %v487 = vpop.permute.xlu0 %486
  %v488 = vsel %vm479, 1, 0
  %vm489 = vcmp.eq.s32.totalorder %v488, 1
  %v490 = vsel %vm489, %v481, 0.0
  %v491 = vsel %vm489, %v483, 0.0
  %v492 = vsel %vm489, %v485, 0.0
  %v493 = vsel %vm489, %v487, 0.0
  %s494 = scalar_lea.vmem %s6, 32
  %v495 = vld [vmem:[%s494] sm:$0xf]
  %v496 = vld [vmem:[%s494 + $0x4] sm:$0xf]
  %v497 = vld [vmem:[%s494 + $0x8] sm:$0xf]
  %v498 = vld [vmem:[%s494 + $0xc] sm:$0xf]
  %v499 = vpack.c.bf16 %v491, %v490
  %v500 = vpack.c.bf16 %v493, %v492
  %v505 = vunpack.c.l.b16 %v495
  %v506 = vunpack.c.l.b16 %v496
  %v507 = vunpack.c.l.b16 %v497
  %v508 = vunpack.c.l.b16 %v498
  %v509 = vpack.c.b16 %v506, %v505
  %v510 = vpack.c.b16 %v508, %v507
  %v512 = vsel %vm355, %v509, 0
  %v515 = vsel %vm355, %v510, 0
  %517 = vmatprep.subr.bf16.mxu0 0
  %518 = vmatpush1.bf16.msra.mxu0 0
  %519 = vmatprep.subr.bf16.mxu0 0
  %520 = vmatpush1.bf16.msra.mxu0 0
  %521 = vmatprep.subr.bf16.mxu0 0
  %522 = vmatpush1.bf16.msra.mxu0 0
  %523 = vmatprep.subr.bf16.mxu0 0
  %524 = vmatpush1.bf16.msra.mxu0 0
  %525 = vmatprep.subr.bf16.mxu0 0
  %526 = vmatpush1.bf16.msra.mxu0 0
  %527 = vmatprep.subr.bf16.mxu0 0
  %528 = vmatpush1.bf16.msra.mxu0 0
  %529 = vmatprep.subr.bf16.mxu0 0
  %530 = vmatpush1.bf16.msra.mxu0 %v500
  %531 = vmatprep.subr.bf16.mxu0 0
  %532 = vmatpush1.bf16.msra.mxu0 %v499
  %533 = vmatprep.subr.bf16.mxu0 0
  %534 = vmatpush2.bf16.msra.mxu0 0
  %535 = vmatprep.subr.bf16.mxu0 0
  %536 = vmatpush2.bf16.msra.mxu0 0
  %537 = vmatprep.subr.bf16.mxu0 0
  %538 = vmatpush2.bf16.msra.mxu0 0
  %539 = vmatprep.subr.bf16.mxu0 0
  %540 = vmatpush2.bf16.msra.mxu0 0
  %541 = vmatprep.subr.bf16.mxu0 0
  %542 = vmatpush2.bf16.msra.mxu0 0
  %543 = vmatprep.subr.bf16.mxu0 0
  %544 = vmatpush2.bf16.msra.mxu0 0
  %545 = vmatprep.subr.bf16.mxu0 0
  %546 = vmatpush2.bf16.msra.mxu0 0
  %547 = vmatprep.subr.bf16.mxu0 0
  %548 = vmatpush2.bf16.msra.mxu0 0
  %549 = vmatprep.mubr.bf16.mxu0 0
  %550 = vmatmul.mubr.bf16.gmra.mxu0 %v512
  %v551 = vpop.f32.mrf.mxu0
  %v552 = vadd.f32 0.0, %v551
  %v553 = vpop.f32.mrf.mxu0
  %v554 = vpop.f32.mrf.mxu0
  %v555 = vadd.f32 0.0, %v554
  %v556 = vpop.f32.mrf.mxu0
  %557 = vmatprep.mubr.bf16.mxu0 0
  %558 = vmatmul.mubr.bf16.gmra.mxu0 %v515
  %v559 = vpop.f32.mrf.mxu0
  %v560 = vadd.f32 0.0, %v559
  %v561 = vpop.f32.mrf.mxu0
  %v562 = vpop.f32.mrf.mxu0
  %v563 = vadd.f32 0.0, %v562
  %v564 = vpop.f32.mrf.mxu0
  %565 = vdwg.mxu0
  %v566 = vadd.f32 %v462, %v552
  %v567 = vadd.f32 %v465, %v555
  %v568 = vadd.f32 %v470, %v560
  %v569 = vadd.f32 %v473, %v563
  %vm570 = vcmp.ge.s32.totalorder %v292, 0
  %vm571 = vcmp.lt.s32.totalorder %v292, 8
  %vm572 = vmand %vm570, %vm571
  %vm573 = vmand %vm572, %vm296
  %vm574 = vmand %vm573, %vm298
  %575 = vrot.lane.b32.xlu0 %v284, 1
  %v576 = vpop.permute.xlu0 %575
  %577 = vrot.lane.b32.xlu0 %v285, 1
  %v578 = vpop.permute.xlu0 %577
  %579 = vrot.lane.b32.xlu0 %v286, 1
  %v580 = vpop.permute.xlu0 %579
  %581 = vrot.lane.b32.xlu0 %v287, 1
  %v582 = vpop.permute.xlu0 %581
  %v583 = vsel %vm574, 1, 0
  %vm584 = vcmp.eq.s32.totalorder %v583, 1
  %v585 = vsel %vm584, %v576, 0.0
  %v586 = vsel %vm584, %v578, 0.0
  %v587 = vsel %vm584, %v580, 0.0
  %v588 = vsel %vm584, %v582, 0.0
  %s589 = scalar_lea.vmem %s6, 48
  %v590 = vld [vmem:[%s589] sm:$0xf]
  %v591 = vld [vmem:[%s589 + $0x4] sm:$0xf]
  %v592 = vld [vmem:[%s589 + $0x8] sm:$0xf]
  %v593 = vld [vmem:[%s589 + $0xc] sm:$0xf]
  %v594 = vpack.c.bf16 %v586, %v585
  %v595 = vpack.c.bf16 %v588, %v587
  %v600 = vunpack.c.l.b16 %v590
  %v601 = vunpack.c.l.b16 %v591
  %v602 = vunpack.c.l.b16 %v592
  %v603 = vunpack.c.l.b16 %v593
  %v604 = vpack.c.b16 %v601, %v600
  %v605 = vpack.c.b16 %v603, %v602
  %v607 = vsel %vm355, %v604, 0
  %v610 = vsel %vm355, %v605, 0
  %612 = vmatprep.subr.bf16.mxu0 0
  %613 = vmatpush1.bf16.msra.mxu0 0
  %614 = vmatprep.subr.bf16.mxu0 0
  %615 = vmatpush1.bf16.msra.mxu0 0
  %616 = vmatprep.subr.bf16.mxu0 0
  %617 = vmatpush1.bf16.msra.mxu0 0
  %618 = vmatprep.subr.bf16.mxu0 0
  %619 = vmatpush1.bf16.msra.mxu0 0
  %620 = vmatprep.subr.bf16.mxu0 0
  %621 = vmatpush1.bf16.msra.mxu0 0
  %622 = vmatprep.subr.bf16.mxu0 0
  %623 = vmatpush1.bf16.msra.mxu0 0
  %624 = vmatprep.subr.bf16.mxu0 0
  %625 = vmatpush1.bf16.msra.mxu0 %v595
  %626 = vmatprep.subr.bf16.mxu0 0
  %627 = vmatpush1.bf16.msra.mxu0 %v594
  %628 = vmatprep.subr.bf16.mxu0 0
  %629 = vmatpush2.bf16.msra.mxu0 0
  %630 = vmatprep.subr.bf16.mxu0 0
  %631 = vmatpush2.bf16.msra.mxu0 0
  %632 = vmatprep.subr.bf16.mxu0 0
  %633 = vmatpush2.bf16.msra.mxu0 0
  %634 = vmatprep.subr.bf16.mxu0 0
  %635 = vmatpush2.bf16.msra.mxu0 0
  %636 = vmatprep.subr.bf16.mxu0 0
  %637 = vmatpush2.bf16.msra.mxu0 0
  %638 = vmatprep.subr.bf16.mxu0 0
  %639 = vmatpush2.bf16.msra.mxu0 0
  %640 = vmatprep.subr.bf16.mxu0 0
  %641 = vmatpush2.bf16.msra.mxu0 0
  %642 = vmatprep.subr.bf16.mxu0 0
  %643 = vmatpush2.bf16.msra.mxu0 0
  %644 = vmatprep.mubr.bf16.mxu0 0
  %645 = vmatmul.mubr.bf16.gmra.mxu0 %v607
  %v646 = vpop.f32.mrf.mxu0
  %v647 = vadd.f32 0.0, %v646
  %v648 = vpop.f32.mrf.mxu0
  %v649 = vpop.f32.mrf.mxu0
  %v650 = vadd.f32 0.0, %v649
  %v651 = vpop.f32.mrf.mxu0
  %652 = vmatprep.mubr.bf16.mxu0 0
  %653 = vmatmul.mubr.bf16.gmra.mxu0 %v610
  %v654 = vpop.f32.mrf.mxu0
  %v655 = vadd.f32 0.0, %v654
  %v656 = vpop.f32.mrf.mxu0
  %v657 = vpop.f32.mrf.mxu0
  %v658 = vadd.f32 0.0, %v657
  %v659 = vpop.f32.mrf.mxu0
  %660 = vdwg.mxu0
  %v661 = vadd.f32 %v566, %v647
  %v662 = vadd.f32 %v567, %v650
  %v663 = vadd.f32 %v568, %v655
  %v664 = vadd.f32 %v569, %v658
  %s665 = scalar_lea.vmem %s6, 64
  %v666 = vld [vmem:[%s665] sm:$0xf]
  %v667 = vld [vmem:[%s665 + $0x4] sm:$0xf]
  %v668 = vld [vmem:[%s665 + $0x8] sm:$0xf]
  %v669 = vld [vmem:[%s665 + $0xc] sm:$0xf]
  %v670 = vpack.c.bf16 %v285, %v284
  %v671 = vpack.c.bf16 %v287, %v286
  %v676 = vunpack.c.l.b16 %v666
  %v677 = vunpack.c.l.b16 %v667
  %v678 = vunpack.c.l.b16 %v668
  %v679 = vunpack.c.l.b16 %v669
  %v680 = vpack.c.b16 %v677, %v676
  %v681 = vpack.c.b16 %v679, %v678
  %v683 = vsel %vm355, %v680, 0
  %v686 = vsel %vm355, %v681, 0
  %688 = vmatprep.subr.bf16.mxu0 0
  %689 = vmatpush1.bf16.msra.mxu0 0
  %690 = vmatprep.subr.bf16.mxu0 0
  %691 = vmatpush1.bf16.msra.mxu0 0
  %692 = vmatprep.subr.bf16.mxu0 0
  %693 = vmatpush1.bf16.msra.mxu0 0
  %694 = vmatprep.subr.bf16.mxu0 0
  %695 = vmatpush1.bf16.msra.mxu0 0
  %696 = vmatprep.subr.bf16.mxu0 0
  %697 = vmatpush1.bf16.msra.mxu0 0
  %698 = vmatprep.subr.bf16.mxu0 0
  %699 = vmatpush1.bf16.msra.mxu0 0
  %700 = vmatprep.subr.bf16.mxu0 0
  %701 = vmatpush1.bf16.msra.mxu0 %v671
  %702 = vmatprep.subr.bf16.mxu0 0
  %703 = vmatpush1.bf16.msra.mxu0 %v670
  %704 = vmatprep.subr.bf16.mxu0 0
  %705 = vmatpush2.bf16.msra.mxu0 0
  %706 = vmatprep.subr.bf16.mxu0 0
  %707 = vmatpush2.bf16.msra.mxu0 0
  %708 = vmatprep.subr.bf16.mxu0 0
  %709 = vmatpush2.bf16.msra.mxu0 0
  %710 = vmatprep.subr.bf16.mxu0 0
  %711 = vmatpush2.bf16.msra.mxu0 0
  %712 = vmatprep.subr.bf16.mxu0 0
  %713 = vmatpush2.bf16.msra.mxu0 0
  %714 = vmatprep.subr.bf16.mxu0 0
  %715 = vmatpush2.bf16.msra.mxu0 0
  %716 = vmatprep.subr.bf16.mxu0 0
  %717 = vmatpush2.bf16.msra.mxu0 0
  %718 = vmatprep.subr.bf16.mxu0 0
  %719 = vmatpush2.bf16.msra.mxu0 0
  %720 = vmatprep.mubr.bf16.mxu0 0
  %721 = vmatmul.mubr.bf16.gmra.mxu0 %v683
  %v722 = vpop.f32.mrf.mxu0
  %v723 = vadd.f32 0.0, %v722
  %v724 = vpop.f32.mrf.mxu0
  %v725 = vpop.f32.mrf.mxu0
  %v726 = vadd.f32 0.0, %v725
  %v727 = vpop.f32.mrf.mxu0
  %728 = vmatprep.mubr.bf16.mxu0 0
  %729 = vmatmul.mubr.bf16.gmra.mxu0 %v686
  %v730 = vpop.f32.mrf.mxu0
  %v731 = vadd.f32 0.0, %v730
  %v732 = vpop.f32.mrf.mxu0
  %v733 = vpop.f32.mrf.mxu0
  %v734 = vadd.f32 0.0, %v733
  %v735 = vpop.f32.mrf.mxu0
  %736 = vdwg.mxu0
  %v737 = vadd.f32 %v661, %v723
  %v738 = vadd.f32 %v662, %v726
  %v739 = vadd.f32 %v663, %v731
  %v740 = vadd.f32 %v664, %v734
  %vm741 = vmand %vm572, %vm476
  %vm742 = vmand %vm741, %vm478
  %743 = vrot.lane.b32.xlu0 %v284, 127
  %v744 = vpop.permute.xlu0 %743
  %745 = vrot.lane.b32.xlu0 %v285, 127
  %v746 = vpop.permute.xlu0 %745
  %747 = vrot.lane.b32.xlu0 %v286, 127
  %v748 = vpop.permute.xlu0 %747
  %749 = vrot.lane.b32.xlu0 %v287, 127
  %v750 = vpop.permute.xlu0 %749
  %v751 = vsel %vm742, 1, 0
  %vm752 = vcmp.eq.s32.totalorder %v751, 1
  %v753 = vsel %vm752, %v744, 0.0
  %v754 = vsel %vm752, %v746, 0.0
  %v755 = vsel %vm752, %v748, 0.0
  %v756 = vsel %vm752, %v750, 0.0
  %s757 = scalar_lea.vmem %s6, 80
  %v758 = vld [vmem:[%s757] sm:$0xf]
  %v759 = vld [vmem:[%s757 + $0x4] sm:$0xf]
  %v760 = vld [vmem:[%s757 + $0x8] sm:$0xf]
  %v761 = vld [vmem:[%s757 + $0xc] sm:$0xf]
  %v762 = vpack.c.bf16 %v754, %v753
  %v763 = vpack.c.bf16 %v756, %v755
  %v768 = vunpack.c.l.b16 %v758
  %v769 = vunpack.c.l.b16 %v759
  %v770 = vunpack.c.l.b16 %v760
  %v771 = vunpack.c.l.b16 %v761
  %v772 = vpack.c.b16 %v769, %v768
  %v773 = vpack.c.b16 %v771, %v770
  %v775 = vsel %vm355, %v772, 0
  %v778 = vsel %vm355, %v773, 0
  %780 = vmatprep.subr.bf16.mxu0 0
  %781 = vmatpush1.bf16.msra.mxu0 0
  %782 = vmatprep.subr.bf16.mxu0 0
  %783 = vmatpush1.bf16.msra.mxu0 0
  %784 = vmatprep.subr.bf16.mxu0 0
  %785 = vmatpush1.bf16.msra.mxu0 0
  %786 = vmatprep.subr.bf16.mxu0 0
  %787 = vmatpush1.bf16.msra.mxu0 0
  %788 = vmatprep.subr.bf16.mxu0 0
  %789 = vmatpush1.bf16.msra.mxu0 0
  %790 = vmatprep.subr.bf16.mxu0 0
  %791 = vmatpush1.bf16.msra.mxu0 0
  %792 = vmatprep.subr.bf16.mxu0 0
  %793 = vmatpush1.bf16.msra.mxu0 %v763
  %794 = vmatprep.subr.bf16.mxu0 0
  %795 = vmatpush1.bf16.msra.mxu0 %v762
  %796 = vmatprep.subr.bf16.mxu0 0
  %797 = vmatpush2.bf16.msra.mxu0 0
  %798 = vmatprep.subr.bf16.mxu0 0
  %799 = vmatpush2.bf16.msra.mxu0 0
  %800 = vmatprep.subr.bf16.mxu0 0
  %801 = vmatpush2.bf16.msra.mxu0 0
  %802 = vmatprep.subr.bf16.mxu0 0
  %803 = vmatpush2.bf16.msra.mxu0 0
  %804 = vmatprep.subr.bf16.mxu0 0
  %805 = vmatpush2.bf16.msra.mxu0 0
  %806 = vmatprep.subr.bf16.mxu0 0
  %807 = vmatpush2.bf16.msra.mxu0 0
  %808 = vmatprep.subr.bf16.mxu0 0
  %809 = vmatpush2.bf16.msra.mxu0 0
  %810 = vmatprep.subr.bf16.mxu0 0
  %811 = vmatpush2.bf16.msra.mxu0 0
  %812 = vmatprep.mubr.bf16.mxu0 0
  %813 = vmatmul.mubr.bf16.gmra.mxu0 %v775
  %v814 = vpop.f32.mrf.mxu0
  %v815 = vadd.f32 0.0, %v814
  %v816 = vpop.f32.mrf.mxu0
  %v817 = vpop.f32.mrf.mxu0
  %v818 = vadd.f32 0.0, %v817
  %v819 = vpop.f32.mrf.mxu0
  %820 = vmatprep.mubr.bf16.mxu0 0
  %821 = vmatmul.mubr.bf16.gmra.mxu0 %v778
  %v822 = vpop.f32.mrf.mxu0
  %v823 = vadd.f32 0.0, %v822
  %v824 = vpop.f32.mrf.mxu0
  %v825 = vpop.f32.mrf.mxu0
  %v826 = vadd.f32 0.0, %v825
  %v827 = vpop.f32.mrf.mxu0
  %828 = vdwg.mxu0
  %v829 = vadd.f32 %v737, %v815
  %v830 = vadd.f32 %v738, %v818
  %v831 = vadd.f32 %v739, %v823
  %v832 = vadd.f32 %v740, %v826
  %vm833 = vcmp.ge.s32.totalorder %v292, 4294967295
  %vm834 = vcmp.lt.s32.totalorder %v292, 7
  %vm835 = vmand %vm833, %vm834
  %vm836 = vmand %vm835, %vm296
  %vm837 = vmand %vm836, %vm298
  %838 = vrot.lane.b32.xlu0 %v284, 121
  %v839 = vpop.permute.xlu0 %838
  %840 = vrot.lane.b32.xlu0 %v285, 121
  %v841 = vpop.permute.xlu0 %840
  %842 = vrot.lane.b32.xlu0 %v286, 121
  %v843 = vpop.permute.xlu0 %842
  %844 = vrot.lane.b32.xlu0 %v287, 121
  %v845 = vpop.permute.xlu0 %844
  %v846 = vsel %vm837, 1, 0
  %vm847 = vcmp.eq.s32.totalorder %v846, 1
  %v848 = vsel %vm847, %v839, 0.0
  %v849 = vsel %vm847, %v841, 0.0
  %v850 = vsel %vm847, %v843, 0.0
  %v851 = vsel %vm847, %v845, 0.0
  %s852 = scalar_lea.vmem %s6, 96
  %v853 = vld [vmem:[%s852] sm:$0xf]
  %v854 = vld [vmem:[%s852 + $0x4] sm:$0xf]
  %v855 = vld [vmem:[%s852 + $0x8] sm:$0xf]
  %v856 = vld [vmem:[%s852 + $0xc] sm:$0xf]
  %v857 = vpack.c.bf16 %v849, %v848
  %v858 = vpack.c.bf16 %v851, %v850
  %v863 = vunpack.c.l.b16 %v853
  %v864 = vunpack.c.l.b16 %v854
  %v865 = vunpack.c.l.b16 %v855
  %v866 = vunpack.c.l.b16 %v856
  %v867 = vpack.c.b16 %v864, %v863
  %v868 = vpack.c.b16 %v866, %v865
  %v870 = vsel %vm355, %v867, 0
  %v873 = vsel %vm355, %v868, 0
  %875 = vmatprep.subr.bf16.mxu0 0
  %876 = vmatpush1.bf16.msra.mxu0 0
  %877 = vmatprep.subr.bf16.mxu0 0
  %878 = vmatpush1.bf16.msra.mxu0 0
  %879 = vmatprep.subr.bf16.mxu0 0
  %880 = vmatpush1.bf16.msra.mxu0 0
  %881 = vmatprep.subr.bf16.mxu0 0
  %882 = vmatpush1.bf16.msra.mxu0 0
  %883 = vmatprep.subr.bf16.mxu0 0
  %884 = vmatpush1.bf16.msra.mxu0 0
  %885 = vmatprep.subr.bf16.mxu0 0
  %886 = vmatpush1.bf16.msra.mxu0 0
  %887 = vmatprep.subr.bf16.mxu0 0
  %888 = vmatpush1.bf16.msra.mxu0 %v858
  %889 = vmatprep.subr.bf16.mxu0 0
  %890 = vmatpush1.bf16.msra.mxu0 %v857
  %891 = vmatprep.subr.bf16.mxu0 0
  %892 = vmatpush2.bf16.msra.mxu0 0
  %893 = vmatprep.subr.bf16.mxu0 0
  %894 = vmatpush2.bf16.msra.mxu0 0
  %895 = vmatprep.subr.bf16.mxu0 0
  %896 = vmatpush2.bf16.msra.mxu0 0
  %897 = vmatprep.subr.bf16.mxu0 0
  %898 = vmatpush2.bf16.msra.mxu0 0
  %899 = vmatprep.subr.bf16.mxu0 0
  %900 = vmatpush2.bf16.msra.mxu0 0
  %901 = vmatprep.subr.bf16.mxu0 0
  %902 = vmatpush2.bf16.msra.mxu0 0
  %903 = vmatprep.subr.bf16.mxu0 0
  %904 = vmatpush2.bf16.msra.mxu0 0
  %905 = vmatprep.subr.bf16.mxu0 0
  %906 = vmatpush2.bf16.msra.mxu0 0
  %907 = vmatprep.mubr.bf16.mxu0 0
  %908 = vmatmul.mubr.bf16.gmra.mxu0 %v870
  %v909 = vpop.f32.mrf.mxu0
  %v910 = vadd.f32 0.0, %v909
  %v911 = vpop.f32.mrf.mxu0
  %v912 = vpop.f32.mrf.mxu0
  %v913 = vadd.f32 0.0, %v912
  %v914 = vpop.f32.mrf.mxu0
  %915 = vmatprep.mubr.bf16.mxu0 0
  %916 = vmatmul.mubr.bf16.gmra.mxu0 %v873
  %v917 = vpop.f32.mrf.mxu0
  %v918 = vadd.f32 0.0, %v917
  %v919 = vpop.f32.mrf.mxu0
  %v920 = vpop.f32.mrf.mxu0
  %v921 = vadd.f32 0.0, %v920
  %v922 = vpop.f32.mrf.mxu0
  %923 = vdwg.mxu0
  %v924 = vadd.f32 %v829, %v910
  %v925 = vadd.f32 %v830, %v913
  %v926 = vadd.f32 %v831, %v918
  %v927 = vadd.f32 %v832, %v921
  %vm928 = vmand %vm835, %vm320
  %vm929 = vmand %vm928, %vm322
  %930 = vrot.lane.b32.xlu0 %v284, 120
  %v931 = vpop.permute.xlu0 %930
  %932 = vrot.lane.b32.xlu0 %v285, 120
  %v933 = vpop.permute.xlu0 %932
  %934 = vrot.lane.b32.xlu0 %v286, 120
  %v935 = vpop.permute.xlu0 %934
  %936 = vrot.lane.b32.xlu0 %v287, 120
  %v937 = vpop.permute.xlu0 %936
  %v938 = vsel %vm929, 1, 0
  %vm939 = vcmp.eq.s32.totalorder %v938, 1
  %v940 = vsel %vm939, %v931, 0.0
  %v941 = vsel %vm939, %v933, 0.0
  %v942 = vsel %vm939, %v935, 0.0
  %v943 = vsel %vm939, %v937, 0.0
  %s944 = scalar_lea.vmem %s6, 112
  %v945 = vld [vmem:[%s944] sm:$0xf]
  %v946 = vld [vmem:[%s944 + $0x4] sm:$0xf]
  %v947 = vld [vmem:[%s944 + $0x8] sm:$0xf]
  %v948 = vld [vmem:[%s944 + $0xc] sm:$0xf]
  %v949 = vpack.c.bf16 %v941, %v940
  %v950 = vpack.c.bf16 %v943, %v942
  %v955 = vunpack.c.l.b16 %v945
  %v956 = vunpack.c.l.b16 %v946
  %v957 = vunpack.c.l.b16 %v947
  %v958 = vunpack.c.l.b16 %v948
  %v959 = vpack.c.b16 %v956, %v955
  %v960 = vpack.c.b16 %v958, %v957
  %v962 = vsel %vm355, %v959, 0
  %v965 = vsel %vm355, %v960, 0
  %967 = vmatprep.subr.bf16.mxu0 0
  %968 = vmatpush1.bf16.msra.mxu0 0
  %969 = vmatprep.subr.bf16.mxu0 0
  %970 = vmatpush1.bf16.msra.mxu0 0
  %971 = vmatprep.subr.bf16.mxu0 0
  %972 = vmatpush1.bf16.msra.mxu0 0
  %973 = vmatprep.subr.bf16.mxu0 0
  %974 = vmatpush1.bf16.msra.mxu0 0
  %975 = vmatprep.subr.bf16.mxu0 0
  %976 = vmatpush1.bf16.msra.mxu0 0
  %977 = vmatprep.subr.bf16.mxu0 0
  %978 = vmatpush1.bf16.msra.mxu0 0
  %979 = vmatprep.subr.bf16.mxu0 0
  %980 = vmatpush1.bf16.msra.mxu0 %v950
  %981 = vmatprep.subr.bf16.mxu0 0
  %982 = vmatpush1.bf16.msra.mxu0 %v949
  %983 = vmatprep.subr.bf16.mxu0 0
  %984 = vmatpush2.bf16.msra.mxu0 0
  %985 = vmatprep.subr.bf16.mxu0 0
  %986 = vmatpush2.bf16.msra.mxu0 0
  %987 = vmatprep.subr.bf16.mxu0 0
  %988 = vmatpush2.bf16.msra.mxu0 0
  %989 = vmatprep.subr.bf16.mxu0 0
  %990 = vmatpush2.bf16.msra.mxu0 0
  %991 = vmatprep.subr.bf16.mxu0 0
  %992 = vmatpush2.bf16.msra.mxu0 0
  %993 = vmatprep.subr.bf16.mxu0 0
  %994 = vmatpush2.bf16.msra.mxu0 0
  %995 = vmatprep.subr.bf16.mxu0 0
  %996 = vmatpush2.bf16.msra.mxu0 0
  %997 = vmatprep.subr.bf16.mxu0 0
  %998 = vmatpush2.bf16.msra.mxu0 0
  %999 = vmatprep.mubr.bf16.mxu0 0
  %1000 = vmatmul.mubr.bf16.gmra.mxu0 %v962
  %v1001 = vpop.f32.mrf.mxu0
  %v1002 = vadd.f32 0.0, %v1001
  %v1003 = vpop.f32.mrf.mxu0
  %v1004 = vpop.f32.mrf.mxu0
  %v1005 = vadd.f32 0.0, %v1004
  %v1006 = vpop.f32.mrf.mxu0
  %1007 = vmatprep.mubr.bf16.mxu0 0
  %1008 = vmatmul.mubr.bf16.gmra.mxu0 %v965
  %v1009 = vpop.f32.mrf.mxu0
  %v1010 = vadd.f32 0.0, %v1009
  %v1011 = vpop.f32.mrf.mxu0
  %v1012 = vpop.f32.mrf.mxu0
  %v1013 = vadd.f32 0.0, %v1012
  %v1014 = vpop.f32.mrf.mxu0
  %1015 = vdwg.mxu0
  %v1016 = vadd.f32 %v924, %v1002
  %v1017 = vadd.f32 %v925, %v1005
  %v1018 = vadd.f32 %v926, %v1010
  %v1019 = vadd.f32 %v927, %v1013
  %vm1020 = vmand %vm835, %vm476
  %vm1021 = vmand %vm1020, %vm478
  %1022 = vrot.lane.b32.xlu0 %v284, 119
  %v1023 = vpop.permute.xlu0 %1022
  %1024 = vrot.lane.b32.xlu0 %v285, 119
  %v1025 = vpop.permute.xlu0 %1024
  %1026 = vrot.lane.b32.xlu0 %v286, 119
  %v1027 = vpop.permute.xlu0 %1026
  %1028 = vrot.lane.b32.xlu0 %v287, 119
  %v1029 = vpop.permute.xlu0 %1028
  %v1030 = vsel %vm1021, 1, 0
  %vm1031 = vcmp.eq.s32.totalorder %v1030, 1
  %v1032 = vsel %vm1031, %v1023, 0.0
  %v1033 = vsel %vm1031, %v1025, 0.0
  %v1034 = vsel %vm1031, %v1027, 0.0
  %v1035 = vsel %vm1031, %v1029, 0.0
  %s1036 = scalar_lea.vmem %s6, 128
  %v1037 = vld [vmem:[%s1036] sm:$0xf]
  %v1038 = vld [vmem:[%s1036 + $0x4] sm:$0xf]
  %v1039 = vld [vmem:[%s1036 + $0x8] sm:$0xf]
  %v1040 = vld [vmem:[%s1036 + $0xc] sm:$0xf]
  %v1041 = vpack.c.bf16 %v1033, %v1032
  %v1042 = vpack.c.bf16 %v1035, %v1034
  %v1047 = vunpack.c.l.b16 %v1037
  %v1048 = vunpack.c.l.b16 %v1038
  %v1049 = vunpack.c.l.b16 %v1039
  %v1050 = vunpack.c.l.b16 %v1040
  %v1051 = vpack.c.b16 %v1048, %v1047
  %v1052 = vpack.c.b16 %v1050, %v1049
  %v1054 = vsel %vm355, %v1051, 0
  %v1057 = vsel %vm355, %v1052, 0
  %1059 = vmatprep.subr.bf16.mxu0 0
  %1060 = vmatpush1.bf16.msra.mxu0 0
  %1061 = vmatprep.subr.bf16.mxu0 0
  %1062 = vmatpush1.bf16.msra.mxu0 0
  %1063 = vmatprep.subr.bf16.mxu0 0
  %1064 = vmatpush1.bf16.msra.mxu0 0
  %1065 = vmatprep.subr.bf16.mxu0 0
  %1066 = vmatpush1.bf16.msra.mxu0 0
  %1067 = vmatprep.subr.bf16.mxu0 0
  %1068 = vmatpush1.bf16.msra.mxu0 0
  %1069 = vmatprep.subr.bf16.mxu0 0
  %1070 = vmatpush1.bf16.msra.mxu0 0
  %1071 = vmatprep.subr.bf16.mxu0 0
  %1072 = vmatpush1.bf16.msra.mxu0 %v1042
  %1073 = vmatprep.subr.bf16.mxu0 0
  %1074 = vmatpush1.bf16.msra.mxu0 %v1041
  %1075 = vmatprep.subr.bf16.mxu0 0
  %1076 = vmatpush2.bf16.msra.mxu0 0
  %1077 = vmatprep.subr.bf16.mxu0 0
  %1078 = vmatpush2.bf16.msra.mxu0 0
  %1079 = vmatprep.subr.bf16.mxu0 0
  %1080 = vmatpush2.bf16.msra.mxu0 0
  %1081 = vmatprep.subr.bf16.mxu0 0
  %1082 = vmatpush2.bf16.msra.mxu0 0
  %1083 = vmatprep.subr.bf16.mxu0 0
  %1084 = vmatpush2.bf16.msra.mxu0 0
  %1085 = vmatprep.subr.bf16.mxu0 0
  %1086 = vmatpush2.bf16.msra.mxu0 0
  %1087 = vmatprep.subr.bf16.mxu0 0
  %1088 = vmatpush2.bf16.msra.mxu0 0
  %1089 = vmatprep.subr.bf16.mxu0 0
  %1090 = vmatpush2.bf16.msra.mxu0 0
  %1091 = vmatprep.mubr.bf16.mxu0 0
  %1092 = vmatmul.mubr.bf16.gmra.mxu0 %v1054
  %v1093 = vpop.f32.mrf.mxu0
  %v1094 = vadd.f32 0.0, %v1093
  %v1095 = vpop.f32.mrf.mxu0
  %v1096 = vpop.f32.mrf.mxu0
  %v1097 = vadd.f32 0.0, %v1096
  %v1098 = vpop.f32.mrf.mxu0
  %1099 = vmatprep.mubr.bf16.mxu0 0
  %1100 = vmatmul.mubr.bf16.gmra.mxu0 %v1057
  %v1101 = vpop.f32.mrf.mxu0
  %v1102 = vadd.f32 0.0, %v1101
  %v1103 = vpop.f32.mrf.mxu0
  %v1104 = vpop.f32.mrf.mxu0
  %v1105 = vadd.f32 0.0, %v1104
  %v1106 = vpop.f32.mrf.mxu0
  %1107 = vdwg.mxu0
  %v1108 = vadd.f32 %v1016, %v1094
  %v1109 = vadd.f32 %v1017, %v1097
  %v1110 = vadd.f32 %v1018, %v1102
  %v1111 = vadd.f32 %v1019, %v1105
  %v1112 = vld [vmem:[%s3] sm:$0xf]
  %v1113 = vld [vmem:[%s3 + $0x4] sm:$0xf]
  %v1114 = vld [vmem:[%s3 + $0x8] sm:$0xf]
  %v1115 = vld [vmem:[%s3 + $0xc] sm:$0xf]
  %v1116 = vld [vmem:[%s2] sm:$0xf]
  %v1117 = vld [vmem:[%s2 + $0x4] sm:$0xf]
  %v1122 = vunpack.c.l.b16 %v1112
  %v1123 = vunpack.c.l.b16 %v1113
  %v1124 = vunpack.c.l.b16 %v1114
  %v1125 = vunpack.c.l.b16 %v1115
  %v1126 = vpack.c.b16 %v1123, %v1122
  %v1127 = vpack.c.b16 %v1125, %v1124
  %v1130 = vunpack.c.l.b16 %v1116
  %v1131 = vunpack.c.l.b16 %v1117
  %v1132 = vpack.c.b16 %v1131, %v1130
  %v1135 = vsel %vm127, %v1126, 0
  %v1138 = vsel %vm127, %v1127, 0
  %1140 = vmatprep.subr.bf16.mxu0 0
  %1141 = vmatpush1.bf16.msra.mxu0 0
  %1142 = vmatprep.subr.bf16.mxu0 0
  %1143 = vmatpush1.bf16.msra.mxu0 0
  %1144 = vmatprep.subr.bf16.mxu0 0
  %1145 = vmatpush1.bf16.msra.mxu0 0
  %1146 = vmatprep.subr.bf16.mxu0 0
  %1147 = vmatpush1.bf16.msra.mxu0 0
  %1148 = vmatprep.subr.bf16.mxu0 0
  %1149 = vmatpush1.bf16.msra.mxu0 0
  %1150 = vmatprep.subr.bf16.mxu0 0
  %1151 = vmatpush1.bf16.msra.mxu0 0
  %1152 = vmatprep.subr.bf16.mxu0 0
  %1153 = vmatpush1.bf16.msra.mxu0 0
  %1154 = vmatprep.subr.bf16.mxu0 0
  %1155 = vmatpush1.bf16.msra.mxu0 %v1132
  %1156 = vmatprep.subr.bf16.mxu0 0
  %1157 = vmatpush2.bf16.msra.mxu0 0
  %1158 = vmatprep.subr.bf16.mxu0 0
  %1159 = vmatpush2.bf16.msra.mxu0 0
  %1160 = vmatprep.subr.bf16.mxu0 0
  %1161 = vmatpush2.bf16.msra.mxu0 0
  %1162 = vmatprep.subr.bf16.mxu0 0
  %1163 = vmatpush2.bf16.msra.mxu0 0
  %1164 = vmatprep.subr.bf16.mxu0 0
  %1165 = vmatpush2.bf16.msra.mxu0 0
  %1166 = vmatprep.subr.bf16.mxu0 0
  %1167 = vmatpush2.bf16.msra.mxu0 0
  %1168 = vmatprep.subr.bf16.mxu0 0
  %1169 = vmatpush2.bf16.msra.mxu0 0
  %1170 = vmatprep.subr.bf16.mxu0 0
  %1171 = vmatpush2.bf16.msra.mxu0 0
  %1172 = vmatprep.mubr.bf16.mxu0 0
  %1173 = vmatmul.mubr.bf16.gmra.mxu0 %v1135
  %v1174 = vpop.f32.mrf.mxu0
  %v1175 = vadd.f32 %v1108, %v1174
  %v1176 = vpop.f32.mrf.mxu0
  %v1177 = vpop.f32.mrf.mxu0
  %v1178 = vadd.f32 %v1109, %v1177
  %v1179 = vpop.f32.mrf.mxu0
  %1180 = vmatprep.mubr.bf16.mxu0 0
  %1181 = vmatmul.mubr.bf16.gmra.mxu0 %v1138
  %v1182 = vpop.f32.mrf.mxu0
  %v1183 = vadd.f32 %v1110, %v1182
  %v1184 = vpop.f32.mrf.mxu0
  %v1185 = vpop.f32.mrf.mxu0
  %v1186 = vadd.f32 %v1111, %v1185
  %v1187 = vpop.f32.mrf.mxu0
  %1188 = vdwg.mxu0
  %v1189 = vld [vmem:[%s7] sm:$0xff]
  %v1190 = vld [vmem:[%s7 + $0x8] sm:$0xff]
  %v1191 = vld [vmem:[%s7 + $0x10] sm:$0xff]
  %v1192 = vld [vmem:[%s7 + $0x18] sm:$0xff]
  %v1193 = vld [vmem:[%s8] sm:$0xff]
  %v1194 = vld [vmem:[%s8 + $0x8] sm:$0xff]
  %v1195 = vld [vmem:[%s8 + $0x10] sm:$0xff]
  %v1196 = vld [vmem:[%s8 + $0x18] sm:$0xff]
  %1197 = vadd.xlane.f32.xlu0 %v1175
  %v1198 = vpop.xlane.xlu0 %1197
  %1199 = vadd.xlane.f32.xlu0 %v1178
  %v1200 = vpop.xlane.xlu0 %1199
  %1201 = vadd.xlane.f32.xlu0 %v1183
  %v1202 = vpop.xlane.xlu0 %1201
  %1203 = vadd.xlane.f32.xlu0 %v1186
  %v1204 = vpop.xlane.xlu0 %1203
  %v1205 = vmul.f32 %v1198, %v199
  %v1206 = vmul.f32 %v1200, %v199
  %v1207 = vmul.f32 %v1202, %v199
  %v1208 = vmul.f32 %v1204, %v199
  %v1209 = vsub.f32 %v1175, %v1205
  %v1210 = vsub.f32 %v1178, %v1206
  %v1211 = vsub.f32 %v1183, %v1207
  %v1212 = vsub.f32 %v1186, %v1208
  %v1213 = vmul.f32 %v1209, %v1209
  %v1214 = vmul.f32 %v1210, %v1210
  %v1215 = vmul.f32 %v1211, %v1211
  %v1216 = vmul.f32 %v1212, %v1212
  %1217 = vadd.xlane.f32.xlu0 %v1213
  %v1218 = vpop.xlane.xlu0 %1217
  %1219 = vadd.xlane.f32.xlu0 %v1214
  %v1220 = vpop.xlane.xlu0 %1219
  %1221 = vadd.xlane.f32.xlu0 %v1215
  %v1222 = vpop.xlane.xlu0 %1221
  %1223 = vadd.xlane.f32.xlu0 %v1216
  %v1224 = vpop.xlane.xlu0 %1223
  %v1225 = vmul.f32 %v1218, %v199
  %v1226 = vmul.f32 %v1220, %v199
  %v1227 = vmul.f32 %v1222, %v199
  %v1228 = vmul.f32 %v1224, %v199
  %v1229 = vadd.f32 %v1225, 1e-05
  %v1230 = vadd.f32 %v1226, 1e-05
  %v1231 = vadd.f32 %v1227, 1e-05
  %v1232 = vadd.f32 %v1228, 1e-05
  %v1233 = vrsqrt.pop %v1229
  %v1234 = vrsqrt.pop %v1230
  %v1235 = vrsqrt.pop %v1231
  %v1236 = vrsqrt.pop %v1232
  %v1237 = vmul.f32 %v1209, %v1233
  %v1238 = vmul.f32 %v1210, %v1234
  %v1239 = vmul.f32 %v1211, %v1235
  %v1240 = vmul.f32 %v1212, %v1236
  %1242 = vset.pattern.permute.xlu0 0
  %1243 = vperm.xlu0 %1242, %v1189
  %v1244 = vpop.permute.xlu0 %1243
  %1247 = vset.pattern.permute.xlu0 0
  %1248 = vperm.xlu0 %1247, %v1190
  %v1249 = vpop.permute.xlu0 %1248
  %1252 = vset.pattern.permute.xlu0 0
  %1253 = vperm.xlu0 %1252, %v1191
  %v1254 = vpop.permute.xlu0 %1253
  %1257 = vset.pattern.permute.xlu0 0
  %1258 = vperm.xlu0 %1257, %v1192
  %v1259 = vpop.permute.xlu0 %1258
  %v1261 = vmul.f32 %v1237, %v1244
  %v1262 = vmul.f32 %v1238, %v1249
  %v1263 = vmul.f32 %v1239, %v1254
  %v1264 = vmul.f32 %v1240, %v1259
  %1266 = vset.pattern.permute.xlu0 0
  %1267 = vperm.xlu0 %1266, %v1193
  %v1268 = vpop.permute.xlu0 %1267
  %1271 = vset.pattern.permute.xlu0 0
  %1272 = vperm.xlu0 %1271, %v1194
  %v1273 = vpop.permute.xlu0 %1272
  %1276 = vset.pattern.permute.xlu0 0
  %1277 = vperm.xlu0 %1276, %v1195
  %v1278 = vpop.permute.xlu0 %1277
  %1281 = vset.pattern.permute.xlu0 0
  %1282 = vperm.xlu0 %1281, %v1196
  %v1283 = vpop.permute.xlu0 %1282
  %v1285 = vadd.f32 %v1261, %v1268
  %v1286 = vadd.f32 %v1262, %v1273
  %v1287 = vadd.f32 %v1263, %v1278
  %v1288 = vadd.f32 %v1264, %v1283
  %v1289 = vmax.f32 %v1285, 0.0
  %v1290 = vmax.f32 %v1286, 0.0
  %v1291 = vmax.f32 %v1287, 0.0
  %v1292 = vmax.f32 %v1288, 0.0
  %v1293 = vpack.c.bf16 %v1290, %v1289
  %v1294 = vpack.c.bf16 %v1292, %v1291
  %v1297 = vunpack.c.l.b16 %v1293
  %v1298 = vunpack.c.h.b16 %v1293
  %v1299 = vunpack.c.l.b16 %v1294
  %v1300 = vunpack.c.h.b16 %v1294
  %v1301 = vpack.c.b16 %v1297, %v1297
  %v1302 = vpack.c.b16 %v1298, %v1298
  %v1303 = vpack.c.b16 %v1299, %v1299
  %v1304 = vpack.c.b16 %v1300, %v1300
  %1309 = vst [vmem:[%s9] sm:$0xf] %v1301
  %1310 = vst [vmem:[%s9 + $0x4] sm:$0xf] %v1302
  %1311 = vst [vmem:[%s9 + $0x8] sm:$0xf] %v1303
  %1312 = vst [vmem:[%s9 + $0xc] sm:$0xf] %v1304
  // Predicated region
  $region38: #{_lambda_.4} parent=0 // pred_check
    _
  $region39: #{_lambda_.4} parent=0 // pred_check_branch
    %1314 = sbr.rel (0) target = $region41
  $region40: #{_lambda_.4} parent=0 // pred_region
    _
  $region41: #{_lambda_.4} parent=0 // pred_fallthru
    _
  // Predicated region
  $region42: #{_lambda_.4} parent=0 // pred_check
    _
  $region43: #{_lambda_.4} parent=0 // pred_check_branch
    %1316 = sbr.rel (0) target = $region45
  $region44: #{_lambda_.4} parent=0 // pred_region
    _
  $region45: #{_lambda_.4} parent=0 // pred_fallthru
    _

// kernel: _lambda_.3
$region0: #{_lambda_.3}
  #allocation0 [shape = 'u32[]', space=smem, size = 0x4, offset = 0x4, fixed_abs, tag = 'smem constant byte address 0x4 - core index']
  #allocation1 [shape = 'u32[144,128]{1,0:T(1,128)}', space=vmem, size = 0x12000, scoped, tag = 'internal scratch']
  %s0 = inlined_call_operand.vmem [shape: f32[3,512], index: 0, kind: input, shape index: {}]
  %s1 = inlined_call_operand.vmem [shape: bf16[9,16,3], index: 1, kind: input, shape index: {}]
  %s2 = inlined_call_operand.vmem [shape: f32[16,1], index: 2, kind: input, shape index: {}, may-alias: {2,5,8}]
  %s3 = inlined_call_operand.vmem [shape: f32[16,1], index: 3, kind: input, shape index: {}, may-alias: {3,6,9}]
  %s4 = inlined_call_operand.vmem [shape: bf16[9,16,16], index: 4, kind: input, shape index: {}]
  %s5 = inlined_call_operand.vmem [shape: f32[16,1], index: 5, kind: input, shape index: {}, may-alias: {2,5,8}]
  %s6 = inlined_call_operand.vmem [shape: f32[16,1], index: 6, kind: input, shape index: {}, may-alias: {3,6,9}]
  %s7 = inlined_call_operand.vmem [shape: bf16[9,16,16], index: 7, kind: input, shape index: {}]
  %s8 = inlined_call_operand.vmem [shape: f32[16,1], index: 8, kind: input, shape index: {}, may-alias: {2,5,8}]
  %s9 = inlined_call_operand.vmem [shape: f32[16,1], index: 9, kind: input, shape index: {}, may-alias: {3,6,9}]
  %s10 = inlined_call_operand.vmem [shape: bf16[16,512], index: 10, kind: output, shape index: {}]
  %s11 = sld [smem:[#allocation0]]
  $region50: #{_lambda_.3} parent=0
    _
  %s13 = ssub.s32 1, %s11
  %s14 = scalar_select 0, %s13, %s11
  // Predicated region
  $region2: #{_lambda_.3} parent=0 // pred_check
    _
  $region3: #{_lambda_.3} parent=0 // pred_check_branch
    %16 = sbr.rel (0) target = $region5
  $region4: #{_lambda_.3} parent=0 // pred_region
    _
  $region5: #{_lambda_.3} parent=0 // pred_fallthru
    _
  // Predicated region
  $region6: #{_lambda_.3} parent=0 // pred_check
    _
  $region7: #{_lambda_.3} parent=0 // pred_check_branch
    %18 = sbr.rel (0) target = $region9
  $region8: #{_lambda_.3} parent=0 // pred_region
    _
  $region9: #{_lambda_.3} parent=0 // pred_fallthru
    _
  // Predicated region
  $region10: #{_lambda_.3} parent=0 // pred_check
    _
  $region11: #{_lambda_.3} parent=0 // pred_check_branch
    %20 = sbr.rel (0) target = $region13
  $region12: #{_lambda_.3} parent=0 // pred_region
    _
  $region13: #{_lambda_.3} parent=0 // pred_fallthru
    _
  // Predicated region
  $region14: #{_lambda_.3} parent=0 // pred_check
    _
  $region15: #{_lambda_.3} parent=0 // pred_check_branch
    %22 = sbr.rel (0) target = $region17
  $region16: #{_lambda_.3} parent=0 // pred_region
    _
  $region17: #{_lambda_.3} parent=0 // pred_fallthru
    _
  // Predicated region
  $region18: #{_lambda_.3} parent=0 // pred_check
    _
  $region19: #{_lambda_.3} parent=0 // pred_check_branch
    %24 = sbr.rel (0) target = $region21
  $region20: #{_lambda_.3} parent=0 // pred_region
    _
  $region21: #{_lambda_.3} parent=0 // pred_fallthru
    _
  // Predicated region
  $region22: #{_lambda_.3} parent=0 // pred_check
    _
  $region23: #{_lambda_.3} parent=0 // pred_check_branch
    %26 = sbr.rel (0) target = $region25
  $region24: #{_lambda_.3} parent=0 // pred_region
    _
  $region25: #{_lambda_.3} parent=0 // pred_fallthru
    _
  // Predicated region
  $region26: #{_lambda_.3} parent=0 // pred_check
    _
  $region27: #{_lambda_.3} parent=0 // pred_check_branch
    %28 = sbr.rel (0) target = $region29
  $region28: #{_lambda_.3} parent=0 // pred_region
    _
  $region29: #{_lambda_.3} parent=0 // pred_fallthru
    _
  // Predicated region
  $region30: #{_lambda_.3} parent=0 // pred_check
    _
  $region31: #{_lambda_.3} parent=0 // pred_check_branch
    %30 = sbr.rel (0) target = $region33
  $region32: #{_lambda_.3} parent=0 // pred_region
    _
  $region33: #{_lambda_.3} parent=0 // pred_fallthru
    _
  // Predicated region
  $region34: #{_lambda_.3} parent=0 // pred_check
    _
  $region35: #{_lambda_.3} parent=0 // pred_check_branch
    %32 = sbr.rel (0) target = $region37
  $region36: #{_lambda_.3} parent=0 // pred_region
    _
  $region37: #{_lambda_.3} parent=0 // pred_fallthru
    _
  // Predicated region
  $region38: #{_lambda_.3} parent=0 // pred_check
    _
  $region39: #{_lambda_.3} parent=0 // pred_check_branch
    %34 = sbr.rel (0) target = $region41
  $region40: #{_lambda_.3} parent=0 // pred_region
    _
  $region41: #{_lambda_.3} parent=0 // pred_fallthru
    _
  %v36 = vld [vmem:[%s0] sm:$0x77]
  %v37 = vld [vmem:[%s0 + $0x8] sm:$0x77]
  %v38 = vlaneseq
  %v39 = vand.u32 %v38, 127
  %v40 = vadd.s32 %v39, 128
  %v41 = vadd.s32 %v39, 256
  %v42 = vadd.s32 %v39, 384
  %v43 = vand.u32 %v39, 15
  %v44 = vand.u32 %v40, 15
  %v45 = vand.u32 %v41, 15
  %v46 = vand.u32 %v42, 15
  %v47 = vshra.s32 %v39, 4
  %v48 = vshra.s32 %v40, 4
  %v49 = vshra.s32 %v41, 4
  %v50 = vshra.s32 %v42, 4
  %v51 = vand.u32 %v47, 15
  %v52 = vand.u32 %v48, 15
  %v53 = vand.u32 %v49, 15
  %v54 = vand.u32 %v50, 15
  %vm55 = vcmp.ge.s32.totalorder %v51, 1
  %vm56 = vcmp.ge.s32.totalorder %v52, 1
  %vm57 = vcmp.ge.s32.totalorder %v53, 1
  %vm58 = vcmp.ge.s32.totalorder %v54, 1
  %vm59 = vcmp.lt.s32.totalorder %v51, 17
  %vm60 = vcmp.lt.s32.totalorder %v52, 17
  %vm61 = vcmp.lt.s32.totalorder %v53, 17
  %vm62 = vcmp.lt.s32.totalorder %v54, 17
  %vm63 = vmand %vm55, %vm59
  %vm64 = vmand %vm56, %vm60
  %vm65 = vmand %vm57, %vm61
  %vm66 = vmand %vm58, %vm62
  %vm67 = vcmp.ge.s32.totalorder %v43, 1
  %vm68 = vcmp.ge.s32.totalorder %v44, 1
  %vm69 = vcmp.ge.s32.totalorder %v45, 1
  %vm70 = vcmp.ge.s32.totalorder %v46, 1
  %vm71 = vmand %vm63, %vm67
  %vm72 = vmand %vm64, %vm68
  %vm73 = vmand %vm65, %vm69
  %vm74 = vmand %vm66, %vm70
  %vm75 = vcmp.lt.s32.totalorder %v43, 17
  %vm76 = vcmp.lt.s32.totalorder %v44, 17
  %vm77 = vcmp.lt.s32.totalorder %v45, 17
  %vm78 = vcmp.lt.s32.totalorder %v46, 17
  %vm79 = vmand %vm71, %vm75
  %vm80 = vmand %vm72, %vm76
  %vm81 = vmand %vm73, %vm77
  %vm82 = vmand %vm74, %vm78
  %v85 = vcombine.high %v36, %v36
  %v86 = vcombine.high %v37, %v37
  %89 = vrot.lane.b32.xlu0 %v36, 17
  %v90 = vpop.permute.xlu0 %89
  %91 = vrot.lane.b32.xlu0 %v85, 17
  %v92 = vpop.permute.xlu0 %91
  %93 = vrot.lane.b32.xlu0 %v37, 17
  %v94 = vpop.permute.xlu0 %93
  %95 = vrot.lane.b32.xlu0 %v86, 17
  %v96 = vpop.permute.xlu0 %95
  %vm97 = vcmp.lt.s32.totalorder %v39, 17
  %v98 = vsel %vm97, %v94, %v96
  %v99 = vsel %vm97, %v92, %v94
  %v100 = vsel %vm97, %v90, %v92
  %v101 = vsel %vm97, %v96, %v90
  %v102 = vsel %vm79, 1, 0
  %v103 = vsel %vm80, 1, 0
  %v104 = vsel %vm81, 1, 0
  %v105 = vsel %vm82, 1, 0
  %vm106 = vcmp.eq.s32.totalorder %v102, 1
  %vm107 = vcmp.eq.s32.totalorder %v103, 1
  %vm108 = vcmp.eq.s32.totalorder %v104, 1
  %vm109 = vcmp.eq.s32.totalorder %v105, 1
  %v110 = vsel %vm106, %v101, 0.0
  %v111 = vsel %vm107, %v100, 0.0
  %v112 = vsel %vm108, %v99, 0.0
  %v113 = vsel %vm109, %v98, 0.0
  %v114 = vld [vmem:[%s1] sm:$0xf]
  %v115 = vld [vmem:[%s1 + $0x4] sm:$0xf]
  %v116 = vpack.c.bf16 %v110, %v110
  %v117 = vpack.c.bf16 %v111, %v111
  %v118 = vpack.c.bf16 %v112, %v112
  %v119 = vpack.c.bf16 %v113, %v113
  %vm120 = vcmp.ge.s32.totalorder %v43, 0
  %vm121 = vcmp.ge.s32.totalorder %v44, 0
  %vm122 = vcmp.ge.s32.totalorder %v45, 0
  %vm123 = vcmp.ge.s32.totalorder %v46, 0
  %vm124 = vmand %vm63, %vm120
  %vm125 = vmand %vm64, %vm121
  %vm126 = vmand %vm65, %vm122
  %vm127 = vmand %vm66, %vm123
  %vm128 = vcmp.lt.s32.totalorder %v43, 16
  %vm129 = vcmp.lt.s32.totalorder %v44, 16
  %vm130 = vcmp.lt.s32.totalorder %v45, 16
  %vm131 = vcmp.lt.s32.totalorder %v46, 16
  %vm132 = vmand %vm124, %vm128
  %vm133 = vmand %vm125, %vm129
  %vm134 = vmand %vm126, %vm130
  %vm135 = vmand %vm127, %vm131
  %136 = vrot.lane.b32.xlu0 %v36, 16
  %v137 = vpop.permute.xlu0 %136
  %138 = vrot.lane.b32.xlu0 %v85, 16
  %v139 = vpop.permute.xlu0 %138
  %140 = vrot.lane.b32.xlu0 %v37, 16
  %v141 = vpop.permute.xlu0 %140
  %142 = vrot.lane.b32.xlu0 %v86, 16
  %v143 = vpop.permute.xlu0 %142
  %vm144 = vcmp.lt.s32.totalorder %v39, 16
  %v145 = vsel %vm144, %v141, %v143
  %v146 = vsel %vm144, %v139, %v141
  %v147 = vsel %vm144, %v137, %v139
  %v148 = vsel %vm144, %v143, %v137
  %v149 = vsel %vm132, 1, 0
  %v150 = vsel %vm133, 1, 0
  %v151 = vsel %vm134, 1, 0
  %v152 = vsel %vm135, 1, 0
  %vm153 = vcmp.eq.s32.totalorder %v149, 1
  %vm154 = vcmp.eq.s32.totalorder %v150, 1
  %vm155 = vcmp.eq.s32.totalorder %v151, 1
  %vm156 = vcmp.eq.s32.totalorder %v152, 1
  %v157 = vsel %vm153, %v148, 0.0
  %v158 = vsel %vm154, %v147, 0.0
  %v159 = vsel %vm155, %v146, 0.0
  %v160 = vsel %vm156, %v145, 0.0
  %s161 = scalar_lea.vmem %s1, 8
  %v162 = vld [vmem:[%s161] sm:$0xf]
  %v163 = vld [vmem:[%s161 + $0x4] sm:$0xf]
  %v164 = vpack.c.bf16 %v157, %v157
  %v165 = vpack.c.bf16 %v158, %v158
  %v166 = vpack.c.bf16 %v159, %v159
  %v167 = vpack.c.bf16 %v160, %v160
  %v170 = vunpack.c.l.b16 %v162
  %v171 = vunpack.c.l.b16 %v163
  %v172 = vpack.c.b16 %v171, %v170
  %vm173 = vcmask 23552
  %v175 = vsel %vm173, %v172, 0
  %vm177 = vcmask 1040384
  %vm178 = vcmask 1041408
  %v179 = vsel %vm177, 4294967295, 65535
  %v180 = vsel %vm178, %v179, 0
  %v182 = vand.u32 %v164, %v180
  %v185 = vand.u32 %v165, %v180
  %v188 = vand.u32 %v166, %v180
  %v191 = vand.u32 %v167, %v180
  %193 = vmatprep.subr.bf16.mxu0 0
  %194 = vmatpush1.bf16.msra.mxu0 0
  %195 = vmatprep.subr.bf16.mxu0 0
  %196 = vmatpush1.bf16.msra.mxu0 0
  %197 = vmatprep.subr.bf16.mxu0 0
  %198 = vmatpush1.bf16.msra.mxu0 0
  %199 = vmatprep.subr.bf16.mxu0 0
  %200 = vmatpush1.bf16.msra.mxu0 0
  %201 = vmatprep.subr.bf16.mxu0 0
  %202 = vmatpush1.bf16.msra.mxu0 0
  %203 = vmatprep.subr.bf16.mxu0 0
  %204 = vmatpush1.bf16.msra.mxu0 0
  %205 = vmatprep.subr.bf16.mxu0 0
  %206 = vmatpush1.bf16.msra.mxu0 0
  %207 = vmatprep.subr.bf16.mxu0 %v185
  %208 = vmatpush1.bf16.msra.mxu0 %v182
  %209 = vmatprep.subr.bf16.mxu0 0
  %210 = vmatpush2.bf16.msra.mxu0 0
  %211 = vmatprep.subr.bf16.mxu0 0
  %212 = vmatpush2.bf16.msra.mxu0 0
  %213 = vmatprep.subr.bf16.mxu0 0
  %214 = vmatpush2.bf16.msra.mxu0 0
  %215 = vmatprep.subr.bf16.mxu0 0
  %216 = vmatpush2.bf16.msra.mxu0 0
  %217 = vmatprep.subr.bf16.mxu0 0
  %218 = vmatpush2.bf16.msra.mxu0 0
  %219 = vmatprep.subr.bf16.mxu0 0
  %220 = vmatpush2.bf16.msra.mxu0 0
  %221 = vmatprep.subr.bf16.mxu0 0
  %222 = vmatpush2.bf16.msra.mxu0 0
  %223 = vmatprep.subr.bf16.mxu0 0
  %224 = vmatpush2.bf16.msra.mxu0 0
  %225 = vmatprep.mubr.bf16.mxu0 0
  %226 = vmatmul.mubr.bf16.gmra.mxu0 %v175
  %v227 = vpop.f32.mrf.mxu0
  %v228 = vadd.f32 0.0, %v227
  %v229 = vpop.f32.mrf.mxu0
  %v230 = vadd.f32 0.0, %v229
  %v231 = vpop.f32.mrf.mxu0
  %v232 = vadd.f32 0.0, %v231
  %v233 = vpop.f32.mrf.mxu0
  %v234 = vadd.f32 0.0, %v233
  %235 = vdwg.mxu0
  %236 = vmatprep.subr.bf16.mxu0 0
  %237 = vmatpush1.bf16.msra.mxu0 0
  %238 = vmatprep.subr.bf16.mxu0 0
  %239 = vmatpush1.bf16.msra.mxu0 0
  %240 = vmatprep.subr.bf16.mxu0 0
  %241 = vmatpush1.bf16.msra.mxu0 0
  %242 = vmatprep.subr.bf16.mxu0 0
  %243 = vmatpush1.bf16.msra.mxu0 0
  %244 = vmatprep.subr.bf16.mxu0 0
  %245 = vmatpush1.bf16.msra.mxu0 0
  %246 = vmatprep.subr.bf16.mxu0 0
  %247 = vmatpush1.bf16.msra.mxu0 0
  %248 = vmatprep.subr.bf16.mxu0 0
  %249 = vmatpush1.bf16.msra.mxu0 0
  %250 = vmatprep.subr.bf16.mxu0 %v191
  %251 = vmatpush1.bf16.msra.mxu0 %v188
  %252 = vmatprep.subr.bf16.mxu0 0
  %253 = vmatpush2.bf16.msra.mxu0 0
  %254 = vmatprep.subr.bf16.mxu0 0
  %255 = vmatpush2.bf16.msra.mxu0 0
  %256 = vmatprep.subr.bf16.mxu0 0
  %257 = vmatpush2.bf16.msra.mxu0 0
  %258 = vmatprep.subr.bf16.mxu0 0
  %259 = vmatpush2.bf16.msra.mxu0 0
  %260 = vmatprep.subr.bf16.mxu0 0
  %261 = vmatpush2.bf16.msra.mxu0 0
  %262 = vmatprep.subr.bf16.mxu0 0
  %263 = vmatpush2.bf16.msra.mxu0 0
  %264 = vmatprep.subr.bf16.mxu0 0
  %265 = vmatpush2.bf16.msra.mxu0 0
  %266 = vmatprep.subr.bf16.mxu0 0
  %267 = vmatpush2.bf16.msra.mxu0 0
  %268 = vmatprep.mubr.bf16.mxu0 0
  %269 = vmatmul.mubr.bf16.gmra.mxu0 %v175
  %v270 = vpop.f32.mrf.mxu0
  %v271 = vadd.f32 0.0, %v270
  %v272 = vpop.f32.mrf.mxu0
  %v273 = vadd.f32 0.0, %v272
  %v274 = vpop.f32.mrf.mxu0
  %v275 = vadd.f32 0.0, %v274
  %v276 = vpop.f32.mrf.mxu0
  %v277 = vadd.f32 0.0, %v276
  %278 = vdwg.mxu0
  %v281 = vunpack.c.l.b16 %v114
  %v282 = vunpack.c.l.b16 %v115
  %v283 = vpack.c.b16 %v282, %v281
  %v285 = vsel %vm173, %v283, 0
  %v288 = vand.u32 %v116, %v180
  %v291 = vand.u32 %v117, %v180
  %v294 = vand.u32 %v118, %v180
  %v297 = vand.u32 %v119, %v180
  %299 = vmatprep.subr.bf16.mxu0 0
  %300 = vmatpush1.bf16.msra.mxu0 0
  %301 = vmatprep.subr.bf16.mxu0 0
  %302 = vmatpush1.bf16.msra.mxu0 0
  %303 = vmatprep.subr.bf16.mxu0 0
  %304 = vmatpush1.bf16.msra.mxu0 0
  %305 = vmatprep.subr.bf16.mxu0 0
  %306 = vmatpush1.bf16.msra.mxu0 0
  %307 = vmatprep.subr.bf16.mxu0 0
  %308 = vmatpush1.bf16.msra.mxu0 0
  %309 = vmatprep.subr.bf16.mxu0 0
  %310 = vmatpush1.bf16.msra.mxu0 0
  %311 = vmatprep.subr.bf16.mxu0 0
  %312 = vmatpush1.bf16.msra.mxu0 0
  %313 = vmatprep.subr.bf16.mxu0 %v291
  %314 = vmatpush1.bf16.msra.mxu0 %v288
  %315 = vmatprep.subr.bf16.mxu0 0
  %316 = vmatpush2.bf16.msra.mxu0 0
  %317 = vmatprep.subr.bf16.mxu0 0
  %318 = vmatpush2.bf16.msra.mxu0 0
  %319 = vmatprep.subr.bf16.mxu0 0
  %320 = vmatpush2.bf16.msra.mxu0 0
  %321 = vmatprep.subr.bf16.mxu0 0
  %322 = vmatpush2.bf16.msra.mxu0 0
  %323 = vmatprep.subr.bf16.mxu0 0
  %324 = vmatpush2.bf16.msra.mxu0 0
  %325 = vmatprep.subr.bf16.mxu0 0
  %326 = vmatpush2.bf16.msra.mxu0 0
  %327 = vmatprep.subr.bf16.mxu0 0
  %328 = vmatpush2.bf16.msra.mxu0 0
  %329 = vmatprep.subr.bf16.mxu0 0
  %330 = vmatpush2.bf16.msra.mxu0 0
  %331 = vmatprep.mubr.bf16.mxu0 0
  %332 = vmatmul.mubr.bf16.gmra.mxu0 %v285
  %v333 = vpop.f32.mrf.mxu0
  %v334 = vadd.f32 %v228, %v333
  %v335 = vpop.f32.mrf.mxu0
  %v336 = vadd.f32 %v230, %v335
  %v337 = vpop.f32.mrf.mxu0
  %v338 = vadd.f32 %v232, %v337
  %v339 = vpop.f32.mrf.mxu0
  %v340 = vadd.f32 %v234, %v339
  %341 = vdwg.mxu0
  %342 = vmatprep.subr.bf16.mxu0 0
  %343 = vmatpush1.bf16.msra.mxu0 0
  %344 = vmatprep.subr.bf16.mxu0 0
  %345 = vmatpush1.bf16.msra.mxu0 0
  %346 = vmatprep.subr.bf16.mxu0 0
  %347 = vmatpush1.bf16.msra.mxu0 0
  %348 = vmatprep.subr.bf16.mxu0 0
  %349 = vmatpush1.bf16.msra.mxu0 0
  %350 = vmatprep.subr.bf16.mxu0 0
  %351 = vmatpush1.bf16.msra.mxu0 0
  %352 = vmatprep.subr.bf16.mxu0 0
  %353 = vmatpush1.bf16.msra.mxu0 0
  %354 = vmatprep.subr.bf16.mxu0 0
  %355 = vmatpush1.bf16.msra.mxu0 0
  %356 = vmatprep.subr.bf16.mxu0 %v297
  %357 = vmatpush1.bf16.msra.mxu0 %v294
  %358 = vmatprep.subr.bf16.mxu0 0
  %359 = vmatpush2.bf16.msra.mxu0 0
  %360 = vmatprep.subr.bf16.mxu0 0
  %361 = vmatpush2.bf16.msra.mxu0 0
  %362 = vmatprep.subr.bf16.mxu0 0
  %363 = vmatpush2.bf16.msra.mxu0 0
  %364 = vmatprep.subr.bf16.mxu0 0
  %365 = vmatpush2.bf16.msra.mxu0 0
  %366 = vmatprep.subr.bf16.mxu0 0
  %367 = vmatpush2.bf16.msra.mxu0 0
  %368 = vmatprep.subr.bf16.mxu0 0
  %369 = vmatpush2.bf16.msra.mxu0 0
  %370 = vmatprep.subr.bf16.mxu0 0
  %371 = vmatpush2.bf16.msra.mxu0 0
  %372 = vmatprep.subr.bf16.mxu0 0
  %373 = vmatpush2.bf16.msra.mxu0 0
  %374 = vmatprep.mubr.bf16.mxu0 0
  %375 = vmatmul.mubr.bf16.gmra.mxu0 %v285
  %v376 = vpop.f32.mrf.mxu0
  %v377 = vadd.f32 %v271, %v376
  %v378 = vpop.f32.mrf.mxu0
  %v379 = vadd.f32 %v273, %v378
  %v380 = vpop.f32.mrf.mxu0
  %v381 = vadd.f32 %v275, %v380
  %v382 = vpop.f32.mrf.mxu0
  %v383 = vadd.f32 %v277, %v382
  %384 = vdwg.mxu0
  %vm385 = vcmp.ge.s32.totalorder %v43, 4294967295
  %vm386 = vcmp.ge.s32.totalorder %v44, 4294967295
  %vm387 = vcmp.ge.s32.totalorder %v45, 4294967295
  %vm388 = vcmp.ge.s32.totalorder %v46, 4294967295
  %vm389 = vmand %vm63, %vm385
  %vm390 = vmand %vm64, %vm386
  %vm391 = vmand %vm65, %vm387
  %vm392 = vmand %vm66, %vm388
  %vm393 = vcmp.lt.s32.totalorder %v43, 15
  %vm394 = vcmp.lt.s32.totalorder %v44, 15
  %vm395 = vcmp.lt.s32.totalorder %v45, 15
  %vm396 = vcmp.lt.s32.totalorder %v46, 15
  %vm397 = vmand %vm389, %vm393
  %vm398 = vmand %vm390, %vm394
  %vm399 = vmand %vm391, %vm395
  %vm400 = vmand %vm392, %vm396
  %401 = vrot.lane.b32.xlu0 %v36, 15
  %v402 = vpop.permute.xlu0 %401
  %403 = vrot.lane.b32.xlu0 %v85, 15
  %v404 = vpop.permute.xlu0 %403
  %405 = vrot.lane.b32.xlu0 %v37, 15
  %v406 = vpop.permute.xlu0 %405
  %407 = vrot.lane.b32.xlu0 %v86, 15
  %v408 = vpop.permute.xlu0 %407
  %vm409 = vcmp.lt.s32.totalorder %v39, 15
  %v410 = vsel %vm409, %v406, %v408
  %v411 = vsel %vm409, %v404, %v406
  %v412 = vsel %vm409, %v402, %v404
  %v413 = vsel %vm409, %v408, %v402
  %v414 = vsel %vm397, 1, 0
  %v415 = vsel %vm398, 1, 0
  %v416 = vsel %vm399, 1, 0
  %v417 = vsel %vm400, 1, 0
  %vm418 = vcmp.eq.s32.totalorder %v414, 1
  %vm419 = vcmp.eq.s32.totalorder %v415, 1
  %vm420 = vcmp.eq.s32.totalorder %v416, 1
  %vm421 = vcmp.eq.s32.totalorder %v417, 1
  %v422 = vsel %vm418, %v413, 0.0
  %v423 = vsel %vm419, %v412, 0.0
  %v424 = vsel %vm420, %v411, 0.0
  %v425 = vsel %vm421, %v410, 0.0
  %s426 = scalar_lea.vmem %s1, 16
  %v427 = vld [vmem:[%s426] sm:$0xf]
  %v428 = vld [vmem:[%s426 + $0x4] sm:$0xf]
  %v429 = vpack.c.bf16 %v422, %v422
  %v430 = vpack.c.bf16 %v423, %v423
  %v431 = vpack.c.bf16 %v424, %v424
  %v432 = vpack.c.bf16 %v425, %v425
  %v435 = vunpack.c.l.b16 %v427
  %v436 = vunpack.c.l.b16 %v428
  %v437 = vpack.c.b16 %v436, %v435
  %v439 = vsel %vm173, %v437, 0
  %v442 = vand.u32 %v429, %v180
  %v445 = vand.u32 %v430, %v180
  %v448 = vand.u32 %v431, %v180
  %v451 = vand.u32 %v432, %v180
  %453 = vmatprep.subr.bf16.mxu0 0
  %454 = vmatpush1.bf16.msra.mxu0 0
  %455 = vmatprep.subr.bf16.mxu0 0
  %456 = vmatpush1.bf16.msra.mxu0 0
  %457 = vmatprep.subr.bf16.mxu0 0
  %458 = vmatpush1.bf16.msra.mxu0 0
  %459 = vmatprep.subr.bf16.mxu0 0
  %460 = vmatpush1.bf16.msra.mxu0 0
  %461 = vmatprep.subr.bf16.mxu0 0
  %462 = vmatpush1.bf16.msra.mxu0 0
  %463 = vmatprep.subr.bf16.mxu0 0
  %464 = vmatpush1.bf16.msra.mxu0 0
  %465 = vmatprep.subr.bf16.mxu0 0
  %466 = vmatpush1.bf16.msra.mxu0 0
  %467 = vmatprep.subr.bf16.mxu0 %v445
  %468 = vmatpush1.bf16.msra.mxu0 %v442
  %469 = vmatprep.subr.bf16.mxu0 0
  %470 = vmatpush2.bf16.msra.mxu0 0
  %471 = vmatprep.subr.bf16.mxu0 0
  %472 = vmatpush2.bf16.msra.mxu0 0
  %473 = vmatprep.subr.bf16.mxu0 0
  %474 = vmatpush2.bf16.msra.mxu0 0
  %475 = vmatprep.subr.bf16.mxu0 0
  %476 = vmatpush2.bf16.msra.mxu0 0
  %477 = vmatprep.subr.bf16.mxu0 0
  %478 = vmatpush2.bf16.msra.mxu0 0
  %479 = vmatprep.subr.bf16.mxu0 0
  %480 = vmatpush2.bf16.msra.mxu0 0
  %481 = vmatprep.subr.bf16.mxu0 0
  %482 = vmatpush2.bf16.msra.mxu0 0
  %483 = vmatprep.subr.bf16.mxu0 0
  %484 = vmatpush2.bf16.msra.mxu0 0
  %485 = vmatprep.mubr.bf16.mxu0 0
  %486 = vmatmul.mubr.bf16.gmra.mxu0 %v439
  %v487 = vpop.f32.mrf.mxu0
  %v488 = vadd.f32 0.0, %v487
  %v489 = vpop.f32.mrf.mxu0
  %v490 = vadd.f32 0.0, %v489
  %v491 = vpop.f32.mrf.mxu0
  %v492 = vadd.f32 0.0, %v491
  %v493 = vpop.f32.mrf.mxu0
  %v494 = vadd.f32 0.0, %v493
  %495 = vdwg.mxu0
  %496 = vmatprep.subr.bf16.mxu0 0
  %497 = vmatpush1.bf16.msra.mxu0 0
  %498 = vmatprep.subr.bf16.mxu0 0
  %499 = vmatpush1.bf16.msra.mxu0 0
  %500 = vmatprep.subr.bf16.mxu0 0
  %501 = vmatpush1.bf16.msra.mxu0 0
  %502 = vmatprep.subr.bf16.mxu0 0
  %503 = vmatpush1.bf16.msra.mxu0 0
  %504 = vmatprep.subr.bf16.mxu0 0
  %505 = vmatpush1.bf16.msra.mxu0 0
  %506 = vmatprep.subr.bf16.mxu0 0
  %507 = vmatpush1.bf16.msra.mxu0 0
  %508 = vmatprep.subr.bf16.mxu0 0
  %509 = vmatpush1.bf16.msra.mxu0 0
  %510 = vmatprep.subr.bf16.mxu0 %v451
  %511 = vmatpush1.bf16.msra.mxu0 %v448
  %512 = vmatprep.subr.bf16.mxu0 0
  %513 = vmatpush2.bf16.msra.mxu0 0
  %514 = vmatprep.subr.bf16.mxu0 0
  %515 = vmatpush2.bf16.msra.mxu0 0
  %516 = vmatprep.subr.bf16.mxu0 0
  %517 = vmatpush2.bf16.msra.mxu0 0
  %518 = vmatprep.subr.bf16.mxu0 0
  %519 = vmatpush2.bf16.msra.mxu0 0
  %520 = vmatprep.subr.bf16.mxu0 0
  %521 = vmatpush2.bf16.msra.mxu0 0
  %522 = vmatprep.subr.bf16.mxu0 0
  %523 = vmatpush2.bf16.msra.mxu0 0
  %524 = vmatprep.subr.bf16.mxu0 0
  %525 = vmatpush2.bf16.msra.mxu0 0
  %526 = vmatprep.subr.bf16.mxu0 0
  %527 = vmatpush2.bf16.msra.mxu0 0
  %528 = vmatprep.mubr.bf16.mxu0 0
  %529 = vmatmul.mubr.bf16.gmra.mxu0 %v439
  %v530 = vpop.f32.mrf.mxu0
  %v531 = vadd.f32 0.0, %v530
  %v532 = vpop.f32.mrf.mxu0
  %v533 = vadd.f32 0.0, %v532
  %v534 = vpop.f32.mrf.mxu0
  %v535 = vadd.f32 0.0, %v534
  %v536 = vpop.f32.mrf.mxu0
  %v537 = vadd.f32 0.0, %v536
  %538 = vdwg.mxu0
  %v539 = vadd.f32 %v334, %v488
  %v540 = vadd.f32 %v336, %v490
  %v541 = vadd.f32 %v377, %v531
  %v542 = vadd.f32 %v379, %v533
  %v543 = vadd.f32 %v338, %v492
  %v544 = vadd.f32 %v340, %v494
  %v545 = vadd.f32 %v381, %v535
  %v546 = vadd.f32 %v383, %v537
  %vm547 = vcmp.ge.s32.totalorder %v51, 0
  %vm548 = vcmp.ge.s32.totalorder %v52, 0
  %vm549 = vcmp.ge.s32.totalorder %v53, 0
  %vm550 = vcmp.ge.s32.totalorder %v54, 0
  %vm551 = vcmp.lt.s32.totalorder %v51, 16
  %vm552 = vcmp.lt.s32.totalorder %v52, 16
  %vm553 = vcmp.lt.s32.totalorder %v53, 16
  %vm554 = vcmp.lt.s32.totalorder %v54, 16
  %vm555 = vmand %vm547, %vm551
  %vm556 = vmand %vm548, %vm552
  %vm557 = vmand %vm549, %vm553
  %vm558 = vmand %vm550, %vm554
  %vm559 = vmand %vm555, %vm67
  %vm560 = vmand %vm556, %vm68
  %vm561 = vmand %vm557, %vm69
  %vm562 = vmand %vm558, %vm70
  %vm563 = vmand %vm559, %vm75
  %vm564 = vmand %vm560, %vm76
  %vm565 = vmand %vm561, %vm77
  %vm566 = vmand %vm562, %vm78
  %567 = vrot.lane.b32.xlu0 %v36, 1
  %v568 = vpop.permute.xlu0 %567
  %569 = vrot.lane.b32.xlu0 %v85, 1
  %v570 = vpop.permute.xlu0 %569
  %571 = vrot.lane.b32.xlu0 %v37, 1
  %v572 = vpop.permute.xlu0 %571
  %573 = vrot.lane.b32.xlu0 %v86, 1
  %v574 = vpop.permute.xlu0 %573
  %vm575 = vcmp.lt.s32.totalorder %v39, 1
  %v576 = vsel %vm575, %v572, %v574
  %v577 = vsel %vm575, %v570, %v572
  %v578 = vsel %vm575, %v568, %v570
  %v579 = vsel %vm575, %v574, %v568
  %v580 = vsel %vm563, 1, 0
  %v581 = vsel %vm564, 1, 0
  %v582 = vsel %vm565, 1, 0
  %v583 = vsel %vm566, 1, 0
  %vm584 = vcmp.eq.s32.totalorder %v580, 1
  %vm585 = vcmp.eq.s32.totalorder %v581, 1
  %vm586 = vcmp.eq.s32.totalorder %v582, 1
  %vm587 = vcmp.eq.s32.totalorder %v583, 1
  %v588 = vsel %vm584, %v579, 0.0
  %v589 = vsel %vm585, %v578, 0.0
  %v590 = vsel %vm586, %v577, 0.0
  %v591 = vsel %vm587, %v576, 0.0
  %s592 = scalar_lea.vmem %s1, 24
  %v593 = vld [vmem:[%s592] sm:$0xf]
  %v594 = vld [vmem:[%s592 + $0x4] sm:$0xf]
  %v595 = vpack.c.bf16 %v588, %v588
  %v596 = vpack.c.bf16 %v589, %v589
  %v597 = vpack.c.bf16 %v590, %v590
  %v598 = vpack.c.bf16 %v591, %v591
  %v601 = vunpack.c.l.b16 %v593
  %v602 = vunpack.c.l.b16 %v594
  %v603 = vpack.c.b16 %v602, %v601
  %v605 = vsel %vm173, %v603, 0
  %v608 = vand.u32 %v595, %v180
  %v611 = vand.u32 %v596, %v180
  %v614 = vand.u32 %v597, %v180
  %v617 = vand.u32 %v598, %v180
  %619 = vmatprep.subr.bf16.mxu0 0
  %620 = vmatpush1.bf16.msra.mxu0 0
  %621 = vmatprep.subr.bf16.mxu0 0
  %622 = vmatpush1.bf16.msra.mxu0 0
  %623 = vmatprep.subr.bf16.mxu0 0
  %624 = vmatpush1.bf16.msra.mxu0 0
  %625 = vmatprep.subr.bf16.mxu0 0
  %626 = vmatpush1.bf16.msra.mxu0 0
  %627 = vmatprep.subr.bf16.mxu0 0
  %628 = vmatpush1.bf16.msra.mxu0 0
  %629 = vmatprep.subr.bf16.mxu0 0
  %630 = vmatpush1.bf16.msra.mxu0 0
  %631 = vmatprep.subr.bf16.mxu0 0
  %632 = vmatpush1.bf16.msra.mxu0 0
  %633 = vmatprep.subr.bf16.mxu0 %v611
  %634 = vmatpush1.bf16.msra.mxu0 %v608
  %635 = vmatprep.subr.bf16.mxu0 0
  %636 = vmatpush2.bf16.msra.mxu0 0
  %637 = vmatprep.subr.bf16.mxu0 0
  %638 = vmatpush2.bf16.msra.mxu0 0
  %639 = vmatprep.subr.bf16.mxu0 0
  %640 = vmatpush2.bf16.msra.mxu0 0
  %641 = vmatprep.subr.bf16.mxu0 0
  %642 = vmatpush2.bf16.msra.mxu0 0
  %643 = vmatprep.subr.bf16.mxu0 0
  %644 = vmatpush2.bf16.msra.mxu0 0
  %645 = vmatprep.subr.bf16.mxu0 0
  %646 = vmatpush2.bf16.msra.mxu0 0
  %647 = vmatprep.subr.bf16.mxu0 0
  %648 = vmatpush2.bf16.msra.mxu0 0
  %649 = vmatprep.subr.bf16.mxu0 0
  %650 = vmatpush2.bf16.msra.mxu0 0
  %651 = vmatprep.mubr.bf16.mxu0 0
  %652 = vmatmul.mubr.bf16.gmra.mxu0 %v605
  %v653 = vpop.f32.mrf.mxu0
  %v654 = vadd.f32 0.0, %v653
  %v655 = vpop.f32.mrf.mxu0
  %v656 = vadd.f32 0.0, %v655
  %v657 = vpop.f32.mrf.mxu0
  %v658 = vadd.f32 0.0, %v657
  %v659 = vpop.f32.mrf.mxu0
  %v660 = vadd.f32 0.0, %v659
  %661 = vdwg.mxu0
  %662 = vmatprep.subr.bf16.mxu0 0
  %663 = vmatpush1.bf16.msra.mxu0 0
  %664 = vmatprep.subr.bf16.mxu0 0
  %665 = vmatpush1.bf16.msra.mxu0 0
  %666 = vmatprep.subr.bf16.mxu0 0
  %667 = vmatpush1.bf16.msra.mxu0 0
  %668 = vmatprep.subr.bf16.mxu0 0
  %669 = vmatpush1.bf16.msra.mxu0 0
  %670 = vmatprep.subr.bf16.mxu0 0
  %671 = vmatpush1.bf16.msra.mxu0 0
  %672 = vmatprep.subr.bf16.mxu0 0
  %673 = vmatpush1.bf16.msra.mxu0 0
  %674 = vmatprep.subr.bf16.mxu0 0
  %675 = vmatpush1.bf16.msra.mxu0 0
  %676 = vmatprep.subr.bf16.mxu0 %v617
  %677 = vmatpush1.bf16.msra.mxu0 %v614
  %678 = vmatprep.subr.bf16.mxu0 0
  %679 = vmatpush2.bf16.msra.mxu0 0
  %680 = vmatprep.subr.bf16.mxu0 0
  %681 = vmatpush2.bf16.msra.mxu0 0
  %682 = vmatprep.subr.bf16.mxu0 0
  %683 = vmatpush2.bf16.msra.mxu0 0
  %684 = vmatprep.subr.bf16.mxu0 0
  %685 = vmatpush2.bf16.msra.mxu0 0
  %686 = vmatprep.subr.bf16.mxu0 0
  %687 = vmatpush2.bf16.msra.mxu0 0
  %688 = vmatprep.subr.bf16.mxu0 0
  %689 = vmatpush2.bf16.msra.mxu0 0
  %690 = vmatprep.subr.bf16.mxu0 0
  %691 = vmatpush2.bf16.msra.mxu0 0
  %692 = vmatprep.subr.bf16.mxu0 0
  %693 = vmatpush2.bf16.msra.mxu0 0
  %694 = vmatprep.mubr.bf16.mxu0 0
  %695 = vmatmul.mubr.bf16.gmra.mxu0 %v605
  %v696 = vpop.f32.mrf.mxu0
  %v697 = vadd.f32 0.0, %v696
  %v698 = vpop.f32.mrf.mxu0
  %v699 = vadd.f32 0.0, %v698
  %v700 = vpop.f32.mrf.mxu0
  %v701 = vadd.f32 0.0, %v700
  %v702 = vpop.f32.mrf.mxu0
  %v703 = vadd.f32 0.0, %v702
  %704 = vdwg.mxu0
  %v705 = vadd.f32 %v539, %v654
  %v706 = vadd.f32 %v540, %v656
  %v707 = vadd.f32 %v541, %v697
  %v708 = vadd.f32 %v542, %v699
  %v709 = vadd.f32 %v543, %v658
  %v710 = vadd.f32 %v544, %v660
  %v711 = vadd.f32 %v545, %v701
  %v712 = vadd.f32 %v546, %v703
  %s713 = scalar_lea.vmem %s1, 32
  %v714 = vld [vmem:[%s713] sm:$0xf]
  %v715 = vld [vmem:[%s713 + $0x4] sm:$0xf]
  %v716 = vpack.c.bf16 %v36, %v36
  %v717 = vpack.c.bf16 %v85, %v85
  %v718 = vpack.c.bf16 %v37, %v37
  %v719 = vpack.c.bf16 %v86, %v86
  %v722 = vunpack.c.l.b16 %v714
  %v723 = vunpack.c.l.b16 %v715
  %v724 = vpack.c.b16 %v723, %v722
  %v726 = vsel %vm173, %v724, 0
  %v729 = vand.u32 %v716, %v180
  %v732 = vand.u32 %v717, %v180
  %v735 = vand.u32 %v718, %v180
  %v738 = vand.u32 %v719, %v180
  %740 = vmatprep.subr.bf16.mxu0 0
  %741 = vmatpush1.bf16.msra.mxu0 0
  %742 = vmatprep.subr.bf16.mxu0 0
  %743 = vmatpush1.bf16.msra.mxu0 0
  %744 = vmatprep.subr.bf16.mxu0 0
  %745 = vmatpush1.bf16.msra.mxu0 0
  %746 = vmatprep.subr.bf16.mxu0 0
  %747 = vmatpush1.bf16.msra.mxu0 0
  %748 = vmatprep.subr.bf16.mxu0 0
  %749 = vmatpush1.bf16.msra.mxu0 0
  %750 = vmatprep.subr.bf16.mxu0 0
  %751 = vmatpush1.bf16.msra.mxu0 0
  %752 = vmatprep.subr.bf16.mxu0 0
  %753 = vmatpush1.bf16.msra.mxu0 0
  %754 = vmatprep.subr.bf16.mxu0 %v732
  %755 = vmatpush1.bf16.msra.mxu0 %v729
  %756 = vmatprep.subr.bf16.mxu0 0
  %757 = vmatpush2.bf16.msra.mxu0 0
  %758 = vmatprep.subr.bf16.mxu0 0
  %759 = vmatpush2.bf16.msra.mxu0 0
  %760 = vmatprep.subr.bf16.mxu0 0
  %761 = vmatpush2.bf16.msra.mxu0 0
  %762 = vmatprep.subr.bf16.mxu0 0
  %763 = vmatpush2.bf16.msra.mxu0 0
  %764 = vmatprep.subr.bf16.mxu0 0
  %765 = vmatpush2.bf16.msra.mxu0 0
  %766 = vmatprep.subr.bf16.mxu0 0
  %767 = vmatpush2.bf16.msra.mxu0 0
  %768 = vmatprep.subr.bf16.mxu0 0
  %769 = vmatpush2.bf16.msra.mxu0 0
  %770 = vmatprep.subr.bf16.mxu0 0
  %771 = vmatpush2.bf16.msra.mxu0 0
  %772 = vmatprep.mubr.bf16.mxu0 0
  %773 = vmatmul.mubr.bf16.gmra.mxu0 %v726
  %v774 = vpop.f32.mrf.mxu0
  %v775 = vadd.f32 0.0, %v774
  %v776 = vpop.f32.mrf.mxu0
  %v777 = vadd.f32 0.0, %v776
  %v778 = vpop.f32.mrf.mxu0
  %v779 = vadd.f32 0.0, %v778
  %v780 = vpop.f32.mrf.mxu0
  %v781 = vadd.f32 0.0, %v780
  %782 = vdwg.mxu0
  %783 = vmatprep.subr.bf16.mxu0 0
  %784 = vmatpush1.bf16.msra.mxu0 0
  %785 = vmatprep.subr.bf16.mxu0 0
  %786 = vmatpush1.bf16.msra.mxu0 0
  %787 = vmatprep.subr.bf16.mxu0 0
  %788 = vmatpush1.bf16.msra.mxu0 0
  %789 = vmatprep.subr.bf16.mxu0 0
  %790 = vmatpush1.bf16.msra.mxu0 0
  %791 = vmatprep.subr.bf16.mxu0 0
  %792 = vmatpush1.bf16.msra.mxu0 0
  %793 = vmatprep.subr.bf16.mxu0 0
  %794 = vmatpush1.bf16.msra.mxu0 0
  %795 = vmatprep.subr.bf16.mxu0 0
  %796 = vmatpush1.bf16.msra.mxu0 0
  %797 = vmatprep.subr.bf16.mxu0 %v738
  %798 = vmatpush1.bf16.msra.mxu0 %v735
  %799 = vmatprep.subr.bf16.mxu0 0
  %800 = vmatpush2.bf16.msra.mxu0 0
  %801 = vmatprep.subr.bf16.mxu0 0
  %802 = vmatpush2.bf16.msra.mxu0 0
  %803 = vmatprep.subr.bf16.mxu0 0
  %804 = vmatpush2.bf16.msra.mxu0 0
  %805 = vmatprep.subr.bf16.mxu0 0
  %806 = vmatpush2.bf16.msra.mxu0 0
  %807 = vmatprep.subr.bf16.mxu0 0
  %808 = vmatpush2.bf16.msra.mxu0 0
  %809 = vmatprep.subr.bf16.mxu0 0
  %810 = vmatpush2.bf16.msra.mxu0 0
  %811 = vmatprep.subr.bf16.mxu0 0
  %812 = vmatpush2.bf16.msra.mxu0 0
  %813 = vmatprep.subr.bf16.mxu0 0
  %814 = vmatpush2.bf16.msra.mxu0 0
  %815 = vmatprep.mubr.bf16.mxu0 0
  %816 = vmatmul.mubr.bf16.gmra.mxu0 %v726
  %v817 = vpop.f32.mrf.mxu0
  %v818 = vadd.f32 0.0, %v817
  %v819 = vpop.f32.mrf.mxu0
  %v820 = vadd.f32 0.0, %v819
  %v821 = vpop.f32.mrf.mxu0
  %v822 = vadd.f32 0.0, %v821
  %v823 = vpop.f32.mrf.mxu0
  %v824 = vadd.f32 0.0, %v823
  %825 = vdwg.mxu0
  %v826 = vadd.f32 %v705, %v775
  %v827 = vadd.f32 %v706, %v777
  %v828 = vadd.f32 %v707, %v818
  %v829 = vadd.f32 %v708, %v820
  %v830 = vadd.f32 %v709, %v779
  %v831 = vadd.f32 %v710, %v781
  %v832 = vadd.f32 %v711, %v822
  %v833 = vadd.f32 %v712, %v824
  %vm834 = vmand %vm555, %vm385
  %vm835 = vmand %vm556, %vm386
  %vm836 = vmand %vm557, %vm387
  %vm837 = vmand %vm558, %vm388
  %vm838 = vmand %vm834, %vm393
  %vm839 = vmand %vm835, %vm394
  %vm840 = vmand %vm836, %vm395
  %vm841 = vmand %vm837, %vm396
  %842 = vrot.lane.b32.xlu0 %v36, 127
  %v843 = vpop.permute.xlu0 %842
  %844 = vrot.lane.b32.xlu0 %v85, 127
  %v845 = vpop.permute.xlu0 %844
  %846 = vrot.lane.b32.xlu0 %v37, 127
  %v847 = vpop.permute.xlu0 %846
  %848 = vrot.lane.b32.xlu0 %v86, 127
  %v849 = vpop.permute.xlu0 %848
  %vm850 = vcmp.lt.s32.totalorder %v39, 127
  %v851 = vsel %vm850, %v847, %v849
  %v852 = vsel %vm850, %v845, %v847
  %v853 = vsel %vm850, %v843, %v845
  %v854 = vsel %vm850, %v849, %v843
  %v855 = vsel %vm838, 1, 0
  %v856 = vsel %vm839, 1, 0
  %v857 = vsel %vm840, 1, 0
  %v858 = vsel %vm841, 1, 0
  %vm859 = vcmp.eq.s32.totalorder %v855, 1
  %vm860 = vcmp.eq.s32.totalorder %v856, 1
  %vm861 = vcmp.eq.s32.totalorder %v857, 1
  %vm862 = vcmp.eq.s32.totalorder %v858, 1
  %v863 = vsel %vm859, %v853, 0.0
  %v864 = vsel %vm860, %v852, 0.0
  %v865 = vsel %vm861, %v851, 0.0
  %v866 = vsel %vm862, %v854, 0.0
  %s867 = scalar_lea.vmem %s1, 40
  %v868 = vld [vmem:[%s867] sm:$0xf]
  %v869 = vld [vmem:[%s867 + $0x4] sm:$0xf]
  %v870 = vpack.c.bf16 %v863, %v863
  %v871 = vpack.c.bf16 %v864, %v864
  %v872 = vpack.c.bf16 %v865, %v865
  %v873 = vpack.c.bf16 %v866, %v866
  %v876 = vunpack.c.l.b16 %v868
  %v877 = vunpack.c.l.b16 %v869
  %v878 = vpack.c.b16 %v877, %v876
  %v880 = vsel %vm173, %v878, 0
  %v883 = vand.u32 %v870, %v180
  %v886 = vand.u32 %v871, %v180
  %v889 = vand.u32 %v872, %v180
  %v892 = vand.u32 %v873, %v180
  %894 = vmatprep.subr.bf16.mxu0 0
  %895 = vmatpush1.bf16.msra.mxu0 0
  %896 = vmatprep.subr.bf16.mxu0 0
  %897 = vmatpush1.bf16.msra.mxu0 0
  %898 = vmatprep.subr.bf16.mxu0 0
  %899 = vmatpush1.bf16.msra.mxu0 0
  %900 = vmatprep.subr.bf16.mxu0 0
  %901 = vmatpush1.bf16.msra.mxu0 0
  %902 = vmatprep.subr.bf16.mxu0 0
  %903 = vmatpush1.bf16.msra.mxu0 0
  %904 = vmatprep.subr.bf16.mxu0 0
  %905 = vmatpush1.bf16.msra.mxu0 0
  %906 = vmatprep.subr.bf16.mxu0 0
  %907 = vmatpush1.bf16.msra.mxu0 0
  %908 = vmatprep.subr.bf16.mxu0 %v886
  %909 = vmatpush1.bf16.msra.mxu0 %v883
  %910 = vmatprep.subr.bf16.mxu0 0
  %911 = vmatpush2.bf16.msra.mxu0 0
  %912 = vmatprep.subr.bf16.mxu0 0
  %913 = vmatpush2.bf16.msra.mxu0 0
  %914 = vmatprep.subr.bf16.mxu0 0
  %915 = vmatpush2.bf16.msra.mxu0 0
  %916 = vmatprep.subr.bf16.mxu0 0
  %917 = vmatpush2.bf16.msra.mxu0 0
  %918 = vmatprep.subr.bf16.mxu0 0
  %919 = vmatpush2.bf16.msra.mxu0 0
  %920 = vmatprep.subr.bf16.mxu0 0
  %921 = vmatpush2.bf16.msra.mxu0 0
  %922 = vmatprep.subr.bf16.mxu0 0
  %923 = vmatpush2.bf16.msra.mxu0 0
  %924 = vmatprep.subr.bf16.mxu0 0
  %925 = vmatpush2.bf16.msra.mxu0 0
  %926 = vmatprep.mubr.bf16.mxu0 0
  %927 = vmatmul.mubr.bf16.gmra.mxu0 %v880
  %v928 = vpop.f32.mrf.mxu0
  %v929 = vadd.f32 0.0, %v928
  %v930 = vpop.f32.mrf.mxu0
  %v931 = vadd.f32 0.0, %v930
  %v932 = vpop.f32.mrf.mxu0
  %v933 = vadd.f32 0.0, %v932
  %v934 = vpop.f32.mrf.mxu0
  %v935 = vadd.f32 0.0, %v934
  %936 = vdwg.mxu0
  %937 = vmatprep.subr.bf16.mxu0 0
  %938 = vmatpush1.bf16.msra.mxu0 0
  %939 = vmatprep.subr.bf16.mxu0 0
  %940 = vmatpush1.bf16.msra.mxu0 0
  %941 = vmatprep.subr.bf16.mxu0 0
  %942 = vmatpush1.bf16.msra.mxu0 0
  %943 = vmatprep.subr.bf16.mxu0 0
  %944 = vmatpush1.bf16.msra.mxu0 0
  %945 = vmatprep.subr.bf16.mxu0 0
  %946 = vmatpush1.bf16.msra.mxu0 0
  %947 = vmatprep.subr.bf16.mxu0 0
  %948 = vmatpush1.bf16.msra.mxu0 0
  %949 = vmatprep.subr.bf16.mxu0 0
  %950 = vmatpush1.bf16.msra.mxu0 0
  %951 = vmatprep.subr.bf16.mxu0 %v892
  %952 = vmatpush1.bf16.msra.mxu0 %v889
  %953 = vmatprep.subr.bf16.mxu0 0
  %954 = vmatpush2.bf16.msra.mxu0 0
  %955 = vmatprep.subr.bf16.mxu0 0
  %956 = vmatpush2.bf16.msra.mxu0 0
  %957 = vmatprep.subr.bf16.mxu0 0
  %958 = vmatpush2.bf16.msra.mxu0 0
  %959 = vmatprep.subr.bf16.mxu0 0
  %960 = vmatpush2.bf16.msra.mxu0 0
  %961 = vmatprep.subr.bf16.mxu0 0
  %962 = vmatpush2.bf16.msra.mxu0 0
  %963 = vmatprep.subr.bf16.mxu0 0
  %964 = vmatpush2.bf16.msra.mxu0 0
  %965 = vmatprep.subr.bf16.mxu0 0
  %966 = vmatpush2.bf16.msra.mxu0 0
  %967 = vmatprep.subr.bf16.mxu0 0
  %968 = vmatpush2.bf16.msra.mxu0 0
  %969 = vmatprep.mubr.bf16.mxu0 0
  %970 = vmatmul.mubr.bf16.gmra.mxu0 %v880
  %v971 = vpop.f32.mrf.mxu0
  %v972 = vadd.f32 0.0, %v971
  %v973 = vpop.f32.mrf.mxu0
  %v974 = vadd.f32 0.0, %v973
  %v975 = vpop.f32.mrf.mxu0
  %v976 = vadd.f32 0.0, %v975
  %v977 = vpop.f32.mrf.mxu0
  %v978 = vadd.f32 0.0, %v977
  %979 = vdwg.mxu0
  %v980 = vadd.f32 %v826, %v929
  %v981 = vadd.f32 %v827, %v931
  %v982 = vadd.f32 %v828, %v972
  %v983 = vadd.f32 %v829, %v974
  %v984 = vadd.f32 %v830, %v933
  %v985 = vadd.f32 %v831, %v935
  %v986 = vadd.f32 %v832, %v976
  %v987 = vadd.f32 %v833, %v978
  %vm988 = vcmp.ge.s32.totalorder %v51, 4294967295
  %vm989 = vcmp.ge.s32.totalorder %v52, 4294967295
  %vm990 = vcmp.ge.s32.totalorder %v53, 4294967295
  %vm991 = vcmp.ge.s32.totalorder %v54, 4294967295
  %vm992 = vcmp.lt.s32.totalorder %v51, 15
  %vm993 = vcmp.lt.s32.totalorder %v52, 15
  %vm994 = vcmp.lt.s32.totalorder %v53, 15
  %vm995 = vcmp.lt.s32.totalorder %v54, 15
  %vm996 = vmand %vm988, %vm992
  %vm997 = vmand %vm989, %vm993
  %vm998 = vmand %vm990, %vm994
  %vm999 = vmand %vm991, %vm995
  %vm1000 = vmand %vm996, %vm67
  %vm1001 = vmand %vm997, %vm68
  %vm1002 = vmand %vm998, %vm69
  %vm1003 = vmand %vm999, %vm70
  %vm1004 = vmand %vm1000, %vm75
  %vm1005 = vmand %vm1001, %vm76
  %vm1006 = vmand %vm1002, %vm77
  %vm1007 = vmand %vm1003, %vm78
  %1008 = vrot.lane.b32.xlu0 %v36, 113
  %v1009 = vpop.permute.xlu0 %1008
  %1010 = vrot.lane.b32.xlu0 %v85, 113
  %v1011 = vpop.permute.xlu0 %1010
  %1012 = vrot.lane.b32.xlu0 %v37, 113
  %v1013 = vpop.permute.xlu0 %1012
  %1014 = vrot.lane.b32.xlu0 %v86, 113
  %v1015 = vpop.permute.xlu0 %1014
  %vm1016 = vcmp.lt.s32.totalorder %v39, 113
  %v1017 = vsel %vm1016, %v1013, %v1015
  %v1018 = vsel %vm1016, %v1011, %v1013
  %v1019 = vsel %vm1016, %v1009, %v1011
  %v1020 = vsel %vm1016, %v1015, %v1009
  %v1021 = vsel %vm1004, 1, 0
  %v1022 = vsel %vm1005, 1, 0
  %v1023 = vsel %vm1006, 1, 0
  %v1024 = vsel %vm1007, 1, 0
  %vm1025 = vcmp.eq.s32.totalorder %v1021, 1
  %vm1026 = vcmp.eq.s32.totalorder %v1022, 1
  %vm1027 = vcmp.eq.s32.totalorder %v1023, 1
  %vm1028 = vcmp.eq.s32.totalorder %v1024, 1
  %v1029 = vsel %vm1025, %v1019, 0.0
  %v1030 = vsel %vm1026, %v1018, 0.0
  %v1031 = vsel %vm1027, %v1017, 0.0
  %v1032 = vsel %vm1028, %v1020, 0.0
  %s1033 = scalar_lea.vmem %s1, 48
  %v1034 = vld [vmem:[%s1033] sm:$0xf]
  %v1035 = vld [vmem:[%s1033 + $0x4] sm:$0xf]
  %v1036 = vpack.c.bf16 %v1029, %v1029
  %v1037 = vpack.c.bf16 %v1030, %v1030
  %v1038 = vpack.c.bf16 %v1031, %v1031
  %v1039 = vpack.c.bf16 %v1032, %v1032
  %v1042 = vunpack.c.l.b16 %v1034
  %v1043 = vunpack.c.l.b16 %v1035
  %v1044 = vpack.c.b16 %v1043, %v1042
  %v1046 = vsel %vm173, %v1044, 0
  %v1049 = vand.u32 %v1036, %v180
  %v1052 = vand.u32 %v1037, %v180
  %v1055 = vand.u32 %v1038, %v180
  %v1058 = vand.u32 %v1039, %v180
  %1060 = vmatprep.subr.bf16.mxu0 0
  %1061 = vmatpush1.bf16.msra.mxu0 0
  %1062 = vmatprep.subr.bf16.mxu0 0
  %1063 = vmatpush1.bf16.msra.mxu0 0
  %1064 = vmatprep.subr.bf16.mxu0 0
  %1065 = vmatpush1.bf16.msra.mxu0 0
  %1066 = vmatprep.subr.bf16.mxu0 0
  %1067 = vmatpush1.bf16.msra.mxu0 0
  %1068 = vmatprep.subr.bf16.mxu0 0
  %1069 = vmatpush1.bf16.msra.mxu0 0
  %1070 = vmatprep.subr.bf16.mxu0 0
  %1071 = vmatpush1.bf16.msra.mxu0 0
  %1072 = vmatprep.subr.bf16.mxu0 0
  %1073 = vmatpush1.bf16.msra.mxu0 0
  %1074 = vmatprep.subr.bf16.mxu0 %v1052
  %1075 = vmatpush1.bf16.msra.mxu0 %v1049
  %1076 = vmatprep.subr.bf16.mxu0 0
  %1077 = vmatpush2.bf16.msra.mxu0 0
  %1078 = vmatprep.subr.bf16.mxu0 0
  %1079 = vmatpush2.bf16.msra.mxu0 0
  %1080 = vmatprep.subr.bf16.mxu0 0
  %1081 = vmatpush2.bf16.msra.mxu0 0
  %1082 = vmatprep.subr.bf16.mxu0 0
  %1083 = vmatpush2.bf16.msra.mxu0 0
  %1084 = vmatprep.subr.bf16.mxu0 0
  %1085 = vmatpush2.bf16.msra.mxu0 0
  %1086 = vmatprep.subr.bf16.mxu0 0
  %1087 = vmatpush2.bf16.msra.mxu0 0
  %1088 = vmatprep.subr.bf16.mxu0 0
  %1089 = vmatpush2.bf16.msra.mxu0 0
  %1090 = vmatprep.subr.bf16.mxu0 0
  %1091 = vmatpush2.bf16.msra.mxu0 0
  %1092 = vmatprep.mubr.bf16.mxu0 0
  %1093 = vmatmul.mubr.bf16.gmra.mxu0 %v1046
  %v1094 = vpop.f32.mrf.mxu0
  %v1095 = vadd.f32 0.0, %v1094
  %v1096 = vpop.f32.mrf.mxu0
  %v1097 = vadd.f32 0.0, %v1096
  %v1098 = vpop.f32.mrf.mxu0
  %v1099 = vadd.f32 0.0, %v1098
  %v1100 = vpop.f32.mrf.mxu0
  %v1101 = vadd.f32 0.0, %v1100
  %1102 = vdwg.mxu0
  %1103 = vmatprep.subr.bf16.mxu0 0
  %1104 = vmatpush1.bf16.msra.mxu0 0
  %1105 = vmatprep.subr.bf16.mxu0 0
  %1106 = vmatpush1.bf16.msra.mxu0 0
  %1107 = vmatprep.subr.bf16.mxu0 0
  %1108 = vmatpush1.bf16.msra.mxu0 0
  %1109 = vmatprep.subr.bf16.mxu0 0
  %1110 = vmatpush1.bf16.msra.mxu0 0
  %1111 = vmatprep.subr.bf16.mxu0 0
  %1112 = vmatpush1.bf16.msra.mxu0 0
  %1113 = vmatprep.subr.bf16.mxu0 0
  %1114 = vmatpush1.bf16.msra.mxu0 0
  %1115 = vmatprep.subr.bf16.mxu0 0
  %1116 = vmatpush1.bf16.msra.mxu0 0
  %1117 = vmatprep.subr.bf16.mxu0 %v1058
  %1118 = vmatpush1.bf16.msra.mxu0 %v1055
  %1119 = vmatprep.subr.bf16.mxu0 0
  %1120 = vmatpush2.bf16.msra.mxu0 0
  %1121 = vmatprep.subr.bf16.mxu0 0
  %1122 = vmatpush2.bf16.msra.mxu0 0
  %1123 = vmatprep.subr.bf16.mxu0 0
  %1124 = vmatpush2.bf16.msra.mxu0 0
  %1125 = vmatprep.subr.bf16.mxu0 0
  %1126 = vmatpush2.bf16.msra.mxu0 0
  %1127 = vmatprep.subr.bf16.mxu0 0
  %1128 = vmatpush2.bf16.msra.mxu0 0
  %1129 = vmatprep.subr.bf16.mxu0 0
  %1130 = vmatpush2.bf16.msra.mxu0 0
  %1131 = vmatprep.subr.bf16.mxu0 0
  %1132 = vmatpush2.bf16.msra.mxu0 0
  %1133 = vmatprep.subr.bf16.mxu0 0
  %1134 = vmatpush2.bf16.msra.mxu0 0
  %1135 = vmatprep.mubr.bf16.mxu0 0
  %1136 = vmatmul.mubr.bf16.gmra.mxu0 %v1046
  %v1137 = vpop.f32.mrf.mxu0
  %v1138 = vadd.f32 0.0, %v1137
  %v1139 = vpop.f32.mrf.mxu0
  %v1140 = vadd.f32 0.0, %v1139
  %v1141 = vpop.f32.mrf.mxu0
  %v1142 = vadd.f32 0.0, %v1141
  %v1143 = vpop.f32.mrf.mxu0
  %v1144 = vadd.f32 0.0, %v1143
  %1145 = vdwg.mxu0
  %v1146 = vadd.f32 %v980, %v1095
  %v1147 = vadd.f32 %v981, %v1097
  %v1148 = vadd.f32 %v982, %v1138
  %v1149 = vadd.f32 %v983, %v1140
  %v1150 = vadd.f32 %v984, %v1099
  %v1151 = vadd.f32 %v985, %v1101
  %v1152 = vadd.f32 %v986, %v1142
  %v1153 = vadd.f32 %v987, %v1144
  %vm1154 = vmand %vm996, %vm120
  %vm1155 = vmand %vm997, %vm121
  %vm1156 = vmand %vm998, %vm122
  %vm1157 = vmand %vm999, %vm123
  %vm1158 = vmand %vm1154, %vm128
  %vm1159 = vmand %vm1155, %vm129
  %vm1160 = vmand %vm1156, %vm130
  %vm1161 = vmand %vm1157, %vm131
  %1162 = vrot.lane.b32.xlu0 %v36, 112
  %v1163 = vpop.permute.xlu0 %1162
  %1164 = vrot.lane.b32.xlu0 %v85, 112
  %v1165 = vpop.permute.xlu0 %1164
  %1166 = vrot.lane.b32.xlu0 %v37, 112
  %v1167 = vpop.permute.xlu0 %1166
  %1168 = vrot.lane.b32.xlu0 %v86, 112
  %v1169 = vpop.permute.xlu0 %1168
  %vm1170 = vcmp.lt.s32.totalorder %v39, 112
  %v1171 = vsel %vm1170, %v1167, %v1169
  %v1172 = vsel %vm1170, %v1165, %v1167
  %v1173 = vsel %vm1170, %v1163, %v1165
  %v1174 = vsel %vm1170, %v1169, %v1163
  %v1175 = vsel %vm1158, 1, 0
  %v1176 = vsel %vm1159, 1, 0
  %v1177 = vsel %vm1160, 1, 0
  %v1178 = vsel %vm1161, 1, 0
  %vm1179 = vcmp.eq.s32.totalorder %v1175, 1
  %vm1180 = vcmp.eq.s32.totalorder %v1176, 1
  %vm1181 = vcmp.eq.s32.totalorder %v1177, 1
  %vm1182 = vcmp.eq.s32.totalorder %v1178, 1
  %v1183 = vsel %vm1179, %v1173, 0.0
  %v1184 = vsel %vm1180, %v1172, 0.0
  %v1185 = vsel %vm1181, %v1171, 0.0
  %v1186 = vsel %vm1182, %v1174, 0.0
  %s1187 = scalar_lea.vmem %s1, 56
  %v1188 = vld [vmem:[%s1187] sm:$0xf]
  %v1189 = vld [vmem:[%s1187 + $0x4] sm:$0xf]
  %v1190 = vpack.c.bf16 %v1183, %v1183
  %v1191 = vpack.c.bf16 %v1184, %v1184
  %v1192 = vpack.c.bf16 %v1185, %v1185
  %v1193 = vpack.c.bf16 %v1186, %v1186
  %v1196 = vunpack.c.l.b16 %v1188
  %v1197 = vunpack.c.l.b16 %v1189
  %v1198 = vpack.c.b16 %v1197, %v1196
  %v1200 = vsel %vm173, %v1198, 0
  %v1203 = vand.u32 %v1190, %v180
  %v1206 = vand.u32 %v1191, %v180
  %v1209 = vand.u32 %v1192, %v180
  %v1212 = vand.u32 %v1193, %v180
  %1214 = vmatprep.subr.bf16.mxu0 0
  %1215 = vmatpush1.bf16.msra.mxu0 0
  %1216 = vmatprep.subr.bf16.mxu0 0
  %1217 = vmatpush1.bf16.msra.mxu0 0
  %1218 = vmatprep.subr.bf16.mxu0 0
  %1219 = vmatpush1.bf16.msra.mxu0 0
  %1220 = vmatprep.subr.bf16.mxu0 0
  %1221 = vmatpush1.bf16.msra.mxu0 0
  %1222 = vmatprep.subr.bf16.mxu0 0
  %1223 = vmatpush1.bf16.msra.mxu0 0
  %1224 = vmatprep.subr.bf16.mxu0 0
  %1225 = vmatpush1.bf16.msra.mxu0 0
  %1226 = vmatprep.subr.bf16.mxu0 0
  %1227 = vmatpush1.bf16.msra.mxu0 0
  %1228 = vmatprep.subr.bf16.mxu0 %v1206
  %1229 = vmatpush1.bf16.msra.mxu0 %v1203
  %1230 = vmatprep.subr.bf16.mxu0 0
  %1231 = vmatpush2.bf16.msra.mxu0 0
  %1232 = vmatprep.subr.bf16.mxu0 0
  %1233 = vmatpush2.bf16.msra.mxu0 0
  %1234 = vmatprep.subr.bf16.mxu0 0
  %1235 = vmatpush2.bf16.msra.mxu0 0
  %1236 = vmatprep.subr.bf16.mxu0 0
  %1237 = vmatpush2.bf16.msra.mxu0 0
  %1238 = vmatprep.subr.bf16.mxu0 0
  %1239 = vmatpush2.bf16.msra.mxu0 0
  %1240 = vmatprep.subr.bf16.mxu0 0
  %1241 = vmatpush2.bf16.msra.mxu0 0
  %1242 = vmatprep.subr.bf16.mxu0 0
  %1243 = vmatpush2.bf16.msra.mxu0 0
  %1244 = vmatprep.subr.bf16.mxu0 0
  %1245 = vmatpush2.bf16.msra.mxu0 0
  %1246 = vmatprep.mubr.bf16.mxu0 0
  %1247 = vmatmul.mubr.bf16.gmra.mxu0 %v1200
  %v1248 = vpop.f32.mrf.mxu0
  %v1249 = vadd.f32 0.0, %v1248
  %v1250 = vpop.f32.mrf.mxu0
  %v1251 = vadd.f32 0.0, %v1250
  %v1252 = vpop.f32.mrf.mxu0
  %v1253 = vadd.f32 0.0, %v1252
  %v1254 = vpop.f32.mrf.mxu0
  %v1255 = vadd.f32 0.0, %v1254
  %1256 = vdwg.mxu0
  %1257 = vmatprep.subr.bf16.mxu0 0
  %1258 = vmatpush1.bf16.msra.mxu0 0
  %1259 = vmatprep.subr.bf16.mxu0 0
  %1260 = vmatpush1.bf16.msra.mxu0 0
  %1261 = vmatprep.subr.bf16.mxu0 0
  %1262 = vmatpush1.bf16.msra.mxu0 0
  %1263 = vmatprep.subr.bf16.mxu0 0
  %1264 = vmatpush1.bf16.msra.mxu0 0
  %1265 = vmatprep.subr.bf16.mxu0 0
  %1266 = vmatpush1.bf16.msra.mxu0 0
  %1267 = vmatprep.subr.bf16.mxu0 0
  %1268 = vmatpush1.bf16.msra.mxu0 0
  %1269 = vmatprep.subr.bf16.mxu0 0
  %1270 = vmatpush1.bf16.msra.mxu0 0
  %1271 = vmatprep.subr.bf16.mxu0 %v1212
  %1272 = vmatpush1.bf16.msra.mxu0 %v1209
  %1273 = vmatprep.subr.bf16.mxu0 0
  %1274 = vmatpush2.bf16.msra.mxu0 0
  %1275 = vmatprep.subr.bf16.mxu0 0
  %1276 = vmatpush2.bf16.msra.mxu0 0
  %1277 = vmatprep.subr.bf16.mxu0 0
  %1278 = vmatpush2.bf16.msra.mxu0 0
  %1279 = vmatprep.subr.bf16.mxu0 0
  %1280 = vmatpush2.bf16.msra.mxu0 0
  %1281 = vmatprep.subr.bf16.mxu0 0
  %1282 = vmatpush2.bf16.msra.mxu0 0
  %1283 = vmatprep.subr.bf16.mxu0 0
  %1284 = vmatpush2.bf16.msra.mxu0 0
  %1285 = vmatprep.subr.bf16.mxu0 0
  %1286 = vmatpush2.bf16.msra.mxu0 0
  %1287 = vmatprep.subr.bf16.mxu0 0
  %1288 = vmatpush2.bf16.msra.mxu0 0
  %1289 = vmatprep.mubr.bf16.mxu0 0
  %1290 = vmatmul.mubr.bf16.gmra.mxu0 %v1200
  %v1291 = vpop.f32.mrf.mxu0
  %v1292 = vadd.f32 0.0, %v1291
  %v1293 = vpop.f32.mrf.mxu0
  %v1294 = vadd.f32 0.0, %v1293
  %v1295 = vpop.f32.mrf.mxu0
  %v1296 = vadd.f32 0.0, %v1295
  %v1297 = vpop.f32.mrf.mxu0
  %v1298 = vadd.f32 0.0, %v1297
  %1299 = vdwg.mxu0
  %v1300 = vadd.f32 %v1146, %v1249
  %v1301 = vadd.f32 %v1147, %v1251
  %v1302 = vadd.f32 %v1148, %v1292
  %v1303 = vadd.f32 %v1149, %v1294
  %v1304 = vadd.f32 %v1150, %v1253
  %v1305 = vadd.f32 %v1151, %v1255
  %v1306 = vadd.f32 %v1152, %v1296
  %v1307 = vadd.f32 %v1153, %v1298
  %vm1308 = vmand %vm996, %vm385
  %vm1309 = vmand %vm997, %vm386
  %vm1310 = vmand %vm998, %vm387
  %vm1311 = vmand %vm999, %vm388
  %vm1312 = vmand %vm1308, %vm393
  %vm1313 = vmand %vm1309, %vm394
  %vm1314 = vmand %vm1310, %vm395
  %vm1315 = vmand %vm1311, %vm396
  %1316 = vrot.lane.b32.xlu0 %v36, 111
  %v1317 = vpop.permute.xlu0 %1316
  %1318 = vrot.lane.b32.xlu0 %v85, 111
  %v1319 = vpop.permute.xlu0 %1318
  %1320 = vrot.lane.b32.xlu0 %v37, 111
  %v1321 = vpop.permute.xlu0 %1320
  %1322 = vrot.lane.b32.xlu0 %v86, 111
  %v1323 = vpop.permute.xlu0 %1322
  %vm1324 = vcmp.lt.s32.totalorder %v39, 111
  %v1325 = vsel %vm1324, %v1321, %v1323
  %v1326 = vsel %vm1324, %v1319, %v1321
  %v1327 = vsel %vm1324, %v1317, %v1319
  %v1328 = vsel %vm1324, %v1323, %v1317
  %v1329 = vsel %vm1312, 1, 0
  %v1330 = vsel %vm1313, 1, 0
  %v1331 = vsel %vm1314, 1, 0
  %v1332 = vsel %vm1315, 1, 0
  %vm1333 = vcmp.eq.s32.totalorder %v1329, 1
  %vm1334 = vcmp.eq.s32.totalorder %v1330, 1
  %vm1335 = vcmp.eq.s32.totalorder %v1331, 1
  %vm1336 = vcmp.eq.s32.totalorder %v1332, 1
  %v1337 = vsel %vm1333, %v1327, 0.0
  %v1338 = vsel %vm1334, %v1326, 0.0
  %v1339 = vsel %vm1335, %v1325, 0.0
  %v1340 = vsel %vm1336, %v1328, 0.0
  %s1341 = scalar_lea.vmem %s1, 64
  %v1342 = vld [vmem:[%s1341] sm:$0xf]
  %v1343 = vld [vmem:[%s1341 + $0x4] sm:$0xf]
  %v1344 = vpack.c.bf16 %v1337, %v1337
  %v1345 = vpack.c.bf16 %v1338, %v1338
  %v1346 = vpack.c.bf16 %v1339, %v1339
  %v1347 = vpack.c.bf16 %v1340, %v1340
  %v1350 = vunpack.c.l.b16 %v1342
  %v1351 = vunpack.c.l.b16 %v1343
  %v1352 = vpack.c.b16 %v1351, %v1350
  %v1354 = vsel %vm173, %v1352, 0
  %v1357 = vand.u32 %v1344, %v180
  %v1360 = vand.u32 %v1345, %v180
  %v1363 = vand.u32 %v1346, %v180
  %v1366 = vand.u32 %v1347, %v180
  %1368 = vmatprep.subr.bf16.mxu0 0
  %1369 = vmatpush1.bf16.msra.mxu0 0
  %1370 = vmatprep.subr.bf16.mxu0 0
  %1371 = vmatpush1.bf16.msra.mxu0 0
  %1372 = vmatprep.subr.bf16.mxu0 0
  %1373 = vmatpush1.bf16.msra.mxu0 0
  %1374 = vmatprep.subr.bf16.mxu0 0
  %1375 = vmatpush1.bf16.msra.mxu0 0
  %1376 = vmatprep.subr.bf16.mxu0 0
  %1377 = vmatpush1.bf16.msra.mxu0 0
  %1378 = vmatprep.subr.bf16.mxu0 0
  %1379 = vmatpush1.bf16.msra.mxu0 0
  %1380 = vmatprep.subr.bf16.mxu0 0
  %1381 = vmatpush1.bf16.msra.mxu0 0
  %1382 = vmatprep.subr.bf16.mxu0 %v1360
  %1383 = vmatpush1.bf16.msra.mxu0 %v1357
  %1384 = vmatprep.subr.bf16.mxu0 0
  %1385 = vmatpush2.bf16.msra.mxu0 0
  %1386 = vmatprep.subr.bf16.mxu0 0
  %1387 = vmatpush2.bf16.msra.mxu0 0
  %1388 = vmatprep.subr.bf16.mxu0 0
  %1389 = vmatpush2.bf16.msra.mxu0 0
  %1390 = vmatprep.subr.bf16.mxu0 0
  %1391 = vmatpush2.bf16.msra.mxu0 0
  %1392 = vmatprep.subr.bf16.mxu0 0
  %1393 = vmatpush2.bf16.msra.mxu0 0
  %1394 = vmatprep.subr.bf16.mxu0 0
  %1395 = vmatpush2.bf16.msra.mxu0 0
  %1396 = vmatprep.subr.bf16.mxu0 0
  %1397 = vmatpush2.bf16.msra.mxu0 0
  %1398 = vmatprep.subr.bf16.mxu0 0
  %1399 = vmatpush2.bf16.msra.mxu0 0
  %1400 = vmatprep.mubr.bf16.mxu0 0
  %1401 = vmatmul.mubr.bf16.gmra.mxu0 %v1354
  %v1402 = vpop.f32.mrf.mxu0
  %v1403 = vadd.f32 0.0, %v1402
  %v1404 = vpop.f32.mrf.mxu0
  %v1405 = vadd.f32 0.0, %v1404
  %v1406 = vpop.f32.mrf.mxu0
  %v1407 = vadd.f32 0.0, %v1406
  %v1408 = vpop.f32.mrf.mxu0
  %v1409 = vadd.f32 0.0, %v1408
  %1410 = vdwg.mxu0
  %1411 = vmatprep.subr.bf16.mxu0 0
  %1412 = vmatpush1.bf16.msra.mxu0 0
  %1413 = vmatprep.subr.bf16.mxu0 0
  %1414 = vmatpush1.bf16.msra.mxu0 0
  %1415 = vmatprep.subr.bf16.mxu0 0
  %1416 = vmatpush1.bf16.msra.mxu0 0
  %1417 = vmatprep.subr.bf16.mxu0 0
  %1418 = vmatpush1.bf16.msra.mxu0 0
  %1419 = vmatprep.subr.bf16.mxu0 0
  %1420 = vmatpush1.bf16.msra.mxu0 0
  %1421 = vmatprep.subr.bf16.mxu0 0
  %1422 = vmatpush1.bf16.msra.mxu0 0
  %1423 = vmatprep.subr.bf16.mxu0 0
  %1424 = vmatpush1.bf16.msra.mxu0 0
  %1425 = vmatprep.subr.bf16.mxu0 %v1366
  %1426 = vmatpush1.bf16.msra.mxu0 %v1363
  %1427 = vmatprep.subr.bf16.mxu0 0
  %1428 = vmatpush2.bf16.msra.mxu0 0
  %1429 = vmatprep.subr.bf16.mxu0 0
  %1430 = vmatpush2.bf16.msra.mxu0 0
  %1431 = vmatprep.subr.bf16.mxu0 0
  %1432 = vmatpush2.bf16.msra.mxu0 0
  %1433 = vmatprep.subr.bf16.mxu0 0
  %1434 = vmatpush2.bf16.msra.mxu0 0
  %1435 = vmatprep.subr.bf16.mxu0 0
  %1436 = vmatpush2.bf16.msra.mxu0 0
  %1437 = vmatprep.subr.bf16.mxu0 0
  %1438 = vmatpush2.bf16.msra.mxu0 0
  %1439 = vmatprep.subr.bf16.mxu0 0
  %1440 = vmatpush2.bf16.msra.mxu0 0
  %1441 = vmatprep.subr.bf16.mxu0 0
  %1442 = vmatpush2.bf16.msra.mxu0 0
  %1443 = vmatprep.mubr.bf16.mxu0 0
  %1444 = vmatmul.mubr.bf16.gmra.mxu0 %v1354
  %v1445 = vpop.f32.mrf.mxu0
  %v1446 = vadd.f32 0.0, %v1445
  %v1447 = vpop.f32.mrf.mxu0
  %v1448 = vadd.f32 0.0, %v1447
  %v1449 = vpop.f32.mrf.mxu0
  %v1450 = vadd.f32 0.0, %v1449
  %v1451 = vpop.f32.mrf.mxu0
  %v1452 = vadd.f32 0.0, %v1451
  %1453 = vdwg.mxu0
  %v1454 = vadd.f32 %v1300, %v1403
  %v1455 = vadd.f32 %v1301, %v1405
  %v1456 = vadd.f32 %v1302, %v1446
  %v1457 = vadd.f32 %v1303, %v1448
  %v1458 = vadd.f32 %v1304, %v1407
  %v1459 = vadd.f32 %v1305, %v1409
  %v1460 = vadd.f32 %v1306, %v1450
  %v1461 = vadd.f32 %v1307, %v1452
  %v1462 = vld [vmem:[%s2] sm:$0xff]
  %v1463 = vld [vmem:[%s2 + $0x8] sm:$0xff]
  %v1464 = vld [vmem:[%s3] sm:$0xff]
  %v1465 = vld [vmem:[%s3 + $0x8] sm:$0xff]
  %v1466 = vadd.f32 %v1454, %v1455
  %v1467 = vadd.f32 %v1466, %v1456
  %v1468 = vadd.f32 %v1467, %v1457
  %1469 = vadd.xlane.f32.xlu0 %v1468
  %v1470 = vpop.xlane.xlu0 %1469
  %v1471 = vadd.f32 %v1458, %v1459
  %v1472 = vadd.f32 %v1471, %v1460
  %v1473 = vadd.f32 %v1472, %v1461
  %1474 = vadd.xlane.f32.xlu0 %v1473
  %v1475 = vpop.xlane.xlu0 %1474
  %v1476 = vrcp.pop 512.0
  %v1477 = vmul.f32 %v1470, %v1476
  %v1478 = vmul.f32 %v1475, %v1476
  %v1479 = vsub.f32 %v1454, %v1477
  %v1480 = vsub.f32 %v1455, %v1477
  %v1481 = vsub.f32 %v1456, %v1477
  %v1482 = vsub.f32 %v1457, %v1477
  %v1483 = vsub.f32 %v1458, %v1478
  %v1484 = vsub.f32 %v1459, %v1478
  %v1485 = vsub.f32 %v1460, %v1478
  %v1486 = vsub.f32 %v1461, %v1478
  %v1487 = vmul.f32 %v1479, %v1479
  %v1488 = vmul.f32 %v1480, %v1480
  %v1489 = vmul.f32 %v1481, %v1481
  %v1490 = vmul.f32 %v1482, %v1482
  %v1491 = vmul.f32 %v1483, %v1483
  %v1492 = vmul.f32 %v1484, %v1484
  %v1493 = vmul.f32 %v1485, %v1485
  %v1494 = vmul.f32 %v1486, %v1486
  %v1495 = vadd.f32 %v1487, %v1488
  %v1496 = vadd.f32 %v1495, %v1489
  %v1497 = vadd.f32 %v1496, %v1490
  %1498 = vadd.xlane.f32.xlu0 %v1497
  %v1499 = vpop.xlane.xlu0 %1498
  %v1500 = vadd.f32 %v1491, %v1492
  %v1501 = vadd.f32 %v1500, %v1493
  %v1502 = vadd.f32 %v1501, %v1494
  %1503 = vadd.xlane.f32.xlu0 %v1502
  %v1504 = vpop.xlane.xlu0 %1503
  %v1505 = vmul.f32 %v1499, %v1476
  %v1506 = vmul.f32 %v1504, %v1476
  %v1507 = vadd.f32 %v1505, 1e-05
  %v1508 = vadd.f32 %v1506, 1e-05
  %v1509 = vrsqrt.pop %v1507
  %v1510 = vrsqrt.pop %v1508
  %v1511 = vmul.f32 %v1479, %v1509
  %v1512 = vmul.f32 %v1480, %v1509
  %v1513 = vmul.f32 %v1481, %v1509
  %v1514 = vmul.f32 %v1482, %v1509
  %v1515 = vmul.f32 %v1483, %v1510
  %v1516 = vmul.f32 %v1484, %v1510
  %v1517 = vmul.f32 %v1485, %v1510
  %v1518 = vmul.f32 %v1486, %v1510
  %1520 = vset.pattern.permute.xlu0 0
  %1521 = vperm.xlu0 %1520, %v1462
  %v1522 = vpop.permute.xlu0 %1521
  %1525 = vset.pattern.permute.xlu0 0
  %1526 = vperm.xlu0 %1525, %v1463
  %v1527 = vpop.permute.xlu0 %1526
  %v1529 = vmul.f32 %v1511, %v1522
  %v1530 = vmul.f32 %v1512, %v1522
  %v1531 = vmul.f32 %v1513, %v1522
  %v1532 = vmul.f32 %v1514, %v1522
  %v1533 = vmul.f32 %v1515, %v1527
  %v1534 = vmul.f32 %v1516, %v1527
  %v1535 = vmul.f32 %v1517, %v1527
  %v1536 = vmul.f32 %v1518, %v1527
  %1538 = vset.pattern.permute.xlu0 0
  %1539 = vperm.xlu0 %1538, %v1464
  %v1540 = vpop.permute.xlu0 %1539
  %1543 = vset.pattern.permute.xlu0 0
  %1544 = vperm.xlu0 %1543, %v1465
  %v1545 = vpop.permute.xlu0 %1544
  %v1547 = vadd.f32 %v1529, %v1540
  %v1548 = vadd.f32 %v1530, %v1540
  %v1549 = vadd.f32 %v1531, %v1540
  %v1550 = vadd.f32 %v1532, %v1540
  %v1551 = vadd.f32 %v1533, %v1545
  %v1552 = vadd.f32 %v1534, %v1545
  %v1553 = vadd.f32 %v1535, %v1545
  %v1554 = vadd.f32 %v1536, %v1545
  %v1555 = vmax.f32 %v1547, 0.0
  %v1556 = vmax.f32 %v1548, 0.0
  %v1557 = vmax.f32 %v1549, 0.0
  %v1558 = vmax.f32 %v1550, 0.0
  %v1559 = vmax.f32 %v1551, 0.0
  %v1560 = vmax.f32 %v1552, 0.0
  %v1561 = vmax.f32 %v1553, 0.0
  %v1562 = vmax.f32 %v1554, 0.0
  %1563 = vrot.lane.b32.xlu0 %v1555, 17
  %v1564 = vpop.permute.xlu0 %1563
  %1565 = vrot.lane.b32.xlu0 %v1559, 17
  %v1566 = vpop.permute.xlu0 %1565
  %1567 = vrot.lane.b32.xlu0 %v1556, 17
  %v1568 = vpop.permute.xlu0 %1567
  %1569 = vrot.lane.b32.xlu0 %v1560, 17
  %v1570 = vpop.permute.xlu0 %1569
  %1571 = vrot.lane.b32.xlu0 %v1557, 17
  %v1572 = vpop.permute.xlu0 %1571
  %1573 = vrot.lane.b32.xlu0 %v1561, 17
  %v1574 = vpop.permute.xlu0 %1573
  %1575 = vrot.lane.b32.xlu0 %v1558, 17
  %v1576 = vpop.permute.xlu0 %1575
  %1577 = vrot.lane.b32.xlu0 %v1562, 17
  %v1578 = vpop.permute.xlu0 %1577
  %v1579 = vsel %vm97, %v1572, %v1576
  %v1580 = vsel %vm97, %v1574, %v1578
  %v1581 = vsel %vm97, %v1568, %v1572
  %v1582 = vsel %vm97, %v1570, %v1574
  %v1583 = vsel %vm97, %v1564, %v1568
  %v1584 = vsel %vm97, %v1566, %v1570
  %v1585 = vsel %vm97, %v1576, %v1564
  %v1586 = vsel %vm97, %v1578, %v1566
  %v1587 = vsel %vm106, %v1585, 0.0
  %v1588 = vsel %vm107, %v1583, 0.0
  %v1589 = vsel %vm108, %v1581, 0.0
  %v1590 = vsel %vm109, %v1579, 0.0
  %v1591 = vsel %vm106, %v1586, 0.0
  %v1592 = vsel %vm107, %v1584, 0.0
  %v1593 = vsel %vm108, %v1582, 0.0
  %v1594 = vsel %vm109, %v1580, 0.0
  %v1595 = vld [vmem:[%s4] sm:$0xf]
  %v1596 = vld [vmem:[%s4 + $0x4] sm:$0xf]
  %v1597 = vpack.c.bf16 %v1591, %v1587
  %v1598 = vpack.c.bf16 %v1592, %v1588
  %v1599 = vpack.c.bf16 %v1593, %v1589
  %v1600 = vpack.c.bf16 %v1594, %v1590
  %1601 = vrot.lane.b32.xlu0 %v1555, 16
  %v1602 = vpop.permute.xlu0 %1601
  %1603 = vrot.lane.b32.xlu0 %v1559, 16
  %v1604 = vpop.permute.xlu0 %1603
  %1605 = vrot.lane.b32.xlu0 %v1556, 16
  %v1606 = vpop.permute.xlu0 %1605
  %1607 = vrot.lane.b32.xlu0 %v1560, 16
  %v1608 = vpop.permute.xlu0 %1607
  %1609 = vrot.lane.b32.xlu0 %v1557, 16
  %v1610 = vpop.permute.xlu0 %1609
  %1611 = vrot.lane.b32.xlu0 %v1561, 16
  %v1612 = vpop.permute.xlu0 %1611
  %1613 = vrot.lane.b32.xlu0 %v1558, 16
  %v1614 = vpop.permute.xlu0 %1613
  %1615 = vrot.lane.b32.xlu0 %v1562, 16
  %v1616 = vpop.permute.xlu0 %1615
  %v1617 = vsel %vm144, %v1610, %v1614
  %v1618 = vsel %vm144, %v1612, %v1616
  %v1619 = vsel %vm144, %v1606, %v1610
  %v1620 = vsel %vm144, %v1608, %v1612
  %v1621 = vsel %vm144, %v1602, %v1606
  %v1622 = vsel %vm144, %v1604, %v1608
  %v1623 = vsel %vm144, %v1614, %v1602
  %v1624 = vsel %vm144, %v1616, %v1604
  %v1625 = vsel %vm153, %v1623, 0.0
  %v1626 = vsel %vm154, %v1621, 0.0
  %v1627 = vsel %vm155, %v1619, 0.0
  %v1628 = vsel %vm156, %v1617, 0.0
  %v1629 = vsel %vm153, %v1624, 0.0
  %v1630 = vsel %vm154, %v1622, 0.0
  %v1631 = vsel %vm155, %v1620, 0.0
  %v1632 = vsel %vm156, %v1618, 0.0
  %s1633 = scalar_lea.vmem %s4, 8
  %v1634 = vld [vmem:[%s1633] sm:$0xf]
  %v1635 = vld [vmem:[%s1633 + $0x4] sm:$0xf]
  %v1636 = vpack.c.bf16 %v1629, %v1625
  %v1637 = vpack.c.bf16 %v1630, %v1626
  %v1638 = vpack.c.bf16 %v1631, %v1627
  %v1639 = vpack.c.bf16 %v1632, %v1628
  %v1642 = vunpack.c.l.b16 %v1634
  %v1643 = vunpack.c.l.b16 %v1635
  %v1644 = vpack.c.b16 %v1643, %v1642
  %vm1645 = vcmask 130048
  %v1647 = vsel %vm1645, %v1644, 0
  %1649 = vmatprep.subr.bf16.mxu0 0
  %1650 = vmatpush1.bf16.msra.mxu0 0
  %1651 = vmatprep.subr.bf16.mxu0 0
  %1652 = vmatpush1.bf16.msra.mxu0 0
  %1653 = vmatprep.subr.bf16.mxu0 0
  %1654 = vmatpush1.bf16.msra.mxu0 0
  %1655 = vmatprep.subr.bf16.mxu0 0
  %1656 = vmatpush1.bf16.msra.mxu0 0
  %1657 = vmatprep.subr.bf16.mxu0 0
  %1658 = vmatpush1.bf16.msra.mxu0 0
  %1659 = vmatprep.subr.bf16.mxu0 0
  %1660 = vmatpush1.bf16.msra.mxu0 0
  %1661 = vmatprep.subr.bf16.mxu0 0
  %1662 = vmatpush1.bf16.msra.mxu0 0
  %1663 = vmatprep.subr.bf16.mxu0 %v1637
  %1664 = vmatpush1.bf16.msra.mxu0 %v1636
  %1665 = vmatprep.subr.bf16.mxu0 0
  %1666 = vmatpush2.bf16.msra.mxu0 0
  %1667 = vmatprep.subr.bf16.mxu0 0
  %1668 = vmatpush2.bf16.msra.mxu0 0
  %1669 = vmatprep.subr.bf16.mxu0 0
  %1670 = vmatpush2.bf16.msra.mxu0 0
  %1671 = vmatprep.subr.bf16.mxu0 0
  %1672 = vmatpush2.bf16.msra.mxu0 0
  %1673 = vmatprep.subr.bf16.mxu0 0
  %1674 = vmatpush2.bf16.msra.mxu0 0
  %1675 = vmatprep.subr.bf16.mxu0 0
  %1676 = vmatpush2.bf16.msra.mxu0 0
  %1677 = vmatprep.subr.bf16.mxu0 0
  %1678 = vmatpush2.bf16.msra.mxu0 0
  %1679 = vmatprep.subr.bf16.mxu0 0
  %1680 = vmatpush2.bf16.msra.mxu0 0
  %1681 = vmatprep.mubr.bf16.mxu0 0
  %1682 = vmatmul.mubr.bf16.gmra.mxu0 %v1647
  %v1683 = vpop.f32.mrf.mxu0
  %v1684 = vadd.f32 0.0, %v1683
  %v1685 = vpop.f32.mrf.mxu0
  %v1686 = vadd.f32 0.0, %v1685
  %v1687 = vpop.f32.mrf.mxu0
  %v1688 = vadd.f32 0.0, %v1687
  %v1689 = vpop.f32.mrf.mxu0
  %v1690 = vadd.f32 0.0, %v1689
  %1691 = vdwg.mxu0
  %1692 = vmatprep.subr.bf16.mxu0 0
  %1693 = vmatpush1.bf16.msra.mxu0 0
  %1694 = vmatprep.subr.bf16.mxu0 0
  %1695 = vmatpush1.bf16.msra.mxu0 0
  %1696 = vmatprep.subr.bf16.mxu0 0
  %1697 = vmatpush1.bf16.msra.mxu0 0
  %1698 = vmatprep.subr.bf16.mxu0 0
  %1699 = vmatpush1.bf16.msra.mxu0 0
  %1700 = vmatprep.subr.bf16.mxu0 0
  %1701 = vmatpush1.bf16.msra.mxu0 0
  %1702 = vmatprep.subr.bf16.mxu0 0
  %1703 = vmatpush1.bf16.msra.mxu0 0
  %1704 = vmatprep.subr.bf16.mxu0 0
  %1705 = vmatpush1.bf16.msra.mxu0 0
  %1706 = vmatprep.subr.bf16.mxu0 %v1639
  %1707 = vmatpush1.bf16.msra.mxu0 %v1638
  %1708 = vmatprep.subr.bf16.mxu0 0
  %1709 = vmatpush2.bf16.msra.mxu0 0
  %1710 = vmatprep.subr.bf16.mxu0 0
  %1711 = vmatpush2.bf16.msra.mxu0 0
  %1712 = vmatprep.subr.bf16.mxu0 0
  %1713 = vmatpush2.bf16.msra.mxu0 0
  %1714 = vmatprep.subr.bf16.mxu0 0
  %1715 = vmatpush2.bf16.msra.mxu0 0
  %1716 = vmatprep.subr.bf16.mxu0 0
  %1717 = vmatpush2.bf16.msra.mxu0 0
  %1718 = vmatprep.subr.bf16.mxu0 0
  %1719 = vmatpush2.bf16.msra.mxu0 0
  %1720 = vmatprep.subr.bf16.mxu0 0
  %1721 = vmatpush2.bf16.msra.mxu0 0
  %1722 = vmatprep.subr.bf16.mxu0 0
  %1723 = vmatpush2.bf16.msra.mxu0 0
  %1724 = vmatprep.mubr.bf16.mxu0 0
  %1725 = vmatmul.mubr.bf16.gmra.mxu0 %v1647
  %v1726 = vpop.f32.mrf.mxu0
  %v1727 = vadd.f32 0.0, %v1726
  %v1728 = vpop.f32.mrf.mxu0
  %v1729 = vadd.f32 0.0, %v1728
  %v1730 = vpop.f32.mrf.mxu0
  %v1731 = vadd.f32 0.0, %v1730
  %v1732 = vpop.f32.mrf.mxu0
  %v1733 = vadd.f32 0.0, %v1732
  %1734 = vdwg.mxu0
  %v1737 = vunpack.c.l.b16 %v1595
  %v1738 = vunpack.c.l.b16 %v1596
  %v1739 = vpack.c.b16 %v1738, %v1737
  %v1741 = vsel %vm1645, %v1739, 0
  %1743 = vmatprep.subr.bf16.mxu0 0
  %1744 = vmatpush1.bf16.msra.mxu0 0
  %1745 = vmatprep.subr.bf16.mxu0 0
  %1746 = vmatpush1.bf16.msra.mxu0 0
  %1747 = vmatprep.subr.bf16.mxu0 0
  %1748 = vmatpush1.bf16.msra.mxu0 0
  %1749 = vmatprep.subr.bf16.mxu0 0
  %1750 = vmatpush1.bf16.msra.mxu0 0
  %1751 = vmatprep.subr.bf16.mxu0 0
  %1752 = vmatpush1.bf16.msra.mxu0 0
  %1753 = vmatprep.subr.bf16.mxu0 0
  %1754 = vmatpush1.bf16.msra.mxu0 0
  %1755 = vmatprep.subr.bf16.mxu0 0
  %1756 = vmatpush1.bf16.msra.mxu0 0
  %1757 = vmatprep.subr.bf16.mxu0 %v1598
  %1758 = vmatpush1.bf16.msra.mxu0 %v1597
  %1759 = vmatprep.subr.bf16.mxu0 0
  %1760 = vmatpush2.bf16.msra.mxu0 0
  %1761 = vmatprep.subr.bf16.mxu0 0
  %1762 = vmatpush2.bf16.msra.mxu0 0
  %1763 = vmatprep.subr.bf16.mxu0 0
  %1764 = vmatpush2.bf16.msra.mxu0 0
  %1765 = vmatprep.subr.bf16.mxu0 0
  %1766 = vmatpush2.bf16.msra.mxu0 0
  %1767 = vmatprep.subr.bf16.mxu0 0
  %1768 = vmatpush2.bf16.msra.mxu0 0
  %1769 = vmatprep.subr.bf16.mxu0 0
  %1770 = vmatpush2.bf16.msra.mxu0 0
  %1771 = vmatprep.subr.bf16.mxu0 0
  %1772 = vmatpush2.bf16.msra.mxu0 0
  %1773 = vmatprep.subr.bf16.mxu0 0
  %1774 = vmatpush2.bf16.msra.mxu0 0
  %1775 = vmatprep.mubr.bf16.mxu0 0
  %1776 = vmatmul.mubr.bf16.gmra.mxu0 %v1741
  %v1777 = vpop.f32.mrf.mxu0
  %v1778 = vadd.f32 %v1684, %v1777
  %v1779 = vpop.f32.mrf.mxu0
  %v1780 = vadd.f32 %v1686, %v1779
  %v1781 = vpop.f32.mrf.mxu0
  %v1782 = vadd.f32 %v1688, %v1781
  %v1783 = vpop.f32.mrf.mxu0
  %v1784 = vadd.f32 %v1690, %v1783
  %1785 = vdwg.mxu0
  %1786 = vmatprep.subr.bf16.mxu0 0
  %1787 = vmatpush1.bf16.msra.mxu0 0
  %1788 = vmatprep.subr.bf16.mxu0 0
  %1789 = vmatpush1.bf16.msra.mxu0 0
  %1790 = vmatprep.subr.bf16.mxu0 0
  %1791 = vmatpush1.bf16.msra.mxu0 0
  %1792 = vmatprep.subr.bf16.mxu0 0
  %1793 = vmatpush1.bf16.msra.mxu0 0
  %1794 = vmatprep.subr.bf16.mxu0 0
  %1795 = vmatpush1.bf16.msra.mxu0 0
  %1796 = vmatprep.subr.bf16.mxu0 0
  %1797 = vmatpush1.bf16.msra.mxu0 0
  %1798 = vmatprep.subr.bf16.mxu0 0
  %1799 = vmatpush1.bf16.msra.mxu0 0
  %1800 = vmatprep.subr.bf16.mxu0 %v1600
  %1801 = vmatpush1.bf16.msra.mxu0 %v1599
  %1802 = vmatprep.subr.bf16.mxu0 0
  %1803 = vmatpush2.bf16.msra.mxu0 0
  %1804 = vmatprep.subr.bf16.mxu0 0
  %1805 = vmatpush2.bf16.msra.mxu0 0
  %1806 = vmatprep.subr.bf16.mxu0 0
  %1807 = vmatpush2.bf16.msra.mxu0 0
  %1808 = vmatprep.subr.bf16.mxu0 0
  %1809 = vmatpush2.bf16.msra.mxu0 0
  %1810 = vmatprep.subr.bf16.mxu0 0
  %1811 = vmatpush2.bf16.msra.mxu0 0
  %1812 = vmatprep.subr.bf16.mxu0 0
  %1813 = vmatpush2.bf16.msra.mxu0 0
  %1814 = vmatprep.subr.bf16.mxu0 0
  %1815 = vmatpush2.bf16.msra.mxu0 0
  %1816 = vmatprep.subr.bf16.mxu0 0
  %1817 = vmatpush2.bf16.msra.mxu0 0
  %1818 = vmatprep.mubr.bf16.mxu0 0
  %1819 = vmatmul.mubr.bf16.gmra.mxu0 %v1741
  %v1820 = vpop.f32.mrf.mxu0
  %v1821 = vadd.f32 %v1727, %v1820
  %v1822 = vpop.f32.mrf.mxu0
  %v1823 = vadd.f32 %v1729, %v1822
  %v1824 = vpop.f32.mrf.mxu0
  %v1825 = vadd.f32 %v1731, %v1824
  %v1826 = vpop.f32.mrf.mxu0
  %v1827 = vadd.f32 %v1733, %v1826
  %1828 = vdwg.mxu0
  %1829 = vrot.lane.b32.xlu0 %v1555, 15
  %v1830 = vpop.permute.xlu0 %1829
  %1831 = vrot.lane.b32.xlu0 %v1559, 15
  %v1832 = vpop.permute.xlu0 %1831
  %1833 = vrot.lane.b32.xlu0 %v1556, 15
  %v1834 = vpop.permute.xlu0 %1833
  %1835 = vrot.lane.b32.xlu0 %v1560, 15
  %v1836 = vpop.permute.xlu0 %1835
  %1837 = vrot.lane.b32.xlu0 %v1557, 15
  %v1838 = vpop.permute.xlu0 %1837
  %1839 = vrot.lane.b32.xlu0 %v1561, 15
  %v1840 = vpop.permute.xlu0 %1839
  %1841 = vrot.lane.b32.xlu0 %v1558, 15
  %v1842 = vpop.permute.xlu0 %1841
  %1843 = vrot.lane.b32.xlu0 %v1562, 15
  %v1844 = vpop.permute.xlu0 %1843
  %v1845 = vsel %vm409, %v1838, %v1842
  %v1846 = vsel %vm409, %v1840, %v1844
  %v1847 = vsel %vm409, %v1834, %v1838
  %v1848 = vsel %vm409, %v1836, %v1840
  %v1849 = vsel %vm409, %v1830, %v1834
  %v1850 = vsel %vm409, %v1832, %v1836
  %v1851 = vsel %vm409, %v1842, %v1830
  %v1852 = vsel %vm409, %v1844, %v1832
  %v1853 = vsel %vm418, %v1851, 0.0
  %v1854 = vsel %vm419, %v1849, 0.0
  %v1855 = vsel %vm420, %v1847, 0.0
  %v1856 = vsel %vm421, %v1845, 0.0
  %v1857 = vsel %vm418, %v1852, 0.0
  %v1858 = vsel %vm419, %v1850, 0.0
  %v1859 = vsel %vm420, %v1848, 0.0
  %v1860 = vsel %vm421, %v1846, 0.0
  %s1861 = scalar_lea.vmem %s4, 16
  %v1862 = vld [vmem:[%s1861] sm:$0xf]
  %v1863 = vld [vmem:[%s1861 + $0x4] sm:$0xf]
  %v1864 = vpack.c.bf16 %v1857, %v1853
  %v1865 = vpack.c.bf16 %v1858, %v1854
  %v1866 = vpack.c.bf16 %v1859, %v1855
  %v1867 = vpack.c.bf16 %v1860, %v1856
  %v1870 = vunpack.c.l.b16 %v1862
  %v1871 = vunpack.c.l.b16 %v1863
  %v1872 = vpack.c.b16 %v1871, %v1870
  %v1874 = vsel %vm1645, %v1872, 0
  %1876 = vmatprep.subr.bf16.mxu0 0
  %1877 = vmatpush1.bf16.msra.mxu0 0
  %1878 = vmatprep.subr.bf16.mxu0 0
  %1879 = vmatpush1.bf16.msra.mxu0 0
  %1880 = vmatprep.subr.bf16.mxu0 0
  %1881 = vmatpush1.bf16.msra.mxu0 0
  %1882 = vmatprep.subr.bf16.mxu0 0
  %1883 = vmatpush1.bf16.msra.mxu0 0
  %1884 = vmatprep.subr.bf16.mxu0 0
  %1885 = vmatpush1.bf16.msra.mxu0 0
  %1886 = vmatprep.subr.bf16.mxu0 0
  %1887 = vmatpush1.bf16.msra.mxu0 0
  %1888 = vmatprep.subr.bf16.mxu0 0
  %1889 = vmatpush1.bf16.msra.mxu0 0
  %1890 = vmatprep.subr.bf16.mxu0 %v1865
  %1891 = vmatpush1.bf16.msra.mxu0 %v1864
  %1892 = vmatprep.subr.bf16.mxu0 0
  %1893 = vmatpush2.bf16.msra.mxu0 0
  %1894 = vmatprep.subr.bf16.mxu0 0
  %1895 = vmatpush2.bf16.msra.mxu0 0
  %1896 = vmatprep.subr.bf16.mxu0 0
  %1897 = vmatpush2.bf16.msra.mxu0 0
  %1898 = vmatprep.subr.bf16.mxu0 0
  %1899 = vmatpush2.bf16.msra.mxu0 0
  %1900 = vmatprep.subr.bf16.mxu0 0
  %1901 = vmatpush2.bf16.msra.mxu0 0
  %1902 = vmatprep.subr.bf16.mxu0 0
  %1903 = vmatpush2.bf16.msra.mxu0 0
  %1904 = vmatprep.subr.bf16.mxu0 0
  %1905 = vmatpush2.bf16.msra.mxu0 0
  %1906 = vmatprep.subr.bf16.mxu0 0
  %1907 = vmatpush2.bf16.msra.mxu0 0
  %1908 = vmatprep.mubr.bf16.mxu0 0
  %1909 = vmatmul.mubr.bf16.gmra.mxu0 %v1874
  %v1910 = vpop.f32.mrf.mxu0
  %v1911 = vadd.f32 0.0, %v1910
  %v1912 = vpop.f32.mrf.mxu0
  %v1913 = vadd.f32 0.0, %v1912
  %v1914 = vpop.f32.mrf.mxu0
  %v1915 = vadd.f32 0.0, %v1914
  %v1916 = vpop.f32.mrf.mxu0
  %v1917 = vadd.f32 0.0, %v1916
  %1918 = vdwg.mxu0
  %1919 = vmatprep.subr.bf16.mxu0 0
  %1920 = vmatpush1.bf16.msra.mxu0 0
  %1921 = vmatprep.subr.bf16.mxu0 0
  %1922 = vmatpush1.bf16.msra.mxu0 0
  %1923 = vmatprep.subr.bf16.mxu0 0
  %1924 = vmatpush1.bf16.msra.mxu0 0
  %1925 = vmatprep.subr.bf16.mxu0 0
  %1926 = vmatpush1.bf16.msra.mxu0 0
  %1927 = vmatprep.subr.bf16.mxu0 0
  %1928 = vmatpush1.bf16.msra.mxu0 0
  %1929 = vmatprep.subr.bf16.mxu0 0
  %1930 = vmatpush1.bf16.msra.mxu0 0
  %1931 = vmatprep.subr.bf16.mxu0 0
  %1932 = vmatpush1.bf16.msra.mxu0 0
  %1933 = vmatprep.subr.bf16.mxu0 %v1867
  %1934 = vmatpush1.bf16.msra.mxu0 %v1866
  %1935 = vmatprep.subr.bf16.mxu0 0
  %1936 = vmatpush2.bf16.msra.mxu0 0
  %1937 = vmatprep.subr.bf16.mxu0 0
  %1938 = vmatpush2.bf16.msra.mxu0 0
  %1939 = vmatprep.subr.bf16.mxu0 0
  %1940 = vmatpush2.bf16.msra.mxu0 0
  %1941 = vmatprep.subr.bf16.mxu0 0
  %1942 = vmatpush2.bf16.msra.mxu0 0
  %1943 = vmatprep.subr.bf16.mxu0 0
  %1944 = vmatpush2.bf16.msra.mxu0 0
  %1945 = vmatprep.subr.bf16.mxu0 0
  %1946 = vmatpush2.bf16.msra.mxu0 0
  %1947 = vmatprep.subr.bf16.mxu0 0
  %1948 = vmatpush2.bf16.msra.mxu0 0
  %1949 = vmatprep.subr.bf16.mxu0 0
  %1950 = vmatpush2.bf16.msra.mxu0 0
  %1951 = vmatprep.mubr.bf16.mxu0 0
  %1952 = vmatmul.mubr.bf16.gmra.mxu0 %v1874
  %v1953 = vpop.f32.mrf.mxu0
  %v1954 = vadd.f32 0.0, %v1953
  %v1955 = vpop.f32.mrf.mxu0
  %v1956 = vadd.f32 0.0, %v1955
  %v1957 = vpop.f32.mrf.mxu0
  %v1958 = vadd.f32 0.0, %v1957
  %v1959 = vpop.f32.mrf.mxu0
  %v1960 = vadd.f32 0.0, %v1959
  %1961 = vdwg.mxu0
  %v1962 = vadd.f32 %v1778, %v1911
  %v1963 = vadd.f32 %v1780, %v1913
  %v1964 = vadd.f32 %v1821, %v1954
  %v1965 = vadd.f32 %v1823, %v1956
  %v1966 = vadd.f32 %v1782, %v1915
  %v1967 = vadd.f32 %v1784, %v1917
  %v1968 = vadd.f32 %v1825, %v1958
  %v1969 = vadd.f32 %v1827, %v1960
  %1970 = vrot.lane.b32.xlu0 %v1555, 1
  %v1971 = vpop.permute.xlu0 %1970
  %1972 = vrot.lane.b32.xlu0 %v1559, 1
  %v1973 = vpop.permute.xlu0 %1972
  %1974 = vrot.lane.b32.xlu0 %v1556, 1
  %v1975 = vpop.permute.xlu0 %1974
  %1976 = vrot.lane.b32.xlu0 %v1560, 1
  %v1977 = vpop.permute.xlu0 %1976
  %1978 = vrot.lane.b32.xlu0 %v1557, 1
  %v1979 = vpop.permute.xlu0 %1978
  %1980 = vrot.lane.b32.xlu0 %v1561, 1
  %v1981 = vpop.permute.xlu0 %1980
  %1982 = vrot.lane.b32.xlu0 %v1558, 1
  %v1983 = vpop.permute.xlu0 %1982
  %1984 = vrot.lane.b32.xlu0 %v1562, 1
  %v1985 = vpop.permute.xlu0 %1984
  %v1986 = vsel %vm575, %v1979, %v1983
  %v1987 = vsel %vm575, %v1981, %v1985
  %v1988 = vsel %vm575, %v1975, %v1979
  %v1989 = vsel %vm575, %v1977, %v1981
  %v1990 = vsel %vm575, %v1971, %v1975
  %v1991 = vsel %vm575, %v1973, %v1977
  %v1992 = vsel %vm575, %v1983, %v1971
  %v1993 = vsel %vm575, %v1985, %v1973
  %v1994 = vsel %vm584, %v1992, 0.0
  %v1995 = vsel %vm585, %v1990, 0.0
  %v1996 = vsel %vm586, %v1988, 0.0
  %v1997 = vsel %vm587, %v1986, 0.0
  %v1998 = vsel %vm584, %v1993, 0.0
  %v1999 = vsel %vm585, %v1991, 0.0
  %v2000 = vsel %vm586, %v1989, 0.0
  %v2001 = vsel %vm587, %v1987, 0.0
  %s2002 = scalar_lea.vmem %s4, 24
  %v2003 = vld [vmem:[%s2002] sm:$0xf]
  %v2004 = vld [vmem:[%s2002 + $0x4] sm:$0xf]
  %v2005 = vpack.c.bf16 %v1998, %v1994
  %v2006 = vpack.c.bf16 %v1999, %v1995
  %v2007 = vpack.c.bf16 %v2000, %v1996
  %v2008 = vpack.c.bf16 %v2001, %v1997
  %v2011 = vunpack.c.l.b16 %v2003
  %v2012 = vunpack.c.l.b16 %v2004
  %v2013 = vpack.c.b16 %v2012, %v2011
  %v2015 = vsel %vm1645, %v2013, 0
  %2017 = vmatprep.subr.bf16.mxu0 0
  %2018 = vmatpush1.bf16.msra.mxu0 0
  %2019 = vmatprep.subr.bf16.mxu0 0
  %2020 = vmatpush1.bf16.msra.mxu0 0
  %2021 = vmatprep.subr.bf16.mxu0 0
  %2022 = vmatpush1.bf16.msra.mxu0 0
  %2023 = vmatprep.subr.bf16.mxu0 0
  %2024 = vmatpush1.bf16.msra.mxu0 0
  %2025 = vmatprep.subr.bf16.mxu0 0
  %2026 = vmatpush1.bf16.msra.mxu0 0
  %2027 = vmatprep.subr.bf16.mxu0 0
  %2028 = vmatpush1.bf16.msra.mxu0 0
  %2029 = vmatprep.subr.bf16.mxu0 0
  %2030 = vmatpush1.bf16.msra.mxu0 0
  %2031 = vmatprep.subr.bf16.mxu0 %v2006
  %2032 = vmatpush1.bf16.msra.mxu0 %v2005
  %2033 = vmatprep.subr.bf16.mxu0 0
  %2034 = vmatpush2.bf16.msra.mxu0 0
  %2035 = vmatprep.subr.bf16.mxu0 0
  %2036 = vmatpush2.bf16.msra.mxu0 0
  %2037 = vmatprep.subr.bf16.mxu0 0
  %2038 = vmatpush2.bf16.msra.mxu0 0
  %2039 = vmatprep.subr.bf16.mxu0 0
  %2040 = vmatpush2.bf16.msra.mxu0 0
  %2041 = vmatprep.subr.bf16.mxu0 0
  %2042 = vmatpush2.bf16.msra.mxu0 0
  %2043 = vmatprep.subr.bf16.mxu0 0
  %2044 = vmatpush2.bf16.msra.mxu0 0
  %2045 = vmatprep.subr.bf16.mxu0 0
  %2046 = vmatpush2.bf16.msra.mxu0 0
  %2047 = vmatprep.subr.bf16.mxu0 0
  %2048 = vmatpush2.bf16.msra.mxu0 0
  %2049 = vmatprep.mubr.bf16.mxu0 0
  %2050 = vmatmul.mubr.bf16.gmra.mxu0 %v2015
  %v2051 = vpop.f32.mrf.mxu0
  %v2052 = vadd.f32 0.0, %v2051
  %v2053 = vpop.f32.mrf.mxu0
  %v2054 = vadd.f32 0.0, %v2053
  %v2055 = vpop.f32.mrf.mxu0
  %v2056 = vadd.f32 0.0, %v2055
  %v2057 = vpop.f32.mrf.mxu0
  %v2058 = vadd.f32 0.0, %v2057
  %2059 = vdwg.mxu0
  %2060 = vmatprep.subr.bf16.mxu0 0
  %2061 = vmatpush1.bf16.msra.mxu0 0
  %2062 = vmatprep.subr.bf16.mxu0 0
  %2063 = vmatpush1.bf16.msra.mxu0 0
  %2064 = vmatprep.subr.bf16.mxu0 0
  %2065 = vmatpush1.bf16.msra.mxu0 0
  %2066 = vmatprep.subr.bf16.mxu0 0
  %2067 = vmatpush1.bf16.msra.mxu0 0
  %2068 = vmatprep.subr.bf16.mxu0 0
  %2069 = vmatpush1.bf16.msra.mxu0 0
  %2070 = vmatprep.subr.bf16.mxu0 0
  %2071 = vmatpush1.bf16.msra.mxu0 0
  %2072 = vmatprep.subr.bf16.mxu0 0
  %2073 = vmatpush1.bf16.msra.mxu0 0
  %2074 = vmatprep.subr.bf16.mxu0 %v2008
  %2075 = vmatpush1.bf16.msra.mxu0 %v2007
  %2076 = vmatprep.subr.bf16.mxu0 0
  %2077 = vmatpush2.bf16.msra.mxu0 0
  %2078 = vmatprep.subr.bf16.mxu0 0
  %2079 = vmatpush2.bf16.msra.mxu0 0
  %2080 = vmatprep.subr.bf16.mxu0 0
  %2081 = vmatpush2.bf16.msra.mxu0 0
  %2082 = vmatprep.subr.bf16.mxu0 0
  %2083 = vmatpush2.bf16.msra.mxu0 0
  %2084 = vmatprep.subr.bf16.mxu0 0
  %2085 = vmatpush2.bf16.msra.mxu0 0
  %2086 = vmatprep.subr.bf16.mxu0 0
  %2087 = vmatpush2.bf16.msra.mxu0 0
  %2088 = vmatprep.subr.bf16.mxu0 0
  %2089 = vmatpush2.bf16.msra.mxu0 0
  %2090 = vmatprep.subr.bf16.mxu0 0
  %2091 = vmatpush2.bf16.msra.mxu0 0
  %2092 = vmatprep.mubr.bf16.mxu0 0
  %2093 = vmatmul.mubr.bf16.gmra.mxu0 %v2015
  %v2094 = vpop.f32.mrf.mxu0
  %v2095 = vadd.f32 0.0, %v2094
  %v2096 = vpop.f32.mrf.mxu0
  %v2097 = vadd.f32 0.0, %v2096
  %v2098 = vpop.f32.mrf.mxu0
  %v2099 = vadd.f32 0.0, %v2098
  %v2100 = vpop.f32.mrf.mxu0
  %v2101 = vadd.f32 0.0, %v2100
  %2102 = vdwg.mxu0
  %v2103 = vadd.f32 %v1962, %v2052
  %v2104 = vadd.f32 %v1963, %v2054
  %v2105 = vadd.f32 %v1964, %v2095
  %v2106 = vadd.f32 %v1965, %v2097
  %v2107 = vadd.f32 %v1966, %v2056
  %v2108 = vadd.f32 %v1967, %v2058
  %v2109 = vadd.f32 %v1968, %v2099
  %v2110 = vadd.f32 %v1969, %v2101
  %s2111 = scalar_lea.vmem %s4, 32
  %v2112 = vld [vmem:[%s2111] sm:$0xf]
  %v2113 = vld [vmem:[%s2111 + $0x4] sm:$0xf]
  %v2114 = vpack.c.bf16 %v1559, %v1555
  %v2115 = vpack.c.bf16 %v1560, %v1556
  %v2116 = vpack.c.bf16 %v1561, %v1557
  %v2117 = vpack.c.bf16 %v1562, %v1558
  %v2120 = vunpack.c.l.b16 %v2112
  %v2121 = vunpack.c.l.b16 %v2113
  %v2122 = vpack.c.b16 %v2121, %v2120
  %v2124 = vsel %vm1645, %v2122, 0
  %2126 = vmatprep.subr.bf16.mxu0 0
  %2127 = vmatpush1.bf16.msra.mxu0 0
  %2128 = vmatprep.subr.bf16.mxu0 0
  %2129 = vmatpush1.bf16.msra.mxu0 0
  %2130 = vmatprep.subr.bf16.mxu0 0
  %2131 = vmatpush1.bf16.msra.mxu0 0
  %2132 = vmatprep.subr.bf16.mxu0 0
  %2133 = vmatpush1.bf16.msra.mxu0 0
  %2134 = vmatprep.subr.bf16.mxu0 0
  %2135 = vmatpush1.bf16.msra.mxu0 0
  %2136 = vmatprep.subr.bf16.mxu0 0
  %2137 = vmatpush1.bf16.msra.mxu0 0
  %2138 = vmatprep.subr.bf16.mxu0 0
  %2139 = vmatpush1.bf16.msra.mxu0 0
  %2140 = vmatprep.subr.bf16.mxu0 %v2115
  %2141 = vmatpush1.bf16.msra.mxu0 %v2114
  %2142 = vmatprep.subr.bf16.mxu0 0
  %2143 = vmatpush2.bf16.msra.mxu0 0
  %2144 = vmatprep.subr.bf16.mxu0 0
  %2145 = vmatpush2.bf16.msra.mxu0 0
  %2146 = vmatprep.subr.bf16.mxu0 0
  %2147 = vmatpush2.bf16.msra.mxu0 0
  %2148 = vmatprep.subr.bf16.mxu0 0
  %2149 = vmatpush2.bf16.msra.mxu0 0
  %2150 = vmatprep.subr.bf16.mxu0 0
  %2151 = vmatpush2.bf16.msra.mxu0 0
  %2152 = vmatprep.subr.bf16.mxu0 0
  %2153 = vmatpush2.bf16.msra.mxu0 0
  %2154 = vmatprep.subr.bf16.mxu0 0
  %2155 = vmatpush2.bf16.msra.mxu0 0
  %2156 = vmatprep.subr.bf16.mxu0 0
  %2157 = vmatpush2.bf16.msra.mxu0 0
  %2158 = vmatprep.mubr.bf16.mxu0 0
  %2159 = vmatmul.mubr.bf16.gmra.mxu0 %v2124
  %v2160 = vpop.f32.mrf.mxu0
  %v2161 = vadd.f32 0.0, %v2160
  %v2162 = vpop.f32.mrf.mxu0
  %v2163 = vadd.f32 0.0, %v2162
  %v2164 = vpop.f32.mrf.mxu0
  %v2165 = vadd.f32 0.0, %v2164
  %v2166 = vpop.f32.mrf.mxu0
  %v2167 = vadd.f32 0.0, %v2166
  %2168 = vdwg.mxu0
  %2169 = vmatprep.subr.bf16.mxu0 0
  %2170 = vmatpush1.bf16.msra.mxu0 0
  %2171 = vmatprep.subr.bf16.mxu0 0
  %2172 = vmatpush1.bf16.msra.mxu0 0
  %2173 = vmatprep.subr.bf16.mxu0 0
  %2174 = vmatpush1.bf16.msra.mxu0 0
  %2175 = vmatprep.subr.bf16.mxu0 0
  %2176 = vmatpush1.bf16.msra.mxu0 0
  %2177 = vmatprep.subr.bf16.mxu0 0
  %2178 = vmatpush1.bf16.msra.mxu0 0
  %2179 = vmatprep.subr.bf16.mxu0 0
  %2180 = vmatpush1.bf16.msra.mxu0 0
  %2181 = vmatprep.subr.bf16.mxu0 0
  %2182 = vmatpush1.bf16.msra.mxu0 0
  %2183 = vmatprep.subr.bf16.mxu0 %v2117
  %2184 = vmatpush1.bf16.msra.mxu0 %v2116
  %2185 = vmatprep.subr.bf16.mxu0 0
  %2186 = vmatpush2.bf16.msra.mxu0 0
  %2187 = vmatprep.subr.bf16.mxu0 0
  %2188 = vmatpush2.bf16.msra.mxu0 0
  %2189 = vmatprep.subr.bf16.mxu0 0
  %2190 = vmatpush2.bf16.msra.mxu0 0
  %2191 = vmatprep.subr.bf16.mxu0 0
  %2192 = vmatpush2.bf16.msra.mxu0 0
  %2193 = vmatprep.subr.bf16.mxu0 0
  %2194 = vmatpush2.bf16.msra.mxu0 0
  %2195 = vmatprep.subr.bf16.mxu0 0
  %2196 = vmatpush2.bf16.msra.mxu0 0
  %2197 = vmatprep.subr.bf16.mxu0 0
  %2198 = vmatpush2.bf16.msra.mxu0 0
  %2199 = vmatprep.subr.bf16.mxu0 0
  %2200 = vmatpush2.bf16.msra.mxu0 0
  %2201 = vmatprep.mubr.bf16.mxu0 0
  %2202 = vmatmul.mubr.bf16.gmra.mxu0 %v2124
  %v2203 = vpop.f32.mrf.mxu0
  %v2204 = vadd.f32 0.0, %v2203
  %v2205 = vpop.f32.mrf.mxu0
  %v2206 = vadd.f32 0.0, %v2205
  %v2207 = vpop.f32.mrf.mxu0
  %v2208 = vadd.f32 0.0, %v2207
  %v2209 = vpop.f32.mrf.mxu0
  %v2210 = vadd.f32 0.0, %v2209
  %2211 = vdwg.mxu0
  %v2212 = vadd.f32 %v2103, %v2161
  %v2213 = vadd.f32 %v2104, %v2163
  %v2214 = vadd.f32 %v2105, %v2204
  %v2215 = vadd.f32 %v2106, %v2206
  %v2216 = vadd.f32 %v2107, %v2165
  %v2217 = vadd.f32 %v2108, %v2167
  %v2218 = vadd.f32 %v2109, %v2208
  %v2219 = vadd.f32 %v2110, %v2210
  %2220 = vrot.lane.b32.xlu0 %v1555, 127
  %v2221 = vpop.permute.xlu0 %2220
  %2222 = vrot.lane.b32.xlu0 %v1559, 127
  %v2223 = vpop.permute.xlu0 %2222
  %2224 = vrot.lane.b32.xlu0 %v1556, 127
  %v2225 = vpop.permute.xlu0 %2224
  %2226 = vrot.lane.b32.xlu0 %v1560, 127
  %v2227 = vpop.permute.xlu0 %2226
  %2228 = vrot.lane.b32.xlu0 %v1557, 127
  %v2229 = vpop.permute.xlu0 %2228
  %2230 = vrot.lane.b32.xlu0 %v1561, 127
  %v2231 = vpop.permute.xlu0 %2230
  %2232 = vrot.lane.b32.xlu0 %v1558, 127
  %v2233 = vpop.permute.xlu0 %2232
  %2234 = vrot.lane.b32.xlu0 %v1562, 127
  %v2235 = vpop.permute.xlu0 %2234
  %v2236 = vsel %vm850, %v2229, %v2233
  %v2237 = vsel %vm850, %v2231, %v2235
  %v2238 = vsel %vm850, %v2225, %v2229
  %v2239 = vsel %vm850, %v2227, %v2231
  %v2240 = vsel %vm850, %v2221, %v2225
  %v2241 = vsel %vm850, %v2223, %v2227
  %v2242 = vsel %vm850, %v2233, %v2221
  %v2243 = vsel %vm850, %v2235, %v2223
  %v2244 = vsel %vm859, %v2240, 0.0
  %v2245 = vsel %vm860, %v2238, 0.0
  %v2246 = vsel %vm861, %v2236, 0.0
  %v2247 = vsel %vm862, %v2242, 0.0
  %v2248 = vsel %vm859, %v2241, 0.0
  %v2249 = vsel %vm860, %v2239, 0.0
  %v2250 = vsel %vm861, %v2237, 0.0
  %v2251 = vsel %vm862, %v2243, 0.0
  %s2252 = scalar_lea.vmem %s4, 40
  %v2253 = vld [vmem:[%s2252] sm:$0xf]
  %v2254 = vld [vmem:[%s2252 + $0x4] sm:$0xf]
  %v2255 = vpack.c.bf16 %v2248, %v2244
  %v2256 = vpack.c.bf16 %v2249, %v2245
  %v2257 = vpack.c.bf16 %v2250, %v2246
  %v2258 = vpack.c.bf16 %v2251, %v2247
  %v2261 = vunpack.c.l.b16 %v2253
  %v2262 = vunpack.c.l.b16 %v2254
  %v2263 = vpack.c.b16 %v2262, %v2261
  %v2265 = vsel %vm1645, %v2263, 0
  %2267 = vmatprep.subr.bf16.mxu0 0
  %2268 = vmatpush1.bf16.msra.mxu0 0
  %2269 = vmatprep.subr.bf16.mxu0 0
  %2270 = vmatpush1.bf16.msra.mxu0 0
  %2271 = vmatprep.subr.bf16.mxu0 0
  %2272 = vmatpush1.bf16.msra.mxu0 0
  %2273 = vmatprep.subr.bf16.mxu0 0
  %2274 = vmatpush1.bf16.msra.mxu0 0
  %2275 = vmatprep.subr.bf16.mxu0 0
  %2276 = vmatpush1.bf16.msra.mxu0 0
  %2277 = vmatprep.subr.bf16.mxu0 0
  %2278 = vmatpush1.bf16.msra.mxu0 0
  %2279 = vmatprep.subr.bf16.mxu0 0
  %2280 = vmatpush1.bf16.msra.mxu0 0
  %2281 = vmatprep.subr.bf16.mxu0 %v2256
  %2282 = vmatpush1.bf16.msra.mxu0 %v2255
  %2283 = vmatprep.subr.bf16.mxu0 0
  %2284 = vmatpush2.bf16.msra.mxu0 0
  %2285 = vmatprep.subr.bf16.mxu0 0
  %2286 = vmatpush2.bf16.msra.mxu0 0
  %2287 = vmatprep.subr.bf16.mxu0 0
  %2288 = vmatpush2.bf16.msra.mxu0 0
  %2289 = vmatprep.subr.bf16.mxu0 0
  %2290 = vmatpush2.bf16.msra.mxu0 0
  %2291 = vmatprep.subr.bf16.mxu0 0
  %2292 = vmatpush2.bf16.msra.mxu0 0
  %2293 = vmatprep.subr.bf16.mxu0 0
  %2294 = vmatpush2.bf16.msra.mxu0 0
  %2295 = vmatprep.subr.bf16.mxu0 0
  %2296 = vmatpush2.bf16.msra.mxu0 0
  %2297 = vmatprep.subr.bf16.mxu0 0
  %2298 = vmatpush2.bf16.msra.mxu0 0
  %2299 = vmatprep.mubr.bf16.mxu0 0
  %2300 = vmatmul.mubr.bf16.gmra.mxu0 %v2265
  %v2301 = vpop.f32.mrf.mxu0
  %v2302 = vadd.f32 0.0, %v2301
  %v2303 = vpop.f32.mrf.mxu0
  %v2304 = vadd.f32 0.0, %v2303
  %v2305 = vpop.f32.mrf.mxu0
  %v2306 = vadd.f32 0.0, %v2305
  %v2307 = vpop.f32.mrf.mxu0
  %v2308 = vadd.f32 0.0, %v2307
  %2309 = vdwg.mxu0
  %2310 = vmatprep.subr.bf16.mxu0 0
  %2311 = vmatpush1.bf16.msra.mxu0 0
  %2312 = vmatprep.subr.bf16.mxu0 0
  %2313 = vmatpush1.bf16.msra.mxu0 0
  %2314 = vmatprep.subr.bf16.mxu0 0
  %2315 = vmatpush1.bf16.msra.mxu0 0
  %2316 = vmatprep.subr.bf16.mxu0 0
  %2317 = vmatpush1.bf16.msra.mxu0 0
  %2318 = vmatprep.subr.bf16.mxu0 0
  %2319 = vmatpush1.bf16.msra.mxu0 0
  %2320 = vmatprep.subr.bf16.mxu0 0
  %2321 = vmatpush1.bf16.msra.mxu0 0
  %2322 = vmatprep.subr.bf16.mxu0 0
  %2323 = vmatpush1.bf16.msra.mxu0 0
  %2324 = vmatprep.subr.bf16.mxu0 %v2258
  %2325 = vmatpush1.bf16.msra.mxu0 %v2257
  %2326 = vmatprep.subr.bf16.mxu0 0
  %2327 = vmatpush2.bf16.msra.mxu0 0
  %2328 = vmatprep.subr.bf16.mxu0 0
  %2329 = vmatpush2.bf16.msra.mxu0 0
  %2330 = vmatprep.subr.bf16.mxu0 0
  %2331 = vmatpush2.bf16.msra.mxu0 0
  %2332 = vmatprep.subr.bf16.mxu0 0
  %2333 = vmatpush2.bf16.msra.mxu0 0
  %2334 = vmatprep.subr.bf16.mxu0 0
  %2335 = vmatpush2.bf16.msra.mxu0 0
  %2336 = vmatprep.subr.bf16.mxu0 0
  %2337 = vmatpush2.bf16.msra.mxu0 0
  %2338 = vmatprep.subr.bf16.mxu0 0
  %2339 = vmatpush2.bf16.msra.mxu0 0
  %2340 = vmatprep.subr.bf16.mxu0 0
  %2341 = vmatpush2.bf16.msra.mxu0 0
  %2342 = vmatprep.mubr.bf16.mxu0 0
  %2343 = vmatmul.mubr.bf16.gmra.mxu0 %v2265
  %v2344 = vpop.f32.mrf.mxu0
  %v2345 = vadd.f32 0.0, %v2344
  %v2346 = vpop.f32.mrf.mxu0
  %v2347 = vadd.f32 0.0, %v2346
  %v2348 = vpop.f32.mrf.mxu0
  %v2349 = vadd.f32 0.0, %v2348
  %v2350 = vpop.f32.mrf.mxu0
  %v2351 = vadd.f32 0.0, %v2350
  %2352 = vdwg.mxu0
  %v2353 = vadd.f32 %v2212, %v2302
  %v2354 = vadd.f32 %v2213, %v2304
  %v2355 = vadd.f32 %v2214, %v2345
  %v2356 = vadd.f32 %v2215, %v2347
  %v2357 = vadd.f32 %v2216, %v2306
  %v2358 = vadd.f32 %v2217, %v2308
  %v2359 = vadd.f32 %v2218, %v2349
  %v2360 = vadd.f32 %v2219, %v2351
  %2361 = vrot.lane.b32.xlu0 %v1555, 113
  %v2362 = vpop.permute.xlu0 %2361
  %2363 = vrot.lane.b32.xlu0 %v1559, 113
  %v2364 = vpop.permute.xlu0 %2363
  %2365 = vrot.lane.b32.xlu0 %v1556, 113
  %v2366 = vpop.permute.xlu0 %2365
  %2367 = vrot.lane.b32.xlu0 %v1560, 113
  %v2368 = vpop.permute.xlu0 %2367
  %2369 = vrot.lane.b32.xlu0 %v1557, 113
  %v2370 = vpop.permute.xlu0 %2369
  %2371 = vrot.lane.b32.xlu0 %v1561, 113
  %v2372 = vpop.permute.xlu0 %2371
  %2373 = vrot.lane.b32.xlu0 %v1558, 113
  %v2374 = vpop.permute.xlu0 %2373
  %2375 = vrot.lane.b32.xlu0 %v1562, 113
  %v2376 = vpop.permute.xlu0 %2375
  %v2377 = vsel %vm1016, %v2370, %v2374
  %v2378 = vsel %vm1016, %v2372, %v2376
  %v2379 = vsel %vm1016, %v2366, %v2370
  %v2380 = vsel %vm1016, %v2368, %v2372
  %v2381 = vsel %vm1016, %v2362, %v2366
  %v2382 = vsel %vm1016, %v2364, %v2368
  %v2383 = vsel %vm1016, %v2374, %v2362
  %v2384 = vsel %vm1016, %v2376, %v2364
  %v2385 = vsel %vm1025, %v2381, 0.0
  %v2386 = vsel %vm1026, %v2379, 0.0
  %v2387 = vsel %vm1027, %v2377, 0.0
  %v2388 = vsel %vm1028, %v2383, 0.0
  %v2389 = vsel %vm1025, %v2382, 0.0
  %v2390 = vsel %vm1026, %v2380, 0.0
  %v2391 = vsel %vm1027, %v2378, 0.0
  %v2392 = vsel %vm1028, %v2384, 0.0
  %s2393 = scalar_lea.vmem %s4, 48
  %v2394 = vld [vmem:[%s2393] sm:$0xf]
  %v2395 = vld [vmem:[%s2393 + $0x4] sm:$0xf]
  %v2396 = vpack.c.bf16 %v2389, %v2385
  %v2397 = vpack.c.bf16 %v2390, %v2386
  %v2398 = vpack.c.bf16 %v2391, %v2387
  %v2399 = vpack.c.bf16 %v2392, %v2388
  %v2402 = vunpack.c.l.b16 %v2394
  %v2403 = vunpack.c.l.b16 %v2395
  %v2404 = vpack.c.b16 %v2403, %v2402
  %v2406 = vsel %vm1645, %v2404, 0
  %2408 = vmatprep.subr.bf16.mxu0 0
  %2409 = vmatpush1.bf16.msra.mxu0 0
  %2410 = vmatprep.subr.bf16.mxu0 0
  %2411 = vmatpush1.bf16.msra.mxu0 0
  %2412 = vmatprep.subr.bf16.mxu0 0
  %2413 = vmatpush1.bf16.msra.mxu0 0
  %2414 = vmatprep.subr.bf16.mxu0 0
  %2415 = vmatpush1.bf16.msra.mxu0 0
  %2416 = vmatprep.subr.bf16.mxu0 0
  %2417 = vmatpush1.bf16.msra.mxu0 0
  %2418 = vmatprep.subr.bf16.mxu0 0
  %2419 = vmatpush1.bf16.msra.mxu0 0
  %2420 = vmatprep.subr.bf16.mxu0 0
  %2421 = vmatpush1.bf16.msra.mxu0 0
  %2422 = vmatprep.subr.bf16.mxu0 %v2397
  %2423 = vmatpush1.bf16.msra.mxu0 %v2396
  %2424 = vmatprep.subr.bf16.mxu0 0
  %2425 = vmatpush2.bf16.msra.mxu0 0
  %2426 = vmatprep.subr.bf16.mxu0 0
  %2427 = vmatpush2.bf16.msra.mxu0 0
  %2428 = vmatprep.subr.bf16.mxu0 0
  %2429 = vmatpush2.bf16.msra.mxu0 0
  %2430 = vmatprep.subr.bf16.mxu0 0
  %2431 = vmatpush2.bf16.msra.mxu0 0
  %2432 = vmatprep.subr.bf16.mxu0 0
  %2433 = vmatpush2.bf16.msra.mxu0 0
  %2434 = vmatprep.subr.bf16.mxu0 0
  %2435 = vmatpush2.bf16.msra.mxu0 0
  %2436 = vmatprep.subr.bf16.mxu0 0
  %2437 = vmatpush2.bf16.msra.mxu0 0
  %2438 = vmatprep.subr.bf16.mxu0 0
  %2439 = vmatpush2.bf16.msra.mxu0 0
  %2440 = vmatprep.mubr.bf16.mxu0 0
  %2441 = vmatmul.mubr.bf16.gmra.mxu0 %v2406
  %v2442 = vpop.f32.mrf.mxu0
  %v2443 = vadd.f32 0.0, %v2442
  %v2444 = vpop.f32.mrf.mxu0
  %v2445 = vadd.f32 0.0, %v2444
  %v2446 = vpop.f32.mrf.mxu0
  %v2447 = vadd.f32 0.0, %v2446
  %v2448 = vpop.f32.mrf.mxu0
  %v2449 = vadd.f32 0.0, %v2448
  %2450 = vdwg.mxu0
  %2451 = vmatprep.subr.bf16.mxu0 0
  %2452 = vmatpush1.bf16.msra.mxu0 0
  %2453 = vmatprep.subr.bf16.mxu0 0
  %2454 = vmatpush1.bf16.msra.mxu0 0
  %2455 = vmatprep.subr.bf16.mxu0 0
  %2456 = vmatpush1.bf16.msra.mxu0 0
  %2457 = vmatprep.subr.bf16.mxu0 0
  %2458 = vmatpush1.bf16.msra.mxu0 0
  %2459 = vmatprep.subr.bf16.mxu0 0
  %2460 = vmatpush1.bf16.msra.mxu0 0
  %2461 = vmatprep.subr.bf16.mxu0 0
  %2462 = vmatpush1.bf16.msra.mxu0 0
  %2463 = vmatprep.subr.bf16.mxu0 0
  %2464 = vmatpush1.bf16.msra.mxu0 0
  %2465 = vmatprep.subr.bf16.mxu0 %v2399
  %2466 = vmatpush1.bf16.msra.mxu0 %v2398
  %2467 = vmatprep.subr.bf16.mxu0 0
  %2468 = vmatpush2.bf16.msra.mxu0 0
  %2469 = vmatprep.subr.bf16.mxu0 0
  %2470 = vmatpush2.bf16.msra.mxu0 0
  %2471 = vmatprep.subr.bf16.mxu0 0
  %2472 = vmatpush2.bf16.msra.mxu0 0
  %2473 = vmatprep.subr.bf16.mxu0 0
  %2474 = vmatpush2.bf16.msra.mxu0 0
  %2475 = vmatprep.subr.bf16.mxu0 0
  %2476 = vmatpush2.bf16.msra.mxu0 0
  %2477 = vmatprep.subr.bf16.mxu0 0
  %2478 = vmatpush2.bf16.msra.mxu0 0
  %2479 = vmatprep.subr.bf16.mxu0 0
  %2480 = vmatpush2.bf16.msra.mxu0 0
  %2481 = vmatprep.subr.bf16.mxu0 0
  %2482 = vmatpush2.bf16.msra.mxu0 0
  %2483 = vmatprep.mubr.bf16.mxu0 0
  %2484 = vmatmul.mubr.bf16.gmra.mxu0 %v2406
  %v2485 = vpop.f32.mrf.mxu0
  %v2486 = vadd.f32 0.0, %v2485
  %v2487 = vpop.f32.mrf.mxu0
  %v2488 = vadd.f32 0.0, %v2487
  %v2489 = vpop.f32.mrf.mxu0
  %v2490 = vadd.f32 0.0, %v2489
  %v2491 = vpop.f32.mrf.mxu0
  %v2492 = vadd.f32 0.0, %v2491
  %2493 = vdwg.mxu0
  %v2494 = vadd.f32 %v2353, %v2443
  %v2495 = vadd.f32 %v2354, %v2445
  %v2496 = vadd.f32 %v2355, %v2486
  %v2497 = vadd.f32 %v2356, %v2488
  %v2498 = vadd.f32 %v2357, %v2447
  %v2499 = vadd.f32 %v2358, %v2449
  %v2500 = vadd.f32 %v2359, %v2490
  %v2501 = vadd.f32 %v2360, %v2492
  %2502 = vrot.lane.b32.xlu0 %v1555, 112
  %v2503 = vpop.permute.xlu0 %2502
  %2504 = vrot.lane.b32.xlu0 %v1559, 112
  %v2505 = vpop.permute.xlu0 %2504
  %2506 = vrot.lane.b32.xlu0 %v1556, 112
  %v2507 = vpop.permute.xlu0 %2506
  %2508 = vrot.lane.b32.xlu0 %v1560, 112
  %v2509 = vpop.permute.xlu0 %2508
  %2510 = vrot.lane.b32.xlu0 %v1557, 112
  %v2511 = vpop.permute.xlu0 %2510
  %2512 = vrot.lane.b32.xlu0 %v1561, 112
  %v2513 = vpop.permute.xlu0 %2512
  %2514 = vrot.lane.b32.xlu0 %v1558, 112
  %v2515 = vpop.permute.xlu0 %2514
  %2516 = vrot.lane.b32.xlu0 %v1562, 112
  %v2517 = vpop.permute.xlu0 %2516
  %v2518 = vsel %vm1170, %v2511, %v2515
  %v2519 = vsel %vm1170, %v2513, %v2517
  %v2520 = vsel %vm1170, %v2507, %v2511
  %v2521 = vsel %vm1170, %v2509, %v2513
  %v2522 = vsel %vm1170, %v2503, %v2507
  %v2523 = vsel %vm1170, %v2505, %v2509
  %v2524 = vsel %vm1170, %v2515, %v2503
  %v2525 = vsel %vm1170, %v2517, %v2505
  %v2526 = vsel %vm1179, %v2522, 0.0
  %v2527 = vsel %vm1180, %v2520, 0.0
  %v2528 = vsel %vm1181, %v2518, 0.0
  %v2529 = vsel %vm1182, %v2524, 0.0
  %v2530 = vsel %vm1179, %v2523, 0.0
  %v2531 = vsel %vm1180, %v2521, 0.0
  %v2532 = vsel %vm1181, %v2519, 0.0
  %v2533 = vsel %vm1182, %v2525, 0.0
  %s2534 = scalar_lea.vmem %s4, 56
  %v2535 = vld [vmem:[%s2534] sm:$0xf]
  %v2536 = vld [vmem:[%s2534 + $0x4] sm:$0xf]
  %v2537 = vpack.c.bf16 %v2530, %v2526
  %v2538 = vpack.c.bf16 %v2531, %v2527
  %v2539 = vpack.c.bf16 %v2532, %v2528
  %v2540 = vpack.c.bf16 %v2533, %v2529
  %v2543 = vunpack.c.l.b16 %v2535
  %v2544 = vunpack.c.l.b16 %v2536
  %v2545 = vpack.c.b16 %v2544, %v2543
  %v2547 = vsel %vm1645, %v2545, 0
  %2549 = vmatprep.subr.bf16.mxu0 0
  %2550 = vmatpush1.bf16.msra.mxu0 0
  %2551 = vmatprep.subr.bf16.mxu0 0
  %2552 = vmatpush1.bf16.msra.mxu0 0
  %2553 = vmatprep.subr.bf16.mxu0 0
  %2554 = vmatpush1.bf16.msra.mxu0 0
  %2555 = vmatprep.subr.bf16.mxu0 0
  %2556 = vmatpush1.bf16.msra.mxu0 0
  %2557 = vmatprep.subr.bf16.mxu0 0
  %2558 = vmatpush1.bf16.msra.mxu0 0
  %2559 = vmatprep.subr.bf16.mxu0 0
  %2560 = vmatpush1.bf16.msra.mxu0 0
  %2561 = vmatprep.subr.bf16.mxu0 0
  %2562 = vmatpush1.bf16.msra.mxu0 0
  %2563 = vmatprep.subr.bf16.mxu0 %v2538
  %2564 = vmatpush1.bf16.msra.mxu0 %v2537
  %2565 = vmatprep.subr.bf16.mxu0 0
  %2566 = vmatpush2.bf16.msra.mxu0 0
  %2567 = vmatprep.subr.bf16.mxu0 0
  %2568 = vmatpush2.bf16.msra.mxu0 0
  %2569 = vmatprep.subr.bf16.mxu0 0
  %2570 = vmatpush2.bf16.msra.mxu0 0
  %2571 = vmatprep.subr.bf16.mxu0 0
  %2572 = vmatpush2.bf16.msra.mxu0 0
  %2573 = vmatprep.subr.bf16.mxu0 0
  %2574 = vmatpush2.bf16.msra.mxu0 0
  %2575 = vmatprep.subr.bf16.mxu0 0
  %2576 = vmatpush2.bf16.msra.mxu0 0
  %2577 = vmatprep.subr.bf16.mxu0 0
  %2578 = vmatpush2.bf16.msra.mxu0 0
  %2579 = vmatprep.subr.bf16.mxu0 0
  %2580 = vmatpush2.bf16.msra.mxu0 0
  %2581 = vmatprep.mubr.bf16.mxu0 0
  %2582 = vmatmul.mubr.bf16.gmra.mxu0 %v2547
  %v2583 = vpop.f32.mrf.mxu0
  %v2584 = vadd.f32 0.0, %v2583
  %v2585 = vpop.f32.mrf.mxu0
  %v2586 = vadd.f32 0.0, %v2585
  %v2587 = vpop.f32.mrf.mxu0
  %v2588 = vadd.f32 0.0, %v2587
  %v2589 = vpop.f32.mrf.mxu0
  %v2590 = vadd.f32 0.0, %v2589
  %2591 = vdwg.mxu0
  %2592 = vmatprep.subr.bf16.mxu0 0
  %2593 = vmatpush1.bf16.msra.mxu0 0
  %2594 = vmatprep.subr.bf16.mxu0 0
  %2595 = vmatpush1.bf16.msra.mxu0 0
  %2596 = vmatprep.subr.bf16.mxu0 0
  %2597 = vmatpush1.bf16.msra.mxu0 0
  %2598 = vmatprep.subr.bf16.mxu0 0
  %2599 = vmatpush1.bf16.msra.mxu0 0
  %2600 = vmatprep.subr.bf16.mxu0 0
  %2601 = vmatpush1.bf16.msra.mxu0 0
  %2602 = vmatprep.subr.bf16.mxu0 0
  %2603 = vmatpush1.bf16.msra.mxu0 0
  %2604 = vmatprep.subr.bf16.mxu0 0
  %2605 = vmatpush1.bf16.msra.mxu0 0
  %2606 = vmatprep.subr.bf16.mxu0 %v2540
  %2607 = vmatpush1.bf16.msra.mxu0 %v2539
  %2608 = vmatprep.subr.bf16.mxu0 0
  %2609 = vmatpush2.bf16.msra.mxu0 0
  %2610 = vmatprep.subr.bf16.mxu0 0
  %2611 = vmatpush2.bf16.msra.mxu0 0
  %2612 = vmatprep.subr.bf16.mxu0 0
  %2613 = vmatpush2.bf16.msra.mxu0 0
  %2614 = vmatprep.subr.bf16.mxu0 0
  %2615 = vmatpush2.bf16.msra.mxu0 0
  %2616 = vmatprep.subr.bf16.mxu0 0
  %2617 = vmatpush2.bf16.msra.mxu0 0
  %2618 = vmatprep.subr.bf16.mxu0 0
  %2619 = vmatpush2.bf16.msra.mxu0 0
  %2620 = vmatprep.subr.bf16.mxu0 0
  %2621 = vmatpush2.bf16.msra.mxu0 0
  %2622 = vmatprep.subr.bf16.mxu0 0
  %2623 = vmatpush2.bf16.msra.mxu0 0
  %2624 = vmatprep.mubr.bf16.mxu0 0
  %2625 = vmatmul.mubr.bf16.gmra.mxu0 %v2547
  %v2626 = vpop.f32.mrf.mxu0
  %v2627 = vadd.f32 0.0, %v2626
  %v2628 = vpop.f32.mrf.mxu0
  %v2629 = vadd.f32 0.0, %v2628
  %v2630 = vpop.f32.mrf.mxu0
  %v2631 = vadd.f32 0.0, %v2630
  %v2632 = vpop.f32.mrf.mxu0
  %v2633 = vadd.f32 0.0, %v2632
  %2634 = vdwg.mxu0
  %v2635 = vadd.f32 %v2494, %v2584
  %v2636 = vadd.f32 %v2495, %v2586
  %v2637 = vadd.f32 %v2496, %v2627
  %v2638 = vadd.f32 %v2497, %v2629
  %v2639 = vadd.f32 %v2498, %v2588
  %v2640 = vadd.f32 %v2499, %v2590
  %v2641 = vadd.f32 %v2500, %v2631
  %v2642 = vadd.f32 %v2501, %v2633
  %2643 = vrot.lane.b32.xlu0 %v1555, 111
  %v2644 = vpop.permute.xlu0 %2643
  %2645 = vrot.lane.b32.xlu0 %v1559, 111
  %v2646 = vpop.permute.xlu0 %2645
  %2647 = vrot.lane.b32.xlu0 %v1556, 111
  %v2648 = vpop.permute.xlu0 %2647
  %2649 = vrot.lane.b32.xlu0 %v1560, 111
  %v2650 = vpop.permute.xlu0 %2649
  %2651 = vrot.lane.b32.xlu0 %v1557, 111
  %v2652 = vpop.permute.xlu0 %2651
  %2653 = vrot.lane.b32.xlu0 %v1561, 111
  %v2654 = vpop.permute.xlu0 %2653
  %2655 = vrot.lane.b32.xlu0 %v1558, 111
  %v2656 = vpop.permute.xlu0 %2655
  %2657 = vrot.lane.b32.xlu0 %v1562, 111
  %v2658 = vpop.permute.xlu0 %2657
  %v2659 = vsel %vm1324, %v2652, %v2656
  %v2660 = vsel %vm1324, %v2654, %v2658
  %v2661 = vsel %vm1324, %v2648, %v2652
  %v2662 = vsel %vm1324, %v2650, %v2654
  %v2663 = vsel %vm1324, %v2644, %v2648
  %v2664 = vsel %vm1324, %v2646, %v2650
  %v2665 = vsel %vm1324, %v2656, %v2644
  %v2666 = vsel %vm1324, %v2658, %v2646
  %v2667 = vsel %vm1333, %v2663, 0.0
  %v2668 = vsel %vm1334, %v2661, 0.0
  %v2669 = vsel %vm1335, %v2659, 0.0
  %v2670 = vsel %vm1336, %v2665, 0.0
  %v2671 = vsel %vm1333, %v2664, 0.0
  %v2672 = vsel %vm1334, %v2662, 0.0
  %v2673 = vsel %vm1335, %v2660, 0.0
  %v2674 = vsel %vm1336, %v2666, 0.0
  %s2675 = scalar_lea.vmem %s4, 64
  %v2676 = vld [vmem:[%s2675] sm:$0xf]
  %v2677 = vld [vmem:[%s2675 + $0x4] sm:$0xf]
  %v2678 = vpack.c.bf16 %v2671, %v2667
  %v2679 = vpack.c.bf16 %v2672, %v2668
  %v2680 = vpack.c.bf16 %v2673, %v2669
  %v2681 = vpack.c.bf16 %v2674, %v2670
  %v2684 = vunpack.c.l.b16 %v2676
  %v2685 = vunpack.c.l.b16 %v2677
  %v2686 = vpack.c.b16 %v2685, %v2684
  %v2688 = vsel %vm1645, %v2686, 0
  %2690 = vmatprep.subr.bf16.mxu0 0
  %2691 = vmatpush1.bf16.msra.mxu0 0
  %2692 = vmatprep.subr.bf16.mxu0 0
  %2693 = vmatpush1.bf16.msra.mxu0 0
  %2694 = vmatprep.subr.bf16.mxu0 0
  %2695 = vmatpush1.bf16.msra.mxu0 0
  %2696 = vmatprep.subr.bf16.mxu0 0
  %2697 = vmatpush1.bf16.msra.mxu0 0
  %2698 = vmatprep.subr.bf16.mxu0 0
  %2699 = vmatpush1.bf16.msra.mxu0 0
  %2700 = vmatprep.subr.bf16.mxu0 0
  %2701 = vmatpush1.bf16.msra.mxu0 0
  %2702 = vmatprep.subr.bf16.mxu0 0
  %2703 = vmatpush1.bf16.msra.mxu0 0
  %2704 = vmatprep.subr.bf16.mxu0 %v2679
  %2705 = vmatpush1.bf16.msra.mxu0 %v2678
  %2706 = vmatprep.subr.bf16.mxu0 0
  %2707 = vmatpush2.bf16.msra.mxu0 0
  %2708 = vmatprep.subr.bf16.mxu0 0
  %2709 = vmatpush2.bf16.msra.mxu0 0
  %2710 = vmatprep.subr.bf16.mxu0 0
  %2711 = vmatpush2.bf16.msra.mxu0 0
  %2712 = vmatprep.subr.bf16.mxu0 0
  %2713 = vmatpush2.bf16.msra.mxu0 0
  %2714 = vmatprep.subr.bf16.mxu0 0
  %2715 = vmatpush2.bf16.msra.mxu0 0
  %2716 = vmatprep.subr.bf16.mxu0 0
  %2717 = vmatpush2.bf16.msra.mxu0 0
  %2718 = vmatprep.subr.bf16.mxu0 0
  %2719 = vmatpush2.bf16.msra.mxu0 0
  %2720 = vmatprep.subr.bf16.mxu0 0
  %2721 = vmatpush2.bf16.msra.mxu0 0
  %2722 = vmatprep.mubr.bf16.mxu0 0
  %2723 = vmatmul.mubr.bf16.gmra.mxu0 %v2688
  %v2724 = vpop.f32.mrf.mxu0
  %v2725 = vadd.f32 0.0, %v2724
  %v2726 = vpop.f32.mrf.mxu0
  %v2727 = vadd.f32 0.0, %v2726
  %v2728 = vpop.f32.mrf.mxu0
  %v2729 = vadd.f32 0.0, %v2728
  %v2730 = vpop.f32.mrf.mxu0
  %v2731 = vadd.f32 0.0, %v2730
  %2732 = vdwg.mxu0
  %2733 = vmatprep.subr.bf16.mxu0 0
  %2734 = vmatpush1.bf16.msra.mxu0 0
  %2735 = vmatprep.subr.bf16.mxu0 0
  %2736 = vmatpush1.bf16.msra.mxu0 0
  %2737 = vmatprep.subr.bf16.mxu0 0
  %2738 = vmatpush1.bf16.msra.mxu0 0
  %2739 = vmatprep.subr.bf16.mxu0 0
  %2740 = vmatpush1.bf16.msra.mxu0 0
  %2741 = vmatprep.subr.bf16.mxu0 0
  %2742 = vmatpush1.bf16.msra.mxu0 0
  %2743 = vmatprep.subr.bf16.mxu0 0
  %2744 = vmatpush1.bf16.msra.mxu0 0
  %2745 = vmatprep.subr.bf16.mxu0 0
  %2746 = vmatpush1.bf16.msra.mxu0 0
  %2747 = vmatprep.subr.bf16.mxu0 %v2681
  %2748 = vmatpush1.bf16.msra.mxu0 %v2680
  %2749 = vmatprep.subr.bf16.mxu0 0
  %2750 = vmatpush2.bf16.msra.mxu0 0
  %2751 = vmatprep.subr.bf16.mxu0 0
  %2752 = vmatpush2.bf16.msra.mxu0 0
  %2753 = vmatprep.subr.bf16.mxu0 0
  %2754 = vmatpush2.bf16.msra.mxu0 0
  %2755 = vmatprep.subr.bf16.mxu0 0
  %2756 = vmatpush2.bf16.msra.mxu0 0
  %2757 = vmatprep.subr.bf16.mxu0 0
  %2758 = vmatpush2.bf16.msra.mxu0 0
  %2759 = vmatprep.subr.bf16.mxu0 0
  %2760 = vmatpush2.bf16.msra.mxu0 0
  %2761 = vmatprep.subr.bf16.mxu0 0
  %2762 = vmatpush2.bf16.msra.mxu0 0
  %2763 = vmatprep.subr.bf16.mxu0 0
  %2764 = vmatpush2.bf16.msra.mxu0 0
  %2765 = vmatprep.mubr.bf16.mxu0 0
  %2766 = vmatmul.mubr.bf16.gmra.mxu0 %v2688
  %v2767 = vpop.f32.mrf.mxu0
  %v2768 = vadd.f32 0.0, %v2767
  %v2769 = vpop.f32.mrf.mxu0
  %v2770 = vadd.f32 0.0, %v2769
  %v2771 = vpop.f32.mrf.mxu0
  %v2772 = vadd.f32 0.0, %v2771
  %v2773 = vpop.f32.mrf.mxu0
  %v2774 = vadd.f32 0.0, %v2773
  %2775 = vdwg.mxu0
  %v2776 = vadd.f32 %v2635, %v2725
  %v2777 = vadd.f32 %v2636, %v2727
  %v2778 = vadd.f32 %v2637, %v2768
  %v2779 = vadd.f32 %v2638, %v2770
  %v2780 = vadd.f32 %v2639, %v2729
  %v2781 = vadd.f32 %v2640, %v2731
  %v2782 = vadd.f32 %v2641, %v2772
  %v2783 = vadd.f32 %v2642, %v2774
  %v2784 = vld [vmem:[%s5] sm:$0xff]
  %v2785 = vld [vmem:[%s5 + $0x8] sm:$0xff]
  %v2786 = vld [vmem:[%s6] sm:$0xff]
  %v2787 = vld [vmem:[%s6 + $0x8] sm:$0xff]
  %v2788 = vadd.f32 %v2776, %v2777
  %v2789 = vadd.f32 %v2788, %v2778
  %v2790 = vadd.f32 %v2789, %v2779
  %2791 = vadd.xlane.f32.xlu0 %v2790
  %v2792 = vpop.xlane.xlu0 %2791
  %v2793 = vadd.f32 %v2780, %v2781
  %v2794 = vadd.f32 %v2793, %v2782
  %v2795 = vadd.f32 %v2794, %v2783
  %2796 = vadd.xlane.f32.xlu0 %v2795
  %v2797 = vpop.xlane.xlu0 %2796
  %v2798 = vmul.f32 %v2792, %v1476
  %v2799 = vmul.f32 %v2797, %v1476
  %v2800 = vsub.f32 %v2776, %v2798
  %v2801 = vsub.f32 %v2777, %v2798
  %v2802 = vsub.f32 %v2778, %v2798
  %v2803 = vsub.f32 %v2779, %v2798
  %v2804 = vsub.f32 %v2780, %v2799
  %v2805 = vsub.f32 %v2781, %v2799
  %v2806 = vsub.f32 %v2782, %v2799
  %v2807 = vsub.f32 %v2783, %v2799
  %v2808 = vmul.f32 %v2800, %v2800
  %v2809 = vmul.f32 %v2801, %v2801
  %v2810 = vmul.f32 %v2802, %v2802
  %v2811 = vmul.f32 %v2803, %v2803
  %v2812 = vmul.f32 %v2804, %v2804
  %v2813 = vmul.f32 %v2805, %v2805
  %v2814 = vmul.f32 %v2806, %v2806
  %v2815 = vmul.f32 %v2807, %v2807
  %v2816 = vadd.f32 %v2808, %v2809
  %v2817 = vadd.f32 %v2816, %v2810
  %v2818 = vadd.f32 %v2817, %v2811
  %2819 = vadd.xlane.f32.xlu0 %v2818
  %v2820 = vpop.xlane.xlu0 %2819
  %v2821 = vadd.f32 %v2812, %v2813
  %v2822 = vadd.f32 %v2821, %v2814
  %v2823 = vadd.f32 %v2822, %v2815
  %2824 = vadd.xlane.f32.xlu0 %v2823
  %v2825 = vpop.xlane.xlu0 %2824
  %v2826 = vmul.f32 %v2820, %v1476
  %v2827 = vmul.f32 %v2825, %v1476
  %v2828 = vadd.f32 %v2826, 1e-05
  %v2829 = vadd.f32 %v2827, 1e-05
  %v2830 = vrsqrt.pop %v2828
  %v2831 = vrsqrt.pop %v2829
  %v2832 = vmul.f32 %v2800, %v2830
  %v2833 = vmul.f32 %v2801, %v2830
  %v2834 = vmul.f32 %v2802, %v2830
  %v2835 = vmul.f32 %v2803, %v2830
  %v2836 = vmul.f32 %v2804, %v2831
  %v2837 = vmul.f32 %v2805, %v2831
  %v2838 = vmul.f32 %v2806, %v2831
  %v2839 = vmul.f32 %v2807, %v2831
  %2841 = vset.pattern.permute.xlu0 0
  %2842 = vperm.xlu0 %2841, %v2784
  %v2843 = vpop.permute.xlu0 %2842
  %2846 = vset.pattern.permute.xlu0 0
  %2847 = vperm.xlu0 %2846, %v2785
  %v2848 = vpop.permute.xlu0 %2847
  %v2850 = vmul.f32 %v2832, %v2843
  %v2851 = vmul.f32 %v2833, %v2843
  %v2852 = vmul.f32 %v2834, %v2843
  %v2853 = vmul.f32 %v2835, %v2843
  %v2854 = vmul.f32 %v2836, %v2848
  %v2855 = vmul.f32 %v2837, %v2848
  %v2856 = vmul.f32 %v2838, %v2848
  %v2857 = vmul.f32 %v2839, %v2848
  %2859 = vset.pattern.permute.xlu0 0
  %2860 = vperm.xlu0 %2859, %v2786
  %v2861 = vpop.permute.xlu0 %2860
  %2864 = vset.pattern.permute.xlu0 0
  %2865 = vperm.xlu0 %2864, %v2787
  %v2866 = vpop.permute.xlu0 %2865
  %v2868 = vadd.f32 %v2850, %v2861
  %v2869 = vadd.f32 %v2851, %v2861
  %v2870 = vadd.f32 %v2852, %v2861
  %v2871 = vadd.f32 %v2853, %v2861
  %v2872 = vadd.f32 %v2854, %v2866
  %v2873 = vadd.f32 %v2855, %v2866
  %v2874 = vadd.f32 %v2856, %v2866
  %v2875 = vadd.f32 %v2857, %v2866
  %v2876 = vmax.f32 %v2868, 0.0
  %v2877 = vmax.f32 %v2869, 0.0
  %v2878 = vmax.f32 %v2870, 0.0
  %v2879 = vmax.f32 %v2871, 0.0
  %v2880 = vmax.f32 %v2872, 0.0
  %v2881 = vmax.f32 %v2873, 0.0
  %v2882 = vmax.f32 %v2874, 0.0
  %v2883 = vmax.f32 %v2875, 0.0
  %2884 = vrot.lane.b32.xlu0 %v2876, 17
  %v2885 = vpop.permute.xlu0 %2884
  %2886 = vrot.lane.b32.xlu0 %v2880, 17
  %v2887 = vpop.permute.xlu0 %2886
  %2888 = vrot.lane.b32.xlu0 %v2877, 17
  %v2889 = vpop.permute.xlu0 %2888
  %2890 = vrot.lane.b32.xlu0 %v2881, 17
  %v2891 = vpop.permute.xlu0 %2890
  %2892 = vrot.lane.b32.xlu0 %v2878, 17
  %v2893 = vpop.permute.xlu0 %2892
  %2894 = vrot.lane.b32.xlu0 %v2882, 17
  %v2895 = vpop.permute.xlu0 %2894
  %2896 = vrot.lane.b32.xlu0 %v2879, 17
  %v2897 = vpop.permute.xlu0 %2896
  %2898 = vrot.lane.b32.xlu0 %v2883, 17
  %v2899 = vpop.permute.xlu0 %2898
  %v2900 = vsel %vm97, %v2893, %v2897
  %v2901 = vsel %vm97, %v2895, %v2899
  %v2902 = vsel %vm97, %v2889, %v2893
  %v2903 = vsel %vm97, %v2891, %v2895
  %v2904 = vsel %vm97, %v2885, %v2889
  %v2905 = vsel %vm97, %v2887, %v2891
  %v2906 = vsel %vm97, %v2897, %v2885
  %v2907 = vsel %vm97, %v2899, %v2887
  %v2908 = vsel %vm106, %v2906, 0.0
  %v2909 = vsel %vm107, %v2904, 0.0
  %v2910 = vsel %vm108, %v2902, 0.0
  %v2911 = vsel %vm109, %v2900, 0.0
  %v2912 = vsel %vm106, %v2907, 0.0
  %v2913 = vsel %vm107, %v2905, 0.0
  %v2914 = vsel %vm108, %v2903, 0.0
  %v2915 = vsel %vm109, %v2901, 0.0
  %v2916 = vld [vmem:[%s7] sm:$0xf]
  %v2917 = vld [vmem:[%s7 + $0x4] sm:$0xf]
  %v2918 = vpack.c.bf16 %v2912, %v2908
  %v2919 = vpack.c.bf16 %v2913, %v2909
  %v2920 = vpack.c.bf16 %v2914, %v2910
  %v2921 = vpack.c.bf16 %v2915, %v2911
  %2922 = vrot.lane.b32.xlu0 %v2876, 16
  %v2923 = vpop.permute.xlu0 %2922
  %2924 = vrot.lane.b32.xlu0 %v2880, 16
  %v2925 = vpop.permute.xlu0 %2924
  %2926 = vrot.lane.b32.xlu0 %v2877, 16
  %v2927 = vpop.permute.xlu0 %2926
  %2928 = vrot.lane.b32.xlu0 %v2881, 16
  %v2929 = vpop.permute.xlu0 %2928
  %2930 = vrot.lane.b32.xlu0 %v2878, 16
  %v2931 = vpop.permute.xlu0 %2930
  %2932 = vrot.lane.b32.xlu0 %v2882, 16
  %v2933 = vpop.permute.xlu0 %2932
  %2934 = vrot.lane.b32.xlu0 %v2879, 16
  %v2935 = vpop.permute.xlu0 %2934
  %2936 = vrot.lane.b32.xlu0 %v2883, 16
  %v2937 = vpop.permute.xlu0 %2936
  %v2938 = vsel %vm144, %v2931, %v2935
  %v2939 = vsel %vm144, %v2933, %v2937
  %v2940 = vsel %vm144, %v2927, %v2931
  %v2941 = vsel %vm144, %v2929, %v2933
  %v2942 = vsel %vm144, %v2923, %v2927
  %v2943 = vsel %vm144, %v2925, %v2929
  %v2944 = vsel %vm144, %v2935, %v2923
  %v2945 = vsel %vm144, %v2937, %v2925
  %v2946 = vsel %vm153, %v2944, 0.0
  %v2947 = vsel %vm154, %v2942, 0.0
  %v2948 = vsel %vm155, %v2940, 0.0
  %v2949 = vsel %vm156, %v2938, 0.0
  %v2950 = vsel %vm153, %v2945, 0.0
  %v2951 = vsel %vm154, %v2943, 0.0
  %v2952 = vsel %vm155, %v2941, 0.0
  %v2953 = vsel %vm156, %v2939, 0.0
  %s2954 = scalar_lea.vmem %s7, 8
  %v2955 = vld [vmem:[%s2954] sm:$0xf]
  %v2956 = vld [vmem:[%s2954 + $0x4] sm:$0xf]
  %v2957 = vpack.c.bf16 %v2950, %v2946
  %v2958 = vpack.c.bf16 %v2951, %v2947
  %v2959 = vpack.c.bf16 %v2952, %v2948
  %v2960 = vpack.c.bf16 %v2953, %v2949
  %v2963 = vunpack.c.l.b16 %v2955
  %v2964 = vunpack.c.l.b16 %v2956
  %v2965 = vpack.c.b16 %v2964, %v2963
  %v2967 = vsel %vm1645, %v2965, 0
  %2969 = vmatprep.subr.bf16.mxu0 0
  %2970 = vmatpush1.bf16.msra.mxu0 0
  %2971 = vmatprep.subr.bf16.mxu0 0
  %2972 = vmatpush1.bf16.msra.mxu0 0
  %2973 = vmatprep.subr.bf16.mxu0 0
  %2974 = vmatpush1.bf16.msra.mxu0 0
  %2975 = vmatprep.subr.bf16.mxu0 0
  %2976 = vmatpush1.bf16.msra.mxu0 0
  %2977 = vmatprep.subr.bf16.mxu0 0
  %2978 = vmatpush1.bf16.msra.mxu0 0
  %2979 = vmatprep.subr.bf16.mxu0 0
  %2980 = vmatpush1.bf16.msra.mxu0 0
  %2981 = vmatprep.subr.bf16.mxu0 0
  %2982 = vmatpush1.bf16.msra.mxu0 0
  %2983 = vmatprep.subr.bf16.mxu0 %v2958
  %2984 = vmatpush1.bf16.msra.mxu0 %v2957
  %2985 = vmatprep.subr.bf16.mxu0 0
  %2986 = vmatpush2.bf16.msra.mxu0 0
  %2987 = vmatprep.subr.bf16.mxu0 0
  %2988 = vmatpush2.bf16.msra.mxu0 0
  %2989 = vmatprep.subr.bf16.mxu0 0
  %2990 = vmatpush2.bf16.msra.mxu0 0
  %2991 = vmatprep.subr.bf16.mxu0 0
  %2992 = vmatpush2.bf16.msra.mxu0 0
  %2993 = vmatprep.subr.bf16.mxu0 0
  %2994 = vmatpush2.bf16.msra.mxu0 0
  %2995 = vmatprep.subr.bf16.mxu0 0
  %2996 = vmatpush2.bf16.msra.mxu0 0
  %2997 = vmatprep.subr.bf16.mxu0 0
  %2998 = vmatpush2.bf16.msra.mxu0 0
  %2999 = vmatprep.subr.bf16.mxu0 0
  %3000 = vmatpush2.bf16.msra.mxu0 0
  %3001 = vmatprep.mubr.bf16.mxu0 0
  %3002 = vmatmul.mubr.bf16.gmra.mxu0 %v2967
  %v3003 = vpop.f32.mrf.mxu0
  %v3004 = vadd.f32 0.0, %v3003
  %v3005 = vpop.f32.mrf.mxu0
  %v3006 = vadd.f32 0.0, %v3005
  %v3007 = vpop.f32.mrf.mxu0
  %v3008 = vadd.f32 0.0, %v3007
  %v3009 = vpop.f32.mrf.mxu0
  %v3010 = vadd.f32 0.0, %v3009
  %3011 = vdwg.mxu0
  %3012 = vmatprep.subr.bf16.mxu0 0
  %3013 = vmatpush1.bf16.msra.mxu0 0
  %3014 = vmatprep.subr.bf16.mxu0 0
  %3015 = vmatpush1.bf16.msra.mxu0 0
  %3016 = vmatprep.subr.bf16.mxu0 0
  %3017 = vmatpush1.bf16.msra.mxu0 0
  %3018 = vmatprep.subr.bf16.mxu0 0
  %3019 = vmatpush1.bf16.msra.mxu0 0
  %3020 = vmatprep.subr.bf16.mxu0 0
  %3021 = vmatpush1.bf16.msra.mxu0 0
  %3022 = vmatprep.subr.bf16.mxu0 0
  %3023 = vmatpush1.bf16.msra.mxu0 0
  %3024 = vmatprep.subr.bf16.mxu0 0
  %3025 = vmatpush1.bf16.msra.mxu0 0
  %3026 = vmatprep.subr.bf16.mxu0 %v2960
  %3027 = vmatpush1.bf16.msra.mxu0 %v2959
  %3028 = vmatprep.subr.bf16.mxu0 0
  %3029 = vmatpush2.bf16.msra.mxu0 0
  %3030 = vmatprep.subr.bf16.mxu0 0
  %3031 = vmatpush2.bf16.msra.mxu0 0
  %3032 = vmatprep.subr.bf16.mxu0 0
  %3033 = vmatpush2.bf16.msra.mxu0 0
  %3034 = vmatprep.subr.bf16.mxu0 0
  %3035 = vmatpush2.bf16.msra.mxu0 0
  %3036 = vmatprep.subr.bf16.mxu0 0
  %3037 = vmatpush2.bf16.msra.mxu0 0
  %3038 = vmatprep.subr.bf16.mxu0 0
  %3039 = vmatpush2.bf16.msra.mxu0 0
  %3040 = vmatprep.subr.bf16.mxu0 0
  %3041 = vmatpush2.bf16.msra.mxu0 0
  %3042 = vmatprep.subr.bf16.mxu0 0
  %3043 = vmatpush2.bf16.msra.mxu0 0
  %3044 = vmatprep.mubr.bf16.mxu0 0
  %3045 = vmatmul.mubr.bf16.gmra.mxu0 %v2967
  %v3046 = vpop.f32.mrf.mxu0
  %v3047 = vadd.f32 0.0, %v3046
  %v3048 = vpop.f32.mrf.mxu0
  %v3049 = vadd.f32 0.0, %v3048
  %v3050 = vpop.f32.mrf.mxu0
  %v3051 = vadd.f32 0.0, %v3050
  %v3052 = vpop.f32.mrf.mxu0
  %v3053 = vadd.f32 0.0, %v3052
  %3054 = vdwg.mxu0
  %v3057 = vunpack.c.l.b16 %v2916
  %v3058 = vunpack.c.l.b16 %v2917
  %v3059 = vpack.c.b16 %v3058, %v3057
  %v3061 = vsel %vm1645, %v3059, 0
  %3063 = vmatprep.subr.bf16.mxu0 0
  %3064 = vmatpush1.bf16.msra.mxu0 0
  %3065 = vmatprep.subr.bf16.mxu0 0
  %3066 = vmatpush1.bf16.msra.mxu0 0
  %3067 = vmatprep.subr.bf16.mxu0 0
  %3068 = vmatpush1.bf16.msra.mxu0 0
  %3069 = vmatprep.subr.bf16.mxu0 0
  %3070 = vmatpush1.bf16.msra.mxu0 0
  %3071 = vmatprep.subr.bf16.mxu0 0
  %3072 = vmatpush1.bf16.msra.mxu0 0
  %3073 = vmatprep.subr.bf16.mxu0 0
  %3074 = vmatpush1.bf16.msra.mxu0 0
  %3075 = vmatprep.subr.bf16.mxu0 0
  %3076 = vmatpush1.bf16.msra.mxu0 0
  %3077 = vmatprep.subr.bf16.mxu0 %v2919
  %3078 = vmatpush1.bf16.msra.mxu0 %v2918
  %3079 = vmatprep.subr.bf16.mxu0 0
  %3080 = vmatpush2.bf16.msra.mxu0 0
  %3081 = vmatprep.subr.bf16.mxu0 0
  %3082 = vmatpush2.bf16.msra.mxu0 0
  %3083 = vmatprep.subr.bf16.mxu0 0
  %3084 = vmatpush2.bf16.msra.mxu0 0
  %3085 = vmatprep.subr.bf16.mxu0 0
  %3086 = vmatpush2.bf16.msra.mxu0 0
  %3087 = vmatprep.subr.bf16.mxu0 0
  %3088 = vmatpush2.bf16.msra.mxu0 0
  %3089 = vmatprep.subr.bf16.mxu0 0
  %3090 = vmatpush2.bf16.msra.mxu0 0
  %3091 = vmatprep.subr.bf16.mxu0 0
  %3092 = vmatpush2.bf16.msra.mxu0 0
  %3093 = vmatprep.subr.bf16.mxu0 0
  %3094 = vmatpush2.bf16.msra.mxu0 0
  %3095 = vmatprep.mubr.bf16.mxu0 0
  %3096 = vmatmul.mubr.bf16.gmra.mxu0 %v3061
  %v3097 = vpop.f32.mrf.mxu0
  %v3098 = vadd.f32 %v3004, %v3097
  %v3099 = vpop.f32.mrf.mxu0
  %v3100 = vadd.f32 %v3006, %v3099
  %v3101 = vpop.f32.mrf.mxu0
  %v3102 = vadd.f32 %v3008, %v3101
  %v3103 = vpop.f32.mrf.mxu0
  %v3104 = vadd.f32 %v3010, %v3103
  %3105 = vdwg.mxu0
  %3106 = vmatprep.subr.bf16.mxu0 0
  %3107 = vmatpush1.bf16.msra.mxu0 0
  %3108 = vmatprep.subr.bf16.mxu0 0
  %3109 = vmatpush1.bf16.msra.mxu0 0
  %3110 = vmatprep.subr.bf16.mxu0 0
  %3111 = vmatpush1.bf16.msra.mxu0 0
  %3112 = vmatprep.subr.bf16.mxu0 0
  %3113 = vmatpush1.bf16.msra.mxu0 0
  %3114 = vmatprep.subr.bf16.mxu0 0
  %3115 = vmatpush1.bf16.msra.mxu0 0
  %3116 = vmatprep.subr.bf16.mxu0 0
  %3117 = vmatpush1.bf16.msra.mxu0 0
  %3118 = vmatprep.subr.bf16.mxu0 0
  %3119 = vmatpush1.bf16.msra.mxu0 0
  %3120 = vmatprep.subr.bf16.mxu0 %v2921
  %3121 = vmatpush1.bf16.msra.mxu0 %v2920
  %3122 = vmatprep.subr.bf16.mxu0 0
  %3123 = vmatpush2.bf16.msra.mxu0 0
  %3124 = vmatprep.subr.bf16.mxu0 0
  %3125 = vmatpush2.bf16.msra.mxu0 0
  %3126 = vmatprep.subr.bf16.mxu0 0
  %3127 = vmatpush2.bf16.msra.mxu0 0
  %3128 = vmatprep.subr.bf16.mxu0 0
  %3129 = vmatpush2.bf16.msra.mxu0 0
  %3130 = vmatprep.subr.bf16.mxu0 0
  %3131 = vmatpush2.bf16.msra.mxu0 0
  %3132 = vmatprep.subr.bf16.mxu0 0
  %3133 = vmatpush2.bf16.msra.mxu0 0
  %3134 = vmatprep.subr.bf16.mxu0 0
  %3135 = vmatpush2.bf16.msra.mxu0 0
  %3136 = vmatprep.subr.bf16.mxu0 0
  %3137 = vmatpush2.bf16.msra.mxu0 0
  %3138 = vmatprep.mubr.bf16.mxu0 0
  %3139 = vmatmul.mubr.bf16.gmra.mxu0 %v3061
  %v3140 = vpop.f32.mrf.mxu0
  %v3141 = vadd.f32 %v3047, %v3140
  %v3142 = vpop.f32.mrf.mxu0
  %v3143 = vadd.f32 %v3049, %v3142
  %v3144 = vpop.f32.mrf.mxu0
  %v3145 = vadd.f32 %v3051, %v3144
  %v3146 = vpop.f32.mrf.mxu0
  %v3147 = vadd.f32 %v3053, %v3146
  %3148 = vdwg.mxu0
  %3149 = vrot.lane.b32.xlu0 %v2876, 15
  %v3150 = vpop.permute.xlu0 %3149
  %3151 = vrot.lane.b32.xlu0 %v2880, 15
  %v3152 = vpop.permute.xlu0 %3151
  %3153 = vrot.lane.b32.xlu0 %v2877, 15
  %v3154 = vpop.permute.xlu0 %3153
  %3155 = vrot.lane.b32.xlu0 %v2881, 15
  %v3156 = vpop.permute.xlu0 %3155
  %3157 = vrot.lane.b32.xlu0 %v2878, 15
  %v3158 = vpop.permute.xlu0 %3157
  %3159 = vrot.lane.b32.xlu0 %v2882, 15
  %v3160 = vpop.permute.xlu0 %3159
  %3161 = vrot.lane.b32.xlu0 %v2879, 15
  %v3162 = vpop.permute.xlu0 %3161
  %3163 = vrot.lane.b32.xlu0 %v2883, 15
  %v3164 = vpop.permute.xlu0 %3163
  %v3165 = vsel %vm409, %v3158, %v3162
  %v3166 = vsel %vm409, %v3160, %v3164
  %v3167 = vsel %vm409, %v3154, %v3158
  %v3168 = vsel %vm409, %v3156, %v3160
  %v3169 = vsel %vm409, %v3150, %v3154
  %v3170 = vsel %vm409, %v3152, %v3156
  %v3171 = vsel %vm409, %v3162, %v3150
  %v3172 = vsel %vm409, %v3164, %v3152
  %v3173 = vsel %vm418, %v3171, 0.0
  %v3174 = vsel %vm419, %v3169, 0.0
  %v3175 = vsel %vm420, %v3167, 0.0
  %v3176 = vsel %vm421, %v3165, 0.0
  %v3177 = vsel %vm418, %v3172, 0.0
  %v3178 = vsel %vm419, %v3170, 0.0
  %v3179 = vsel %vm420, %v3168, 0.0
  %v3180 = vsel %vm421, %v3166, 0.0
  %s3181 = scalar_lea.vmem %s7, 16
  %v3182 = vld [vmem:[%s3181] sm:$0xf]
  %v3183 = vld [vmem:[%s3181 + $0x4] sm:$0xf]
  %v3184 = vpack.c.bf16 %v3177, %v3173
  %v3185 = vpack.c.bf16 %v3178, %v3174
  %v3186 = vpack.c.bf16 %v3179, %v3175
  %v3187 = vpack.c.bf16 %v3180, %v3176
  %v3190 = vunpack.c.l.b16 %v3182
  %v3191 = vunpack.c.l.b16 %v3183
  %v3192 = vpack.c.b16 %v3191, %v3190
  %v3194 = vsel %vm1645, %v3192, 0
  %3196 = vmatprep.subr.bf16.mxu0 0
  %3197 = vmatpush1.bf16.msra.mxu0 0
  %3198 = vmatprep.subr.bf16.mxu0 0
  %3199 = vmatpush1.bf16.msra.mxu0 0
  %3200 = vmatprep.subr.bf16.mxu0 0
  %3201 = vmatpush1.bf16.msra.mxu0 0
  %3202 = vmatprep.subr.bf16.mxu0 0
  %3203 = vmatpush1.bf16.msra.mxu0 0
  %3204 = vmatprep.subr.bf16.mxu0 0
  %3205 = vmatpush1.bf16.msra.mxu0 0
  %3206 = vmatprep.subr.bf16.mxu0 0
  %3207 = vmatpush1.bf16.msra.mxu0 0
  %3208 = vmatprep.subr.bf16.mxu0 0
  %3209 = vmatpush1.bf16.msra.mxu0 0
  %3210 = vmatprep.subr.bf16.mxu0 %v3185
  %3211 = vmatpush1.bf16.msra.mxu0 %v3184
  %3212 = vmatprep.subr.bf16.mxu0 0
  %3213 = vmatpush2.bf16.msra.mxu0 0
  %3214 = vmatprep.subr.bf16.mxu0 0
  %3215 = vmatpush2.bf16.msra.mxu0 0
  %3216 = vmatprep.subr.bf16.mxu0 0
  %3217 = vmatpush2.bf16.msra.mxu0 0
  %3218 = vmatprep.subr.bf16.mxu0 0
  %3219 = vmatpush2.bf16.msra.mxu0 0
  %3220 = vmatprep.subr.bf16.mxu0 0
  %3221 = vmatpush2.bf16.msra.mxu0 0
  %3222 = vmatprep.subr.bf16.mxu0 0
  %3223 = vmatpush2.bf16.msra.mxu0 0
  %3224 = vmatprep.subr.bf16.mxu0 0
  %3225 = vmatpush2.bf16.msra.mxu0 0
  %3226 = vmatprep.subr.bf16.mxu0 0
  %3227 = vmatpush2.bf16.msra.mxu0 0
  %3228 = vmatprep.mubr.bf16.mxu0 0
  %3229 = vmatmul.mubr.bf16.gmra.mxu0 %v3194
  %v3230 = vpop.f32.mrf.mxu0
  %v3231 = vadd.f32 0.0, %v3230
  %v3232 = vpop.f32.mrf.mxu0
  %v3233 = vadd.f32 0.0, %v3232
  %v3234 = vpop.f32.mrf.mxu0
  %v3235 = vadd.f32 0.0, %v3234
  %v3236 = vpop.f32.mrf.mxu0
  %v3237 = vadd.f32 0.0, %v3236
  %3238 = vdwg.mxu0
  %3239 = vmatprep.subr.bf16.mxu0 0
  %3240 = vmatpush1.bf16.msra.mxu0 0
  %3241 = vmatprep.subr.bf16.mxu0 0
  %3242 = vmatpush1.bf16.msra.mxu0 0
  %3243 = vmatprep.subr.bf16.mxu0 0
  %3244 = vmatpush1.bf16.msra.mxu0 0
  %3245 = vmatprep.subr.bf16.mxu0 0
  %3246 = vmatpush1.bf16.msra.mxu0 0
  %3247 = vmatprep.subr.bf16.mxu0 0
  %3248 = vmatpush1.bf16.msra.mxu0 0
  %3249 = vmatprep.subr.bf16.mxu0 0
  %3250 = vmatpush1.bf16.msra.mxu0 0
  %3251 = vmatprep.subr.bf16.mxu0 0
  %3252 = vmatpush1.bf16.msra.mxu0 0
  %3253 = vmatprep.subr.bf16.mxu0 %v3187
  %3254 = vmatpush1.bf16.msra.mxu0 %v3186
  %3255 = vmatprep.subr.bf16.mxu0 0
  %3256 = vmatpush2.bf16.msra.mxu0 0
  %3257 = vmatprep.subr.bf16.mxu0 0
  %3258 = vmatpush2.bf16.msra.mxu0 0
  %3259 = vmatprep.subr.bf16.mxu0 0
  %3260 = vmatpush2.bf16.msra.mxu0 0
  %3261 = vmatprep.subr.bf16.mxu0 0
  %3262 = vmatpush2.bf16.msra.mxu0 0
  %3263 = vmatprep.subr.bf16.mxu0 0
  %3264 = vmatpush2.bf16.msra.mxu0 0
  %3265 = vmatprep.subr.bf16.mxu0 0
  %3266 = vmatpush2.bf16.msra.mxu0 0
  %3267 = vmatprep.subr.bf16.mxu0 0
  %3268 = vmatpush2.bf16.msra.mxu0 0
  %3269 = vmatprep.subr.bf16.mxu0 0
  %3270 = vmatpush2.bf16.msra.mxu0 0
  %3271 = vmatprep.mubr.bf16.mxu0 0
  %3272 = vmatmul.mubr.bf16.gmra.mxu0 %v3194
  %v3273 = vpop.f32.mrf.mxu0
  %v3274 = vadd.f32 0.0, %v3273
  %v3275 = vpop.f32.mrf.mxu0
  %v3276 = vadd.f32 0.0, %v3275
  %v3277 = vpop.f32.mrf.mxu0
  %v3278 = vadd.f32 0.0, %v3277
  %v3279 = vpop.f32.mrf.mxu0
  %v3280 = vadd.f32 0.0, %v3279
  %3281 = vdwg.mxu0
  %v3282 = vadd.f32 %v3098, %v3231
  %v3283 = vadd.f32 %v3100, %v3233
  %v3284 = vadd.f32 %v3141, %v3274
  %v3285 = vadd.f32 %v3143, %v3276
  %v3286 = vadd.f32 %v3102, %v3235
  %v3287 = vadd.f32 %v3104, %v3237
  %v3288 = vadd.f32 %v3145, %v3278
  %v3289 = vadd.f32 %v3147, %v3280
  %3290 = vrot.lane.b32.xlu0 %v2876, 1
  %v3291 = vpop.permute.xlu0 %3290
  %3292 = vrot.lane.b32.xlu0 %v2880, 1
  %v3293 = vpop.permute.xlu0 %3292
  %3294 = vrot.lane.b32.xlu0 %v2877, 1
  %v3295 = vpop.permute.xlu0 %3294
  %3296 = vrot.lane.b32.xlu0 %v2881, 1
  %v3297 = vpop.permute.xlu0 %3296
  %3298 = vrot.lane.b32.xlu0 %v2878, 1
  %v3299 = vpop.permute.xlu0 %3298
  %3300 = vrot.lane.b32.xlu0 %v2882, 1
  %v3301 = vpop.permute.xlu0 %3300
  %3302 = vrot.lane.b32.xlu0 %v2879, 1
  %v3303 = vpop.permute.xlu0 %3302
  %3304 = vrot.lane.b32.xlu0 %v2883, 1
  %v3305 = vpop.permute.xlu0 %3304
  %v3306 = vsel %vm575, %v3299, %v3303
  %v3307 = vsel %vm575, %v3301, %v3305
  %v3308 = vsel %vm575, %v3295, %v3299
  %v3309 = vsel %vm575, %v3297, %v3301
  %v3310 = vsel %vm575, %v3291, %v3295
  %v3311 = vsel %vm575, %v3293, %v3297
  %v3312 = vsel %vm575, %v3303, %v3291
  %v3313 = vsel %vm575, %v3305, %v3293
  %v3314 = vsel %vm584, %v3312, 0.0
  %v3315 = vsel %vm585, %v3310, 0.0
  %v3316 = vsel %vm586, %v3308, 0.0
  %v3317 = vsel %vm587, %v3306, 0.0
  %v3318 = vsel %vm584, %v3313, 0.0
  %v3319 = vsel %vm585, %v3311, 0.0
  %v3320 = vsel %vm586, %v3309, 0.0
  %v3321 = vsel %vm587, %v3307, 0.0
  %s3322 = scalar_lea.vmem %s7, 24
  %v3323 = vld [vmem:[%s3322] sm:$0xf]
  %v3324 = vld [vmem:[%s3322 + $0x4] sm:$0xf]
  %v3325 = vpack.c.bf16 %v3318, %v3314
  %v3326 = vpack.c.bf16 %v3319, %v3315
  %v3327 = vpack.c.bf16 %v3320, %v3316
  %v3328 = vpack.c.bf16 %v3321, %v3317
  %v3331 = vunpack.c.l.b16 %v3323
  %v3332 = vunpack.c.l.b16 %v3324
  %v3333 = vpack.c.b16 %v3332, %v3331
  %v3335 = vsel %vm1645, %v3333, 0
  %3337 = vmatprep.subr.bf16.mxu0 0
  %3338 = vmatpush1.bf16.msra.mxu0 0
  %3339 = vmatprep.subr.bf16.mxu0 0
  %3340 = vmatpush1.bf16.msra.mxu0 0
  %3341 = vmatprep.subr.bf16.mxu0 0
  %3342 = vmatpush1.bf16.msra.mxu0 0
  %3343 = vmatprep.subr.bf16.mxu0 0
  %3344 = vmatpush1.bf16.msra.mxu0 0
  %3345 = vmatprep.subr.bf16.mxu0 0
  %3346 = vmatpush1.bf16.msra.mxu0 0
  %3347 = vmatprep.subr.bf16.mxu0 0
  %3348 = vmatpush1.bf16.msra.mxu0 0
  %3349 = vmatprep.subr.bf16.mxu0 0
  %3350 = vmatpush1.bf16.msra.mxu0 0
  %3351 = vmatprep.subr.bf16.mxu0 %v3326
  %3352 = vmatpush1.bf16.msra.mxu0 %v3325
  %3353 = vmatprep.subr.bf16.mxu0 0
  %3354 = vmatpush2.bf16.msra.mxu0 0
  %3355 = vmatprep.subr.bf16.mxu0 0
  %3356 = vmatpush2.bf16.msra.mxu0 0
  %3357 = vmatprep.subr.bf16.mxu0 0
  %3358 = vmatpush2.bf16.msra.mxu0 0
  %3359 = vmatprep.subr.bf16.mxu0 0
  %3360 = vmatpush2.bf16.msra.mxu0 0
  %3361 = vmatprep.subr.bf16.mxu0 0
  %3362 = vmatpush2.bf16.msra.mxu0 0
  %3363 = vmatprep.subr.bf16.mxu0 0
  %3364 = vmatpush2.bf16.msra.mxu0 0
  %3365 = vmatprep.subr.bf16.mxu0 0
  %3366 = vmatpush2.bf16.msra.mxu0 0
  %3367 = vmatprep.subr.bf16.mxu0 0
  %3368 = vmatpush2.bf16.msra.mxu0 0
  %3369 = vmatprep.mubr.bf16.mxu0 0
  %3370 = vmatmul.mubr.bf16.gmra.mxu0 %v3335
  %v3371 = vpop.f32.mrf.mxu0
  %v3372 = vadd.f32 0.0, %v3371
  %v3373 = vpop.f32.mrf.mxu0
  %v3374 = vadd.f32 0.0, %v3373
  %v3375 = vpop.f32.mrf.mxu0
  %v3376 = vadd.f32 0.0, %v3375
  %v3377 = vpop.f32.mrf.mxu0
  %v3378 = vadd.f32 0.0, %v3377
  %3379 = vdwg.mxu0
  %3380 = vmatprep.subr.bf16.mxu0 0
  %3381 = vmatpush1.bf16.msra.mxu0 0
  %3382 = vmatprep.subr.bf16.mxu0 0
  %3383 = vmatpush1.bf16.msra.mxu0 0
  %3384 = vmatprep.subr.bf16.mxu0 0
  %3385 = vmatpush1.bf16.msra.mxu0 0
  %3386 = vmatprep.subr.bf16.mxu0 0
  %3387 = vmatpush1.bf16.msra.mxu0 0
  %3388 = vmatprep.subr.bf16.mxu0 0
  %3389 = vmatpush1.bf16.msra.mxu0 0
  %3390 = vmatprep.subr.bf16.mxu0 0
  %3391 = vmatpush1.bf16.msra.mxu0 0
  %3392 = vmatprep.subr.bf16.mxu0 0
  %3393 = vmatpush1.bf16.msra.mxu0 0
  %3394 = vmatprep.subr.bf16.mxu0 %v3328
  %3395 = vmatpush1.bf16.msra.mxu0 %v3327
  %3396 = vmatprep.subr.bf16.mxu0 0
  %3397 = vmatpush2.bf16.msra.mxu0 0
  %3398 = vmatprep.subr.bf16.mxu0 0
  %3399 = vmatpush2.bf16.msra.mxu0 0
  %3400 = vmatprep.subr.bf16.mxu0 0
  %3401 = vmatpush2.bf16.msra.mxu0 0
  %3402 = vmatprep.subr.bf16.mxu0 0
  %3403 = vmatpush2.bf16.msra.mxu0 0
  %3404 = vmatprep.subr.bf16.mxu0 0
  %3405 = vmatpush2.bf16.msra.mxu0 0
  %3406 = vmatprep.subr.bf16.mxu0 0
  %3407 = vmatpush2.bf16.msra.mxu0 0
  %3408 = vmatprep.subr.bf16.mxu0 0
  %3409 = vmatpush2.bf16.msra.mxu0 0
  %3410 = vmatprep.subr.bf16.mxu0 0
  %3411 = vmatpush2.bf16.msra.mxu0 0
  %3412 = vmatprep.mubr.bf16.mxu0 0
  %3413 = vmatmul.mubr.bf16.gmra.mxu0 %v3335
  %v3414 = vpop.f32.mrf.mxu0
  %v3415 = vadd.f32 0.0, %v3414
  %v3416 = vpop.f32.mrf.mxu0
  %v3417 = vadd.f32 0.0, %v3416
  %v3418 = vpop.f32.mrf.mxu0
  %v3419 = vadd.f32 0.0, %v3418
  %v3420 = vpop.f32.mrf.mxu0
  %v3421 = vadd.f32 0.0, %v3420
  %3422 = vdwg.mxu0
  %v3423 = vadd.f32 %v3282, %v3372
  %v3424 = vadd.f32 %v3283, %v3374
  %v3425 = vadd.f32 %v3284, %v3415
  %v3426 = vadd.f32 %v3285, %v3417
  %v3427 = vadd.f32 %v3286, %v3376
  %v3428 = vadd.f32 %v3287, %v3378
  %v3429 = vadd.f32 %v3288, %v3419
  %v3430 = vadd.f32 %v3289, %v3421
  %s3431 = scalar_lea.vmem %s7, 32
  %v3432 = vld [vmem:[%s3431] sm:$0xf]
  %v3433 = vld [vmem:[%s3431 + $0x4] sm:$0xf]
  %v3434 = vpack.c.bf16 %v2880, %v2876
  %v3435 = vpack.c.bf16 %v2881, %v2877
  %v3436 = vpack.c.bf16 %v2882, %v2878
  %v3437 = vpack.c.bf16 %v2883, %v2879
  %v3440 = vunpack.c.l.b16 %v3432
  %v3441 = vunpack.c.l.b16 %v3433
  %v3442 = vpack.c.b16 %v3441, %v3440
  %v3444 = vsel %vm1645, %v3442, 0
  %3446 = vmatprep.subr.bf16.mxu0 0
  %3447 = vmatpush1.bf16.msra.mxu0 0
  %3448 = vmatprep.subr.bf16.mxu0 0
  %3449 = vmatpush1.bf16.msra.mxu0 0
  %3450 = vmatprep.subr.bf16.mxu0 0
  %3451 = vmatpush1.bf16.msra.mxu0 0
  %3452 = vmatprep.subr.bf16.mxu0 0
  %3453 = vmatpush1.bf16.msra.mxu0 0
  %3454 = vmatprep.subr.bf16.mxu0 0
  %3455 = vmatpush1.bf16.msra.mxu0 0
  %3456 = vmatprep.subr.bf16.mxu0 0
  %3457 = vmatpush1.bf16.msra.mxu0 0
  %3458 = vmatprep.subr.bf16.mxu0 0
  %3459 = vmatpush1.bf16.msra.mxu0 0
  %3460 = vmatprep.subr.bf16.mxu0 %v3435
  %3461 = vmatpush1.bf16.msra.mxu0 %v3434
  %3462 = vmatprep.subr.bf16.mxu0 0
  %3463 = vmatpush2.bf16.msra.mxu0 0
  %3464 = vmatprep.subr.bf16.mxu0 0
  %3465 = vmatpush2.bf16.msra.mxu0 0
  %3466 = vmatprep.subr.bf16.mxu0 0
  %3467 = vmatpush2.bf16.msra.mxu0 0
  %3468 = vmatprep.subr.bf16.mxu0 0
  %3469 = vmatpush2.bf16.msra.mxu0 0
  %3470 = vmatprep.subr.bf16.mxu0 0
  %3471 = vmatpush2.bf16.msra.mxu0 0
  %3472 = vmatprep.subr.bf16.mxu0 0
  %3473 = vmatpush2.bf16.msra.mxu0 0
  %3474 = vmatprep.subr.bf16.mxu0 0
  %3475 = vmatpush2.bf16.msra.mxu0 0
  %3476 = vmatprep.subr.bf16.mxu0 0
  %3477 = vmatpush2.bf16.msra.mxu0 0
  %3478 = vmatprep.mubr.bf16.mxu0 0
  %3479 = vmatmul.mubr.bf16.gmra.mxu0 %v3444
  %v3480 = vpop.f32.mrf.mxu0
  %v3481 = vadd.f32 0.0, %v3480
  %v3482 = vpop.f32.mrf.mxu0
  %v3483 = vadd.f32 0.0, %v3482
  %v3484 = vpop.f32.mrf.mxu0
  %v3485 = vadd.f32 0.0, %v3484
  %v3486 = vpop.f32.mrf.mxu0
  %v3487 = vadd.f32 0.0, %v3486
  %3488 = vdwg.mxu0
  %3489 = vmatprep.subr.bf16.mxu0 0
  %3490 = vmatpush1.bf16.msra.mxu0 0
  %3491 = vmatprep.subr.bf16.mxu0 0
  %3492 = vmatpush1.bf16.msra.mxu0 0
  %3493 = vmatprep.subr.bf16.mxu0 0
  %3494 = vmatpush1.bf16.msra.mxu0 0
  %3495 = vmatprep.subr.bf16.mxu0 0
  %3496 = vmatpush1.bf16.msra.mxu0 0
  %3497 = vmatprep.subr.bf16.mxu0 0
  %3498 = vmatpush1.bf16.msra.mxu0 0
  %3499 = vmatprep.subr.bf16.mxu0 0
  %3500 = vmatpush1.bf16.msra.mxu0 0
  %3501 = vmatprep.subr.bf16.mxu0 0
  %3502 = vmatpush1.bf16.msra.mxu0 0
  %3503 = vmatprep.subr.bf16.mxu0 %v3437
  %3504 = vmatpush1.bf16.msra.mxu0 %v3436
  %3505 = vmatprep.subr.bf16.mxu0 0
  %3506 = vmatpush2.bf16.msra.mxu0 0
  %3507 = vmatprep.subr.bf16.mxu0 0
  %3508 = vmatpush2.bf16.msra.mxu0 0
  %3509 = vmatprep.subr.bf16.mxu0 0
  %3510 = vmatpush2.bf16.msra.mxu0 0
  %3511 = vmatprep.subr.bf16.mxu0 0
  %3512 = vmatpush2.bf16.msra.mxu0 0
  %3513 = vmatprep.subr.bf16.mxu0 0
  %3514 = vmatpush2.bf16.msra.mxu0 0
  %3515 = vmatprep.subr.bf16.mxu0 0
  %3516 = vmatpush2.bf16.msra.mxu0 0
  %3517 = vmatprep.subr.bf16.mxu0 0
  %3518 = vmatpush2.bf16.msra.mxu0 0
  %3519 = vmatprep.subr.bf16.mxu0 0
  %3520 = vmatpush2.bf16.msra.mxu0 0
  %3521 = vmatprep.mubr.bf16.mxu0 0
  %3522 = vmatmul.mubr.bf16.gmra.mxu0 %v3444
  %v3523 = vpop.f32.mrf.mxu0
  %v3524 = vadd.f32 0.0, %v3523
  %v3525 = vpop.f32.mrf.mxu0
  %v3526 = vadd.f32 0.0, %v3525
  %v3527 = vpop.f32.mrf.mxu0
  %v3528 = vadd.f32 0.0, %v3527
  %v3529 = vpop.f32.mrf.mxu0
  %v3530 = vadd.f32 0.0, %v3529
  %3531 = vdwg.mxu0
  %v3532 = vadd.f32 %v3423, %v3481
  %v3533 = vadd.f32 %v3424, %v3483
  %v3534 = vadd.f32 %v3425, %v3524
  %v3535 = vadd.f32 %v3426, %v3526
  %v3536 = vadd.f32 %v3427, %v3485
  %v3537 = vadd.f32 %v3428, %v3487
  %v3538 = vadd.f32 %v3429, %v3528
  %v3539 = vadd.f32 %v3430, %v3530
  %3540 = vrot.lane.b32.xlu0 %v2876, 127
  %v3541 = vpop.permute.xlu0 %3540
  %3542 = vrot.lane.b32.xlu0 %v2880, 127
  %v3543 = vpop.permute.xlu0 %3542
  %3544 = vrot.lane.b32.xlu0 %v2877, 127
  %v3545 = vpop.permute.xlu0 %3544
  %3546 = vrot.lane.b32.xlu0 %v2881, 127
  %v3547 = vpop.permute.xlu0 %3546
  %3548 = vrot.lane.b32.xlu0 %v2878, 127
  %v3549 = vpop.permute.xlu0 %3548
  %3550 = vrot.lane.b32.xlu0 %v2882, 127
  %v3551 = vpop.permute.xlu0 %3550
  %3552 = vrot.lane.b32.xlu0 %v2879, 127
  %v3553 = vpop.permute.xlu0 %3552
  %3554 = vrot.lane.b32.xlu0 %v2883, 127
  %v3555 = vpop.permute.xlu0 %3554
  %v3556 = vsel %vm850, %v3549, %v3553
  %v3557 = vsel %vm850, %v3551, %v3555
  %v3558 = vsel %vm850, %v3545, %v3549
  %v3559 = vsel %vm850, %v3547, %v3551
  %v3560 = vsel %vm850, %v3541, %v3545
  %v3561 = vsel %vm850, %v3543, %v3547
  %v3562 = vsel %vm850, %v3553, %v3541
  %v3563 = vsel %vm850, %v3555, %v3543
  %v3564 = vsel %vm859, %v3560, 0.0
  %v3565 = vsel %vm860, %v3558, 0.0
  %v3566 = vsel %vm861, %v3556, 0.0
  %v3567 = vsel %vm862, %v3562, 0.0
  %v3568 = vsel %vm859, %v3561, 0.0
  %v3569 = vsel %vm860, %v3559, 0.0
  %v3570 = vsel %vm861, %v3557, 0.0
  %v3571 = vsel %vm862, %v3563, 0.0
  %s3572 = scalar_lea.vmem %s7, 40
  %v3573 = vld [vmem:[%s3572] sm:$0xf]
  %v3574 = vld [vmem:[%s3572 + $0x4] sm:$0xf]
  %v3575 = vpack.c.bf16 %v3568, %v3564
  %v3576 = vpack.c.bf16 %v3569, %v3565
  %v3577 = vpack.c.bf16 %v3570, %v3566
  %v3578 = vpack.c.bf16 %v3571, %v3567
  %v3581 = vunpack.c.l.b16 %v3573
  %v3582 = vunpack.c.l.b16 %v3574
  %v3583 = vpack.c.b16 %v3582, %v3581
  %v3585 = vsel %vm1645, %v3583, 0
  %3587 = vmatprep.subr.bf16.mxu0 0
  %3588 = vmatpush1.bf16.msra.mxu0 0
  %3589 = vmatprep.subr.bf16.mxu0 0
  %3590 = vmatpush1.bf16.msra.mxu0 0
  %3591 = vmatprep.subr.bf16.mxu0 0
  %3592 = vmatpush1.bf16.msra.mxu0 0
  %3593 = vmatprep.subr.bf16.mxu0 0
  %3594 = vmatpush1.bf16.msra.mxu0 0
  %3595 = vmatprep.subr.bf16.mxu0 0
  %3596 = vmatpush1.bf16.msra.mxu0 0
  %3597 = vmatprep.subr.bf16.mxu0 0
  %3598 = vmatpush1.bf16.msra.mxu0 0
  %3599 = vmatprep.subr.bf16.mxu0 0
  %3600 = vmatpush1.bf16.msra.mxu0 0
  %3601 = vmatprep.subr.bf16.mxu0 %v3576
  %3602 = vmatpush1.bf16.msra.mxu0 %v3575
  %3603 = vmatprep.subr.bf16.mxu0 0
  %3604 = vmatpush2.bf16.msra.mxu0 0
  %3605 = vmatprep.subr.bf16.mxu0 0
  %3606 = vmatpush2.bf16.msra.mxu0 0
  %3607 = vmatprep.subr.bf16.mxu0 0
  %3608 = vmatpush2.bf16.msra.mxu0 0
  %3609 = vmatprep.subr.bf16.mxu0 0
  %3610 = vmatpush2.bf16.msra.mxu0 0
  %3611 = vmatprep.subr.bf16.mxu0 0
  %3612 = vmatpush2.bf16.msra.mxu0 0
  %3613 = vmatprep.subr.bf16.mxu0 0
  %3614 = vmatpush2.bf16.msra.mxu0 0
  %3615 = vmatprep.subr.bf16.mxu0 0
  %3616 = vmatpush2.bf16.msra.mxu0 0
  %3617 = vmatprep.subr.bf16.mxu0 0
  %3618 = vmatpush2.bf16.msra.mxu0 0
  %3619 = vmatprep.mubr.bf16.mxu0 0
  %3620 = vmatmul.mubr.bf16.gmra.mxu0 %v3585
  %v3621 = vpop.f32.mrf.mxu0
  %v3622 = vadd.f32 0.0, %v3621
  %v3623 = vpop.f32.mrf.mxu0
  %v3624 = vadd.f32 0.0, %v3623
  %v3625 = vpop.f32.mrf.mxu0
  %v3626 = vadd.f32 0.0, %v3625
  %v3627 = vpop.f32.mrf.mxu0
  %v3628 = vadd.f32 0.0, %v3627
  %3629 = vdwg.mxu0
  %3630 = vmatprep.subr.bf16.mxu0 0
  %3631 = vmatpush1.bf16.msra.mxu0 0
  %3632 = vmatprep.subr.bf16.mxu0 0
  %3633 = vmatpush1.bf16.msra.mxu0 0
  %3634 = vmatprep.subr.bf16.mxu0 0
  %3635 = vmatpush1.bf16.msra.mxu0 0
  %3636 = vmatprep.subr.bf16.mxu0 0
  %3637 = vmatpush1.bf16.msra.mxu0 0
  %3638 = vmatprep.subr.bf16.mxu0 0
  %3639 = vmatpush1.bf16.msra.mxu0 0
  %3640 = vmatprep.subr.bf16.mxu0 0
  %3641 = vmatpush1.bf16.msra.mxu0 0
  %3642 = vmatprep.subr.bf16.mxu0 0
  %3643 = vmatpush1.bf16.msra.mxu0 0
  %3644 = vmatprep.subr.bf16.mxu0 %v3578
  %3645 = vmatpush1.bf16.msra.mxu0 %v3577
  %3646 = vmatprep.subr.bf16.mxu0 0
  %3647 = vmatpush2.bf16.msra.mxu0 0
  %3648 = vmatprep.subr.bf16.mxu0 0
  %3649 = vmatpush2.bf16.msra.mxu0 0
  %3650 = vmatprep.subr.bf16.mxu0 0
  %3651 = vmatpush2.bf16.msra.mxu0 0
  %3652 = vmatprep.subr.bf16.mxu0 0
  %3653 = vmatpush2.bf16.msra.mxu0 0
  %3654 = vmatprep.subr.bf16.mxu0 0
  %3655 = vmatpush2.bf16.msra.mxu0 0
  %3656 = vmatprep.subr.bf16.mxu0 0
  %3657 = vmatpush2.bf16.msra.mxu0 0
  %3658 = vmatprep.subr.bf16.mxu0 0
  %3659 = vmatpush2.bf16.msra.mxu0 0
  %3660 = vmatprep.subr.bf16.mxu0 0
  %3661 = vmatpush2.bf16.msra.mxu0 0
  %3662 = vmatprep.mubr.bf16.mxu0 0
  %3663 = vmatmul.mubr.bf16.gmra.mxu0 %v3585
  %v3664 = vpop.f32.mrf.mxu0
  %v3665 = vadd.f32 0.0, %v3664
  %v3666 = vpop.f32.mrf.mxu0
  %v3667 = vadd.f32 0.0, %v3666
  %v3668 = vpop.f32.mrf.mxu0
  %v3669 = vadd.f32 0.0, %v3668
  %v3670 = vpop.f32.mrf.mxu0
  %v3671 = vadd.f32 0.0, %v3670
  %3672 = vdwg.mxu0
  %v3673 = vadd.f32 %v3532, %v3622
  %v3674 = vadd.f32 %v3533, %v3624
  %v3675 = vadd.f32 %v3534, %v3665
  %v3676 = vadd.f32 %v3535, %v3667
  %v3677 = vadd.f32 %v3536, %v3626
  %v3678 = vadd.f32 %v3537, %v3628
  %v3679 = vadd.f32 %v3538, %v3669
  %v3680 = vadd.f32 %v3539, %v3671
  %3681 = vrot.lane.b32.xlu0 %v2876, 113
  %v3682 = vpop.permute.xlu0 %3681
  %3683 = vrot.lane.b32.xlu0 %v2880, 113
  %v3684 = vpop.permute.xlu0 %3683
  %3685 = vrot.lane.b32.xlu0 %v2877, 113
  %v3686 = vpop.permute.xlu0 %3685
  %3687 = vrot.lane.b32.xlu0 %v2881, 113
  %v3688 = vpop.permute.xlu0 %3687
  %3689 = vrot.lane.b32.xlu0 %v2878, 113
  %v3690 = vpop.permute.xlu0 %3689
  %3691 = vrot.lane.b32.xlu0 %v2882, 113
  %v3692 = vpop.permute.xlu0 %3691
  %3693 = vrot.lane.b32.xlu0 %v2879, 113
  %v3694 = vpop.permute.xlu0 %3693
  %3695 = vrot.lane.b32.xlu0 %v2883, 113
  %v3696 = vpop.permute.xlu0 %3695
  %v3697 = vsel %vm1016, %v3690, %v3694
  %v3698 = vsel %vm1016, %v3692, %v3696
  %v3699 = vsel %vm1016, %v3686, %v3690
  %v3700 = vsel %vm1016, %v3688, %v3692
  %v3701 = vsel %vm1016, %v3682, %v3686
  %v3702 = vsel %vm1016, %v3684, %v3688
  %v3703 = vsel %vm1016, %v3694, %v3682
  %v3704 = vsel %vm1016, %v3696, %v3684
  %v3705 = vsel %vm1025, %v3701, 0.0
  %v3706 = vsel %vm1026, %v3699, 0.0
  %v3707 = vsel %vm1027, %v3697, 0.0
  %v3708 = vsel %vm1028, %v3703, 0.0
  %v3709 = vsel %vm1025, %v3702, 0.0
  %v3710 = vsel %vm1026, %v3700, 0.0
  %v3711 = vsel %vm1027, %v3698, 0.0
  %v3712 = vsel %vm1028, %v3704, 0.0
  %s3713 = scalar_lea.vmem %s7, 48
  %v3714 = vld [vmem:[%s3713] sm:$0xf]
  %v3715 = vld [vmem:[%s3713 + $0x4] sm:$0xf]
  %v3716 = vpack.c.bf16 %v3709, %v3705
  %v3717 = vpack.c.bf16 %v3710, %v3706
  %v3718 = vpack.c.bf16 %v3711, %v3707
  %v3719 = vpack.c.bf16 %v3712, %v3708
  %v3722 = vunpack.c.l.b16 %v3714
  %v3723 = vunpack.c.l.b16 %v3715
  %v3724 = vpack.c.b16 %v3723, %v3722
  %v3726 = vsel %vm1645, %v3724, 0
  %3728 = vmatprep.subr.bf16.mxu0 0
  %3729 = vmatpush1.bf16.msra.mxu0 0
  %3730 = vmatprep.subr.bf16.mxu0 0
  %3731 = vmatpush1.bf16.msra.mxu0 0
  %3732 = vmatprep.subr.bf16.mxu0 0
  %3733 = vmatpush1.bf16.msra.mxu0 0
  %3734 = vmatprep.subr.bf16.mxu0 0
  %3735 = vmatpush1.bf16.msra.mxu0 0
  %3736 = vmatprep.subr.bf16.mxu0 0
  %3737 = vmatpush1.bf16.msra.mxu0 0
  %3738 = vmatprep.subr.bf16.mxu0 0
  %3739 = vmatpush1.bf16.msra.mxu0 0
  %3740 = vmatprep.subr.bf16.mxu0 0
  %3741 = vmatpush1.bf16.msra.mxu0 0
  %3742 = vmatprep.subr.bf16.mxu0 %v3717
  %3743 = vmatpush1.bf16.msra.mxu0 %v3716
  %3744 = vmatprep.subr.bf16.mxu0 0
  %3745 = vmatpush2.bf16.msra.mxu0 0
  %3746 = vmatprep.subr.bf16.mxu0 0
  %3747 = vmatpush2.bf16.msra.mxu0 0
  %3748 = vmatprep.subr.bf16.mxu0 0
  %3749 = vmatpush2.bf16.msra.mxu0 0
  %3750 = vmatprep.subr.bf16.mxu0 0
  %3751 = vmatpush2.bf16.msra.mxu0 0
  %3752 = vmatprep.subr.bf16.mxu0 0
  %3753 = vmatpush2.bf16.msra.mxu0 0
  %3754 = vmatprep.subr.bf16.mxu0 0
  %3755 = vmatpush2.bf16.msra.mxu0 0
  %3756 = vmatprep.subr.bf16.mxu0 0
  %3757 = vmatpush2.bf16.msra.mxu0 0
  %3758 = vmatprep.subr.bf16.mxu0 0
  %3759 = vmatpush2.bf16.msra.mxu0 0
  %3760 = vmatprep.mubr.bf16.mxu0 0
  %3761 = vmatmul.mubr.bf16.gmra.mxu0 %v3726
  %v3762 = vpop.f32.mrf.mxu0
  %v3763 = vadd.f32 0.0, %v3762
  %v3764 = vpop.f32.mrf.mxu0
  %v3765 = vadd.f32 0.0, %v3764
  %v3766 = vpop.f32.mrf.mxu0
  %v3767 = vadd.f32 0.0, %v3766
  %v3768 = vpop.f32.mrf.mxu0
  %v3769 = vadd.f32 0.0, %v3768
  %3770 = vdwg.mxu0
  %3771 = vmatprep.subr.bf16.mxu0 0
  %3772 = vmatpush1.bf16.msra.mxu0 0
  %3773 = vmatprep.subr.bf16.mxu0 0
  %3774 = vmatpush1.bf16.msra.mxu0 0
  %3775 = vmatprep.subr.bf16.mxu0 0
  %3776 = vmatpush1.bf16.msra.mxu0 0
  %3777 = vmatprep.subr.bf16.mxu0 0
  %3778 = vmatpush1.bf16.msra.mxu0 0
  %3779 = vmatprep.subr.bf16.mxu0 0
  %3780 = vmatpush1.bf16.msra.mxu0 0
  %3781 = vmatprep.subr.bf16.mxu0 0
  %3782 = vmatpush1.bf16.msra.mxu0 0
  %3783 = vmatprep.subr.bf16.mxu0 0
  %3784 = vmatpush1.bf16.msra.mxu0 0
  %3785 = vmatprep.subr.bf16.mxu0 %v3719
  %3786 = vmatpush1.bf16.msra.mxu0 %v3718
  %3787 = vmatprep.subr.bf16.mxu0 0
  %3788 = vmatpush2.bf16.msra.mxu0 0
  %3789 = vmatprep.subr.bf16.mxu0 0
  %3790 = vmatpush2.bf16.msra.mxu0 0
  %3791 = vmatprep.subr.bf16.mxu0 0
  %3792 = vmatpush2.bf16.msra.mxu0 0
  %3793 = vmatprep.subr.bf16.mxu0 0
  %3794 = vmatpush2.bf16.msra.mxu0 0
  %3795 = vmatprep.subr.bf16.mxu0 0
  %3796 = vmatpush2.bf16.msra.mxu0 0
  %3797 = vmatprep.subr.bf16.mxu0 0
  %3798 = vmatpush2.bf16.msra.mxu0 0
  %3799 = vmatprep.subr.bf16.mxu0 0
  %3800 = vmatpush2.bf16.msra.mxu0 0
  %3801 = vmatprep.subr.bf16.mxu0 0
  %3802 = vmatpush2.bf16.msra.mxu0 0
  %3803 = vmatprep.mubr.bf16.mxu0 0
  %3804 = vmatmul.mubr.bf16.gmra.mxu0 %v3726
  %v3805 = vpop.f32.mrf.mxu0
  %v3806 = vadd.f32 0.0, %v3805
  %v3807 = vpop.f32.mrf.mxu0
  %v3808 = vadd.f32 0.0, %v3807
  %v3809 = vpop.f32.mrf.mxu0
  %v3810 = vadd.f32 0.0, %v3809
  %v3811 = vpop.f32.mrf.mxu0
  %v3812 = vadd.f32 0.0, %v3811
  %3813 = vdwg.mxu0
  %v3814 = vadd.f32 %v3673, %v3763
  %v3815 = vadd.f32 %v3674, %v3765
  %v3816 = vadd.f32 %v3675, %v3806
  %v3817 = vadd.f32 %v3676, %v3808
  %v3818 = vadd.f32 %v3677, %v3767
  %v3819 = vadd.f32 %v3678, %v3769
  %v3820 = vadd.f32 %v3679, %v3810
  %v3821 = vadd.f32 %v3680, %v3812
  %3822 = vrot.lane.b32.xlu0 %v2876, 112
  %v3823 = vpop.permute.xlu0 %3822
  %3824 = vrot.lane.b32.xlu0 %v2880, 112
  %v3825 = vpop.permute.xlu0 %3824
  %3826 = vrot.lane.b32.xlu0 %v2877, 112
  %v3827 = vpop.permute.xlu0 %3826
  %3828 = vrot.lane.b32.xlu0 %v2881, 112
  %v3829 = vpop.permute.xlu0 %3828
  %3830 = vrot.lane.b32.xlu0 %v2878, 112
  %v3831 = vpop.permute.xlu0 %3830
  %3832 = vrot.lane.b32.xlu0 %v2882, 112
  %v3833 = vpop.permute.xlu0 %3832
  %3834 = vrot.lane.b32.xlu0 %v2879, 112
  %v3835 = vpop.permute.xlu0 %3834
  %3836 = vrot.lane.b32.xlu0 %v2883, 112
  %v3837 = vpop.permute.xlu0 %3836
  %v3838 = vsel %vm1170, %v3831, %v3835
  %v3839 = vsel %vm1170, %v3833, %v3837
  %v3840 = vsel %vm1170, %v3827, %v3831
  %v3841 = vsel %vm1170, %v3829, %v3833
  %v3842 = vsel %vm1170, %v3823, %v3827
  %v3843 = vsel %vm1170, %v3825, %v3829
  %v3844 = vsel %vm1170, %v3835, %v3823
  %v3845 = vsel %vm1170, %v3837, %v3825
  %v3846 = vsel %vm1179, %v3842, 0.0
  %v3847 = vsel %vm1180, %v3840, 0.0
  %v3848 = vsel %vm1181, %v3838, 0.0
  %v3849 = vsel %vm1182, %v3844, 0.0
  %v3850 = vsel %vm1179, %v3843, 0.0
  %v3851 = vsel %vm1180, %v3841, 0.0
  %v3852 = vsel %vm1181, %v3839, 0.0
  %v3853 = vsel %vm1182, %v3845, 0.0
  %s3854 = scalar_lea.vmem %s7, 56
  %v3855 = vld [vmem:[%s3854] sm:$0xf]
  %v3856 = vld [vmem:[%s3854 + $0x4] sm:$0xf]
  %v3857 = vpack.c.bf16 %v3850, %v3846
  %v3858 = vpack.c.bf16 %v3851, %v3847
  %v3859 = vpack.c.bf16 %v3852, %v3848
  %v3860 = vpack.c.bf16 %v3853, %v3849
  %v3863 = vunpack.c.l.b16 %v3855
  %v3864 = vunpack.c.l.b16 %v3856
  %v3865 = vpack.c.b16 %v3864, %v3863
  %v3867 = vsel %vm1645, %v3865, 0
  %3869 = vmatprep.subr.bf16.mxu0 0
  %3870 = vmatpush1.bf16.msra.mxu0 0
  %3871 = vmatprep.subr.bf16.mxu0 0
  %3872 = vmatpush1.bf16.msra.mxu0 0
  %3873 = vmatprep.subr.bf16.mxu0 0
  %3874 = vmatpush1.bf16.msra.mxu0 0
  %3875 = vmatprep.subr.bf16.mxu0 0
  %3876 = vmatpush1.bf16.msra.mxu0 0
  %3877 = vmatprep.subr.bf16.mxu0 0
  %3878 = vmatpush1.bf16.msra.mxu0 0
  %3879 = vmatprep.subr.bf16.mxu0 0
  %3880 = vmatpush1.bf16.msra.mxu0 0
  %3881 = vmatprep.subr.bf16.mxu0 0
  %3882 = vmatpush1.bf16.msra.mxu0 0
  %3883 = vmatprep.subr.bf16.mxu0 %v3858
  %3884 = vmatpush1.bf16.msra.mxu0 %v3857
  %3885 = vmatprep.subr.bf16.mxu0 0
  %3886 = vmatpush2.bf16.msra.mxu0 0
  %3887 = vmatprep.subr.bf16.mxu0 0
  %3888 = vmatpush2.bf16.msra.mxu0 0
  %3889 = vmatprep.subr.bf16.mxu0 0
  %3890 = vmatpush2.bf16.msra.mxu0 0
  %3891 = vmatprep.subr.bf16.mxu0 0
  %3892 = vmatpush2.bf16.msra.mxu0 0
  %3893 = vmatprep.subr.bf16.mxu0 0
  %3894 = vmatpush2.bf16.msra.mxu0 0
  %3895 = vmatprep.subr.bf16.mxu0 0
  %3896 = vmatpush2.bf16.msra.mxu0 0
  %3897 = vmatprep.subr.bf16.mxu0 0
  %3898 = vmatpush2.bf16.msra.mxu0 0
  %3899 = vmatprep.subr.bf16.mxu0 0
  %3900 = vmatpush2.bf16.msra.mxu0 0
  %3901 = vmatprep.mubr.bf16.mxu0 0
  %3902 = vmatmul.mubr.bf16.gmra.mxu0 %v3867
  %v3903 = vpop.f32.mrf.mxu0
  %v3904 = vadd.f32 0.0, %v3903
  %v3905 = vpop.f32.mrf.mxu0
  %v3906 = vadd.f32 0.0, %v3905
  %v3907 = vpop.f32.mrf.mxu0
  %v3908 = vadd.f32 0.0, %v3907
  %v3909 = vpop.f32.mrf.mxu0
  %v3910 = vadd.f32 0.0, %v3909
  %3911 = vdwg.mxu0
  %3912 = vmatprep.subr.bf16.mxu0 0
  %3913 = vmatpush1.bf16.msra.mxu0 0
  %3914 = vmatprep.subr.bf16.mxu0 0
  %3915 = vmatpush1.bf16.msra.mxu0 0
  %3916 = vmatprep.subr.bf16.mxu0 0
  %3917 = vmatpush1.bf16.msra.mxu0 0
  %3918 = vmatprep.subr.bf16.mxu0 0
  %3919 = vmatpush1.bf16.msra.mxu0 0
  %3920 = vmatprep.subr.bf16.mxu0 0
  %3921 = vmatpush1.bf16.msra.mxu0 0
  %3922 = vmatprep.subr.bf16.mxu0 0
  %3923 = vmatpush1.bf16.msra.mxu0 0
  %3924 = vmatprep.subr.bf16.mxu0 0
  %3925 = vmatpush1.bf16.msra.mxu0 0
  %3926 = vmatprep.subr.bf16.mxu0 %v3860
  %3927 = vmatpush1.bf16.msra.mxu0 %v3859
  %3928 = vmatprep.subr.bf16.mxu0 0
  %3929 = vmatpush2.bf16.msra.mxu0 0
  %3930 = vmatprep.subr.bf16.mxu0 0
  %3931 = vmatpush2.bf16.msra.mxu0 0
  %3932 = vmatprep.subr.bf16.mxu0 0
  %3933 = vmatpush2.bf16.msra.mxu0 0
  %3934 = vmatprep.subr.bf16.mxu0 0
  %3935 = vmatpush2.bf16.msra.mxu0 0
  %3936 = vmatprep.subr.bf16.mxu0 0
  %3937 = vmatpush2.bf16.msra.mxu0 0
  %3938 = vmatprep.subr.bf16.mxu0 0
  %3939 = vmatpush2.bf16.msra.mxu0 0
  %3940 = vmatprep.subr.bf16.mxu0 0
  %3941 = vmatpush2.bf16.msra.mxu0 0
  %3942 = vmatprep.subr.bf16.mxu0 0
  %3943 = vmatpush2.bf16.msra.mxu0 0
  %3944 = vmatprep.mubr.bf16.mxu0 0
  %3945 = vmatmul.mubr.bf16.gmra.mxu0 %v3867
  %v3946 = vpop.f32.mrf.mxu0
  %v3947 = vadd.f32 0.0, %v3946
  %v3948 = vpop.f32.mrf.mxu0
  %v3949 = vadd.f32 0.0, %v3948
  %v3950 = vpop.f32.mrf.mxu0
  %v3951 = vadd.f32 0.0, %v3950
  %v3952 = vpop.f32.mrf.mxu0
  %v3953 = vadd.f32 0.0, %v3952
  %3954 = vdwg.mxu0
  %v3955 = vadd.f32 %v3814, %v3904
  %v3956 = vadd.f32 %v3815, %v3906
  %v3957 = vadd.f32 %v3816, %v3947
  %v3958 = vadd.f32 %v3817, %v3949
  %v3959 = vadd.f32 %v3818, %v3908
  %v3960 = vadd.f32 %v3819, %v3910
  %v3961 = vadd.f32 %v3820, %v3951
  %v3962 = vadd.f32 %v3821, %v3953
  %3963 = vrot.lane.b32.xlu0 %v2876, 111
  %v3964 = vpop.permute.xlu0 %3963
  %3965 = vrot.lane.b32.xlu0 %v2880, 111
  %v3966 = vpop.permute.xlu0 %3965
  %3967 = vrot.lane.b32.xlu0 %v2877, 111
  %v3968 = vpop.permute.xlu0 %3967
  %3969 = vrot.lane.b32.xlu0 %v2881, 111
  %v3970 = vpop.permute.xlu0 %3969
  %3971 = vrot.lane.b32.xlu0 %v2878, 111
  %v3972 = vpop.permute.xlu0 %3971
  %3973 = vrot.lane.b32.xlu0 %v2882, 111
  %v3974 = vpop.permute.xlu0 %3973
  %3975 = vrot.lane.b32.xlu0 %v2879, 111
  %v3976 = vpop.permute.xlu0 %3975
  %3977 = vrot.lane.b32.xlu0 %v2883, 111
  %v3978 = vpop.permute.xlu0 %3977
  %v3979 = vsel %vm1324, %v3972, %v3976
  %v3980 = vsel %vm1324, %v3974, %v3978
  %v3981 = vsel %vm1324, %v3968, %v3972
  %v3982 = vsel %vm1324, %v3970, %v3974
  %v3983 = vsel %vm1324, %v3964, %v3968
  %v3984 = vsel %vm1324, %v3966, %v3970
  %v3985 = vsel %vm1324, %v3976, %v3964
  %v3986 = vsel %vm1324, %v3978, %v3966
  %v3987 = vsel %vm1333, %v3983, 0.0
  %v3988 = vsel %vm1334, %v3981, 0.0
  %v3989 = vsel %vm1335, %v3979, 0.0
  %v3990 = vsel %vm1336, %v3985, 0.0
  %v3991 = vsel %vm1333, %v3984, 0.0
  %v3992 = vsel %vm1334, %v3982, 0.0
  %v3993 = vsel %vm1335, %v3980, 0.0
  %v3994 = vsel %vm1336, %v3986, 0.0
  %s3995 = scalar_lea.vmem %s7, 64
  %v3996 = vld [vmem:[%s3995] sm:$0xf]
  %v3997 = vld [vmem:[%s3995 + $0x4] sm:$0xf]
  %v3998 = vpack.c.bf16 %v3991, %v3987
  %v3999 = vpack.c.bf16 %v3992, %v3988
  %v4000 = vpack.c.bf16 %v3993, %v3989
  %v4001 = vpack.c.bf16 %v3994, %v3990
  %v4004 = vunpack.c.l.b16 %v3996
  %v4005 = vunpack.c.l.b16 %v3997
  %v4006 = vpack.c.b16 %v4005, %v4004
  %v4008 = vsel %vm1645, %v4006, 0
  %4010 = vmatprep.subr.bf16.mxu0 0
  %4011 = vmatpush1.bf16.msra.mxu0 0
  %4012 = vmatprep.subr.bf16.mxu0 0
  %4013 = vmatpush1.bf16.msra.mxu0 0
  %4014 = vmatprep.subr.bf16.mxu0 0
  %4015 = vmatpush1.bf16.msra.mxu0 0
  %4016 = vmatprep.subr.bf16.mxu0 0
  %4017 = vmatpush1.bf16.msra.mxu0 0
  %4018 = vmatprep.subr.bf16.mxu0 0
  %4019 = vmatpush1.bf16.msra.mxu0 0
  %4020 = vmatprep.subr.bf16.mxu0 0
  %4021 = vmatpush1.bf16.msra.mxu0 0
  %4022 = vmatprep.subr.bf16.mxu0 0
  %4023 = vmatpush1.bf16.msra.mxu0 0
  %4024 = vmatprep.subr.bf16.mxu0 %v3999
  %4025 = vmatpush1.bf16.msra.mxu0 %v3998
  %4026 = vmatprep.subr.bf16.mxu0 0
  %4027 = vmatpush2.bf16.msra.mxu0 0
  %4028 = vmatprep.subr.bf16.mxu0 0
  %4029 = vmatpush2.bf16.msra.mxu0 0
  %4030 = vmatprep.subr.bf16.mxu0 0
  %4031 = vmatpush2.bf16.msra.mxu0 0
  %4032 = vmatprep.subr.bf16.mxu0 0
  %4033 = vmatpush2.bf16.msra.mxu0 0
  %4034 = vmatprep.subr.bf16.mxu0 0
  %4035 = vmatpush2.bf16.msra.mxu0 0
  %4036 = vmatprep.subr.bf16.mxu0 0
  %4037 = vmatpush2.bf16.msra.mxu0 0
  %4038 = vmatprep.subr.bf16.mxu0 0
  %4039 = vmatpush2.bf16.msra.mxu0 0
  %4040 = vmatprep.subr.bf16.mxu0 0
  %4041 = vmatpush2.bf16.msra.mxu0 0
  %4042 = vmatprep.mubr.bf16.mxu0 0
  %4043 = vmatmul.mubr.bf16.gmra.mxu0 %v4008
  %v4044 = vpop.f32.mrf.mxu0
  %v4045 = vadd.f32 0.0, %v4044
  %v4046 = vpop.f32.mrf.mxu0
  %v4047 = vadd.f32 0.0, %v4046
  %v4048 = vpop.f32.mrf.mxu0
  %v4049 = vadd.f32 0.0, %v4048
  %v4050 = vpop.f32.mrf.mxu0
  %v4051 = vadd.f32 0.0, %v4050
  %4052 = vdwg.mxu0
  %4053 = vmatprep.subr.bf16.mxu0 0
  %4054 = vmatpush1.bf16.msra.mxu0 0
  %4055 = vmatprep.subr.bf16.mxu0 0
  %4056 = vmatpush1.bf16.msra.mxu0 0
  %4057 = vmatprep.subr.bf16.mxu0 0
  %4058 = vmatpush1.bf16.msra.mxu0 0
  %4059 = vmatprep.subr.bf16.mxu0 0
  %4060 = vmatpush1.bf16.msra.mxu0 0
  %4061 = vmatprep.subr.bf16.mxu0 0
  %4062 = vmatpush1.bf16.msra.mxu0 0
  %4063 = vmatprep.subr.bf16.mxu0 0
  %4064 = vmatpush1.bf16.msra.mxu0 0
  %4065 = vmatprep.subr.bf16.mxu0 0
  %4066 = vmatpush1.bf16.msra.mxu0 0
  %4067 = vmatprep.subr.bf16.mxu0 %v4001
  %4068 = vmatpush1.bf16.msra.mxu0 %v4000
  %4069 = vmatprep.subr.bf16.mxu0 0
  %4070 = vmatpush2.bf16.msra.mxu0 0
  %4071 = vmatprep.subr.bf16.mxu0 0
  %4072 = vmatpush2.bf16.msra.mxu0 0
  %4073 = vmatprep.subr.bf16.mxu0 0
  %4074 = vmatpush2.bf16.msra.mxu0 0
  %4075 = vmatprep.subr.bf16.mxu0 0
  %4076 = vmatpush2.bf16.msra.mxu0 0
  %4077 = vmatprep.subr.bf16.mxu0 0
  %4078 = vmatpush2.bf16.msra.mxu0 0
  %4079 = vmatprep.subr.bf16.mxu0 0
  %4080 = vmatpush2.bf16.msra.mxu0 0
  %4081 = vmatprep.subr.bf16.mxu0 0
  %4082 = vmatpush2.bf16.msra.mxu0 0
  %4083 = vmatprep.subr.bf16.mxu0 0
  %4084 = vmatpush2.bf16.msra.mxu0 0
  %4085 = vmatprep.mubr.bf16.mxu0 0
  %4086 = vmatmul.mubr.bf16.gmra.mxu0 %v4008
  %v4087 = vpop.f32.mrf.mxu0
  %v4088 = vadd.f32 0.0, %v4087
  %v4089 = vpop.f32.mrf.mxu0
  %v4090 = vadd.f32 0.0, %v4089
  %v4091 = vpop.f32.mrf.mxu0
  %v4092 = vadd.f32 0.0, %v4091
  %v4093 = vpop.f32.mrf.mxu0
  %v4094 = vadd.f32 0.0, %v4093
  %4095 = vdwg.mxu0
  %v4096 = vadd.f32 %v3955, %v4045
  %v4097 = vadd.f32 %v3956, %v4047
  %v4098 = vadd.f32 %v3957, %v4088
  %v4099 = vadd.f32 %v3958, %v4090
  %v4100 = vadd.f32 %v3959, %v4049
  %v4101 = vadd.f32 %v3960, %v4051
  %v4102 = vadd.f32 %v3961, %v4092
  %v4103 = vadd.f32 %v3962, %v4094
  %v4104 = vadd.f32 %v1454, %v4096
  %v4105 = vadd.f32 %v1455, %v4097
  %v4106 = vadd.f32 %v1456, %v4098
  %v4107 = vadd.f32 %v1457, %v4099
  %v4108 = vadd.f32 %v1458, %v4100
  %v4109 = vadd.f32 %v1459, %v4101
  %v4110 = vadd.f32 %v1460, %v4102
  %v4111 = vadd.f32 %v1461, %v4103
  %v4112 = vld [vmem:[%s8] sm:$0xff]
  %v4113 = vld [vmem:[%s8 + $0x8] sm:$0xff]
  %v4114 = vld [vmem:[%s9] sm:$0xff]
  %v4115 = vld [vmem:[%s9 + $0x8] sm:$0xff]
  %v4116 = vadd.f32 %v4104, %v4105
  %v4117 = vadd.f32 %v4116, %v4106
  %v4118 = vadd.f32 %v4117, %v4107
  %4119 = vadd.xlane.f32.xlu0 %v4118
  %v4120 = vpop.xlane.xlu0 %4119
  %v4121 = vadd.f32 %v4108, %v4109
  %v4122 = vadd.f32 %v4121, %v4110
  %v4123 = vadd.f32 %v4122, %v4111
  %4124 = vadd.xlane.f32.xlu0 %v4123
  %v4125 = vpop.xlane.xlu0 %4124
  %v4126 = vmul.f32 %v4120, %v1476
  %v4127 = vmul.f32 %v4125, %v1476
  %v4128 = vsub.f32 %v4104, %v4126
  %v4129 = vsub.f32 %v4105, %v4126
  %v4130 = vsub.f32 %v4106, %v4126
  %v4131 = vsub.f32 %v4107, %v4126
  %v4132 = vsub.f32 %v4108, %v4127
  %v4133 = vsub.f32 %v4109, %v4127
  %v4134 = vsub.f32 %v4110, %v4127
  %v4135 = vsub.f32 %v4111, %v4127
  %v4136 = vmul.f32 %v4128, %v4128
  %v4137 = vmul.f32 %v4129, %v4129
  %v4138 = vmul.f32 %v4130, %v4130
  %v4139 = vmul.f32 %v4131, %v4131
  %v4140 = vmul.f32 %v4132, %v4132
  %v4141 = vmul.f32 %v4133, %v4133
  %v4142 = vmul.f32 %v4134, %v4134
  %v4143 = vmul.f32 %v4135, %v4135
  %v4144 = vadd.f32 %v4136, %v4137
  %v4145 = vadd.f32 %v4144, %v4138
  %v4146 = vadd.f32 %v4145, %v4139
  %4147 = vadd.xlane.f32.xlu0 %v4146
  %v4148 = vpop.xlane.xlu0 %4147
  %v4149 = vadd.f32 %v4140, %v4141
  %v4150 = vadd.f32 %v4149, %v4142
  %v4151 = vadd.f32 %v4150, %v4143
  %4152 = vadd.xlane.f32.xlu0 %v4151
  %v4153 = vpop.xlane.xlu0 %4152
  %v4154 = vmul.f32 %v4148, %v1476
  %v4155 = vmul.f32 %v4153, %v1476
  %v4156 = vadd.f32 %v4154, 1e-05
  %v4157 = vadd.f32 %v4155, 1e-05
  %v4158 = vrsqrt.pop %v4156
  %v4159 = vrsqrt.pop %v4157
  %v4160 = vmul.f32 %v4128, %v4158
  %v4161 = vmul.f32 %v4129, %v4158
  %v4162 = vmul.f32 %v4130, %v4158
  %v4163 = vmul.f32 %v4131, %v4158
  %v4164 = vmul.f32 %v4132, %v4159
  %v4165 = vmul.f32 %v4133, %v4159
  %v4166 = vmul.f32 %v4134, %v4159
  %v4167 = vmul.f32 %v4135, %v4159
  %4169 = vset.pattern.permute.xlu0 0
  %4170 = vperm.xlu0 %4169, %v4112
  %v4171 = vpop.permute.xlu0 %4170
  %4174 = vset.pattern.permute.xlu0 0
  %4175 = vperm.xlu0 %4174, %v4113
  %v4176 = vpop.permute.xlu0 %4175
  %v4178 = vmul.f32 %v4160, %v4171
  %v4179 = vmul.f32 %v4161, %v4171
  %v4180 = vmul.f32 %v4162, %v4171
  %v4181 = vmul.f32 %v4163, %v4171
  %v4182 = vmul.f32 %v4164, %v4176
  %v4183 = vmul.f32 %v4165, %v4176
  %v4184 = vmul.f32 %v4166, %v4176
  %v4185 = vmul.f32 %v4167, %v4176
  %4187 = vset.pattern.permute.xlu0 0
  %4188 = vperm.xlu0 %4187, %v4114
  %v4189 = vpop.permute.xlu0 %4188
  %4192 = vset.pattern.permute.xlu0 0
  %4193 = vperm.xlu0 %4192, %v4115
  %v4194 = vpop.permute.xlu0 %4193
  %v4196 = vadd.f32 %v4178, %v4189
  %v4197 = vadd.f32 %v4179, %v4189
  %v4198 = vadd.f32 %v4180, %v4189
  %v4199 = vadd.f32 %v4181, %v4189
  %v4200 = vadd.f32 %v4182, %v4194
  %v4201 = vadd.f32 %v4183, %v4194
  %v4202 = vadd.f32 %v4184, %v4194
  %v4203 = vadd.f32 %v4185, %v4194
  %v4204 = vmax.f32 %v4196, 0.0
  %v4205 = vmax.f32 %v4197, 0.0
  %v4206 = vmax.f32 %v4198, 0.0
  %v4207 = vmax.f32 %v4199, 0.0
  %v4208 = vmax.f32 %v4200, 0.0
  %v4209 = vmax.f32 %v4201, 0.0
  %v4210 = vmax.f32 %v4202, 0.0
  %v4211 = vmax.f32 %v4203, 0.0
  %v4212 = vpack.c.bf16 %v4208, %v4204
  %v4213 = vpack.c.bf16 %v4209, %v4205
  %v4214 = vpack.c.bf16 %v4210, %v4206
  %v4215 = vpack.c.bf16 %v4211, %v4207
  %v4220 = vunpack.c.l.b16 %v4212
  %v4221 = vunpack.c.l.b16 %v4213
  %v4222 = vunpack.c.l.b16 %v4214
  %v4223 = vunpack.c.l.b16 %v4215
  %v4224 = vunpack.c.h.b16 %v4212
  %v4225 = vunpack.c.h.b16 %v4213
  %v4226 = vunpack.c.h.b16 %v4214
  %v4227 = vunpack.c.h.b16 %v4215
  %v4228 = vpack.c.b16 %v4221, %v4220
  %v4229 = vpack.c.b16 %v4223, %v4222
  %v4230 = vpack.c.b16 %v4225, %v4224
  %v4231 = vpack.c.b16 %v4227, %v4226
  %4236 = vst [vmem:[%s10] sm:$0xff] %v4228
  %4237 = vst [vmem:[%s10 + $0x8] sm:$0xff] %v4229
  %4238 = vst [vmem:[%s10 + $0x10] sm:$0xff] %v4230
  %4239 = vst [vmem:[%s10 + $0x18] sm:$0xff] %v4231
  // Predicated region
  $region42: #{_lambda_.3} parent=0 // pred_check
    _
  $region43: #{_lambda_.3} parent=0 // pred_check_branch
    %4241 = sbr.rel (0) target = $region45
  $region44: #{_lambda_.3} parent=0 // pred_region
    _
  $region45: #{_lambda_.3} parent=0 // pred_fallthru
    _
  // Predicated region
  $region46: #{_lambda_.3} parent=0 // pred_check
    _
  $region47: #{_lambda_.3} parent=0 // pred_check_branch
    %4243 = sbr.rel (0) target = $region49
  $region48: #{_lambda_.3} parent=0 // pred_region
    _
  $region49: #{_lambda_.3} parent=0 // pred_fallthru
    _

// kernel: _lambda_.5
$region0: #{_lambda_.5}
  #allocation0 [shape = 'u32[]', space=smem, size = 0x4, offset = 0x4, fixed_abs, tag = 'smem constant byte address 0x4 - core index']
  #allocation1 [shape = 'u32[144,128]{1,0:T(1,128)}', space=vmem, size = 0x12000, scoped, tag = 'internal scratch']
  %s0 = inlined_call_operand.vmem [shape: bf16[288,32], index: 0, kind: input, shape index: {}]
  %s1 = inlined_call_operand.vmem [shape: bf16[64,288], index: 1, kind: input, shape index: {}]
  %s2 = inlined_call_operand.vmem [shape: bf16[32,32], index: 2, kind: input, shape index: {}]
  %s3 = inlined_call_operand.vmem [shape: bf16[64,32], index: 3, kind: input, shape index: {}]
  %s4 = inlined_call_operand.vmem [shape: f32[64,1], index: 4, kind: input, shape index: {}, may-alias: {4,7}]
  %s5 = inlined_call_operand.vmem [shape: f32[64,1], index: 5, kind: input, shape index: {}, may-alias: {5,8}]
  %s6 = inlined_call_operand.vmem [shape: bf16[9,64,64], index: 6, kind: input, shape index: {}]
  %s7 = inlined_call_operand.vmem [shape: f32[64,1], index: 7, kind: input, shape index: {}, may-alias: {4,7}]
  %s8 = inlined_call_operand.vmem [shape: f32[64,1], index: 8, kind: input, shape index: {}, may-alias: {5,8}]
  %s9 = inlined_call_operand.vmem [shape: f32[128,64], index: 9, kind: input, shape index: {}]
  %s10 = inlined_call_operand.vmem [shape: f32[128,1], index: 10, kind: input, shape index: {}]
  %s11 = inlined_call_operand.vmem [shape: f32[128,2], index: 11, kind: output, shape index: {}]
  %s12 = sld [smem:[#allocation0]]
  $region54: #{_lambda_.5} parent=0
    _
  %s14 = ssub.s32 1, %s12
  %s15 = scalar_select 0, %s14, %s12
  // Predicated region
  $region2: #{_lambda_.5} parent=0 // pred_check
    _
  $region3: #{_lambda_.5} parent=0 // pred_check_branch
    %17 = sbr.rel (0) target = $region5
  $region4: #{_lambda_.5} parent=0 // pred_region
    _
  $region5: #{_lambda_.5} parent=0 // pred_fallthru
    _
  // Predicated region
  $region6: #{_lambda_.5} parent=0 // pred_check
    _
  $region7: #{_lambda_.5} parent=0 // pred_check_branch
    %19 = sbr.rel (0) target = $region9
  $region8: #{_lambda_.5} parent=0 // pred_region
    _
  $region9: #{_lambda_.5} parent=0 // pred_fallthru
    _
  // Predicated region
  $region10: #{_lambda_.5} parent=0 // pred_check
    _
  $region11: #{_lambda_.5} parent=0 // pred_check_branch
    %21 = sbr.rel (0) target = $region13
  $region12: #{_lambda_.5} parent=0 // pred_region
    _
  $region13: #{_lambda_.5} parent=0 // pred_fallthru
    _
  // Predicated region
  $region14: #{_lambda_.5} parent=0 // pred_check
    _
  $region15: #{_lambda_.5} parent=0 // pred_check_branch
    %23 = sbr.rel (0) target = $region17
  $region16: #{_lambda_.5} parent=0 // pred_region
    _
  $region17: #{_lambda_.5} parent=0 // pred_fallthru
    _
  // Predicated region
  $region18: #{_lambda_.5} parent=0 // pred_check
    _
  $region19: #{_lambda_.5} parent=0 // pred_check_branch
    %25 = sbr.rel (0) target = $region21
  $region20: #{_lambda_.5} parent=0 // pred_region
    _
  $region21: #{_lambda_.5} parent=0 // pred_fallthru
    _
  // Predicated region
  $region22: #{_lambda_.5} parent=0 // pred_check
    _
  $region23: #{_lambda_.5} parent=0 // pred_check_branch
    %27 = sbr.rel (0) target = $region25
  $region24: #{_lambda_.5} parent=0 // pred_region
    _
  $region25: #{_lambda_.5} parent=0 // pred_fallthru
    _
  // Predicated region
  $region26: #{_lambda_.5} parent=0 // pred_check
    _
  $region27: #{_lambda_.5} parent=0 // pred_check_branch
    %29 = sbr.rel (0) target = $region29
  $region28: #{_lambda_.5} parent=0 // pred_region
    _
  $region29: #{_lambda_.5} parent=0 // pred_fallthru
    _
  // Predicated region
  $region30: #{_lambda_.5} parent=0 // pred_check
    _
  $region31: #{_lambda_.5} parent=0 // pred_check_branch
    %31 = sbr.rel (0) target = $region33
  $region32: #{_lambda_.5} parent=0 // pred_region
    _
  $region33: #{_lambda_.5} parent=0 // pred_fallthru
    _
  // Predicated region
  $region34: #{_lambda_.5} parent=0 // pred_check
    _
  $region35: #{_lambda_.5} parent=0 // pred_check_branch
    %33 = sbr.rel (0) target = $region37
  $region36: #{_lambda_.5} parent=0 // pred_region
    _
  $region37: #{_lambda_.5} parent=0 // pred_fallthru
    _
  // Predicated region
  $region38: #{_lambda_.5} parent=0 // pred_check
    _
  $region39: #{_lambda_.5} parent=0 // pred_check_branch
    %35 = sbr.rel (0) target = $region41
  $region40: #{_lambda_.5} parent=0 // pred_region
    _
  $region41: #{_lambda_.5} parent=0 // pred_fallthru
    _
  // Predicated region
  $region42: #{_lambda_.5} parent=0 // pred_check
    _
  $region43: #{_lambda_.5} parent=0 // pred_check_branch
    %37 = sbr.rel (0) target = $region45
  $region44: #{_lambda_.5} parent=0 // pred_region
    _
  $region45: #{_lambda_.5} parent=0 // pred_fallthru
    _
  %v39 = vld [vmem:[%s1] sm:$0xff]
  %v40 = vld [vmem:[%s1 + $0x8] sm:$0xf]
  %v41 = vld [vmem:[%s1 + $0xc] sm:$0xff]
  %v42 = vld [vmem:[%s1 + $0x14] sm:$0xf]
  %v43 = vld [vmem:[%s1 + $0x18] sm:$0xff]
  %v44 = vld [vmem:[%s1 + $0x20] sm:$0xf]
  %v45 = vld [vmem:[%s1 + $0x24] sm:$0xff]
  %v46 = vld [vmem:[%s1 + $0x2c] sm:$0xf]
  %v47 = vld [vmem:[%s1 + $0x30] sm:$0xff]
  %v48 = vld [vmem:[%s1 + $0x38] sm:$0xf]
  %v49 = vld [vmem:[%s1 + $0x3c] sm:$0xff]
  %v50 = vld [vmem:[%s1 + $0x44] sm:$0xf]
  %v51 = vld [vmem:[%s1 + $0x48] sm:$0xff]
  %v52 = vld [vmem:[%s1 + $0x50] sm:$0xf]
  %v53 = vld [vmem:[%s1 + $0x54] sm:$0xff]
  %v54 = vld [vmem:[%s1 + $0x5c] sm:$0xf]
  %v55 = vld [vmem:[%s0] sm:$0xf]
  %v56 = vld [vmem:[%s0 + $0x4] sm:$0xf]
  %v57 = vld [vmem:[%s0 + $0x8] sm:$0xf]
  %v58 = vld [vmem:[%s0 + $0xc] sm:$0xf]
  %v59 = vld [vmem:[%s0 + $0x10] sm:$0xf]
  %v60 = vld [vmem:[%s0 + $0x14] sm:$0xf]
  %v61 = vld [vmem:[%s0 + $0x18] sm:$0xf]
  %v62 = vld [vmem:[%s0 + $0x1c] sm:$0xf]
  %v63 = vld [vmem:[%s0 + $0x20] sm:$0xf]
  %v64 = vld [vmem:[%s0 + $0x24] sm:$0xf]
  %v65 = vld [vmem:[%s0 + $0x28] sm:$0xf]
  %v66 = vld [vmem:[%s0 + $0x2c] sm:$0xf]
  %v67 = vld [vmem:[%s0 + $0x30] sm:$0xf]
  %v68 = vld [vmem:[%s0 + $0x34] sm:$0xf]
  %v69 = vld [vmem:[%s0 + $0x38] sm:$0xf]
  %v70 = vld [vmem:[%s0 + $0x3c] sm:$0xf]
  %v71 = vld [vmem:[%s0 + $0x40] sm:$0xf]
  %v72 = vld [vmem:[%s0 + $0x44] sm:$0xf]
  %v73 = vld [vmem:[%s0 + $0x48] sm:$0xf]
  %v74 = vld [vmem:[%s0 + $0x4c] sm:$0xf]
  %v75 = vld [vmem:[%s0 + $0x50] sm:$0xf]
  %v76 = vld [vmem:[%s0 + $0x54] sm:$0xf]
  %v77 = vld [vmem:[%s0 + $0x58] sm:$0xf]
  %v78 = vld [vmem:[%s0 + $0x5c] sm:$0xf]
  %v79 = vld [vmem:[%s0 + $0x60] sm:$0xf]
  %v80 = vld [vmem:[%s0 + $0x64] sm:$0xf]
  %v81 = vld [vmem:[%s0 + $0x68] sm:$0xf]
  %v82 = vld [vmem:[%s0 + $0x6c] sm:$0xf]
  %v83 = vld [vmem:[%s0 + $0x70] sm:$0xf]
  %v84 = vld [vmem:[%s0 + $0x74] sm:$0xf]
  %v85 = vld [vmem:[%s0 + $0x78] sm:$0xf]
  %v86 = vld [vmem:[%s0 + $0x7c] sm:$0xf]
  %v87 = vld [vmem:[%s0 + $0x80] sm:$0xf]
  %v88 = vld [vmem:[%s0 + $0x84] sm:$0xf]
  %v89 = vld [vmem:[%s0 + $0x88] sm:$0xf]
  %v90 = vld [vmem:[%s0 + $0x8c] sm:$0xf]
  %v107 = vunpack.c.l.b16 %v39
  %v108 = vunpack.c.h.b16 %v39
  %v109 = vunpack.c.l.b16 %v40
  %v110 = vunpack.c.l.b16 %v41
  %v111 = vunpack.c.h.b16 %v41
  %v112 = vunpack.c.l.b16 %v42
  %v113 = vunpack.c.l.b16 %v43
  %v114 = vunpack.c.h.b16 %v43
  %v115 = vunpack.c.l.b16 %v44
  %v116 = vunpack.c.l.b16 %v45
  %v117 = vunpack.c.h.b16 %v45
  %v118 = vunpack.c.l.b16 %v46
  %v119 = vunpack.c.l.b16 %v47
  %v120 = vunpack.c.h.b16 %v47
  %v121 = vunpack.c.l.b16 %v48
  %v122 = vunpack.c.l.b16 %v49
  %v123 = vunpack.c.h.b16 %v49
  %v124 = vunpack.c.l.b16 %v50
  %v125 = vunpack.c.l.b16 %v51
  %v126 = vunpack.c.h.b16 %v51
  %v127 = vunpack.c.l.b16 %v52
  %v128 = vunpack.c.l.b16 %v53
  %v129 = vunpack.c.h.b16 %v53
  %v130 = vunpack.c.l.b16 %v54
  %v131 = vpack.c.b16 %v110, %v107
  %v132 = vpack.c.b16 %v111, %v108
  %v133 = vpack.c.b16 %v112, %v109
  %v134 = vpack.c.b16 %v116, %v113
  %v135 = vpack.c.b16 %v117, %v114
  %v136 = vpack.c.b16 %v118, %v115
  %v137 = vpack.c.b16 %v122, %v119
  %v138 = vpack.c.b16 %v123, %v120
  %v139 = vpack.c.b16 %v124, %v121
  %v140 = vpack.c.b16 %v128, %v125
  %v141 = vpack.c.b16 %v129, %v126
  %v142 = vpack.c.b16 %v130, %v127
  %v187 = vunpack.c.l.b16 %v55
  %v188 = vunpack.c.l.b16 %v56
  %v189 = vunpack.c.l.b16 %v57
  %v190 = vunpack.c.l.b16 %v58
  %v191 = vunpack.c.l.b16 %v59
  %v192 = vunpack.c.l.b16 %v60
  %v193 = vunpack.c.l.b16 %v61
  %v194 = vunpack.c.l.b16 %v62
  %v195 = vunpack.c.l.b16 %v63
  %v196 = vunpack.c.l.b16 %v64
  %v197 = vunpack.c.l.b16 %v65
  %v198 = vunpack.c.l.b16 %v66
  %v199 = vunpack.c.l.b16 %v67
  %v200 = vunpack.c.l.b16 %v68
  %v201 = vunpack.c.l.b16 %v69
  %v202 = vunpack.c.l.b16 %v70
  %v203 = vunpack.c.l.b16 %v71
  %v204 = vunpack.c.l.b16 %v72
  %v205 = vunpack.c.l.b16 %v73
  %v206 = vunpack.c.l.b16 %v74
  %v207 = vunpack.c.l.b16 %v75
  %v208 = vunpack.c.l.b16 %v76
  %v209 = vunpack.c.l.b16 %v77
  %v210 = vunpack.c.l.b16 %v78
  %v211 = vunpack.c.l.b16 %v79
  %v212 = vunpack.c.l.b16 %v80
  %v213 = vunpack.c.l.b16 %v81
  %v214 = vunpack.c.l.b16 %v82
  %v215 = vunpack.c.l.b16 %v83
  %v216 = vunpack.c.l.b16 %v84
  %v217 = vunpack.c.l.b16 %v85
  %v218 = vunpack.c.l.b16 %v86
  %v219 = vunpack.c.l.b16 %v87
  %v220 = vunpack.c.l.b16 %v88
  %v221 = vunpack.c.l.b16 %v89
  %v222 = vunpack.c.l.b16 %v90
  %v223 = vpack.c.b16 %v188, %v187
  %v224 = vpack.c.b16 %v190, %v189
  %v225 = vpack.c.b16 %v192, %v191
  %v226 = vpack.c.b16 %v194, %v193
  %v227 = vpack.c.b16 %v196, %v195
  %v228 = vpack.c.b16 %v198, %v197
  %v229 = vpack.c.b16 %v200, %v199
  %v230 = vpack.c.b16 %v202, %v201
  %v231 = vpack.c.b16 %v204, %v203
  %v232 = vpack.c.b16 %v206, %v205
  %v233 = vpack.c.b16 %v208, %v207
  %v234 = vpack.c.b16 %v210, %v209
  %v235 = vpack.c.b16 %v212, %v211
  %v236 = vpack.c.b16 %v214, %v213
  %v237 = vpack.c.b16 %v216, %v215
  %v238 = vpack.c.b16 %v218, %v217
  %v239 = vpack.c.b16 %v220, %v219
  %v240 = vpack.c.b16 %v222, %v221
  %vm259 = vcmask 261120
  %v261 = vsel %vm259, %v133, 0
  %v264 = vsel %vm259, %v136, 0
  %v267 = vsel %vm259, %v139, 0
  %v270 = vsel %vm259, %v142, 0
  %272 = vmatprep.subr.bf16.mxu0 0
  %273 = vmatpush1.bf16.msra.mxu0 %v230
  %274 = vmatprep.subr.bf16.mxu0 0
  %275 = vmatpush1.bf16.msra.mxu0 %v229
  %276 = vmatprep.subr.bf16.mxu0 0
  %277 = vmatpush1.bf16.msra.mxu0 %v228
  %278 = vmatprep.subr.bf16.mxu0 0
  %279 = vmatpush1.bf16.msra.mxu0 %v227
  %280 = vmatprep.subr.bf16.mxu0 0
  %281 = vmatpush1.bf16.msra.mxu0 %v226
  %282 = vmatprep.subr.bf16.mxu0 0
  %283 = vmatpush1.bf16.msra.mxu0 %v225
  %284 = vmatprep.subr.bf16.mxu0 0
  %285 = vmatpush1.bf16.msra.mxu0 %v224
  %286 = vmatprep.subr.bf16.mxu0 0
  %287 = vmatpush1.bf16.msra.mxu0 %v223
  %288 = vmatprep.subr.bf16.mxu0 0
  %289 = vmatpush2.bf16.msra.mxu0 %v238
  %290 = vmatprep.subr.bf16.mxu0 0
  %291 = vmatpush2.bf16.msra.mxu0 %v237
  %292 = vmatprep.subr.bf16.mxu0 0
  %293 = vmatpush2.bf16.msra.mxu0 %v236
  %294 = vmatprep.subr.bf16.mxu0 0
  %295 = vmatpush2.bf16.msra.mxu0 %v235
  %296 = vmatprep.subr.bf16.mxu0 0
  %297 = vmatpush2.bf16.msra.mxu0 %v234
  %298 = vmatprep.subr.bf16.mxu0 0
  %299 = vmatpush2.bf16.msra.mxu0 %v233
  %300 = vmatprep.subr.bf16.mxu0 0
  %301 = vmatpush2.bf16.msra.mxu0 %v232
  %302 = vmatprep.subr.bf16.mxu0 0
  %303 = vmatpush2.bf16.msra.mxu0 %v231
  %304 = vmatprep.mubr.bf16.mxu0 %v132
  %305 = vmatmul.mubr.bf16.gmra.mxu0 %v131
  %v306 = vpop.f32.mrf.mxu0
  %v307 = vadd.f32 0.0, %v306
  %v308 = vpop.f32.mrf.mxu0
  %v309 = vpop.f32.mrf.mxu0
  %v310 = vadd.f32 0.0, %v309
  %v311 = vpop.f32.mrf.mxu0
  %312 = vmatprep.mubr.bf16.mxu0 %v135
  %313 = vmatmul.mubr.bf16.gmra.mxu0 %v134
  %v314 = vpop.f32.mrf.mxu0
  %v315 = vadd.f32 0.0, %v314
  %v316 = vpop.f32.mrf.mxu0
  %v317 = vpop.f32.mrf.mxu0
  %v318 = vadd.f32 0.0, %v317
  %v319 = vpop.f32.mrf.mxu0
  %320 = vmatprep.mubr.bf16.mxu0 %v138
  %321 = vmatmul.mubr.bf16.gmra.mxu0 %v137
  %v322 = vpop.f32.mrf.mxu0
  %v323 = vadd.f32 0.0, %v322
  %v324 = vpop.f32.mrf.mxu0
  %v325 = vpop.f32.mrf.mxu0
  %v326 = vadd.f32 0.0, %v325
  %v327 = vpop.f32.mrf.mxu0
  %328 = vmatprep.mubr.bf16.mxu0 %v141
  %329 = vmatmul.mubr.bf16.gmra.mxu0 %v140
  %v330 = vpop.f32.mrf.mxu0
  %v331 = vadd.f32 0.0, %v330
  %v332 = vpop.f32.mrf.mxu0
  %v333 = vpop.f32.mrf.mxu0
  %v334 = vadd.f32 0.0, %v333
  %v335 = vpop.f32.mrf.mxu0
  %336 = vdwg.mxu0
  %337 = vmatprep.subr.bf16.mxu0 0
  %338 = vmatpush1.bf16.msra.mxu0 0
  %339 = vmatprep.subr.bf16.mxu0 0
  %340 = vmatpush1.bf16.msra.mxu0 0
  %341 = vmatprep.subr.bf16.mxu0 0
  %342 = vmatpush1.bf16.msra.mxu0 0
  %343 = vmatprep.subr.bf16.mxu0 0
  %344 = vmatpush1.bf16.msra.mxu0 0
  %345 = vmatprep.subr.bf16.mxu0 0
  %346 = vmatpush1.bf16.msra.mxu0 0
  %347 = vmatprep.subr.bf16.mxu0 0
  %348 = vmatpush1.bf16.msra.mxu0 0
  %349 = vmatprep.subr.bf16.mxu0 0
  %350 = vmatpush1.bf16.msra.mxu0 %v240
  %351 = vmatprep.subr.bf16.mxu0 0
  %352 = vmatpush1.bf16.msra.mxu0 %v239
  %353 = vmatprep.subr.bf16.mxu0 0
  %354 = vmatpush2.bf16.msra.mxu0 0
  %355 = vmatprep.subr.bf16.mxu0 0
  %356 = vmatpush2.bf16.msra.mxu0 0
  %357 = vmatprep.subr.bf16.mxu0 0
  %358 = vmatpush2.bf16.msra.mxu0 0
  %359 = vmatprep.subr.bf16.mxu0 0
  %360 = vmatpush2.bf16.msra.mxu0 0
  %361 = vmatprep.subr.bf16.mxu0 0
  %362 = vmatpush2.bf16.msra.mxu0 0
  %363 = vmatprep.subr.bf16.mxu0 0
  %364 = vmatpush2.bf16.msra.mxu0 0
  %365 = vmatprep.subr.bf16.mxu0 0
  %366 = vmatpush2.bf16.msra.mxu0 0
  %367 = vmatprep.subr.bf16.mxu0 0
  %368 = vmatpush2.bf16.msra.mxu0 0
  %369 = vmatprep.mubr.bf16.mxu0 0
  %370 = vmatmul.mubr.bf16.gmra.mxu0 %v261
  %v371 = vpop.f32.mrf.mxu0
  %v372 = vadd.f32 %v307, %v371
  %v373 = vpop.f32.mrf.mxu0
  %v374 = vpop.f32.mrf.mxu0
  %v375 = vadd.f32 %v310, %v374
  %v376 = vpop.f32.mrf.mxu0
  %377 = vmatprep.mubr.bf16.mxu0 0
  %378 = vmatmul.mubr.bf16.gmra.mxu0 %v264
  %v379 = vpop.f32.mrf.mxu0
  %v380 = vadd.f32 %v315, %v379
  %v381 = vpop.f32.mrf.mxu0
  %v382 = vpop.f32.mrf.mxu0
  %v383 = vadd.f32 %v318, %v382
  %v384 = vpop.f32.mrf.mxu0
  %385 = vmatprep.mubr.bf16.mxu0 0
  %386 = vmatmul.mubr.bf16.gmra.mxu0 %v267
  %v387 = vpop.f32.mrf.mxu0
  %v388 = vadd.f32 %v323, %v387
  %v389 = vpop.f32.mrf.mxu0
  %v390 = vpop.f32.mrf.mxu0
  %v391 = vadd.f32 %v326, %v390
  %v392 = vpop.f32.mrf.mxu0
  %393 = vmatprep.mubr.bf16.mxu0 0
  %394 = vmatmul.mubr.bf16.gmra.mxu0 %v270
  %v395 = vpop.f32.mrf.mxu0
  %v396 = vadd.f32 %v331, %v395
  %v397 = vpop.f32.mrf.mxu0
  %v398 = vpop.f32.mrf.mxu0
  %v399 = vadd.f32 %v334, %v398
  %v400 = vpop.f32.mrf.mxu0
  %401 = vdwg.mxu0
  %v402 = vld [vmem:[%s4] sm:$0xff]
  %v403 = vld [vmem:[%s4 + $0x8] sm:$0xff]
  %v404 = vld [vmem:[%s4 + $0x10] sm:$0xff]
  %v405 = vld [vmem:[%s4 + $0x18] sm:$0xff]
  %v406 = vld [vmem:[%s4 + $0x20] sm:$0xff]
  %v407 = vld [vmem:[%s4 + $0x28] sm:$0xff]
  %v408 = vld [vmem:[%s4 + $0x30] sm:$0xff]
  %v409 = vld [vmem:[%s4 + $0x38] sm:$0xff]
  %v410 = vld [vmem:[%s5] sm:$0xff]
  %v411 = vld [vmem:[%s5 + $0x8] sm:$0xff]
  %v412 = vld [vmem:[%s5 + $0x10] sm:$0xff]
  %v413 = vld [vmem:[%s5 + $0x18] sm:$0xff]
  %v414 = vld [vmem:[%s5 + $0x20] sm:$0xff]
  %v415 = vld [vmem:[%s5 + $0x28] sm:$0xff]
  %v416 = vld [vmem:[%s5 + $0x30] sm:$0xff]
  %v417 = vld [vmem:[%s5 + $0x38] sm:$0xff]
  %v418 = vsel %vm259, %v372, 0.0
  %419 = vadd.xlane.f32.xlu0 %v418
  %v420 = vpop.xlane.xlu0 %419
  %v421 = vsel %vm259, %v375, 0.0
  %422 = vadd.xlane.f32.xlu0 %v421
  %v423 = vpop.xlane.xlu0 %422
  %v424 = vsel %vm259, %v380, 0.0
  %425 = vadd.xlane.f32.xlu0 %v424
  %v426 = vpop.xlane.xlu0 %425
  %v427 = vsel %vm259, %v383, 0.0
  %428 = vadd.xlane.f32.xlu0 %v427
  %v429 = vpop.xlane.xlu0 %428
  %v430 = vsel %vm259, %v388, 0.0
  %431 = vadd.xlane.f32.xlu0 %v430
  %v432 = vpop.xlane.xlu0 %431
  %v433 = vsel %vm259, %v391, 0.0
  %434 = vadd.xlane.f32.xlu0 %v433
  %v435 = vpop.xlane.xlu0 %434
  %v436 = vsel %vm259, %v396, 0.0
  %437 = vadd.xlane.f32.xlu0 %v436
  %v438 = vpop.xlane.xlu0 %437
  %v439 = vsel %vm259, %v399, 0.0
  %440 = vadd.xlane.f32.xlu0 %v439
  %v441 = vpop.xlane.xlu0 %440
  %v442 = vrcp.pop 32.0
  %v443 = vmul.f32 %v420, %v442
  %v444 = vmul.f32 %v423, %v442
  %v445 = vmul.f32 %v426, %v442
  %v446 = vmul.f32 %v429, %v442
  %v447 = vmul.f32 %v432, %v442
  %v448 = vmul.f32 %v435, %v442
  %v449 = vmul.f32 %v438, %v442
  %v450 = vmul.f32 %v441, %v442
  %v451 = vsub.f32 %v372, %v443
  %v452 = vsub.f32 %v375, %v444
  %v453 = vsub.f32 %v380, %v445
  %v454 = vsub.f32 %v383, %v446
  %v455 = vsub.f32 %v388, %v447
  %v456 = vsub.f32 %v391, %v448
  %v457 = vsub.f32 %v396, %v449
  %v458 = vsub.f32 %v399, %v450
  %v459 = vmul.f32 %v451, %v451
  %v460 = vmul.f32 %v452, %v452
  %v461 = vmul.f32 %v453, %v453
  %v462 = vmul.f32 %v454, %v454
  %v463 = vmul.f32 %v455, %v455
  %v464 = vmul.f32 %v456, %v456
  %v465 = vmul.f32 %v457, %v457
  %v466 = vmul.f32 %v458, %v458
  %v467 = vsel %vm259, %v459, 0.0
  %468 = vadd.xlane.f32.xlu0 %v467
  %v469 = vpop.xlane.xlu0 %468
  %v470 = vsel %vm259, %v460, 0.0
  %471 = vadd.xlane.f32.xlu0 %v470
  %v472 = vpop.xlane.xlu0 %471
  %v473 = vsel %vm259, %v461, 0.0
  %474 = vadd.xlane.f32.xlu0 %v473
  %v475 = vpop.xlane.xlu0 %474
  %v476 = vsel %vm259, %v462, 0.0
  %477 = vadd.xlane.f32.xlu0 %v476
  %v478 = vpop.xlane.xlu0 %477
  %v479 = vsel %vm259, %v463, 0.0
  %480 = vadd.xlane.f32.xlu0 %v479
  %v481 = vpop.xlane.xlu0 %480
  %v482 = vsel %vm259, %v464, 0.0
  %483 = vadd.xlane.f32.xlu0 %v482
  %v484 = vpop.xlane.xlu0 %483
  %v485 = vsel %vm259, %v465, 0.0
  %486 = vadd.xlane.f32.xlu0 %v485
  %v487 = vpop.xlane.xlu0 %486
  %v488 = vsel %vm259, %v466, 0.0
  %489 = vadd.xlane.f32.xlu0 %v488
  %v490 = vpop.xlane.xlu0 %489
  %v491 = vmul.f32 %v469, %v442
  %v492 = vmul.f32 %v472, %v442
  %v493 = vmul.f32 %v475, %v442
  %v494 = vmul.f32 %v478, %v442
  %v495 = vmul.f32 %v481, %v442
  %v496 = vmul.f32 %v484, %v442
  %v497 = vmul.f32 %v487, %v442
  %v498 = vmul.f32 %v490, %v442
  %v499 = vadd.f32 %v491, 1e-05
  %v500 = vadd.f32 %v492, 1e-05
  %v501 = vadd.f32 %v493, 1e-05
  %v502 = vadd.f32 %v494, 1e-05
  %v503 = vadd.f32 %v495, 1e-05
  %v504 = vadd.f32 %v496, 1e-05
  %v505 = vadd.f32 %v497, 1e-05
  %v506 = vadd.f32 %v498, 1e-05
  %v507 = vrsqrt.pop %v499
  %v508 = vrsqrt.pop %v500
  %v509 = vrsqrt.pop %v501
  %v510 = vrsqrt.pop %v502
  %v511 = vrsqrt.pop %v503
  %v512 = vrsqrt.pop %v504
  %v513 = vrsqrt.pop %v505
  %v514 = vrsqrt.pop %v506
  %v515 = vmul.f32 %v451, %v507
  %v516 = vmul.f32 %v452, %v508
  %v517 = vmul.f32 %v453, %v509
  %v518 = vmul.f32 %v454, %v510
  %v519 = vmul.f32 %v455, %v511
  %v520 = vmul.f32 %v456, %v512
  %v521 = vmul.f32 %v457, %v513
  %v522 = vmul.f32 %v458, %v514
  %524 = vset.pattern.permute.xlu0 0
  %525 = vperm.xlu0 %524, %v402
  %v526 = vpop.permute.xlu0 %525
  %529 = vset.pattern.permute.xlu0 0
  %530 = vperm.xlu0 %529, %v403
  %v531 = vpop.permute.xlu0 %530
  %534 = vset.pattern.permute.xlu0 0
  %535 = vperm.xlu0 %534, %v404
  %v536 = vpop.permute.xlu0 %535
  %539 = vset.pattern.permute.xlu0 0
  %540 = vperm.xlu0 %539, %v405
  %v541 = vpop.permute.xlu0 %540
  %544 = vset.pattern.permute.xlu0 0
  %545 = vperm.xlu0 %544, %v406
  %v546 = vpop.permute.xlu0 %545
  %549 = vset.pattern.permute.xlu0 0
  %550 = vperm.xlu0 %549, %v407
  %v551 = vpop.permute.xlu0 %550
  %554 = vset.pattern.permute.xlu0 0
  %555 = vperm.xlu0 %554, %v408
  %v556 = vpop.permute.xlu0 %555
  %559 = vset.pattern.permute.xlu0 0
  %560 = vperm.xlu0 %559, %v409
  %v561 = vpop.permute.xlu0 %560
  %v563 = vmul.f32 %v515, %v526
  %v564 = vmul.f32 %v516, %v531
  %v565 = vmul.f32 %v517, %v536
  %v566 = vmul.f32 %v518, %v541
  %v567 = vmul.f32 %v519, %v546
  %v568 = vmul.f32 %v520, %v551
  %v569 = vmul.f32 %v521, %v556
  %v570 = vmul.f32 %v522, %v561
  %572 = vset.pattern.permute.xlu0 0
  %573 = vperm.xlu0 %572, %v410
  %v574 = vpop.permute.xlu0 %573
  %577 = vset.pattern.permute.xlu0 0
  %578 = vperm.xlu0 %577, %v411
  %v579 = vpop.permute.xlu0 %578
  %582 = vset.pattern.permute.xlu0 0
  %583 = vperm.xlu0 %582, %v412
  %v584 = vpop.permute.xlu0 %583
  %587 = vset.pattern.permute.xlu0 0
  %588 = vperm.xlu0 %587, %v413
  %v589 = vpop.permute.xlu0 %588
  %592 = vset.pattern.permute.xlu0 0
  %593 = vperm.xlu0 %592, %v414
  %v594 = vpop.permute.xlu0 %593
  %597 = vset.pattern.permute.xlu0 0
  %598 = vperm.xlu0 %597, %v415
  %v599 = vpop.permute.xlu0 %598
  %602 = vset.pattern.permute.xlu0 0
  %603 = vperm.xlu0 %602, %v416
  %v604 = vpop.permute.xlu0 %603
  %607 = vset.pattern.permute.xlu0 0
  %608 = vperm.xlu0 %607, %v417
  %v609 = vpop.permute.xlu0 %608
  %v611 = vadd.f32 %v563, %v574
  %v612 = vadd.f32 %v564, %v579
  %v613 = vadd.f32 %v565, %v584
  %v614 = vadd.f32 %v566, %v589
  %v615 = vadd.f32 %v567, %v594
  %v616 = vadd.f32 %v568, %v599
  %v617 = vadd.f32 %v569, %v604
  %v618 = vadd.f32 %v570, %v609
  %v619 = vmax.f32 %v611, 0.0
  %v620 = vmax.f32 %v612, 0.0
  %v621 = vmax.f32 %v613, 0.0
  %v622 = vmax.f32 %v614, 0.0
  %v623 = vmax.f32 %v615, 0.0
  %v624 = vmax.f32 %v616, 0.0
  %v625 = vmax.f32 %v617, 0.0
  %v626 = vmax.f32 %v618, 0.0
  %v627 = vlaneseq
  %v628 = vand.u32 %v627, 127
  %v629 = vand.u32 %v628, 3
  %v630 = vshra.s32 %v628, 2
  %v631 = vand.u32 %v630, 3
  %v632 = vlaneseq
  %v633 = vshrl.u32 %v632, 7
  %v634 = vadd.s32 %v633, 8
  %v635 = vadd.s32 %v633, 16
  %v636 = vadd.s32 %v633, 24
  %vm637 = vcmp.ge.s32.totalorder %v631, 1
  %vm638 = vcmp.lt.s32.totalorder %v631, 5
  %vm639 = vmand %vm637, %vm638
  %vm640 = vcmp.ge.s32.totalorder %v629, 1
  %vm641 = vmand %vm639, %vm640
  %vm642 = vcmp.lt.s32.totalorder %v629, 5
  %vm643 = vmand %vm641, %vm642
  %v644 = vadd.s32 %v628, 4294967291
  %vm645 = vcmp.eq.s32.totalorder %v633, %v644
  %vm646 = vcmp.eq.s32.totalorder %v634, %v644
  %vm647 = vcmp.eq.s32.totalorder %v635, %v644
  %vm648 = vcmp.eq.s32.totalorder %v636, %v644
  %v649 = vsel %vm643, 1, 0
  %vm650 = vcmp.eq.s32.totalorder %v649, 1
  %vm651 = vmand %vm645, %vm650
  %vm652 = vmand %vm646, %vm650
  %vm653 = vmand %vm647, %vm650
  %vm654 = vmand %vm648, %vm650
  %v655 = vsel %vm651, 1, 0
  %v656 = vsel %vm652, 1, 0
  %v657 = vsel %vm653, 1, 0
  %v658 = vsel %vm654, 1, 0
  %v659 = vcvt.s32.f32 %v655
  %v660 = vcvt.s32.f32 %v656
  %v661 = vcvt.s32.f32 %v657
  %v662 = vcvt.s32.f32 %v658
  %v664 = vsel %vm259, %v619, 0
  %v667 = vsel %vm259, %v620, 0
  %v670 = vsel %vm259, %v621, 0
  %v673 = vsel %vm259, %v622, 0
  %v676 = vsel %vm259, %v623, 0
  %v679 = vsel %vm259, %v624, 0
  %v682 = vsel %vm259, %v625, 0
  %v685 = vsel %vm259, %v626, 0
  %687 = vmatprep.subr.mxu0 0.0
  %688 = vmatpush1.msra.mxu0 0.0
  %689 = vmatprep.subr.mxu0 0.0
  %690 = vmatpush1.msra.mxu0 0.0
  %691 = vmatprep.subr.mxu0 0.0
  %692 = vmatpush1.msra.mxu0 0.0
  %693 = vmatprep.subr.mxu0 0.0
  %694 = vmatpush1.msra.mxu0 0.0
  %695 = vmatprep.subr.mxu0 0.0
  %696 = vmatpush1.msra.mxu0 0.0
  %697 = vmatprep.subr.mxu0 0.0
  %698 = vmatpush1.msra.mxu0 0.0
  %699 = vmatprep.subr.mxu0 0.0
  %700 = vmatpush1.msra.mxu0 0.0
  %701 = vmatprep.subr.mxu0 0.0
  %702 = vmatpush1.msra.mxu0 0.0
  %703 = vmatprep.subr.mxu0 0.0
  %704 = vmatpush1.msra.mxu0 0.0
  %705 = vmatprep.subr.mxu0 0.0
  %706 = vmatpush1.msra.mxu0 0.0
  %707 = vmatprep.subr.mxu0 0.0
  %708 = vmatpush1.msra.mxu0 0.0
  %709 = vmatprep.subr.mxu0 0.0
  %710 = vmatpush1.msra.mxu0 0.0
  %711 = vmatprep.subr.mxu0 0.0
  %712 = vmatpush1.msra.mxu0 %v662
  %713 = vmatprep.subr.mxu0 0.0
  %714 = vmatpush1.msra.mxu0 %v661
  %715 = vmatprep.subr.mxu0 0.0
  %716 = vmatpush1.msra.mxu0 %v660
  %717 = vmatprep.subr.mxu0 0.0
  %718 = vmatpush1.msra.mxu0 %v659
  %719 = vmatprep.subr.mxu0 0.0
  %720 = vmatpush2.msra.mxu0 0.0
  %721 = vmatprep.subr.mxu0 0.0
  %722 = vmatpush2.msra.mxu0 0.0
  %723 = vmatprep.subr.mxu0 0.0
  %724 = vmatpush2.msra.mxu0 0.0
  %725 = vmatprep.subr.mxu0 0.0
  %726 = vmatpush2.msra.mxu0 0.0
  %727 = vmatprep.subr.mxu0 0.0
  %728 = vmatpush2.msra.mxu0 0.0
  %729 = vmatprep.subr.mxu0 0.0
  %730 = vmatpush2.msra.mxu0 0.0
  %731 = vmatprep.subr.mxu0 0.0
  %732 = vmatpush2.msra.mxu0 0.0
  %733 = vmatprep.subr.mxu0 0.0
  %734 = vmatpush2.msra.mxu0 0.0
  %735 = vmatprep.subr.mxu0 0.0
  %736 = vmatpush2.msra.mxu0 0.0
  %737 = vmatprep.subr.mxu0 0.0
  %738 = vmatpush2.msra.mxu0 0.0
  %739 = vmatprep.subr.mxu0 0.0
  %740 = vmatpush2.msra.mxu0 0.0
  %741 = vmatprep.subr.mxu0 0.0
  %742 = vmatpush2.msra.mxu0 0.0
  %743 = vmatprep.subr.mxu0 0.0
  %744 = vmatpush2.msra.mxu0 0.0
  %745 = vmatprep.subr.mxu0 0.0
  %746 = vmatpush2.msra.mxu0 0.0
  %747 = vmatprep.subr.mxu0 0.0
  %748 = vmatpush2.msra.mxu0 0.0
  %749 = vmatprep.subr.mxu0 0.0
  %750 = vmatpush2.msra.mxu0 0.0
  %751 = vmatprep.mubr.f32.mxu0 0.0
  %752 = vmatmul.mubr.f32.gmra.mxu0 %v664
  %v753 = vpop.f32.mrf.mxu0
  %v754 = vadd.f32 0.0, %v753
  %v755 = vpop.f32.mrf.mxu0
  %756 = vmatprep.mubr.f32.mxu0 0.0
  %757 = vmatmul.mubr.f32.gmra.mxu0 %v667
  %v758 = vpop.f32.mrf.mxu0
  %v759 = vadd.f32 0.0, %v758
  %v760 = vpop.f32.mrf.mxu0
  %761 = vmatprep.mubr.f32.mxu0 0.0
  %762 = vmatmul.mubr.f32.gmra.mxu0 %v670
  %v763 = vpop.f32.mrf.mxu0
  %v764 = vadd.f32 0.0, %v763
  %v765 = vpop.f32.mrf.mxu0
  %766 = vmatprep.mubr.f32.mxu0 0.0
  %767 = vmatmul.mubr.f32.gmra.mxu0 %v673
  %v768 = vpop.f32.mrf.mxu0
  %v769 = vadd.f32 0.0, %v768
  %v770 = vpop.f32.mrf.mxu0
  %771 = vmatprep.mubr.f32.mxu0 0.0
  %772 = vmatmul.mubr.f32.gmra.mxu0 %v676
  %v773 = vpop.f32.mrf.mxu0
  %v774 = vadd.f32 0.0, %v773
  %v775 = vpop.f32.mrf.mxu0
  %776 = vmatprep.mubr.f32.mxu0 0.0
  %777 = vmatmul.mubr.f32.gmra.mxu0 %v679
  %v778 = vpop.f32.mrf.mxu0
  %v779 = vadd.f32 0.0, %v778
  %v780 = vpop.f32.mrf.mxu0
  %781 = vmatprep.mubr.f32.mxu0 0.0
  %782 = vmatmul.mubr.f32.gmra.mxu0 %v682
  %v783 = vpop.f32.mrf.mxu0
  %v784 = vadd.f32 0.0, %v783
  %v785 = vpop.f32.mrf.mxu0
  %786 = vmatprep.mubr.f32.mxu0 0.0
  %787 = vmatmul.mubr.f32.gmra.mxu0 %v685
  %v788 = vpop.f32.mrf.mxu0
  %v789 = vadd.f32 0.0, %v788
  %v790 = vpop.f32.mrf.mxu0
  %791 = vdwg.mxu0
  %v792 = vld [vmem:[%s6] sm:$0xf]
  %v793 = vld [vmem:[%s6 + $0x4] sm:$0xf]
  %v794 = vld [vmem:[%s6 + $0x8] sm:$0xf]
  %v795 = vld [vmem:[%s6 + $0xc] sm:$0xf]
  %v796 = vld [vmem:[%s6 + $0x10] sm:$0xf]
  %v797 = vld [vmem:[%s6 + $0x14] sm:$0xf]
  %v798 = vld [vmem:[%s6 + $0x18] sm:$0xf]
  %v799 = vld [vmem:[%s6 + $0x1c] sm:$0xf]
  %v800 = vpack.c.bf16 %v759, %v754
  %v801 = vpack.c.bf16 %v769, %v764
  %v802 = vpack.c.bf16 %v779, %v774
  %v803 = vpack.c.bf16 %v789, %v784
  %vm804 = vcmp.ge.s32.totalorder %v629, 0
  %vm805 = vmand %vm639, %vm804
  %vm806 = vcmp.lt.s32.totalorder %v629, 4
  %vm807 = vmand %vm805, %vm806
  %v808 = vadd.s32 %v628, 4294967292
  %vm809 = vcmp.eq.s32.totalorder %v633, %v808
  %vm810 = vcmp.eq.s32.totalorder %v634, %v808
  %vm811 = vcmp.eq.s32.totalorder %v635, %v808
  %vm812 = vcmp.eq.s32.totalorder %v636, %v808
  %v813 = vsel %vm807, 1, 0
  %vm814 = vcmp.eq.s32.totalorder %v813, 1
  %vm815 = vmand %vm809, %vm814
  %vm816 = vmand %vm810, %vm814
  %vm817 = vmand %vm811, %vm814
  %vm818 = vmand %vm812, %vm814
  %v819 = vsel %vm815, 1, 0
  %v820 = vsel %vm816, 1, 0
  %v821 = vsel %vm817, 1, 0
  %v822 = vsel %vm818, 1, 0
  %v823 = vcvt.s32.f32 %v819
  %v824 = vcvt.s32.f32 %v820
  %v825 = vcvt.s32.f32 %v821
  %v826 = vcvt.s32.f32 %v822
  %827 = vmatprep.subr.mxu0 0.0
  %828 = vmatpush1.msra.mxu0 0.0
  %829 = vmatprep.subr.mxu0 0.0
  %830 = vmatpush1.msra.mxu0 0.0
  %831 = vmatprep.subr.mxu0 0.0
  %832 = vmatpush1.msra.mxu0 0.0
  %833 = vmatprep.subr.mxu0 0.0
  %834 = vmatpush1.msra.mxu0 0.0
  %835 = vmatprep.subr.mxu0 0.0
  %836 = vmatpush1.msra.mxu0 0.0
  %837 = vmatprep.subr.mxu0 0.0
  %838 = vmatpush1.msra.mxu0 0.0
  %839 = vmatprep.subr.mxu0 0.0
  %840 = vmatpush1.msra.mxu0 0.0
  %841 = vmatprep.subr.mxu0 0.0
  %842 = vmatpush1.msra.mxu0 0.0
  %843 = vmatprep.subr.mxu0 0.0
  %844 = vmatpush1.msra.mxu0 0.0
  %845 = vmatprep.subr.mxu0 0.0
  %846 = vmatpush1.msra.mxu0 0.0
  %847 = vmatprep.subr.mxu0 0.0
  %848 = vmatpush1.msra.mxu0 0.0
  %849 = vmatprep.subr.mxu0 0.0
  %850 = vmatpush1.msra.mxu0 0.0
  %851 = vmatprep.subr.mxu0 0.0
  %852 = vmatpush1.msra.mxu0 %v826
  %853 = vmatprep.subr.mxu0 0.0
  %854 = vmatpush1.msra.mxu0 %v825
  %855 = vmatprep.subr.mxu0 0.0
  %856 = vmatpush1.msra.mxu0 %v824
  %857 = vmatprep.subr.mxu0 0.0
  %858 = vmatpush1.msra.mxu0 %v823
  %859 = vmatprep.subr.mxu0 0.0
  %860 = vmatpush2.msra.mxu0 0.0
  %861 = vmatprep.subr.mxu0 0.0
  %862 = vmatpush2.msra.mxu0 0.0
  %863 = vmatprep.subr.mxu0 0.0
  %864 = vmatpush2.msra.mxu0 0.0
  %865 = vmatprep.subr.mxu0 0.0
  %866 = vmatpush2.msra.mxu0 0.0
  %867 = vmatprep.subr.mxu0 0.0
  %868 = vmatpush2.msra.mxu0 0.0
  %869 = vmatprep.subr.mxu0 0.0
  %870 = vmatpush2.msra.mxu0 0.0
  %871 = vmatprep.subr.mxu0 0.0
  %872 = vmatpush2.msra.mxu0 0.0
  %873 = vmatprep.subr.mxu0 0.0
  %874 = vmatpush2.msra.mxu0 0.0
  %875 = vmatprep.subr.mxu0 0.0
  %876 = vmatpush2.msra.mxu0 0.0
  %877 = vmatprep.subr.mxu0 0.0
  %878 = vmatpush2.msra.mxu0 0.0
  %879 = vmatprep.subr.mxu0 0.0
  %880 = vmatpush2.msra.mxu0 0.0
  %881 = vmatprep.subr.mxu0 0.0
  %882 = vmatpush2.msra.mxu0 0.0
  %883 = vmatprep.subr.mxu0 0.0
  %884 = vmatpush2.msra.mxu0 0.0
  %885 = vmatprep.subr.mxu0 0.0
  %886 = vmatpush2.msra.mxu0 0.0
  %887 = vmatprep.subr.mxu0 0.0
  %888 = vmatpush2.msra.mxu0 0.0
  %889 = vmatprep.subr.mxu0 0.0
  %890 = vmatpush2.msra.mxu0 0.0
  %891 = vmatprep.mubr.f32.mxu0 0.0
  %892 = vmatmul.mubr.f32.gmra.mxu0 %v664
  %v893 = vpop.f32.mrf.mxu0
  %v894 = vadd.f32 0.0, %v893
  %v895 = vpop.f32.mrf.mxu0
  %896 = vmatprep.mubr.f32.mxu0 0.0
  %897 = vmatmul.mubr.f32.gmra.mxu0 %v667
  %v898 = vpop.f32.mrf.mxu0
  %v899 = vadd.f32 0.0, %v898
  %v900 = vpop.f32.mrf.mxu0
  %901 = vmatprep.mubr.f32.mxu0 0.0
  %902 = vmatmul.mubr.f32.gmra.mxu0 %v670
  %v903 = vpop.f32.mrf.mxu0
  %v904 = vadd.f32 0.0, %v903
  %v905 = vpop.f32.mrf.mxu0
  %906 = vmatprep.mubr.f32.mxu0 0.0
  %907 = vmatmul.mubr.f32.gmra.mxu0 %v673
  %v908 = vpop.f32.mrf.mxu0
  %v909 = vadd.f32 0.0, %v908
  %v910 = vpop.f32.mrf.mxu0
  %911 = vmatprep.mubr.f32.mxu0 0.0
  %912 = vmatmul.mubr.f32.gmra.mxu0 %v676
  %v913 = vpop.f32.mrf.mxu0
  %v914 = vadd.f32 0.0, %v913
  %v915 = vpop.f32.mrf.mxu0
  %916 = vmatprep.mubr.f32.mxu0 0.0
  %917 = vmatmul.mubr.f32.gmra.mxu0 %v679
  %v918 = vpop.f32.mrf.mxu0
  %v919 = vadd.f32 0.0, %v918
  %v920 = vpop.f32.mrf.mxu0
  %921 = vmatprep.mubr.f32.mxu0 0.0
  %922 = vmatmul.mubr.f32.gmra.mxu0 %v682
  %v923 = vpop.f32.mrf.mxu0
  %v924 = vadd.f32 0.0, %v923
  %v925 = vpop.f32.mrf.mxu0
  %926 = vmatprep.mubr.f32.mxu0 0.0
  %927 = vmatmul.mubr.f32.gmra.mxu0 %v685
  %v928 = vpop.f32.mrf.mxu0
  %v929 = vadd.f32 0.0, %v928
  %v930 = vpop.f32.mrf.mxu0
  %931 = vdwg.mxu0
  %s932 = scalar_lea.vmem %s6, 32
  %v933 = vld [vmem:[%s932] sm:$0xf]
  %v934 = vld [vmem:[%s932 + $0x4] sm:$0xf]
  %v935 = vld [vmem:[%s932 + $0x8] sm:$0xf]
  %v936 = vld [vmem:[%s932 + $0xc] sm:$0xf]
  %v937 = vld [vmem:[%s932 + $0x10] sm:$0xf]
  %v938 = vld [vmem:[%s932 + $0x14] sm:$0xf]
  %v939 = vld [vmem:[%s932 + $0x18] sm:$0xf]
  %v940 = vld [vmem:[%s932 + $0x1c] sm:$0xf]
  %v941 = vpack.c.bf16 %v899, %v894
  %v942 = vpack.c.bf16 %v909, %v904
  %v943 = vpack.c.bf16 %v919, %v914
  %v944 = vpack.c.bf16 %v929, %v924
  %v953 = vunpack.c.l.b16 %v933
  %v954 = vunpack.c.l.b16 %v934
  %v955 = vunpack.c.l.b16 %v935
  %v956 = vunpack.c.l.b16 %v936
  %v957 = vunpack.c.l.b16 %v937
  %v958 = vunpack.c.l.b16 %v938
  %v959 = vunpack.c.l.b16 %v939
  %v960 = vunpack.c.l.b16 %v940
  %v961 = vpack.c.b16 %v954, %v953
  %v962 = vpack.c.b16 %v956, %v955
  %v963 = vpack.c.b16 %v958, %v957
  %v964 = vpack.c.b16 %v960, %v959
  %vm965 = vcmask 523264
  %v967 = vsel %vm965, %v961, 0
  %v970 = vsel %vm965, %v962, 0
  %v973 = vsel %vm965, %v963, 0
  %v976 = vsel %vm965, %v964, 0
  %978 = vmatprep.subr.bf16.mxu0 0
  %979 = vmatpush1.bf16.msra.mxu0 0
  %980 = vmatprep.subr.bf16.mxu0 0
  %981 = vmatpush1.bf16.msra.mxu0 0
  %982 = vmatprep.subr.bf16.mxu0 0
  %983 = vmatpush1.bf16.msra.mxu0 0
  %984 = vmatprep.subr.bf16.mxu0 0
  %985 = vmatpush1.bf16.msra.mxu0 0
  %986 = vmatprep.subr.bf16.mxu0 0
  %987 = vmatpush1.bf16.msra.mxu0 %v944
  %988 = vmatprep.subr.bf16.mxu0 0
  %989 = vmatpush1.bf16.msra.mxu0 %v943
  %990 = vmatprep.subr.bf16.mxu0 0
  %991 = vmatpush1.bf16.msra.mxu0 %v942
  %992 = vmatprep.subr.bf16.mxu0 0
  %993 = vmatpush1.bf16.msra.mxu0 %v941
  %994 = vmatprep.subr.bf16.mxu0 0
  %995 = vmatpush2.bf16.msra.mxu0 0
  %996 = vmatprep.subr.bf16.mxu0 0
  %997 = vmatpush2.bf16.msra.mxu0 0
  %998 = vmatprep.subr.bf16.mxu0 0
  %999 = vmatpush2.bf16.msra.mxu0 0
  %1000 = vmatprep.subr.bf16.mxu0 0
  %1001 = vmatpush2.bf16.msra.mxu0 0
  %1002 = vmatprep.subr.bf16.mxu0 0
  %1003 = vmatpush2.bf16.msra.mxu0 0
  %1004 = vmatprep.subr.bf16.mxu0 0
  %1005 = vmatpush2.bf16.msra.mxu0 0
  %1006 = vmatprep.subr.bf16.mxu0 0
  %1007 = vmatpush2.bf16.msra.mxu0 0
  %1008 = vmatprep.subr.bf16.mxu0 0
  %1009 = vmatpush2.bf16.msra.mxu0 0
  %1010 = vmatprep.mubr.bf16.mxu0 0
  %1011 = vmatmul.mubr.bf16.gmra.mxu0 %v967
  %v1012 = vpop.f32.mrf.mxu0
  %v1013 = vadd.f32 0.0, %v1012
  %v1014 = vpop.f32.mrf.mxu0
  %v1015 = vpop.f32.mrf.mxu0
  %v1016 = vadd.f32 0.0, %v1015
  %v1017 = vpop.f32.mrf.mxu0
  %1018 = vmatprep.mubr.bf16.mxu0 0
  %1019 = vmatmul.mubr.bf16.gmra.mxu0 %v970
  %v1020 = vpop.f32.mrf.mxu0
  %v1021 = vadd.f32 0.0, %v1020
  %v1022 = vpop.f32.mrf.mxu0
  %v1023 = vpop.f32.mrf.mxu0
  %v1024 = vadd.f32 0.0, %v1023
  %v1025 = vpop.f32.mrf.mxu0
  %1026 = vmatprep.mubr.bf16.mxu0 0
  %1027 = vmatmul.mubr.bf16.gmra.mxu0 %v973
  %v1028 = vpop.f32.mrf.mxu0
  %v1029 = vadd.f32 0.0, %v1028
  %v1030 = vpop.f32.mrf.mxu0
  %v1031 = vpop.f32.mrf.mxu0
  %v1032 = vadd.f32 0.0, %v1031
  %v1033 = vpop.f32.mrf.mxu0
  %1034 = vmatprep.mubr.bf16.mxu0 0
  %1035 = vmatmul.mubr.bf16.gmra.mxu0 %v976
  %v1036 = vpop.f32.mrf.mxu0
  %v1037 = vadd.f32 0.0, %v1036
  %v1038 = vpop.f32.mrf.mxu0
  %v1039 = vpop.f32.mrf.mxu0
  %v1040 = vadd.f32 0.0, %v1039
  %v1041 = vpop.f32.mrf.mxu0
  %1042 = vdwg.mxu0
  %v1051 = vunpack.c.l.b16 %v792
  %v1052 = vunpack.c.l.b16 %v793
  %v1053 = vunpack.c.l.b16 %v794
  %v1054 = vunpack.c.l.b16 %v795
  %v1055 = vunpack.c.l.b16 %v796
  %v1056 = vunpack.c.l.b16 %v797
  %v1057 = vunpack.c.l.b16 %v798
  %v1058 = vunpack.c.l.b16 %v799
  %v1059 = vpack.c.b16 %v1052, %v1051
  %v1060 = vpack.c.b16 %v1054, %v1053
  %v1061 = vpack.c.b16 %v1056, %v1055
  %v1062 = vpack.c.b16 %v1058, %v1057
  %v1064 = vsel %vm965, %v1059, 0
  %v1067 = vsel %vm965, %v1060, 0
  %v1070 = vsel %vm965, %v1061, 0
  %v1073 = vsel %vm965, %v1062, 0
  %1075 = vmatprep.subr.bf16.mxu0 0
  %1076 = vmatpush1.bf16.msra.mxu0 0
  %1077 = vmatprep.subr.bf16.mxu0 0
  %1078 = vmatpush1.bf16.msra.mxu0 0
  %1079 = vmatprep.subr.bf16.mxu0 0
  %1080 = vmatpush1.bf16.msra.mxu0 0
  %1081 = vmatprep.subr.bf16.mxu0 0
  %1082 = vmatpush1.bf16.msra.mxu0 0
  %1083 = vmatprep.subr.bf16.mxu0 0
  %1084 = vmatpush1.bf16.msra.mxu0 %v803
  %1085 = vmatprep.subr.bf16.mxu0 0
  %1086 = vmatpush1.bf16.msra.mxu0 %v802
  %1087 = vmatprep.subr.bf16.mxu0 0
  %1088 = vmatpush1.bf16.msra.mxu0 %v801
  %1089 = vmatprep.subr.bf16.mxu0 0
  %1090 = vmatpush1.bf16.msra.mxu0 %v800
  %1091 = vmatprep.subr.bf16.mxu0 0
  %1092 = vmatpush2.bf16.msra.mxu0 0
  %1093 = vmatprep.subr.bf16.mxu0 0
  %1094 = vmatpush2.bf16.msra.mxu0 0
  %1095 = vmatprep.subr.bf16.mxu0 0
  %1096 = vmatpush2.bf16.msra.mxu0 0
  %1097 = vmatprep.subr.bf16.mxu0 0
  %1098 = vmatpush2.bf16.msra.mxu0 0
  %1099 = vmatprep.subr.bf16.mxu0 0
  %1100 = vmatpush2.bf16.msra.mxu0 0
  %1101 = vmatprep.subr.bf16.mxu0 0
  %1102 = vmatpush2.bf16.msra.mxu0 0
  %1103 = vmatprep.subr.bf16.mxu0 0
  %1104 = vmatpush2.bf16.msra.mxu0 0
  %1105 = vmatprep.subr.bf16.mxu0 0
  %1106 = vmatpush2.bf16.msra.mxu0 0
  %1107 = vmatprep.mubr.bf16.mxu0 0
  %1108 = vmatmul.mubr.bf16.gmra.mxu0 %v1064
  %v1109 = vpop.f32.mrf.mxu0
  %v1110 = vadd.f32 %v1013, %v1109
  %v1111 = vpop.f32.mrf.mxu0
  %v1112 = vpop.f32.mrf.mxu0
  %v1113 = vadd.f32 %v1016, %v1112
  %v1114 = vpop.f32.mrf.mxu0
  %1115 = vmatprep.mubr.bf16.mxu0 0
  %1116 = vmatmul.mubr.bf16.gmra.mxu0 %v1067
  %v1117 = vpop.f32.mrf.mxu0
  %v1118 = vadd.f32 %v1021, %v1117
  %v1119 = vpop.f32.mrf.mxu0
  %v1120 = vpop.f32.mrf.mxu0
  %v1121 = vadd.f32 %v1024, %v1120
  %v1122 = vpop.f32.mrf.mxu0
  %1123 = vmatprep.mubr.bf16.mxu0 0
  %1124 = vmatmul.mubr.bf16.gmra.mxu0 %v1070
  %v1125 = vpop.f32.mrf.mxu0
  %v1126 = vadd.f32 %v1029, %v1125
  %v1127 = vpop.f32.mrf.mxu0
  %v1128 = vpop.f32.mrf.mxu0
  %v1129 = vadd.f32 %v1032, %v1128
  %v1130 = vpop.f32.mrf.mxu0
  %1131 = vmatprep.mubr.bf16.mxu0 0
  %1132 = vmatmul.mubr.bf16.gmra.mxu0 %v1073
  %v1133 = vpop.f32.mrf.mxu0
  %v1134 = vadd.f32 %v1037, %v1133
  %v1135 = vpop.f32.mrf.mxu0
  %v1136 = vpop.f32.mrf.mxu0
  %v1137 = vadd.f32 %v1040, %v1136
  %v1138 = vpop.f32.mrf.mxu0
  %1139 = vdwg.mxu0
  %vm1140 = vcmp.ge.s32.totalorder %v629, 4294967295
  %vm1141 = vmand %vm639, %vm1140
  %vm1142 = vcmp.lt.s32.totalorder %v629, 3
  %vm1143 = vmand %vm1141, %vm1142
  %v1144 = vadd.s32 %v628, 4294967293
  %vm1145 = vcmp.eq.s32.totalorder %v633, %v1144
  %vm1146 = vcmp.eq.s32.totalorder %v634, %v1144
  %vm1147 = vcmp.eq.s32.totalorder %v635, %v1144
  %vm1148 = vcmp.eq.s32.totalorder %v636, %v1144
  %v1149 = vsel %vm1143, 1, 0
  %vm1150 = vcmp.eq.s32.totalorder %v1149, 1
  %vm1151 = vmand %vm1145, %vm1150
  %vm1152 = vmand %vm1146, %vm1150
  %vm1153 = vmand %vm1147, %vm1150
  %vm1154 = vmand %vm1148, %vm1150
  %v1155 = vsel %vm1151, 1, 0
  %v1156 = vsel %vm1152, 1, 0
  %v1157 = vsel %vm1153, 1, 0
  %v1158 = vsel %vm1154, 1, 0
  %v1159 = vcvt.s32.f32 %v1155
  %v1160 = vcvt.s32.f32 %v1156
  %v1161 = vcvt.s32.f32 %v1157
  %v1162 = vcvt.s32.f32 %v1158
  %1163 = vmatprep.subr.mxu0 0.0
  %1164 = vmatpush1.msra.mxu0 0.0
  %1165 = vmatprep.subr.mxu0 0.0
  %1166 = vmatpush1.msra.mxu0 0.0
  %1167 = vmatprep.subr.mxu0 0.0
  %1168 = vmatpush1.msra.mxu0 0.0
  %1169 = vmatprep.subr.mxu0 0.0
  %1170 = vmatpush1.msra.mxu0 0.0
  %1171 = vmatprep.subr.mxu0 0.0
  %1172 = vmatpush1.msra.mxu0 0.0
  %1173 = vmatprep.subr.mxu0 0.0
  %1174 = vmatpush1.msra.mxu0 0.0
  %1175 = vmatprep.subr.mxu0 0.0
  %1176 = vmatpush1.msra.mxu0 0.0
  %1177 = vmatprep.subr.mxu0 0.0
  %1178 = vmatpush1.msra.mxu0 0.0
  %1179 = vmatprep.subr.mxu0 0.0
  %1180 = vmatpush1.msra.mxu0 0.0
  %1181 = vmatprep.subr.mxu0 0.0
  %1182 = vmatpush1.msra.mxu0 0.0
  %1183 = vmatprep.subr.mxu0 0.0
  %1184 = vmatpush1.msra.mxu0 0.0
  %1185 = vmatprep.subr.mxu0 0.0
  %1186 = vmatpush1.msra.mxu0 0.0
  %1187 = vmatprep.subr.mxu0 0.0
  %1188 = vmatpush1.msra.mxu0 %v1162
  %1189 = vmatprep.subr.mxu0 0.0
  %1190 = vmatpush1.msra.mxu0 %v1161
  %1191 = vmatprep.subr.mxu0 0.0
  %1192 = vmatpush1.msra.mxu0 %v1160
  %1193 = vmatprep.subr.mxu0 0.0
  %1194 = vmatpush1.msra.mxu0 %v1159
  %1195 = vmatprep.subr.mxu0 0.0
  %1196 = vmatpush2.msra.mxu0 0.0
  %1197 = vmatprep.subr.mxu0 0.0
  %1198 = vmatpush2.msra.mxu0 0.0
  %1199 = vmatprep.subr.mxu0 0.0
  %1200 = vmatpush2.msra.mxu0 0.0
  %1201 = vmatprep.subr.mxu0 0.0
  %1202 = vmatpush2.msra.mxu0 0.0
  %1203 = vmatprep.subr.mxu0 0.0
  %1204 = vmatpush2.msra.mxu0 0.0
  %1205 = vmatprep.subr.mxu0 0.0
  %1206 = vmatpush2.msra.mxu0 0.0
  %1207 = vmatprep.subr.mxu0 0.0
  %1208 = vmatpush2.msra.mxu0 0.0
  %1209 = vmatprep.subr.mxu0 0.0
  %1210 = vmatpush2.msra.mxu0 0.0
  %1211 = vmatprep.subr.mxu0 0.0
  %1212 = vmatpush2.msra.mxu0 0.0
  %1213 = vmatprep.subr.mxu0 0.0
  %1214 = vmatpush2.msra.mxu0 0.0
  %1215 = vmatprep.subr.mxu0 0.0
  %1216 = vmatpush2.msra.mxu0 0.0
  %1217 = vmatprep.subr.mxu0 0.0
  %1218 = vmatpush2.msra.mxu0 0.0
  %1219 = vmatprep.subr.mxu0 0.0
  %1220 = vmatpush2.msra.mxu0 0.0
  %1221 = vmatprep.subr.mxu0 0.0
  %1222 = vmatpush2.msra.mxu0 0.0
  %1223 = vmatprep.subr.mxu0 0.0
  %1224 = vmatpush2.msra.mxu0 0.0
  %1225 = vmatprep.subr.mxu0 0.0
  %1226 = vmatpush2.msra.mxu0 0.0
  %1227 = vmatprep.mubr.f32.mxu0 0.0
  %1228 = vmatmul.mubr.f32.gmra.mxu0 %v664
  %v1229 = vpop.f32.mrf.mxu0
  %v1230 = vadd.f32 0.0, %v1229
  %v1231 = vpop.f32.mrf.mxu0
  %1232 = vmatprep.mubr.f32.mxu0 0.0
  %1233 = vmatmul.mubr.f32.gmra.mxu0 %v667
  %v1234 = vpop.f32.mrf.mxu0
  %v1235 = vadd.f32 0.0, %v1234
  %v1236 = vpop.f32.mrf.mxu0
  %1237 = vmatprep.mubr.f32.mxu0 0.0
  %1238 = vmatmul.mubr.f32.gmra.mxu0 %v670
  %v1239 = vpop.f32.mrf.mxu0
  %v1240 = vadd.f32 0.0, %v1239
  %v1241 = vpop.f32.mrf.mxu0
  %1242 = vmatprep.mubr.f32.mxu0 0.0
  %1243 = vmatmul.mubr.f32.gmra.mxu0 %v673
  %v1244 = vpop.f32.mrf.mxu0
  %v1245 = vadd.f32 0.0, %v1244
  %v1246 = vpop.f32.mrf.mxu0
  %1247 = vmatprep.mubr.f32.mxu0 0.0
  %1248 = vmatmul.mubr.f32.gmra.mxu0 %v676
  %v1249 = vpop.f32.mrf.mxu0
  %v1250 = vadd.f32 0.0, %v1249
  %v1251 = vpop.f32.mrf.mxu0
  %1252 = vmatprep.mubr.f32.mxu0 0.0
  %1253 = vmatmul.mubr.f32.gmra.mxu0 %v679
  %v1254 = vpop.f32.mrf.mxu0
  %v1255 = vadd.f32 0.0, %v1254
  %v1256 = vpop.f32.mrf.mxu0
  %1257 = vmatprep.mubr.f32.mxu0 0.0
  %1258 = vmatmul.mubr.f32.gmra.mxu0 %v682
  %v1259 = vpop.f32.mrf.mxu0
  %v1260 = vadd.f32 0.0, %v1259
  %v1261 = vpop.f32.mrf.mxu0
  %1262 = vmatprep.mubr.f32.mxu0 0.0
  %1263 = vmatmul.mubr.f32.gmra.mxu0 %v685
  %v1264 = vpop.f32.mrf.mxu0
  %v1265 = vadd.f32 0.0, %v1264
  %v1266 = vpop.f32.mrf.mxu0
  %1267 = vdwg.mxu0
  %s1268 = scalar_lea.vmem %s6, 64
  %v1269 = vld [vmem:[%s1268] sm:$0xf]
  %v1270 = vld [vmem:[%s1268 + $0x4] sm:$0xf]
  %v1271 = vld [vmem:[%s1268 + $0x8] sm:$0xf]
  %v1272 = vld [vmem:[%s1268 + $0xc] sm:$0xf]
  %v1273 = vld [vmem:[%s1268 + $0x10] sm:$0xf]
  %v1274 = vld [vmem:[%s1268 + $0x14] sm:$0xf]
  %v1275 = vld [vmem:[%s1268 + $0x18] sm:$0xf]
  %v1276 = vld [vmem:[%s1268 + $0x1c] sm:$0xf]
  %v1277 = vpack.c.bf16 %v1235, %v1230
  %v1278 = vpack.c.bf16 %v1245, %v1240
  %v1279 = vpack.c.bf16 %v1255, %v1250
  %v1280 = vpack.c.bf16 %v1265, %v1260
  %v1289 = vunpack.c.l.b16 %v1269
  %v1290 = vunpack.c.l.b16 %v1270
  %v1291 = vunpack.c.l.b16 %v1271
  %v1292 = vunpack.c.l.b16 %v1272
  %v1293 = vunpack.c.l.b16 %v1273
  %v1294 = vunpack.c.l.b16 %v1274
  %v1295 = vunpack.c.l.b16 %v1275
  %v1296 = vunpack.c.l.b16 %v1276
  %v1297 = vpack.c.b16 %v1290, %v1289
  %v1298 = vpack.c.b16 %v1292, %v1291
  %v1299 = vpack.c.b16 %v1294, %v1293
  %v1300 = vpack.c.b16 %v1296, %v1295
  %v1302 = vsel %vm965, %v1297, 0
  %v1305 = vsel %vm965, %v1298, 0
  %v1308 = vsel %vm965, %v1299, 0
  %v1311 = vsel %vm965, %v1300, 0
  %1313 = vmatprep.subr.bf16.mxu0 0
  %1314 = vmatpush1.bf16.msra.mxu0 0
  %1315 = vmatprep.subr.bf16.mxu0 0
  %1316 = vmatpush1.bf16.msra.mxu0 0
  %1317 = vmatprep.subr.bf16.mxu0 0
  %1318 = vmatpush1.bf16.msra.mxu0 0
  %1319 = vmatprep.subr.bf16.mxu0 0
  %1320 = vmatpush1.bf16.msra.mxu0 0
  %1321 = vmatprep.subr.bf16.mxu0 0
  %1322 = vmatpush1.bf16.msra.mxu0 %v1280
  %1323 = vmatprep.subr.bf16.mxu0 0
  %1324 = vmatpush1.bf16.msra.mxu0 %v1279
  %1325 = vmatprep.subr.bf16.mxu0 0
  %1326 = vmatpush1.bf16.msra.mxu0 %v1278
  %1327 = vmatprep.subr.bf16.mxu0 0
  %1328 = vmatpush1.bf16.msra.mxu0 %v1277
  %1329 = vmatprep.subr.bf16.mxu0 0
  %1330 = vmatpush2.bf16.msra.mxu0 0
  %1331 = vmatprep.subr.bf16.mxu0 0
  %1332 = vmatpush2.bf16.msra.mxu0 0
  %1333 = vmatprep.subr.bf16.mxu0 0
  %1334 = vmatpush2.bf16.msra.mxu0 0
  %1335 = vmatprep.subr.bf16.mxu0 0
  %1336 = vmatpush2.bf16.msra.mxu0 0
  %1337 = vmatprep.subr.bf16.mxu0 0
  %1338 = vmatpush2.bf16.msra.mxu0 0
  %1339 = vmatprep.subr.bf16.mxu0 0
  %1340 = vmatpush2.bf16.msra.mxu0 0
  %1341 = vmatprep.subr.bf16.mxu0 0
  %1342 = vmatpush2.bf16.msra.mxu0 0
  %1343 = vmatprep.subr.bf16.mxu0 0
  %1344 = vmatpush2.bf16.msra.mxu0 0
  %1345 = vmatprep.mubr.bf16.mxu0 0
  %1346 = vmatmul.mubr.bf16.gmra.mxu0 %v1302
  %v1347 = vpop.f32.mrf.mxu0
  %v1348 = vadd.f32 0.0, %v1347
  %v1349 = vpop.f32.mrf.mxu0
  %v1350 = vpop.f32.mrf.mxu0
  %v1351 = vadd.f32 0.0, %v1350
  %v1352 = vpop.f32.mrf.mxu0
  %1353 = vmatprep.mubr.bf16.mxu0 0
  %1354 = vmatmul.mubr.bf16.gmra.mxu0 %v1305
  %v1355 = vpop.f32.mrf.mxu0
  %v1356 = vadd.f32 0.0, %v1355
  %v1357 = vpop.f32.mrf.mxu0
  %v1358 = vpop.f32.mrf.mxu0
  %v1359 = vadd.f32 0.0, %v1358
  %v1360 = vpop.f32.mrf.mxu0
  %1361 = vmatprep.mubr.bf16.mxu0 0
  %1362 = vmatmul.mubr.bf16.gmra.mxu0 %v1308
  %v1363 = vpop.f32.mrf.mxu0
  %v1364 = vadd.f32 0.0, %v1363
  %v1365 = vpop.f32.mrf.mxu0
  %v1366 = vpop.f32.mrf.mxu0
  %v1367 = vadd.f32 0.0, %v1366
  %v1368 = vpop.f32.mrf.mxu0
  %1369 = vmatprep.mubr.bf16.mxu0 0
  %1370 = vmatmul.mubr.bf16.gmra.mxu0 %v1311
  %v1371 = vpop.f32.mrf.mxu0
  %v1372 = vadd.f32 0.0, %v1371
  %v1373 = vpop.f32.mrf.mxu0
  %v1374 = vpop.f32.mrf.mxu0
  %v1375 = vadd.f32 0.0, %v1374
  %v1376 = vpop.f32.mrf.mxu0
  %1377 = vdwg.mxu0
  %v1378 = vadd.f32 %v1110, %v1348
  %v1379 = vadd.f32 %v1113, %v1351
  %v1380 = vadd.f32 %v1118, %v1356
  %v1381 = vadd.f32 %v1121, %v1359
  %v1382 = vadd.f32 %v1126, %v1364
  %v1383 = vadd.f32 %v1129, %v1367
  %v1384 = vadd.f32 %v1134, %v1372
  %v1385 = vadd.f32 %v1137, %v1375
  %vm1386 = vcmp.ge.s32.totalorder %v631, 0
  %vm1387 = vcmp.lt.s32.totalorder %v631, 4
  %vm1388 = vmand %vm1386, %vm1387
  %vm1389 = vmand %vm1388, %vm640
  %vm1390 = vmand %vm1389, %vm642
  %v1391 = vadd.s32 %v628, 4294967295
  %vm1392 = vcmp.eq.s32.totalorder %v633, %v1391
  %vm1393 = vcmp.eq.s32.totalorder %v634, %v1391
  %vm1394 = vcmp.eq.s32.totalorder %v635, %v1391
  %vm1395 = vcmp.eq.s32.totalorder %v636, %v1391
  %v1396 = vsel %vm1390, 1, 0
  %vm1397 = vcmp.eq.s32.totalorder %v1396, 1
  %vm1398 = vmand %vm1392, %vm1397
  %vm1399 = vmand %vm1393, %vm1397
  %vm1400 = vmand %vm1394, %vm1397
  %vm1401 = vmand %vm1395, %vm1397
  %v1402 = vsel %vm1398, 1, 0
  %v1403 = vsel %vm1399, 1, 0
  %v1404 = vsel %vm1400, 1, 0
  %v1405 = vsel %vm1401, 1, 0
  %v1406 = vcvt.s32.f32 %v1402
  %v1407 = vcvt.s32.f32 %v1403
  %v1408 = vcvt.s32.f32 %v1404
  %v1409 = vcvt.s32.f32 %v1405
  %1410 = vmatprep.subr.mxu0 0.0
  %1411 = vmatpush1.msra.mxu0 0.0
  %1412 = vmatprep.subr.mxu0 0.0
  %1413 = vmatpush1.msra.mxu0 0.0
  %1414 = vmatprep.subr.mxu0 0.0
  %1415 = vmatpush1.msra.mxu0 0.0
  %1416 = vmatprep.subr.mxu0 0.0
  %1417 = vmatpush1.msra.mxu0 0.0
  %1418 = vmatprep.subr.mxu0 0.0
  %1419 = vmatpush1.msra.mxu0 0.0
  %1420 = vmatprep.subr.mxu0 0.0
  %1421 = vmatpush1.msra.mxu0 0.0
  %1422 = vmatprep.subr.mxu0 0.0
  %1423 = vmatpush1.msra.mxu0 0.0
  %1424 = vmatprep.subr.mxu0 0.0
  %1425 = vmatpush1.msra.mxu0 0.0
  %1426 = vmatprep.subr.mxu0 0.0
  %1427 = vmatpush1.msra.mxu0 0.0
  %1428 = vmatprep.subr.mxu0 0.0
  %1429 = vmatpush1.msra.mxu0 0.0
  %1430 = vmatprep.subr.mxu0 0.0
  %1431 = vmatpush1.msra.mxu0 0.0
  %1432 = vmatprep.subr.mxu0 0.0
  %1433 = vmatpush1.msra.mxu0 0.0
  %1434 = vmatprep.subr.mxu0 0.0
  %1435 = vmatpush1.msra.mxu0 %v1409
  %1436 = vmatprep.subr.mxu0 0.0
  %1437 = vmatpush1.msra.mxu0 %v1408
  %1438 = vmatprep.subr.mxu0 0.0
  %1439 = vmatpush1.msra.mxu0 %v1407
  %1440 = vmatprep.subr.mxu0 0.0
  %1441 = vmatpush1.msra.mxu0 %v1406
  %1442 = vmatprep.subr.mxu0 0.0
  %1443 = vmatpush2.msra.mxu0 0.0
  %1444 = vmatprep.subr.mxu0 0.0
  %1445 = vmatpush2.msra.mxu0 0.0
  %1446 = vmatprep.subr.mxu0 0.0
  %1447 = vmatpush2.msra.mxu0 0.0
  %1448 = vmatprep.subr.mxu0 0.0
  %1449 = vmatpush2.msra.mxu0 0.0
  %1450 = vmatprep.subr.mxu0 0.0
  %1451 = vmatpush2.msra.mxu0 0.0
  %1452 = vmatprep.subr.mxu0 0.0
  %1453 = vmatpush2.msra.mxu0 0.0
  %1454 = vmatprep.subr.mxu0 0.0
  %1455 = vmatpush2.msra.mxu0 0.0
  %1456 = vmatprep.subr.mxu0 0.0
  %1457 = vmatpush2.msra.mxu0 0.0
  %1458 = vmatprep.subr.mxu0 0.0
  %1459 = vmatpush2.msra.mxu0 0.0
  %1460 = vmatprep.subr.mxu0 0.0
  %1461 = vmatpush2.msra.mxu0 0.0
  %1462 = vmatprep.subr.mxu0 0.0
  %1463 = vmatpush2.msra.mxu0 0.0
  %1464 = vmatprep.subr.mxu0 0.0
  %1465 = vmatpush2.msra.mxu0 0.0
  %1466 = vmatprep.subr.mxu0 0.0
  %1467 = vmatpush2.msra.mxu0 0.0
  %1468 = vmatprep.subr.mxu0 0.0
  %1469 = vmatpush2.msra.mxu0 0.0
  %1470 = vmatprep.subr.mxu0 0.0
  %1471 = vmatpush2.msra.mxu0 0.0
  %1472 = vmatprep.subr.mxu0 0.0
  %1473 = vmatpush2.msra.mxu0 0.0
  %1474 = vmatprep.mubr.f32.mxu0 0.0
  %1475 = vmatmul.mubr.f32.gmra.mxu0 %v664
  %v1476 = vpop.f32.mrf.mxu0
  %v1477 = vadd.f32 0.0, %v1476
  %v1478 = vpop.f32.mrf.mxu0
  %1479 = vmatprep.mubr.f32.mxu0 0.0
  %1480 = vmatmul.mubr.f32.gmra.mxu0 %v667
  %v1481 = vpop.f32.mrf.mxu0
  %v1482 = vadd.f32 0.0, %v1481
  %v1483 = vpop.f32.mrf.mxu0
  %1484 = vmatprep.mubr.f32.mxu0 0.0
  %1485 = vmatmul.mubr.f32.gmra.mxu0 %v670
  %v1486 = vpop.f32.mrf.mxu0
  %v1487 = vadd.f32 0.0, %v1486
  %v1488 = vpop.f32.mrf.mxu0
  %1489 = vmatprep.mubr.f32.mxu0 0.0
  %1490 = vmatmul.mubr.f32.gmra.mxu0 %v673
  %v1491 = vpop.f32.mrf.mxu0
  %v1492 = vadd.f32 0.0, %v1491
  %v1493 = vpop.f32.mrf.mxu0
  %1494 = vmatprep.mubr.f32.mxu0 0.0
  %1495 = vmatmul.mubr.f32.gmra.mxu0 %v676
  %v1496 = vpop.f32.mrf.mxu0
  %v1497 = vadd.f32 0.0, %v1496
  %v1498 = vpop.f32.mrf.mxu0
  %1499 = vmatprep.mubr.f32.mxu0 0.0
  %1500 = vmatmul.mubr.f32.gmra.mxu0 %v679
  %v1501 = vpop.f32.mrf.mxu0
  %v1502 = vadd.f32 0.0, %v1501
  %v1503 = vpop.f32.mrf.mxu0
  %1504 = vmatprep.mubr.f32.mxu0 0.0
  %1505 = vmatmul.mubr.f32.gmra.mxu0 %v682
  %v1506 = vpop.f32.mrf.mxu0
  %v1507 = vadd.f32 0.0, %v1506
  %v1508 = vpop.f32.mrf.mxu0
  %1509 = vmatprep.mubr.f32.mxu0 0.0
  %1510 = vmatmul.mubr.f32.gmra.mxu0 %v685
  %v1511 = vpop.f32.mrf.mxu0
  %v1512 = vadd.f32 0.0, %v1511
  %v1513 = vpop.f32.mrf.mxu0
  %1514 = vdwg.mxu0
  %s1515 = scalar_lea.vmem %s6, 96
  %v1516 = vld [vmem:[%s1515] sm:$0xf]
  %v1517 = vld [vmem:[%s1515 + $0x4] sm:$0xf]
  %v1518 = vld [vmem:[%s1515 + $0x8] sm:$0xf]
  %v1519 = vld [vmem:[%s1515 + $0xc] sm:$0xf]
  %v1520 = vld [vmem:[%s1515 + $0x10] sm:$0xf]
  %v1521 = vld [vmem:[%s1515 + $0x14] sm:$0xf]
  %v1522 = vld [vmem:[%s1515 + $0x18] sm:$0xf]
  %v1523 = vld [vmem:[%s1515 + $0x1c] sm:$0xf]
  %v1524 = vpack.c.bf16 %v1482, %v1477
  %v1525 = vpack.c.bf16 %v1492, %v1487
  %v1526 = vpack.c.bf16 %v1502, %v1497
  %v1527 = vpack.c.bf16 %v1512, %v1507
  %v1536 = vunpack.c.l.b16 %v1516
  %v1537 = vunpack.c.l.b16 %v1517
  %v1538 = vunpack.c.l.b16 %v1518
  %v1539 = vunpack.c.l.b16 %v1519
  %v1540 = vunpack.c.l.b16 %v1520
  %v1541 = vunpack.c.l.b16 %v1521
  %v1542 = vunpack.c.l.b16 %v1522
  %v1543 = vunpack.c.l.b16 %v1523
  %v1544 = vpack.c.b16 %v1537, %v1536
  %v1545 = vpack.c.b16 %v1539, %v1538
  %v1546 = vpack.c.b16 %v1541, %v1540
  %v1547 = vpack.c.b16 %v1543, %v1542
  %v1549 = vsel %vm965, %v1544, 0
  %v1552 = vsel %vm965, %v1545, 0
  %v1555 = vsel %vm965, %v1546, 0
  %v1558 = vsel %vm965, %v1547, 0
  %1560 = vmatprep.subr.bf16.mxu0 0
  %1561 = vmatpush1.bf16.msra.mxu0 0
  %1562 = vmatprep.subr.bf16.mxu0 0
  %1563 = vmatpush1.bf16.msra.mxu0 0
  %1564 = vmatprep.subr.bf16.mxu0 0
  %1565 = vmatpush1.bf16.msra.mxu0 0
  %1566 = vmatprep.subr.bf16.mxu0 0
  %1567 = vmatpush1.bf16.msra.mxu0 0
  %1568 = vmatprep.subr.bf16.mxu0 0
  %1569 = vmatpush1.bf16.msra.mxu0 %v1527
  %1570 = vmatprep.subr.bf16.mxu0 0
  %1571 = vmatpush1.bf16.msra.mxu0 %v1526
  %1572 = vmatprep.subr.bf16.mxu0 0
  %1573 = vmatpush1.bf16.msra.mxu0 %v1525
  %1574 = vmatprep.subr.bf16.mxu0 0
  %1575 = vmatpush1.bf16.msra.mxu0 %v1524
  %1576 = vmatprep.subr.bf16.mxu0 0
  %1577 = vmatpush2.bf16.msra.mxu0 0
  %1578 = vmatprep.subr.bf16.mxu0 0
  %1579 = vmatpush2.bf16.msra.mxu0 0
  %1580 = vmatprep.subr.bf16.mxu0 0
  %1581 = vmatpush2.bf16.msra.mxu0 0
  %1582 = vmatprep.subr.bf16.mxu0 0
  %1583 = vmatpush2.bf16.msra.mxu0 0
  %1584 = vmatprep.subr.bf16.mxu0 0
  %1585 = vmatpush2.bf16.msra.mxu0 0
  %1586 = vmatprep.subr.bf16.mxu0 0
  %1587 = vmatpush2.bf16.msra.mxu0 0
  %1588 = vmatprep.subr.bf16.mxu0 0
  %1589 = vmatpush2.bf16.msra.mxu0 0
  %1590 = vmatprep.subr.bf16.mxu0 0
  %1591 = vmatpush2.bf16.msra.mxu0 0
  %1592 = vmatprep.mubr.bf16.mxu0 0
  %1593 = vmatmul.mubr.bf16.gmra.mxu0 %v1549
  %v1594 = vpop.f32.mrf.mxu0
  %v1595 = vadd.f32 0.0, %v1594
  %v1596 = vpop.f32.mrf.mxu0
  %v1597 = vpop.f32.mrf.mxu0
  %v1598 = vadd.f32 0.0, %v1597
  %v1599 = vpop.f32.mrf.mxu0
  %1600 = vmatprep.mubr.bf16.mxu0 0
  %1601 = vmatmul.mubr.bf16.gmra.mxu0 %v1552
  %v1602 = vpop.f32.mrf.mxu0
  %v1603 = vadd.f32 0.0, %v1602
  %v1604 = vpop.f32.mrf.mxu0
  %v1605 = vpop.f32.mrf.mxu0
  %v1606 = vadd.f32 0.0, %v1605
  %v1607 = vpop.f32.mrf.mxu0
  %1608 = vmatprep.mubr.bf16.mxu0 0
  %1609 = vmatmul.mubr.bf16.gmra.mxu0 %v1555
  %v1610 = vpop.f32.mrf.mxu0
  %v1611 = vadd.f32 0.0, %v1610
  %v1612 = vpop.f32.mrf.mxu0
  %v1613 = vpop.f32.mrf.mxu0
  %v1614 = vadd.f32 0.0, %v1613
  %v1615 = vpop.f32.mrf.mxu0
  %1616 = vmatprep.mubr.bf16.mxu0 0
  %1617 = vmatmul.mubr.bf16.gmra.mxu0 %v1558
  %v1618 = vpop.f32.mrf.mxu0
  %v1619 = vadd.f32 0.0, %v1618
  %v1620 = vpop.f32.mrf.mxu0
  %v1621 = vpop.f32.mrf.mxu0
  %v1622 = vadd.f32 0.0, %v1621
  %v1623 = vpop.f32.mrf.mxu0
  %1624 = vdwg.mxu0
  %v1625 = vadd.f32 %v1378, %v1595
  %v1626 = vadd.f32 %v1379, %v1598
  %v1627 = vadd.f32 %v1380, %v1603
  %v1628 = vadd.f32 %v1381, %v1606
  %v1629 = vadd.f32 %v1382, %v1611
  %v1630 = vadd.f32 %v1383, %v1614
  %v1631 = vadd.f32 %v1384, %v1619
  %v1632 = vadd.f32 %v1385, %v1622
  %s1633 = scalar_lea.vmem %s6, 128
  %v1634 = vld [vmem:[%s1633] sm:$0xf]
  %v1635 = vld [vmem:[%s1633 + $0x4] sm:$0xf]
  %v1636 = vld [vmem:[%s1633 + $0x8] sm:$0xf]
  %v1637 = vld [vmem:[%s1633 + $0xc] sm:$0xf]
  %v1638 = vld [vmem:[%s1633 + $0x10] sm:$0xf]
  %v1639 = vld [vmem:[%s1633 + $0x14] sm:$0xf]
  %v1640 = vld [vmem:[%s1633 + $0x18] sm:$0xf]
  %v1641 = vld [vmem:[%s1633 + $0x1c] sm:$0xf]
  %v1642 = vpack.c.bf16 %v620, %v619
  %v1643 = vpack.c.bf16 %v622, %v621
  %v1644 = vpack.c.bf16 %v624, %v623
  %v1645 = vpack.c.bf16 %v626, %v625
  %v1654 = vunpack.c.l.b16 %v1634
  %v1655 = vunpack.c.l.b16 %v1635
  %v1656 = vunpack.c.l.b16 %v1636
  %v1657 = vunpack.c.l.b16 %v1637
  %v1658 = vunpack.c.l.b16 %v1638
  %v1659 = vunpack.c.l.b16 %v1639
  %v1660 = vunpack.c.l.b16 %v1640
  %v1661 = vunpack.c.l.b16 %v1641
  %v1662 = vpack.c.b16 %v1655, %v1654
  %v1663 = vpack.c.b16 %v1657, %v1656
  %v1664 = vpack.c.b16 %v1659, %v1658
  %v1665 = vpack.c.b16 %v1661, %v1660
  %v1667 = vsel %vm965, %v1662, 0
  %v1670 = vsel %vm965, %v1663, 0
  %v1673 = vsel %vm965, %v1664, 0
  %v1676 = vsel %vm965, %v1665, 0
  %1678 = vmatprep.subr.bf16.mxu0 0
  %1679 = vmatpush1.bf16.msra.mxu0 0
  %1680 = vmatprep.subr.bf16.mxu0 0
  %1681 = vmatpush1.bf16.msra.mxu0 0
  %1682 = vmatprep.subr.bf16.mxu0 0
  %1683 = vmatpush1.bf16.msra.mxu0 0
  %1684 = vmatprep.subr.bf16.mxu0 0
  %1685 = vmatpush1.bf16.msra.mxu0 0
  %1686 = vmatprep.subr.bf16.mxu0 0
  %1687 = vmatpush1.bf16.msra.mxu0 %v1645
  %1688 = vmatprep.subr.bf16.mxu0 0
  %1689 = vmatpush1.bf16.msra.mxu0 %v1644
  %1690 = vmatprep.subr.bf16.mxu0 0
  %1691 = vmatpush1.bf16.msra.mxu0 %v1643
  %1692 = vmatprep.subr.bf16.mxu0 0
  %1693 = vmatpush1.bf16.msra.mxu0 %v1642
  %1694 = vmatprep.subr.bf16.mxu0 0
  %1695 = vmatpush2.bf16.msra.mxu0 0
  %1696 = vmatprep.subr.bf16.mxu0 0
  %1697 = vmatpush2.bf16.msra.mxu0 0
  %1698 = vmatprep.subr.bf16.mxu0 0
  %1699 = vmatpush2.bf16.msra.mxu0 0
  %1700 = vmatprep.subr.bf16.mxu0 0
  %1701 = vmatpush2.bf16.msra.mxu0 0
  %1702 = vmatprep.subr.bf16.mxu0 0
  %1703 = vmatpush2.bf16.msra.mxu0 0
  %1704 = vmatprep.subr.bf16.mxu0 0
  %1705 = vmatpush2.bf16.msra.mxu0 0
  %1706 = vmatprep.subr.bf16.mxu0 0
  %1707 = vmatpush2.bf16.msra.mxu0 0
  %1708 = vmatprep.subr.bf16.mxu0 0
  %1709 = vmatpush2.bf16.msra.mxu0 0
  %1710 = vmatprep.mubr.bf16.mxu0 0
  %1711 = vmatmul.mubr.bf16.gmra.mxu0 %v1667
  %v1712 = vpop.f32.mrf.mxu0
  %v1713 = vadd.f32 0.0, %v1712
  %v1714 = vpop.f32.mrf.mxu0
  %v1715 = vpop.f32.mrf.mxu0
  %v1716 = vadd.f32 0.0, %v1715
  %v1717 = vpop.f32.mrf.mxu0
  %1718 = vmatprep.mubr.bf16.mxu0 0
  %1719 = vmatmul.mubr.bf16.gmra.mxu0 %v1670
  %v1720 = vpop.f32.mrf.mxu0
  %v1721 = vadd.f32 0.0, %v1720
  %v1722 = vpop.f32.mrf.mxu0
  %v1723 = vpop.f32.mrf.mxu0
  %v1724 = vadd.f32 0.0, %v1723
  %v1725 = vpop.f32.mrf.mxu0
  %1726 = vmatprep.mubr.bf16.mxu0 0
  %1727 = vmatmul.mubr.bf16.gmra.mxu0 %v1673
  %v1728 = vpop.f32.mrf.mxu0
  %v1729 = vadd.f32 0.0, %v1728
  %v1730 = vpop.f32.mrf.mxu0
  %v1731 = vpop.f32.mrf.mxu0
  %v1732 = vadd.f32 0.0, %v1731
  %v1733 = vpop.f32.mrf.mxu0
  %1734 = vmatprep.mubr.bf16.mxu0 0
  %1735 = vmatmul.mubr.bf16.gmra.mxu0 %v1676
  %v1736 = vpop.f32.mrf.mxu0
  %v1737 = vadd.f32 0.0, %v1736
  %v1738 = vpop.f32.mrf.mxu0
  %v1739 = vpop.f32.mrf.mxu0
  %v1740 = vadd.f32 0.0, %v1739
  %v1741 = vpop.f32.mrf.mxu0
  %1742 = vdwg.mxu0
  %v1743 = vadd.f32 %v1625, %v1713
  %v1744 = vadd.f32 %v1626, %v1716
  %v1745 = vadd.f32 %v1627, %v1721
  %v1746 = vadd.f32 %v1628, %v1724
  %v1747 = vadd.f32 %v1629, %v1729
  %v1748 = vadd.f32 %v1630, %v1732
  %v1749 = vadd.f32 %v1631, %v1737
  %v1750 = vadd.f32 %v1632, %v1740
  %vm1751 = vmand %vm1388, %vm1140
  %vm1752 = vmand %vm1751, %vm1142
  %v1753 = vadd.s32 %v628, 1
  %vm1754 = vcmp.eq.s32.totalorder %v633, %v1753
  %vm1755 = vcmp.eq.s32.totalorder %v634, %v1753
  %vm1756 = vcmp.eq.s32.totalorder %v635, %v1753
  %vm1757 = vcmp.eq.s32.totalorder %v636, %v1753
  %v1758 = vsel %vm1752, 1, 0
  %vm1759 = vcmp.eq.s32.totalorder %v1758, 1
  %vm1760 = vmand %vm1754, %vm1759
  %vm1761 = vmand %vm1755, %vm1759
  %vm1762 = vmand %vm1756, %vm1759
  %vm1763 = vmand %vm1757, %vm1759
  %v1764 = vsel %vm1760, 1, 0
  %v1765 = vsel %vm1761, 1, 0
  %v1766 = vsel %vm1762, 1, 0
  %v1767 = vsel %vm1763, 1, 0
  %v1768 = vcvt.s32.f32 %v1764
  %v1769 = vcvt.s32.f32 %v1765
  %v1770 = vcvt.s32.f32 %v1766
  %v1771 = vcvt.s32.f32 %v1767
  %1772 = vmatprep.subr.mxu0 0.0
  %1773 = vmatpush1.msra.mxu0 0.0
  %1774 = vmatprep.subr.mxu0 0.0
  %1775 = vmatpush1.msra.mxu0 0.0
  %1776 = vmatprep.subr.mxu0 0.0
  %1777 = vmatpush1.msra.mxu0 0.0
  %1778 = vmatprep.subr.mxu0 0.0
  %1779 = vmatpush1.msra.mxu0 0.0
  %1780 = vmatprep.subr.mxu0 0.0
  %1781 = vmatpush1.msra.mxu0 0.0
  %1782 = vmatprep.subr.mxu0 0.0
  %1783 = vmatpush1.msra.mxu0 0.0
  %1784 = vmatprep.subr.mxu0 0.0
  %1785 = vmatpush1.msra.mxu0 0.0
  %1786 = vmatprep.subr.mxu0 0.0
  %1787 = vmatpush1.msra.mxu0 0.0
  %1788 = vmatprep.subr.mxu0 0.0
  %1789 = vmatpush1.msra.mxu0 0.0
  %1790 = vmatprep.subr.mxu0 0.0
  %1791 = vmatpush1.msra.mxu0 0.0
  %1792 = vmatprep.subr.mxu0 0.0
  %1793 = vmatpush1.msra.mxu0 0.0
  %1794 = vmatprep.subr.mxu0 0.0
  %1795 = vmatpush1.msra.mxu0 0.0
  %1796 = vmatprep.subr.mxu0 0.0
  %1797 = vmatpush1.msra.mxu0 %v1771
  %1798 = vmatprep.subr.mxu0 0.0
  %1799 = vmatpush1.msra.mxu0 %v1770
  %1800 = vmatprep.subr.mxu0 0.0
  %1801 = vmatpush1.msra.mxu0 %v1769
  %1802 = vmatprep.subr.mxu0 0.0
  %1803 = vmatpush1.msra.mxu0 %v1768
  %1804 = vmatprep.subr.mxu0 0.0
  %1805 = vmatpush2.msra.mxu0 0.0
  %1806 = vmatprep.subr.mxu0 0.0
  %1807 = vmatpush2.msra.mxu0 0.0
  %1808 = vmatprep.subr.mxu0 0.0
  %1809 = vmatpush2.msra.mxu0 0.0
  %1810 = vmatprep.subr.mxu0 0.0
  %1811 = vmatpush2.msra.mxu0 0.0
  %1812 = vmatprep.subr.mxu0 0.0
  %1813 = vmatpush2.msra.mxu0 0.0
  %1814 = vmatprep.subr.mxu0 0.0
  %1815 = vmatpush2.msra.mxu0 0.0
  %1816 = vmatprep.subr.mxu0 0.0
  %1817 = vmatpush2.msra.mxu0 0.0
  %1818 = vmatprep.subr.mxu0 0.0
  %1819 = vmatpush2.msra.mxu0 0.0
  %1820 = vmatprep.subr.mxu0 0.0
  %1821 = vmatpush2.msra.mxu0 0.0
  %1822 = vmatprep.subr.mxu0 0.0
  %1823 = vmatpush2.msra.mxu0 0.0
  %1824 = vmatprep.subr.mxu0 0.0
  %1825 = vmatpush2.msra.mxu0 0.0
  %1826 = vmatprep.subr.mxu0 0.0
  %1827 = vmatpush2.msra.mxu0 0.0
  %1828 = vmatprep.subr.mxu0 0.0
  %1829 = vmatpush2.msra.mxu0 0.0
  %1830 = vmatprep.subr.mxu0 0.0
  %1831 = vmatpush2.msra.mxu0 0.0
  %1832 = vmatprep.subr.mxu0 0.0
  %1833 = vmatpush2.msra.mxu0 0.0
  %1834 = vmatprep.subr.mxu0 0.0
  %1835 = vmatpush2.msra.mxu0 0.0
  %1836 = vmatprep.mubr.f32.mxu0 0.0
  %1837 = vmatmul.mubr.f32.gmra.mxu0 %v664
  %v1838 = vpop.f32.mrf.mxu0
  %v1839 = vadd.f32 0.0, %v1838
  %v1840 = vpop.f32.mrf.mxu0
  %1841 = vmatprep.mubr.f32.mxu0 0.0
  %1842 = vmatmul.mubr.f32.gmra.mxu0 %v667
  %v1843 = vpop.f32.mrf.mxu0
  %v1844 = vadd.f32 0.0, %v1843
  %v1845 = vpop.f32.mrf.mxu0
  %1846 = vmatprep.mubr.f32.mxu0 0.0
  %1847 = vmatmul.mubr.f32.gmra.mxu0 %v670
  %v1848 = vpop.f32.mrf.mxu0
  %v1849 = vadd.f32 0.0, %v1848
  %v1850 = vpop.f32.mrf.mxu0
  %1851 = vmatprep.mubr.f32.mxu0 0.0
  %1852 = vmatmul.mubr.f32.gmra.mxu0 %v673
  %v1853 = vpop.f32.mrf.mxu0
  %v1854 = vadd.f32 0.0, %v1853
  %v1855 = vpop.f32.mrf.mxu0
  %1856 = vmatprep.mubr.f32.mxu0 0.0
  %1857 = vmatmul.mubr.f32.gmra.mxu0 %v676
  %v1858 = vpop.f32.mrf.mxu0
  %v1859 = vadd.f32 0.0, %v1858
  %v1860 = vpop.f32.mrf.mxu0
  %1861 = vmatprep.mubr.f32.mxu0 0.0
  %1862 = vmatmul.mubr.f32.gmra.mxu0 %v679
  %v1863 = vpop.f32.mrf.mxu0
  %v1864 = vadd.f32 0.0, %v1863
  %v1865 = vpop.f32.mrf.mxu0
  %1866 = vmatprep.mubr.f32.mxu0 0.0
  %1867 = vmatmul.mubr.f32.gmra.mxu0 %v682
  %v1868 = vpop.f32.mrf.mxu0
  %v1869 = vadd.f32 0.0, %v1868
  %v1870 = vpop.f32.mrf.mxu0
  %1871 = vmatprep.mubr.f32.mxu0 0.0
  %1872 = vmatmul.mubr.f32.gmra.mxu0 %v685
  %v1873 = vpop.f32.mrf.mxu0
  %v1874 = vadd.f32 0.0, %v1873
  %v1875 = vpop.f32.mrf.mxu0
  %1876 = vdwg.mxu0
  %s1877 = scalar_lea.vmem %s6, 160
  %v1878 = vld [vmem:[%s1877] sm:$0xf]
  %v1879 = vld [vmem:[%s1877 + $0x4] sm:$0xf]
  %v1880 = vld [vmem:[%s1877 + $0x8] sm:$0xf]
  %v1881 = vld [vmem:[%s1877 + $0xc] sm:$0xf]
  %v1882 = vld [vmem:[%s1877 + $0x10] sm:$0xf]
  %v1883 = vld [vmem:[%s1877 + $0x14] sm:$0xf]
  %v1884 = vld [vmem:[%s1877 + $0x18] sm:$0xf]
  %v1885 = vld [vmem:[%s1877 + $0x1c] sm:$0xf]
  %v1886 = vpack.c.bf16 %v1844, %v1839
  %v1887 = vpack.c.bf16 %v1854, %v1849
  %v1888 = vpack.c.bf16 %v1864, %v1859
  %v1889 = vpack.c.bf16 %v1874, %v1869
  %v1898 = vunpack.c.l.b16 %v1878
  %v1899 = vunpack.c.l.b16 %v1879
  %v1900 = vunpack.c.l.b16 %v1880
  %v1901 = vunpack.c.l.b16 %v1881
  %v1902 = vunpack.c.l.b16 %v1882
  %v1903 = vunpack.c.l.b16 %v1883
  %v1904 = vunpack.c.l.b16 %v1884
  %v1905 = vunpack.c.l.b16 %v1885
  %v1906 = vpack.c.b16 %v1899, %v1898
  %v1907 = vpack.c.b16 %v1901, %v1900
  %v1908 = vpack.c.b16 %v1903, %v1902
  %v1909 = vpack.c.b16 %v1905, %v1904
  %v1911 = vsel %vm965, %v1906, 0
  %v1914 = vsel %vm965, %v1907, 0
  %v1917 = vsel %vm965, %v1908, 0
  %v1920 = vsel %vm965, %v1909, 0
  %1922 = vmatprep.subr.bf16.mxu0 0
  %1923 = vmatpush1.bf16.msra.mxu0 0
  %1924 = vmatprep.subr.bf16.mxu0 0
  %1925 = vmatpush1.bf16.msra.mxu0 0
  %1926 = vmatprep.subr.bf16.mxu0 0
  %1927 = vmatpush1.bf16.msra.mxu0 0
  %1928 = vmatprep.subr.bf16.mxu0 0
  %1929 = vmatpush1.bf16.msra.mxu0 0
  %1930 = vmatprep.subr.bf16.mxu0 0
  %1931 = vmatpush1.bf16.msra.mxu0 %v1889
  %1932 = vmatprep.subr.bf16.mxu0 0
  %1933 = vmatpush1.bf16.msra.mxu0 %v1888
  %1934 = vmatprep.subr.bf16.mxu0 0
  %1935 = vmatpush1.bf16.msra.mxu0 %v1887
  %1936 = vmatprep.subr.bf16.mxu0 0
  %1937 = vmatpush1.bf16.msra.mxu0 %v1886
  %1938 = vmatprep.subr.bf16.mxu0 0
  %1939 = vmatpush2.bf16.msra.mxu0 0
  %1940 = vmatprep.subr.bf16.mxu0 0
  %1941 = vmatpush2.bf16.msra.mxu0 0
  %1942 = vmatprep.subr.bf16.mxu0 0
  %1943 = vmatpush2.bf16.msra.mxu0 0
  %1944 = vmatprep.subr.bf16.mxu0 0
  %1945 = vmatpush2.bf16.msra.mxu0 0
  %1946 = vmatprep.subr.bf16.mxu0 0
  %1947 = vmatpush2.bf16.msra.mxu0 0
  %1948 = vmatprep.subr.bf16.mxu0 0
  %1949 = vmatpush2.bf16.msra.mxu0 0
  %1950 = vmatprep.subr.bf16.mxu0 0
  %1951 = vmatpush2.bf16.msra.mxu0 0
  %1952 = vmatprep.subr.bf16.mxu0 0
  %1953 = vmatpush2.bf16.msra.mxu0 0
  %1954 = vmatprep.mubr.bf16.mxu0 0
  %1955 = vmatmul.mubr.bf16.gmra.mxu0 %v1911
  %v1956 = vpop.f32.mrf.mxu0
  %v1957 = vadd.f32 0.0, %v1956
  %v1958 = vpop.f32.mrf.mxu0
  %v1959 = vpop.f32.mrf.mxu0
  %v1960 = vadd.f32 0.0, %v1959
  %v1961 = vpop.f32.mrf.mxu0
  %1962 = vmatprep.mubr.bf16.mxu0 0
  %1963 = vmatmul.mubr.bf16.gmra.mxu0 %v1914
  %v1964 = vpop.f32.mrf.mxu0
  %v1965 = vadd.f32 0.0, %v1964
  %v1966 = vpop.f32.mrf.mxu0
  %v1967 = vpop.f32.mrf.mxu0
  %v1968 = vadd.f32 0.0, %v1967
  %v1969 = vpop.f32.mrf.mxu0
  %1970 = vmatprep.mubr.bf16.mxu0 0
  %1971 = vmatmul.mubr.bf16.gmra.mxu0 %v1917
  %v1972 = vpop.f32.mrf.mxu0
  %v1973 = vadd.f32 0.0, %v1972
  %v1974 = vpop.f32.mrf.mxu0
  %v1975 = vpop.f32.mrf.mxu0
  %v1976 = vadd.f32 0.0, %v1975
  %v1977 = vpop.f32.mrf.mxu0
  %1978 = vmatprep.mubr.bf16.mxu0 0
  %1979 = vmatmul.mubr.bf16.gmra.mxu0 %v1920
  %v1980 = vpop.f32.mrf.mxu0
  %v1981 = vadd.f32 0.0, %v1980
  %v1982 = vpop.f32.mrf.mxu0
  %v1983 = vpop.f32.mrf.mxu0
  %v1984 = vadd.f32 0.0, %v1983
  %v1985 = vpop.f32.mrf.mxu0
  %1986 = vdwg.mxu0
  %v1987 = vadd.f32 %v1743, %v1957
  %v1988 = vadd.f32 %v1744, %v1960
  %v1989 = vadd.f32 %v1745, %v1965
  %v1990 = vadd.f32 %v1746, %v1968
  %v1991 = vadd.f32 %v1747, %v1973
  %v1992 = vadd.f32 %v1748, %v1976
  %v1993 = vadd.f32 %v1749, %v1981
  %v1994 = vadd.f32 %v1750, %v1984
  %vm1995 = vcmp.ge.s32.totalorder %v631, 4294967295
  %vm1996 = vcmp.lt.s32.totalorder %v631, 3
  %vm1997 = vmand %vm1995, %vm1996
  %vm1998 = vmand %vm1997, %vm640
  %vm1999 = vmand %vm1998, %vm642
  %v2000 = vadd.s32 %v628, 3
  %vm2001 = vcmp.eq.s32.totalorder %v633, %v2000
  %vm2002 = vcmp.eq.s32.totalorder %v634, %v2000
  %vm2003 = vcmp.eq.s32.totalorder %v635, %v2000
  %vm2004 = vcmp.eq.s32.totalorder %v636, %v2000
  %v2005 = vsel %vm1999, 1, 0
  %vm2006 = vcmp.eq.s32.totalorder %v2005, 1
  %vm2007 = vmand %vm2001, %vm2006
  %vm2008 = vmand %vm2002, %vm2006
  %vm2009 = vmand %vm2003, %vm2006
  %vm2010 = vmand %vm2004, %vm2006
  %v2011 = vsel %vm2007, 1, 0
  %v2012 = vsel %vm2008, 1, 0
  %v2013 = vsel %vm2009, 1, 0
  %v2014 = vsel %vm2010, 1, 0
  %v2015 = vcvt.s32.f32 %v2011
  %v2016 = vcvt.s32.f32 %v2012
  %v2017 = vcvt.s32.f32 %v2013
  %v2018 = vcvt.s32.f32 %v2014
  %2019 = vmatprep.subr.mxu0 0.0
  %2020 = vmatpush1.msra.mxu0 0.0
  %2021 = vmatprep.subr.mxu0 0.0
  %2022 = vmatpush1.msra.mxu0 0.0
  %2023 = vmatprep.subr.mxu0 0.0
  %2024 = vmatpush1.msra.mxu0 0.0
  %2025 = vmatprep.subr.mxu0 0.0
  %2026 = vmatpush1.msra.mxu0 0.0
  %2027 = vmatprep.subr.mxu0 0.0
  %2028 = vmatpush1.msra.mxu0 0.0
  %2029 = vmatprep.subr.mxu0 0.0
  %2030 = vmatpush1.msra.mxu0 0.0
  %2031 = vmatprep.subr.mxu0 0.0
  %2032 = vmatpush1.msra.mxu0 0.0
  %2033 = vmatprep.subr.mxu0 0.0
  %2034 = vmatpush1.msra.mxu0 0.0
  %2035 = vmatprep.subr.mxu0 0.0
  %2036 = vmatpush1.msra.mxu0 0.0
  %2037 = vmatprep.subr.mxu0 0.0
  %2038 = vmatpush1.msra.mxu0 0.0
  %2039 = vmatprep.subr.mxu0 0.0
  %2040 = vmatpush1.msra.mxu0 0.0
  %2041 = vmatprep.subr.mxu0 0.0
  %2042 = vmatpush1.msra.mxu0 0.0
  %2043 = vmatprep.subr.mxu0 0.0
  %2044 = vmatpush1.msra.mxu0 %v2018
  %2045 = vmatprep.subr.mxu0 0.0
  %2046 = vmatpush1.msra.mxu0 %v2017
  %2047 = vmatprep.subr.mxu0 0.0
  %2048 = vmatpush1.msra.mxu0 %v2016
  %2049 = vmatprep.subr.mxu0 0.0
  %2050 = vmatpush1.msra.mxu0 %v2015
  %2051 = vmatprep.subr.mxu0 0.0
  %2052 = vmatpush2.msra.mxu0 0.0
  %2053 = vmatprep.subr.mxu0 0.0
  %2054 = vmatpush2.msra.mxu0 0.0
  %2055 = vmatprep.subr.mxu0 0.0
  %2056 = vmatpush2.msra.mxu0 0.0
  %2057 = vmatprep.subr.mxu0 0.0
  %2058 = vmatpush2.msra.mxu0 0.0
  %2059 = vmatprep.subr.mxu0 0.0
  %2060 = vmatpush2.msra.mxu0 0.0
  %2061 = vmatprep.subr.mxu0 0.0
  %2062 = vmatpush2.msra.mxu0 0.0
  %2063 = vmatprep.subr.mxu0 0.0
  %2064 = vmatpush2.msra.mxu0 0.0
  %2065 = vmatprep.subr.mxu0 0.0
  %2066 = vmatpush2.msra.mxu0 0.0
  %2067 = vmatprep.subr.mxu0 0.0
  %2068 = vmatpush2.msra.mxu0 0.0
  %2069 = vmatprep.subr.mxu0 0.0
  %2070 = vmatpush2.msra.mxu0 0.0
  %2071 = vmatprep.subr.mxu0 0.0
  %2072 = vmatpush2.msra.mxu0 0.0
  %2073 = vmatprep.subr.mxu0 0.0
  %2074 = vmatpush2.msra.mxu0 0.0
  %2075 = vmatprep.subr.mxu0 0.0
  %2076 = vmatpush2.msra.mxu0 0.0
  %2077 = vmatprep.subr.mxu0 0.0
  %2078 = vmatpush2.msra.mxu0 0.0
  %2079 = vmatprep.subr.mxu0 0.0
  %2080 = vmatpush2.msra.mxu0 0.0
  %2081 = vmatprep.subr.mxu0 0.0
  %2082 = vmatpush2.msra.mxu0 0.0
  %2083 = vmatprep.mubr.f32.mxu0 0.0
  %2084 = vmatmul.mubr.f32.gmra.mxu0 %v664
  %v2085 = vpop.f32.mrf.mxu0
  %v2086 = vadd.f32 0.0, %v2085
  %v2087 = vpop.f32.mrf.mxu0
  %2088 = vmatprep.mubr.f32.mxu0 0.0
  %2089 = vmatmul.mubr.f32.gmra.mxu0 %v667
  %v2090 = vpop.f32.mrf.mxu0
  %v2091 = vadd.f32 0.0, %v2090
  %v2092 = vpop.f32.mrf.mxu0
  %2093 = vmatprep.mubr.f32.mxu0 0.0
  %2094 = vmatmul.mubr.f32.gmra.mxu0 %v670
  %v2095 = vpop.f32.mrf.mxu0
  %v2096 = vadd.f32 0.0, %v2095
  %v2097 = vpop.f32.mrf.mxu0
  %2098 = vmatprep.mubr.f32.mxu0 0.0
  %2099 = vmatmul.mubr.f32.gmra.mxu0 %v673
  %v2100 = vpop.f32.mrf.mxu0
  %v2101 = vadd.f32 0.0, %v2100
  %v2102 = vpop.f32.mrf.mxu0
  %2103 = vmatprep.mubr.f32.mxu0 0.0
  %2104 = vmatmul.mubr.f32.gmra.mxu0 %v676
  %v2105 = vpop.f32.mrf.mxu0
  %v2106 = vadd.f32 0.0, %v2105
  %v2107 = vpop.f32.mrf.mxu0
  %2108 = vmatprep.mubr.f32.mxu0 0.0
  %2109 = vmatmul.mubr.f32.gmra.mxu0 %v679
  %v2110 = vpop.f32.mrf.mxu0
  %v2111 = vadd.f32 0.0, %v2110
  %v2112 = vpop.f32.mrf.mxu0
  %2113 = vmatprep.mubr.f32.mxu0 0.0
  %2114 = vmatmul.mubr.f32.gmra.mxu0 %v682
  %v2115 = vpop.f32.mrf.mxu0
  %v2116 = vadd.f32 0.0, %v2115
  %v2117 = vpop.f32.mrf.mxu0
  %2118 = vmatprep.mubr.f32.mxu0 0.0
  %2119 = vmatmul.mubr.f32.gmra.mxu0 %v685
  %v2120 = vpop.f32.mrf.mxu0
  %v2121 = vadd.f32 0.0, %v2120
  %v2122 = vpop.f32.mrf.mxu0
  %2123 = vdwg.mxu0
  %s2124 = scalar_lea.vmem %s6, 192
  %v2125 = vld [vmem:[%s2124] sm:$0xf]
  %v2126 = vld [vmem:[%s2124 + $0x4] sm:$0xf]
  %v2127 = vld [vmem:[%s2124 + $0x8] sm:$0xf]
  %v2128 = vld [vmem:[%s2124 + $0xc] sm:$0xf]
  %v2129 = vld [vmem:[%s2124 + $0x10] sm:$0xf]
  %v2130 = vld [vmem:[%s2124 + $0x14] sm:$0xf]
  %v2131 = vld [vmem:[%s2124 + $0x18] sm:$0xf]
  %v2132 = vld [vmem:[%s2124 + $0x1c] sm:$0xf]
  %v2133 = vpack.c.bf16 %v2091, %v2086
  %v2134 = vpack.c.bf16 %v2101, %v2096
  %v2135 = vpack.c.bf16 %v2111, %v2106
  %v2136 = vpack.c.bf16 %v2121, %v2116
  %v2145 = vunpack.c.l.b16 %v2125
  %v2146 = vunpack.c.l.b16 %v2126
  %v2147 = vunpack.c.l.b16 %v2127
  %v2148 = vunpack.c.l.b16 %v2128
  %v2149 = vunpack.c.l.b16 %v2129
  %v2150 = vunpack.c.l.b16 %v2130
  %v2151 = vunpack.c.l.b16 %v2131
  %v2152 = vunpack.c.l.b16 %v2132
  %v2153 = vpack.c.b16 %v2146, %v2145
  %v2154 = vpack.c.b16 %v2148, %v2147
  %v2155 = vpack.c.b16 %v2150, %v2149
  %v2156 = vpack.c.b16 %v2152, %v2151
  %v2158 = vsel %vm965, %v2153, 0
  %v2161 = vsel %vm965, %v2154, 0
  %v2164 = vsel %vm965, %v2155, 0
  %v2167 = vsel %vm965, %v2156, 0
  %2169 = vmatprep.subr.bf16.mxu0 0
  %2170 = vmatpush1.bf16.msra.mxu0 0
  %2171 = vmatprep.subr.bf16.mxu0 0
  %2172 = vmatpush1.bf16.msra.mxu0 0
  %2173 = vmatprep.subr.bf16.mxu0 0
  %2174 = vmatpush1.bf16.msra.mxu0 0
  %2175 = vmatprep.subr.bf16.mxu0 0
  %2176 = vmatpush1.bf16.msra.mxu0 0
  %2177 = vmatprep.subr.bf16.mxu0 0
  %2178 = vmatpush1.bf16.msra.mxu0 %v2136
  %2179 = vmatprep.subr.bf16.mxu0 0
  %2180 = vmatpush1.bf16.msra.mxu0 %v2135
  %2181 = vmatprep.subr.bf16.mxu0 0
  %2182 = vmatpush1.bf16.msra.mxu0 %v2134
  %2183 = vmatprep.subr.bf16.mxu0 0
  %2184 = vmatpush1.bf16.msra.mxu0 %v2133
  %2185 = vmatprep.subr.bf16.mxu0 0
  %2186 = vmatpush2.bf16.msra.mxu0 0
  %2187 = vmatprep.subr.bf16.mxu0 0
  %2188 = vmatpush2.bf16.msra.mxu0 0
  %2189 = vmatprep.subr.bf16.mxu0 0
  %2190 = vmatpush2.bf16.msra.mxu0 0
  %2191 = vmatprep.subr.bf16.mxu0 0
  %2192 = vmatpush2.bf16.msra.mxu0 0
  %2193 = vmatprep.subr.bf16.mxu0 0
  %2194 = vmatpush2.bf16.msra.mxu0 0
  %2195 = vmatprep.subr.bf16.mxu0 0
  %2196 = vmatpush2.bf16.msra.mxu0 0
  %2197 = vmatprep.subr.bf16.mxu0 0
  %2198 = vmatpush2.bf16.msra.mxu0 0
  %2199 = vmatprep.subr.bf16.mxu0 0
  %2200 = vmatpush2.bf16.msra.mxu0 0
  %2201 = vmatprep.mubr.bf16.mxu0 0
  %2202 = vmatmul.mubr.bf16.gmra.mxu0 %v2158
  %v2203 = vpop.f32.mrf.mxu0
  %v2204 = vadd.f32 0.0, %v2203
  %v2205 = vpop.f32.mrf.mxu0
  %v2206 = vpop.f32.mrf.mxu0
  %v2207 = vadd.f32 0.0, %v2206
  %v2208 = vpop.f32.mrf.mxu0
  %2209 = vmatprep.mubr.bf16.mxu0 0
  %2210 = vmatmul.mubr.bf16.gmra.mxu0 %v2161
  %v2211 = vpop.f32.mrf.mxu0
  %v2212 = vadd.f32 0.0, %v2211
  %v2213 = vpop.f32.mrf.mxu0
  %v2214 = vpop.f32.mrf.mxu0
  %v2215 = vadd.f32 0.0, %v2214
  %v2216 = vpop.f32.mrf.mxu0
  %2217 = vmatprep.mubr.bf16.mxu0 0
  %2218 = vmatmul.mubr.bf16.gmra.mxu0 %v2164
  %v2219 = vpop.f32.mrf.mxu0
  %v2220 = vadd.f32 0.0, %v2219
  %v2221 = vpop.f32.mrf.mxu0
  %v2222 = vpop.f32.mrf.mxu0
  %v2223 = vadd.f32 0.0, %v2222
  %v2224 = vpop.f32.mrf.mxu0
  %2225 = vmatprep.mubr.bf16.mxu0 0
  %2226 = vmatmul.mubr.bf16.gmra.mxu0 %v2167
  %v2227 = vpop.f32.mrf.mxu0
  %v2228 = vadd.f32 0.0, %v2227
  %v2229 = vpop.f32.mrf.mxu0
  %v2230 = vpop.f32.mrf.mxu0
  %v2231 = vadd.f32 0.0, %v2230
  %v2232 = vpop.f32.mrf.mxu0
  %2233 = vdwg.mxu0
  %v2234 = vadd.f32 %v1987, %v2204
  %v2235 = vadd.f32 %v1988, %v2207
  %v2236 = vadd.f32 %v1989, %v2212
  %v2237 = vadd.f32 %v1990, %v2215
  %v2238 = vadd.f32 %v1991, %v2220
  %v2239 = vadd.f32 %v1992, %v2223
  %v2240 = vadd.f32 %v1993, %v2228
  %v2241 = vadd.f32 %v1994, %v2231
  %vm2242 = vmand %vm1997, %vm804
  %vm2243 = vmand %vm2242, %vm806
  %v2244 = vadd.s32 %v628, 4
  %vm2245 = vcmp.eq.s32.totalorder %v633, %v2244
  %vm2246 = vcmp.eq.s32.totalorder %v634, %v2244
  %vm2247 = vcmp.eq.s32.totalorder %v635, %v2244
  %vm2248 = vcmp.eq.s32.totalorder %v636, %v2244
  %v2249 = vsel %vm2243, 1, 0
  %vm2250 = vcmp.eq.s32.totalorder %v2249, 1
  %vm2251 = vmand %vm2245, %vm2250
  %vm2252 = vmand %vm2246, %vm2250
  %vm2253 = vmand %vm2247, %vm2250
  %vm2254 = vmand %vm2248, %vm2250
  %v2255 = vsel %vm2251, 1, 0
  %v2256 = vsel %vm2252, 1, 0
  %v2257 = vsel %vm2253, 1, 0
  %v2258 = vsel %vm2254, 1, 0
  %v2259 = vcvt.s32.f32 %v2255
  %v2260 = vcvt.s32.f32 %v2256
  %v2261 = vcvt.s32.f32 %v2257
  %v2262 = vcvt.s32.f32 %v2258
  %2263 = vmatprep.subr.mxu0 0.0
  %2264 = vmatpush1.msra.mxu0 0.0
  %2265 = vmatprep.subr.mxu0 0.0
  %2266 = vmatpush1.msra.mxu0 0.0
  %2267 = vmatprep.subr.mxu0 0.0
  %2268 = vmatpush1.msra.mxu0 0.0
  %2269 = vmatprep.subr.mxu0 0.0
  %2270 = vmatpush1.msra.mxu0 0.0
  %2271 = vmatprep.subr.mxu0 0.0
  %2272 = vmatpush1.msra.mxu0 0.0
  %2273 = vmatprep.subr.mxu0 0.0
  %2274 = vmatpush1.msra.mxu0 0.0
  %2275 = vmatprep.subr.mxu0 0.0
  %2276 = vmatpush1.msra.mxu0 0.0
  %2277 = vmatprep.subr.mxu0 0.0
  %2278 = vmatpush1.msra.mxu0 0.0
  %2279 = vmatprep.subr.mxu0 0.0
  %2280 = vmatpush1.msra.mxu0 0.0
  %2281 = vmatprep.subr.mxu0 0.0
  %2282 = vmatpush1.msra.mxu0 0.0
  %2283 = vmatprep.subr.mxu0 0.0
  %2284 = vmatpush1.msra.mxu0 0.0
  %2285 = vmatprep.subr.mxu0 0.0
  %2286 = vmatpush1.msra.mxu0 0.0
  %2287 = vmatprep.subr.mxu0 0.0
  %2288 = vmatpush1.msra.mxu0 %v2262
  %2289 = vmatprep.subr.mxu0 0.0
  %2290 = vmatpush1.msra.mxu0 %v2261
  %2291 = vmatprep.subr.mxu0 0.0
  %2292 = vmatpush1.msra.mxu0 %v2260
  %2293 = vmatprep.subr.mxu0 0.0
  %2294 = vmatpush1.msra.mxu0 %v2259
  %2295 = vmatprep.subr.mxu0 0.0
  %2296 = vmatpush2.msra.mxu0 0.0
  %2297 = vmatprep.subr.mxu0 0.0
  %2298 = vmatpush2.msra.mxu0 0.0
  %2299 = vmatprep.subr.mxu0 0.0
  %2300 = vmatpush2.msra.mxu0 0.0
  %2301 = vmatprep.subr.mxu0 0.0
  %2302 = vmatpush2.msra.mxu0 0.0
  %2303 = vmatprep.subr.mxu0 0.0
  %2304 = vmatpush2.msra.mxu0 0.0
  %2305 = vmatprep.subr.mxu0 0.0
  %2306 = vmatpush2.msra.mxu0 0.0
  %2307 = vmatprep.subr.mxu0 0.0
  %2308 = vmatpush2.msra.mxu0 0.0
  %2309 = vmatprep.subr.mxu0 0.0
  %2310 = vmatpush2.msra.mxu0 0.0
  %2311 = vmatprep.subr.mxu0 0.0
  %2312 = vmatpush2.msra.mxu0 0.0
  %2313 = vmatprep.subr.mxu0 0.0
  %2314 = vmatpush2.msra.mxu0 0.0
  %2315 = vmatprep.subr.mxu0 0.0
  %2316 = vmatpush2.msra.mxu0 0.0
  %2317 = vmatprep.subr.mxu0 0.0
  %2318 = vmatpush2.msra.mxu0 0.0
  %2319 = vmatprep.subr.mxu0 0.0
  %2320 = vmatpush2.msra.mxu0 0.0
  %2321 = vmatprep.subr.mxu0 0.0
  %2322 = vmatpush2.msra.mxu0 0.0
  %2323 = vmatprep.subr.mxu0 0.0
  %2324 = vmatpush2.msra.mxu0 0.0
  %2325 = vmatprep.subr.mxu0 0.0
  %2326 = vmatpush2.msra.mxu0 0.0
  %2327 = vmatprep.mubr.f32.mxu0 0.0
  %2328 = vmatmul.mubr.f32.gmra.mxu0 %v664
  %v2329 = vpop.f32.mrf.mxu0
  %v2330 = vadd.f32 0.0, %v2329
  %v2331 = vpop.f32.mrf.mxu0
  %2332 = vmatprep.mubr.f32.mxu0 0.0
  %2333 = vmatmul.mubr.f32.gmra.mxu0 %v667
  %v2334 = vpop.f32.mrf.mxu0
  %v2335 = vadd.f32 0.0, %v2334
  %v2336 = vpop.f32.mrf.mxu0
  %2337 = vmatprep.mubr.f32.mxu0 0.0
  %2338 = vmatmul.mubr.f32.gmra.mxu0 %v670
  %v2339 = vpop.f32.mrf.mxu0
  %v2340 = vadd.f32 0.0, %v2339
  %v2341 = vpop.f32.mrf.mxu0
  %2342 = vmatprep.mubr.f32.mxu0 0.0
  %2343 = vmatmul.mubr.f32.gmra.mxu0 %v673
  %v2344 = vpop.f32.mrf.mxu0
  %v2345 = vadd.f32 0.0, %v2344
  %v2346 = vpop.f32.mrf.mxu0
  %2347 = vmatprep.mubr.f32.mxu0 0.0
  %2348 = vmatmul.mubr.f32.gmra.mxu0 %v676
  %v2349 = vpop.f32.mrf.mxu0
  %v2350 = vadd.f32 0.0, %v2349
  %v2351 = vpop.f32.mrf.mxu0
  %2352 = vmatprep.mubr.f32.mxu0 0.0
  %2353 = vmatmul.mubr.f32.gmra.mxu0 %v679
  %v2354 = vpop.f32.mrf.mxu0
  %v2355 = vadd.f32 0.0, %v2354
  %v2356 = vpop.f32.mrf.mxu0
  %2357 = vmatprep.mubr.f32.mxu0 0.0
  %2358 = vmatmul.mubr.f32.gmra.mxu0 %v682
  %v2359 = vpop.f32.mrf.mxu0
  %v2360 = vadd.f32 0.0, %v2359
  %v2361 = vpop.f32.mrf.mxu0
  %2362 = vmatprep.mubr.f32.mxu0 0.0
  %2363 = vmatmul.mubr.f32.gmra.mxu0 %v685
  %v2364 = vpop.f32.mrf.mxu0
  %v2365 = vadd.f32 0.0, %v2364
  %v2366 = vpop.f32.mrf.mxu0
  %2367 = vdwg.mxu0
  %s2368 = scalar_lea.vmem %s6, 224
  %v2369 = vld [vmem:[%s2368] sm:$0xf]
  %v2370 = vld [vmem:[%s2368 + $0x4] sm:$0xf]
  %v2371 = vld [vmem:[%s2368 + $0x8] sm:$0xf]
  %v2372 = vld [vmem:[%s2368 + $0xc] sm:$0xf]
  %v2373 = vld [vmem:[%s2368 + $0x10] sm:$0xf]
  %v2374 = vld [vmem:[%s2368 + $0x14] sm:$0xf]
  %v2375 = vld [vmem:[%s2368 + $0x18] sm:$0xf]
  %v2376 = vld [vmem:[%s2368 + $0x1c] sm:$0xf]
  %v2377 = vpack.c.bf16 %v2335, %v2330
  %v2378 = vpack.c.bf16 %v2345, %v2340
  %v2379 = vpack.c.bf16 %v2355, %v2350
  %v2380 = vpack.c.bf16 %v2365, %v2360
  %v2389 = vunpack.c.l.b16 %v2369
  %v2390 = vunpack.c.l.b16 %v2370
  %v2391 = vunpack.c.l.b16 %v2371
  %v2392 = vunpack.c.l.b16 %v2372
  %v2393 = vunpack.c.l.b16 %v2373
  %v2394 = vunpack.c.l.b16 %v2374
  %v2395 = vunpack.c.l.b16 %v2375
  %v2396 = vunpack.c.l.b16 %v2376
  %v2397 = vpack.c.b16 %v2390, %v2389
  %v2398 = vpack.c.b16 %v2392, %v2391
  %v2399 = vpack.c.b16 %v2394, %v2393
  %v2400 = vpack.c.b16 %v2396, %v2395
  %v2402 = vsel %vm965, %v2397, 0
  %v2405 = vsel %vm965, %v2398, 0
  %v2408 = vsel %vm965, %v2399, 0
  %v2411 = vsel %vm965, %v2400, 0
  %2413 = vmatprep.subr.bf16.mxu0 0
  %2414 = vmatpush1.bf16.msra.mxu0 0
  %2415 = vmatprep.subr.bf16.mxu0 0
  %2416 = vmatpush1.bf16.msra.mxu0 0
  %2417 = vmatprep.subr.bf16.mxu0 0
  %2418 = vmatpush1.bf16.msra.mxu0 0
  %2419 = vmatprep.subr.bf16.mxu0 0
  %2420 = vmatpush1.bf16.msra.mxu0 0
  %2421 = vmatprep.subr.bf16.mxu0 0
  %2422 = vmatpush1.bf16.msra.mxu0 %v2380
  %2423 = vmatprep.subr.bf16.mxu0 0
  %2424 = vmatpush1.bf16.msra.mxu0 %v2379
  %2425 = vmatprep.subr.bf16.mxu0 0
  %2426 = vmatpush1.bf16.msra.mxu0 %v2378
  %2427 = vmatprep.subr.bf16.mxu0 0
  %2428 = vmatpush1.bf16.msra.mxu0 %v2377
  %2429 = vmatprep.subr.bf16.mxu0 0
  %2430 = vmatpush2.bf16.msra.mxu0 0
  %2431 = vmatprep.subr.bf16.mxu0 0
  %2432 = vmatpush2.bf16.msra.mxu0 0
  %2433 = vmatprep.subr.bf16.mxu0 0
  %2434 = vmatpush2.bf16.msra.mxu0 0
  %2435 = vmatprep.subr.bf16.mxu0 0
  %2436 = vmatpush2.bf16.msra.mxu0 0
  %2437 = vmatprep.subr.bf16.mxu0 0
  %2438 = vmatpush2.bf16.msra.mxu0 0
  %2439 = vmatprep.subr.bf16.mxu0 0
  %2440 = vmatpush2.bf16.msra.mxu0 0
  %2441 = vmatprep.subr.bf16.mxu0 0
  %2442 = vmatpush2.bf16.msra.mxu0 0
  %2443 = vmatprep.subr.bf16.mxu0 0
  %2444 = vmatpush2.bf16.msra.mxu0 0
  %2445 = vmatprep.mubr.bf16.mxu0 0
  %2446 = vmatmul.mubr.bf16.gmra.mxu0 %v2402
  %v2447 = vpop.f32.mrf.mxu0
  %v2448 = vadd.f32 0.0, %v2447
  %v2449 = vpop.f32.mrf.mxu0
  %v2450 = vpop.f32.mrf.mxu0
  %v2451 = vadd.f32 0.0, %v2450
  %v2452 = vpop.f32.mrf.mxu0
  %2453 = vmatprep.mubr.bf16.mxu0 0
  %2454 = vmatmul.mubr.bf16.gmra.mxu0 %v2405
  %v2455 = vpop.f32.mrf.mxu0
  %v2456 = vadd.f32 0.0, %v2455
  %v2457 = vpop.f32.mrf.mxu0
  %v2458 = vpop.f32.mrf.mxu0
  %v2459 = vadd.f32 0.0, %v2458
  %v2460 = vpop.f32.mrf.mxu0
  %2461 = vmatprep.mubr.bf16.mxu0 0
  %2462 = vmatmul.mubr.bf16.gmra.mxu0 %v2408
  %v2463 = vpop.f32.mrf.mxu0
  %v2464 = vadd.f32 0.0, %v2463
  %v2465 = vpop.f32.mrf.mxu0
  %v2466 = vpop.f32.mrf.mxu0
  %v2467 = vadd.f32 0.0, %v2466
  %v2468 = vpop.f32.mrf.mxu0
  %2469 = vmatprep.mubr.bf16.mxu0 0
  %2470 = vmatmul.mubr.bf16.gmra.mxu0 %v2411
  %v2471 = vpop.f32.mrf.mxu0
  %v2472 = vadd.f32 0.0, %v2471
  %v2473 = vpop.f32.mrf.mxu0
  %v2474 = vpop.f32.mrf.mxu0
  %v2475 = vadd.f32 0.0, %v2474
  %v2476 = vpop.f32.mrf.mxu0
  %2477 = vdwg.mxu0
  %v2478 = vadd.f32 %v2234, %v2448
  %v2479 = vadd.f32 %v2235, %v2451
  %v2480 = vadd.f32 %v2236, %v2456
  %v2481 = vadd.f32 %v2237, %v2459
  %v2482 = vadd.f32 %v2238, %v2464
  %v2483 = vadd.f32 %v2239, %v2467
  %v2484 = vadd.f32 %v2240, %v2472
  %v2485 = vadd.f32 %v2241, %v2475
  %vm2486 = vmand %vm1997, %vm1140
  %vm2487 = vmand %vm2486, %vm1142
  %v2488 = vadd.s32 %v628, 5
  %vm2489 = vcmp.eq.s32.totalorder %v633, %v2488
  %vm2490 = vcmp.eq.s32.totalorder %v634, %v2488
  %vm2491 = vcmp.eq.s32.totalorder %v635, %v2488
  %vm2492 = vcmp.eq.s32.totalorder %v636, %v2488
  %v2493 = vsel %vm2487, 1, 0
  %vm2494 = vcmp.eq.s32.totalorder %v2493, 1
  %vm2495 = vmand %vm2489, %vm2494
  %vm2496 = vmand %vm2490, %vm2494
  %vm2497 = vmand %vm2491, %vm2494
  %vm2498 = vmand %vm2492, %vm2494
  %v2499 = vsel %vm2495, 1, 0
  %v2500 = vsel %vm2496, 1, 0
  %v2501 = vsel %vm2497, 1, 0
  %v2502 = vsel %vm2498, 1, 0
  %v2503 = vcvt.s32.f32 %v2499
  %v2504 = vcvt.s32.f32 %v2500
  %v2505 = vcvt.s32.f32 %v2501
  %v2506 = vcvt.s32.f32 %v2502
  %2507 = vmatprep.subr.mxu0 0.0
  %2508 = vmatpush1.msra.mxu0 0.0
  %2509 = vmatprep.subr.mxu0 0.0
  %2510 = vmatpush1.msra.mxu0 0.0
  %2511 = vmatprep.subr.mxu0 0.0
  %2512 = vmatpush1.msra.mxu0 0.0
  %2513 = vmatprep.subr.mxu0 0.0
  %2514 = vmatpush1.msra.mxu0 0.0
  %2515 = vmatprep.subr.mxu0 0.0
  %2516 = vmatpush1.msra.mxu0 0.0
  %2517 = vmatprep.subr.mxu0 0.0
  %2518 = vmatpush1.msra.mxu0 0.0
  %2519 = vmatprep.subr.mxu0 0.0
  %2520 = vmatpush1.msra.mxu0 0.0
  %2521 = vmatprep.subr.mxu0 0.0
  %2522 = vmatpush1.msra.mxu0 0.0
  %2523 = vmatprep.subr.mxu0 0.0
  %2524 = vmatpush1.msra.mxu0 0.0
  %2525 = vmatprep.subr.mxu0 0.0
  %2526 = vmatpush1.msra.mxu0 0.0
  %2527 = vmatprep.subr.mxu0 0.0
  %2528 = vmatpush1.msra.mxu0 0.0
  %2529 = vmatprep.subr.mxu0 0.0
  %2530 = vmatpush1.msra.mxu0 0.0
  %2531 = vmatprep.subr.mxu0 0.0
  %2532 = vmatpush1.msra.mxu0 %v2506
  %2533 = vmatprep.subr.mxu0 0.0
  %2534 = vmatpush1.msra.mxu0 %v2505
  %2535 = vmatprep.subr.mxu0 0.0
  %2536 = vmatpush1.msra.mxu0 %v2504
  %2537 = vmatprep.subr.mxu0 0.0
  %2538 = vmatpush1.msra.mxu0 %v2503
  %2539 = vmatprep.subr.mxu0 0.0
  %2540 = vmatpush2.msra.mxu0 0.0
  %2541 = vmatprep.subr.mxu0 0.0
  %2542 = vmatpush2.msra.mxu0 0.0
  %2543 = vmatprep.subr.mxu0 0.0
  %2544 = vmatpush2.msra.mxu0 0.0
  %2545 = vmatprep.subr.mxu0 0.0
  %2546 = vmatpush2.msra.mxu0 0.0
  %2547 = vmatprep.subr.mxu0 0.0
  %2548 = vmatpush2.msra.mxu0 0.0
  %2549 = vmatprep.subr.mxu0 0.0
  %2550 = vmatpush2.msra.mxu0 0.0
  %2551 = vmatprep.subr.mxu0 0.0
  %2552 = vmatpush2.msra.mxu0 0.0
  %2553 = vmatprep.subr.mxu0 0.0
  %2554 = vmatpush2.msra.mxu0 0.0
  %2555 = vmatprep.subr.mxu0 0.0
  %2556 = vmatpush2.msra.mxu0 0.0
  %2557 = vmatprep.subr.mxu0 0.0
  %2558 = vmatpush2.msra.mxu0 0.0
  %2559 = vmatprep.subr.mxu0 0.0
  %2560 = vmatpush2.msra.mxu0 0.0
  %2561 = vmatprep.subr.mxu0 0.0
  %2562 = vmatpush2.msra.mxu0 0.0
  %2563 = vmatprep.subr.mxu0 0.0
  %2564 = vmatpush2.msra.mxu0 0.0
  %2565 = vmatprep.subr.mxu0 0.0
  %2566 = vmatpush2.msra.mxu0 0.0
  %2567 = vmatprep.subr.mxu0 0.0
  %2568 = vmatpush2.msra.mxu0 0.0
  %2569 = vmatprep.subr.mxu0 0.0
  %2570 = vmatpush2.msra.mxu0 0.0
  %2571 = vmatprep.mubr.f32.mxu0 0.0
  %2572 = vmatmul.mubr.f32.gmra.mxu0 %v664
  %v2573 = vpop.f32.mrf.mxu0
  %v2574 = vadd.f32 0.0, %v2573
  %v2575 = vpop.f32.mrf.mxu0
  %2576 = vmatprep.mubr.f32.mxu0 0.0
  %2577 = vmatmul.mubr.f32.gmra.mxu0 %v667
  %v2578 = vpop.f32.mrf.mxu0
  %v2579 = vadd.f32 0.0, %v2578
  %v2580 = vpop.f32.mrf.mxu0
  %2581 = vmatprep.mubr.f32.mxu0 0.0
  %2582 = vmatmul.mubr.f32.gmra.mxu0 %v670
  %v2583 = vpop.f32.mrf.mxu0
  %v2584 = vadd.f32 0.0, %v2583
  %v2585 = vpop.f32.mrf.mxu0
  %2586 = vmatprep.mubr.f32.mxu0 0.0
  %2587 = vmatmul.mubr.f32.gmra.mxu0 %v673
  %v2588 = vpop.f32.mrf.mxu0
  %v2589 = vadd.f32 0.0, %v2588
  %v2590 = vpop.f32.mrf.mxu0
  %2591 = vmatprep.mubr.f32.mxu0 0.0
  %2592 = vmatmul.mubr.f32.gmra.mxu0 %v676
  %v2593 = vpop.f32.mrf.mxu0
  %v2594 = vadd.f32 0.0, %v2593
  %v2595 = vpop.f32.mrf.mxu0
  %2596 = vmatprep.mubr.f32.mxu0 0.0
  %2597 = vmatmul.mubr.f32.gmra.mxu0 %v679
  %v2598 = vpop.f32.mrf.mxu0
  %v2599 = vadd.f32 0.0, %v2598
  %v2600 = vpop.f32.mrf.mxu0
  %2601 = vmatprep.mubr.f32.mxu0 0.0
  %2602 = vmatmul.mubr.f32.gmra.mxu0 %v682
  %v2603 = vpop.f32.mrf.mxu0
  %v2604 = vadd.f32 0.0, %v2603
  %v2605 = vpop.f32.mrf.mxu0
  %2606 = vmatprep.mubr.f32.mxu0 0.0
  %2607 = vmatmul.mubr.f32.gmra.mxu0 %v685
  %v2608 = vpop.f32.mrf.mxu0
  %v2609 = vadd.f32 0.0, %v2608
  %v2610 = vpop.f32.mrf.mxu0
  %2611 = vdwg.mxu0
  %s2612 = scalar_lea.vmem %s6, 256
  %v2613 = vld [vmem:[%s2612] sm:$0xf]
  %v2614 = vld [vmem:[%s2612 + $0x4] sm:$0xf]
  %v2615 = vld [vmem:[%s2612 + $0x8] sm:$0xf]
  %v2616 = vld [vmem:[%s2612 + $0xc] sm:$0xf]
  %v2617 = vld [vmem:[%s2612 + $0x10] sm:$0xf]
  %v2618 = vld [vmem:[%s2612 + $0x14] sm:$0xf]
  %v2619 = vld [vmem:[%s2612 + $0x18] sm:$0xf]
  %v2620 = vld [vmem:[%s2612 + $0x1c] sm:$0xf]
  %v2621 = vpack.c.bf16 %v2579, %v2574
  %v2622 = vpack.c.bf16 %v2589, %v2584
  %v2623 = vpack.c.bf16 %v2599, %v2594
  %v2624 = vpack.c.bf16 %v2609, %v2604
  %v2633 = vunpack.c.l.b16 %v2613
  %v2634 = vunpack.c.l.b16 %v2614
  %v2635 = vunpack.c.l.b16 %v2615
  %v2636 = vunpack.c.l.b16 %v2616
  %v2637 = vunpack.c.l.b16 %v2617
  %v2638 = vunpack.c.l.b16 %v2618
  %v2639 = vunpack.c.l.b16 %v2619
  %v2640 = vunpack.c.l.b16 %v2620
  %v2641 = vpack.c.b16 %v2634, %v2633
  %v2642 = vpack.c.b16 %v2636, %v2635
  %v2643 = vpack.c.b16 %v2638, %v2637
  %v2644 = vpack.c.b16 %v2640, %v2639
  %v2646 = vsel %vm965, %v2641, 0
  %v2649 = vsel %vm965, %v2642, 0
  %v2652 = vsel %vm965, %v2643, 0
  %v2655 = vsel %vm965, %v2644, 0
  %2657 = vmatprep.subr.bf16.mxu0 0
  %2658 = vmatpush1.bf16.msra.mxu0 0
  %2659 = vmatprep.subr.bf16.mxu0 0
  %2660 = vmatpush1.bf16.msra.mxu0 0
  %2661 = vmatprep.subr.bf16.mxu0 0
  %2662 = vmatpush1.bf16.msra.mxu0 0
  %2663 = vmatprep.subr.bf16.mxu0 0
  %2664 = vmatpush1.bf16.msra.mxu0 0
  %2665 = vmatprep.subr.bf16.mxu0 0
  %2666 = vmatpush1.bf16.msra.mxu0 %v2624
  %2667 = vmatprep.subr.bf16.mxu0 0
  %2668 = vmatpush1.bf16.msra.mxu0 %v2623
  %2669 = vmatprep.subr.bf16.mxu0 0
  %2670 = vmatpush1.bf16.msra.mxu0 %v2622
  %2671 = vmatprep.subr.bf16.mxu0 0
  %2672 = vmatpush1.bf16.msra.mxu0 %v2621
  %2673 = vmatprep.subr.bf16.mxu0 0
  %2674 = vmatpush2.bf16.msra.mxu0 0
  %2675 = vmatprep.subr.bf16.mxu0 0
  %2676 = vmatpush2.bf16.msra.mxu0 0
  %2677 = vmatprep.subr.bf16.mxu0 0
  %2678 = vmatpush2.bf16.msra.mxu0 0
  %2679 = vmatprep.subr.bf16.mxu0 0
  %2680 = vmatpush2.bf16.msra.mxu0 0
  %2681 = vmatprep.subr.bf16.mxu0 0
  %2682 = vmatpush2.bf16.msra.mxu0 0
  %2683 = vmatprep.subr.bf16.mxu0 0
  %2684 = vmatpush2.bf16.msra.mxu0 0
  %2685 = vmatprep.subr.bf16.mxu0 0
  %2686 = vmatpush2.bf16.msra.mxu0 0
  %2687 = vmatprep.subr.bf16.mxu0 0
  %2688 = vmatpush2.bf16.msra.mxu0 0
  %2689 = vmatprep.mubr.bf16.mxu0 0
  %2690 = vmatmul.mubr.bf16.gmra.mxu0 %v2646
  %v2691 = vpop.f32.mrf.mxu0
  %v2692 = vadd.f32 0.0, %v2691
  %v2693 = vpop.f32.mrf.mxu0
  %v2694 = vpop.f32.mrf.mxu0
  %v2695 = vadd.f32 0.0, %v2694
  %v2696 = vpop.f32.mrf.mxu0
  %2697 = vmatprep.mubr.bf16.mxu0 0
  %2698 = vmatmul.mubr.bf16.gmra.mxu0 %v2649
  %v2699 = vpop.f32.mrf.mxu0
  %v2700 = vadd.f32 0.0, %v2699
  %v2701 = vpop.f32.mrf.mxu0
  %v2702 = vpop.f32.mrf.mxu0
  %v2703 = vadd.f32 0.0, %v2702
  %v2704 = vpop.f32.mrf.mxu0
  %2705 = vmatprep.mubr.bf16.mxu0 0
  %2706 = vmatmul.mubr.bf16.gmra.mxu0 %v2652
  %v2707 = vpop.f32.mrf.mxu0
  %v2708 = vadd.f32 0.0, %v2707
  %v2709 = vpop.f32.mrf.mxu0
  %v2710 = vpop.f32.mrf.mxu0
  %v2711 = vadd.f32 0.0, %v2710
  %v2712 = vpop.f32.mrf.mxu0
  %2713 = vmatprep.mubr.bf16.mxu0 0
  %2714 = vmatmul.mubr.bf16.gmra.mxu0 %v2655
  %v2715 = vpop.f32.mrf.mxu0
  %v2716 = vadd.f32 0.0, %v2715
  %v2717 = vpop.f32.mrf.mxu0
  %v2718 = vpop.f32.mrf.mxu0
  %v2719 = vadd.f32 0.0, %v2718
  %v2720 = vpop.f32.mrf.mxu0
  %2721 = vdwg.mxu0
  %v2722 = vadd.f32 %v2478, %v2692
  %v2723 = vadd.f32 %v2479, %v2695
  %v2724 = vadd.f32 %v2480, %v2700
  %v2725 = vadd.f32 %v2481, %v2703
  %v2726 = vadd.f32 %v2482, %v2708
  %v2727 = vadd.f32 %v2483, %v2711
  %v2728 = vadd.f32 %v2484, %v2716
  %v2729 = vadd.f32 %v2485, %v2719
  %v2730 = vld [vmem:[%s3] sm:$0xf]
  %v2731 = vld [vmem:[%s3 + $0x4] sm:$0xf]
  %v2732 = vld [vmem:[%s3 + $0x8] sm:$0xf]
  %v2733 = vld [vmem:[%s3 + $0xc] sm:$0xf]
  %v2734 = vld [vmem:[%s3 + $0x10] sm:$0xf]
  %v2735 = vld [vmem:[%s3 + $0x14] sm:$0xf]
  %v2736 = vld [vmem:[%s3 + $0x18] sm:$0xf]
  %v2737 = vld [vmem:[%s3 + $0x1c] sm:$0xf]
  %v2738 = vld [vmem:[%s2] sm:$0xf]
  %v2739 = vld [vmem:[%s2 + $0x4] sm:$0xf]
  %v2740 = vld [vmem:[%s2 + $0x8] sm:$0xf]
  %v2741 = vld [vmem:[%s2 + $0xc] sm:$0xf]
  %v2750 = vunpack.c.l.b16 %v2730
  %v2751 = vunpack.c.l.b16 %v2731
  %v2752 = vunpack.c.l.b16 %v2732
  %v2753 = vunpack.c.l.b16 %v2733
  %v2754 = vunpack.c.l.b16 %v2734
  %v2755 = vunpack.c.l.b16 %v2735
  %v2756 = vunpack.c.l.b16 %v2736
  %v2757 = vunpack.c.l.b16 %v2737
  %v2758 = vpack.c.b16 %v2751, %v2750
  %v2759 = vpack.c.b16 %v2753, %v2752
  %v2760 = vpack.c.b16 %v2755, %v2754
  %v2761 = vpack.c.b16 %v2757, %v2756
  %v2766 = vunpack.c.l.b16 %v2738
  %v2767 = vunpack.c.l.b16 %v2739
  %v2768 = vunpack.c.l.b16 %v2740
  %v2769 = vunpack.c.l.b16 %v2741
  %v2770 = vpack.c.b16 %v2767, %v2766
  %v2771 = vpack.c.b16 %v2769, %v2768
  %v2775 = vsel %vm259, %v2758, 0
  %v2778 = vsel %vm259, %v2759, 0
  %v2781 = vsel %vm259, %v2760, 0
  %v2784 = vsel %vm259, %v2761, 0
  %2786 = vmatprep.subr.bf16.mxu0 0
  %2787 = vmatpush1.bf16.msra.mxu0 0
  %2788 = vmatprep.subr.bf16.mxu0 0
  %2789 = vmatpush1.bf16.msra.mxu0 0
  %2790 = vmatprep.subr.bf16.mxu0 0
  %2791 = vmatpush1.bf16.msra.mxu0 0
  %2792 = vmatprep.subr.bf16.mxu0 0
  %2793 = vmatpush1.bf16.msra.mxu0 0
  %2794 = vmatprep.subr.bf16.mxu0 0
  %2795 = vmatpush1.bf16.msra.mxu0 0
  %2796 = vmatprep.subr.bf16.mxu0 0
  %2797 = vmatpush1.bf16.msra.mxu0 0
  %2798 = vmatprep.subr.bf16.mxu0 0
  %2799 = vmatpush1.bf16.msra.mxu0 %v2771
  %2800 = vmatprep.subr.bf16.mxu0 0
  %2801 = vmatpush1.bf16.msra.mxu0 %v2770
  %2802 = vmatprep.subr.bf16.mxu0 0
  %2803 = vmatpush2.bf16.msra.mxu0 0
  %2804 = vmatprep.subr.bf16.mxu0 0
  %2805 = vmatpush2.bf16.msra.mxu0 0
  %2806 = vmatprep.subr.bf16.mxu0 0
  %2807 = vmatpush2.bf16.msra.mxu0 0
  %2808 = vmatprep.subr.bf16.mxu0 0
  %2809 = vmatpush2.bf16.msra.mxu0 0
  %2810 = vmatprep.subr.bf16.mxu0 0
  %2811 = vmatpush2.bf16.msra.mxu0 0
  %2812 = vmatprep.subr.bf16.mxu0 0
  %2813 = vmatpush2.bf16.msra.mxu0 0
  %2814 = vmatprep.subr.bf16.mxu0 0
  %2815 = vmatpush2.bf16.msra.mxu0 0
  %2816 = vmatprep.subr.bf16.mxu0 0
  %2817 = vmatpush2.bf16.msra.mxu0 0
  %2818 = vmatprep.mubr.bf16.mxu0 0
  %2819 = vmatmul.mubr.bf16.gmra.mxu0 %v2775
  %v2820 = vpop.f32.mrf.mxu0
  %v2821 = vadd.f32 %v2722, %v2820
  %v2822 = vpop.f32.mrf.mxu0
  %v2823 = vpop.f32.mrf.mxu0
  %v2824 = vadd.f32 %v2723, %v2823
  %v2825 = vpop.f32.mrf.mxu0
  %2826 = vmatprep.mubr.bf16.mxu0 0
  %2827 = vmatmul.mubr.bf16.gmra.mxu0 %v2778
  %v2828 = vpop.f32.mrf.mxu0
  %v2829 = vadd.f32 %v2724, %v2828
  %v2830 = vpop.f32.mrf.mxu0
  %v2831 = vpop.f32.mrf.mxu0
  %v2832 = vadd.f32 %v2725, %v2831
  %v2833 = vpop.f32.mrf.mxu0
  %2834 = vmatprep.mubr.bf16.mxu0 0
  %2835 = vmatmul.mubr.bf16.gmra.mxu0 %v2781
  %v2836 = vpop.f32.mrf.mxu0
  %v2837 = vadd.f32 %v2726, %v2836
  %v2838 = vpop.f32.mrf.mxu0
  %v2839 = vpop.f32.mrf.mxu0
  %v2840 = vadd.f32 %v2727, %v2839
  %v2841 = vpop.f32.mrf.mxu0
  %2842 = vmatprep.mubr.bf16.mxu0 0
  %2843 = vmatmul.mubr.bf16.gmra.mxu0 %v2784
  %v2844 = vpop.f32.mrf.mxu0
  %v2845 = vadd.f32 %v2728, %v2844
  %v2846 = vpop.f32.mrf.mxu0
  %v2847 = vpop.f32.mrf.mxu0
  %v2848 = vadd.f32 %v2729, %v2847
  %v2849 = vpop.f32.mrf.mxu0
  %2850 = vdwg.mxu0
  %v2851 = vld [vmem:[%s7] sm:$0xff]
  %v2852 = vld [vmem:[%s7 + $0x8] sm:$0xff]
  %v2853 = vld [vmem:[%s7 + $0x10] sm:$0xff]
  %v2854 = vld [vmem:[%s7 + $0x18] sm:$0xff]
  %v2855 = vld [vmem:[%s7 + $0x20] sm:$0xff]
  %v2856 = vld [vmem:[%s7 + $0x28] sm:$0xff]
  %v2857 = vld [vmem:[%s7 + $0x30] sm:$0xff]
  %v2858 = vld [vmem:[%s7 + $0x38] sm:$0xff]
  %v2859 = vld [vmem:[%s8] sm:$0xff]
  %v2860 = vld [vmem:[%s8 + $0x8] sm:$0xff]
  %v2861 = vld [vmem:[%s8 + $0x10] sm:$0xff]
  %v2862 = vld [vmem:[%s8 + $0x18] sm:$0xff]
  %v2863 = vld [vmem:[%s8 + $0x20] sm:$0xff]
  %v2864 = vld [vmem:[%s8 + $0x28] sm:$0xff]
  %v2865 = vld [vmem:[%s8 + $0x30] sm:$0xff]
  %v2866 = vld [vmem:[%s8 + $0x38] sm:$0xff]
  %v2867 = vsel %vm259, %v2821, 0.0
  %2868 = vadd.xlane.f32.xlu0 %v2867
  %v2869 = vpop.xlane.xlu0 %2868
  %v2870 = vsel %vm259, %v2824, 0.0
  %2871 = vadd.xlane.f32.xlu0 %v2870
  %v2872 = vpop.xlane.xlu0 %2871
  %v2873 = vsel %vm259, %v2829, 0.0
  %2874 = vadd.xlane.f32.xlu0 %v2873
  %v2875 = vpop.xlane.xlu0 %2874
  %v2876 = vsel %vm259, %v2832, 0.0
  %2877 = vadd.xlane.f32.xlu0 %v2876
  %v2878 = vpop.xlane.xlu0 %2877
  %v2879 = vsel %vm259, %v2837, 0.0
  %2880 = vadd.xlane.f32.xlu0 %v2879
  %v2881 = vpop.xlane.xlu0 %2880
  %v2882 = vsel %vm259, %v2840, 0.0
  %2883 = vadd.xlane.f32.xlu0 %v2882
  %v2884 = vpop.xlane.xlu0 %2883
  %v2885 = vsel %vm259, %v2845, 0.0
  %2886 = vadd.xlane.f32.xlu0 %v2885
  %v2887 = vpop.xlane.xlu0 %2886
  %v2888 = vsel %vm259, %v2848, 0.0
  %2889 = vadd.xlane.f32.xlu0 %v2888
  %v2890 = vpop.xlane.xlu0 %2889
  %v2891 = vmul.f32 %v2869, %v442
  %v2892 = vmul.f32 %v2872, %v442
  %v2893 = vmul.f32 %v2875, %v442
  %v2894 = vmul.f32 %v2878, %v442
  %v2895 = vmul.f32 %v2881, %v442
  %v2896 = vmul.f32 %v2884, %v442
  %v2897 = vmul.f32 %v2887, %v442
  %v2898 = vmul.f32 %v2890, %v442
  %v2899 = vsub.f32 %v2821, %v2891
  %v2900 = vsub.f32 %v2824, %v2892
  %v2901 = vsub.f32 %v2829, %v2893
  %v2902 = vsub.f32 %v2832, %v2894
  %v2903 = vsub.f32 %v2837, %v2895
  %v2904 = vsub.f32 %v2840, %v2896
  %v2905 = vsub.f32 %v2845, %v2897
  %v2906 = vsub.f32 %v2848, %v2898
  %v2907 = vmul.f32 %v2899, %v2899
  %v2908 = vmul.f32 %v2900, %v2900
  %v2909 = vmul.f32 %v2901, %v2901
  %v2910 = vmul.f32 %v2902, %v2902
  %v2911 = vmul.f32 %v2903, %v2903
  %v2912 = vmul.f32 %v2904, %v2904
  %v2913 = vmul.f32 %v2905, %v2905
  %v2914 = vmul.f32 %v2906, %v2906
  %v2915 = vsel %vm259, %v2907, 0.0
  %2916 = vadd.xlane.f32.xlu0 %v2915
  %v2917 = vpop.xlane.xlu0 %2916
  %v2918 = vsel %vm259, %v2908, 0.0
  %2919 = vadd.xlane.f32.xlu0 %v2918
  %v2920 = vpop.xlane.xlu0 %2919
  %v2921 = vsel %vm259, %v2909, 0.0
  %2922 = vadd.xlane.f32.xlu0 %v2921
  %v2923 = vpop.xlane.xlu0 %2922
  %v2924 = vsel %vm259, %v2910, 0.0
  %2925 = vadd.xlane.f32.xlu0 %v2924
  %v2926 = vpop.xlane.xlu0 %2925
  %v2927 = vsel %vm259, %v2911, 0.0
  %2928 = vadd.xlane.f32.xlu0 %v2927
  %v2929 = vpop.xlane.xlu0 %2928
  %v2930 = vsel %vm259, %v2912, 0.0
  %2931 = vadd.xlane.f32.xlu0 %v2930
  %v2932 = vpop.xlane.xlu0 %2931
  %v2933 = vsel %vm259, %v2913, 0.0
  %2934 = vadd.xlane.f32.xlu0 %v2933
  %v2935 = vpop.xlane.xlu0 %2934
  %v2936 = vsel %vm259, %v2914, 0.0
  %2937 = vadd.xlane.f32.xlu0 %v2936
  %v2938 = vpop.xlane.xlu0 %2937
  %v2939 = vmul.f32 %v2917, %v442
  %v2940 = vmul.f32 %v2920, %v442
  %v2941 = vmul.f32 %v2923, %v442
  %v2942 = vmul.f32 %v2926, %v442
  %v2943 = vmul.f32 %v2929, %v442
  %v2944 = vmul.f32 %v2932, %v442
  %v2945 = vmul.f32 %v2935, %v442
  %v2946 = vmul.f32 %v2938, %v442
  %v2947 = vadd.f32 %v2939, 1e-05
  %v2948 = vadd.f32 %v2940, 1e-05
  %v2949 = vadd.f32 %v2941, 1e-05
  %v2950 = vadd.f32 %v2942, 1e-05
  %v2951 = vadd.f32 %v2943, 1e-05
  %v2952 = vadd.f32 %v2944, 1e-05
  %v2953 = vadd.f32 %v2945, 1e-05
  %v2954 = vadd.f32 %v2946, 1e-05
  %v2955 = vrsqrt.pop %v2947
  %v2956 = vrsqrt.pop %v2948
  %v2957 = vrsqrt.pop %v2949
  %v2958 = vrsqrt.pop %v2950
  %v2959 = vrsqrt.pop %v2951
  %v2960 = vrsqrt.pop %v2952
  %v2961 = vrsqrt.pop %v2953
  %v2962 = vrsqrt.pop %v2954
  %v2963 = vmul.f32 %v2899, %v2955
  %v2964 = vmul.f32 %v2900, %v2956
  %v2965 = vmul.f32 %v2901, %v2957
  %v2966 = vmul.f32 %v2902, %v2958
  %v2967 = vmul.f32 %v2903, %v2959
  %v2968 = vmul.f32 %v2904, %v2960
  %v2969 = vmul.f32 %v2905, %v2961
  %v2970 = vmul.f32 %v2906, %v2962
  %2972 = vset.pattern.permute.xlu0 0
  %2973 = vperm.xlu0 %2972, %v2851
  %v2974 = vpop.permute.xlu0 %2973
  %2977 = vset.pattern.permute.xlu0 0
  %2978 = vperm.xlu0 %2977, %v2852
  %v2979 = vpop.permute.xlu0 %2978
  %2982 = vset.pattern.permute.xlu0 0
  %2983 = vperm.xlu0 %2982, %v2853
  %v2984 = vpop.permute.xlu0 %2983
  %2987 = vset.pattern.permute.xlu0 0
  %2988 = vperm.xlu0 %2987, %v2854
  %v2989 = vpop.permute.xlu0 %2988
  %2992 = vset.pattern.permute.xlu0 0
  %2993 = vperm.xlu0 %2992, %v2855
  %v2994 = vpop.permute.xlu0 %2993
  %2997 = vset.pattern.permute.xlu0 0
  %2998 = vperm.xlu0 %2997, %v2856
  %v2999 = vpop.permute.xlu0 %2998
  %3002 = vset.pattern.permute.xlu0 0
  %3003 = vperm.xlu0 %3002, %v2857
  %v3004 = vpop.permute.xlu0 %3003
  %3007 = vset.pattern.permute.xlu0 0
  %3008 = vperm.xlu0 %3007, %v2858
  %v3009 = vpop.permute.xlu0 %3008
  %v3011 = vmul.f32 %v2963, %v2974
  %v3012 = vmul.f32 %v2964, %v2979
  %v3013 = vmul.f32 %v2965, %v2984
  %v3014 = vmul.f32 %v2966, %v2989
  %v3015 = vmul.f32 %v2967, %v2994
  %v3016 = vmul.f32 %v2968, %v2999
  %v3017 = vmul.f32 %v2969, %v3004
  %v3018 = vmul.f32 %v2970, %v3009
  %3020 = vset.pattern.permute.xlu0 0
  %3021 = vperm.xlu0 %3020, %v2859
  %v3022 = vpop.permute.xlu0 %3021
  %3025 = vset.pattern.permute.xlu0 0
  %3026 = vperm.xlu0 %3025, %v2860
  %v3027 = vpop.permute.xlu0 %3026
  %3030 = vset.pattern.permute.xlu0 0
  %3031 = vperm.xlu0 %3030, %v2861
  %v3032 = vpop.permute.xlu0 %3031
  %3035 = vset.pattern.permute.xlu0 0
  %3036 = vperm.xlu0 %3035, %v2862
  %v3037 = vpop.permute.xlu0 %3036
  %3040 = vset.pattern.permute.xlu0 0
  %3041 = vperm.xlu0 %3040, %v2863
  %v3042 = vpop.permute.xlu0 %3041
  %3045 = vset.pattern.permute.xlu0 0
  %3046 = vperm.xlu0 %3045, %v2864
  %v3047 = vpop.permute.xlu0 %3046
  %3050 = vset.pattern.permute.xlu0 0
  %3051 = vperm.xlu0 %3050, %v2865
  %v3052 = vpop.permute.xlu0 %3051
  %3055 = vset.pattern.permute.xlu0 0
  %3056 = vperm.xlu0 %3055, %v2866
  %v3057 = vpop.permute.xlu0 %3056
  %v3059 = vadd.f32 %v3011, %v3022
  %v3060 = vadd.f32 %v3012, %v3027
  %v3061 = vadd.f32 %v3013, %v3032
  %v3062 = vadd.f32 %v3014, %v3037
  %v3063 = vadd.f32 %v3015, %v3042
  %v3064 = vadd.f32 %v3016, %v3047
  %v3065 = vadd.f32 %v3017, %v3052
  %v3066 = vadd.f32 %v3018, %v3057
  %v3067 = vmax.f32 %v3059, 0.0
  %v3068 = vmax.f32 %v3060, 0.0
  %v3069 = vmax.f32 %v3061, 0.0
  %v3070 = vmax.f32 %v3062, 0.0
  %v3071 = vmax.f32 %v3063, 0.0
  %v3072 = vmax.f32 %v3064, 0.0
  %v3073 = vmax.f32 %v3065, 0.0
  %v3074 = vmax.f32 %v3066, 0.0
  %v3075 = vshra.s32 %v633, 4
  %v3076 = vshra.s32 %v634, 4
  %v3077 = vshra.s32 %v635, 4
  %v3078 = vshra.s32 %v636, 4
  %vm3079 = vcmp.eq.s32.totalorder %v3075, %v628
  %vm3080 = vcmp.eq.s32.totalorder %v3076, %v628
  %vm3081 = vcmp.eq.s32.totalorder %v3077, %v628
  %vm3082 = vcmp.eq.s32.totalorder %v3078, %v628
  %v3083 = vsel %vm3079, 0.0625, 0.0
  %v3084 = vsel %vm3080, 0.0625, 0.0
  %v3085 = vsel %vm3081, 0.0625, 0.0
  %v3086 = vsel %vm3082, 0.0625, 0.0
  %v3088 = vsel %vm259, %v3067, 0
  %v3091 = vsel %vm259, %v3068, 0
  %v3094 = vsel %vm259, %v3069, 0
  %v3097 = vsel %vm259, %v3070, 0
  %v3100 = vsel %vm259, %v3071, 0
  %v3103 = vsel %vm259, %v3072, 0
  %v3106 = vsel %vm259, %v3073, 0
  %v3109 = vsel %vm259, %v3074, 0
  %3111 = vmatprep.subr.mxu0 0.0
  %3112 = vmatpush1.msra.mxu0 0.0
  %3113 = vmatprep.subr.mxu0 0.0
  %3114 = vmatpush1.msra.mxu0 0.0
  %3115 = vmatprep.subr.mxu0 0.0
  %3116 = vmatpush1.msra.mxu0 0.0
  %3117 = vmatprep.subr.mxu0 0.0
  %3118 = vmatpush1.msra.mxu0 0.0
  %3119 = vmatprep.subr.mxu0 0.0
  %3120 = vmatpush1.msra.mxu0 0.0
  %3121 = vmatprep.subr.mxu0 0.0
  %3122 = vmatpush1.msra.mxu0 0.0
  %3123 = vmatprep.subr.mxu0 0.0
  %3124 = vmatpush1.msra.mxu0 0.0
  %3125 = vmatprep.subr.mxu0 0.0
  %3126 = vmatpush1.msra.mxu0 0.0
  %3127 = vmatprep.subr.mxu0 0.0
  %3128 = vmatpush1.msra.mxu0 0.0
  %3129 = vmatprep.subr.mxu0 0.0
  %3130 = vmatpush1.msra.mxu0 0.0
  %3131 = vmatprep.subr.mxu0 0.0
  %3132 = vmatpush1.msra.mxu0 0.0
  %3133 = vmatprep.subr.mxu0 0.0
  %3134 = vmatpush1.msra.mxu0 0.0
  %3135 = vmatprep.subr.mxu0 0.0
  %3136 = vmatpush1.msra.mxu0 %v3086
  %3137 = vmatprep.subr.mxu0 0.0
  %3138 = vmatpush1.msra.mxu0 %v3085
  %3139 = vmatprep.subr.mxu0 0.0
  %3140 = vmatpush1.msra.mxu0 %v3084
  %3141 = vmatprep.subr.mxu0 0.0
  %3142 = vmatpush1.msra.mxu0 %v3083
  %3143 = vmatprep.subr.mxu0 0.0
  %3144 = vmatpush2.msra.mxu0 0.0
  %3145 = vmatprep.subr.mxu0 0.0
  %3146 = vmatpush2.msra.mxu0 0.0
  %3147 = vmatprep.subr.mxu0 0.0
  %3148 = vmatpush2.msra.mxu0 0.0
  %3149 = vmatprep.subr.mxu0 0.0
  %3150 = vmatpush2.msra.mxu0 0.0
  %3151 = vmatprep.subr.mxu0 0.0
  %3152 = vmatpush2.msra.mxu0 0.0
  %3153 = vmatprep.subr.mxu0 0.0
  %3154 = vmatpush2.msra.mxu0 0.0
  %3155 = vmatprep.subr.mxu0 0.0
  %3156 = vmatpush2.msra.mxu0 0.0
  %3157 = vmatprep.subr.mxu0 0.0
  %3158 = vmatpush2.msra.mxu0 0.0
  %3159 = vmatprep.subr.mxu0 0.0
  %3160 = vmatpush2.msra.mxu0 0.0
  %3161 = vmatprep.subr.mxu0 0.0
  %3162 = vmatpush2.msra.mxu0 0.0
  %3163 = vmatprep.subr.mxu0 0.0
  %3164 = vmatpush2.msra.mxu0 0.0
  %3165 = vmatprep.subr.mxu0 0.0
  %3166 = vmatpush2.msra.mxu0 0.0
  %3167 = vmatprep.subr.mxu0 0.0
  %3168 = vmatpush2.msra.mxu0 0.0
  %3169 = vmatprep.subr.mxu0 0.0
  %3170 = vmatpush2.msra.mxu0 0.0
  %3171 = vmatprep.subr.mxu0 0.0
  %3172 = vmatpush2.msra.mxu0 0.0
  %3173 = vmatprep.subr.mxu0 0.0
  %3174 = vmatpush2.msra.mxu0 0.0
  %3175 = vmatprep.mubr.f32.mxu0 0.0
  %3176 = vmatmul.mubr.f32.gmra.mxu0 %v3088
  %v3177 = vpop.f32.mrf.mxu0
  %v3178 = vadd.f32 0.0, %v3177
  %v3179 = vpop.f32.mrf.mxu0
  %3180 = vmatprep.mubr.f32.mxu0 0.0
  %3181 = vmatmul.mubr.f32.gmra.mxu0 %v3091
  %v3182 = vpop.f32.mrf.mxu0
  %v3183 = vadd.f32 0.0, %v3182
  %v3184 = vpop.f32.mrf.mxu0
  %3185 = vmatprep.mubr.f32.mxu0 0.0
  %3186 = vmatmul.mubr.f32.gmra.mxu0 %v3094
  %v3187 = vpop.f32.mrf.mxu0
  %v3188 = vadd.f32 0.0, %v3187
  %v3189 = vpop.f32.mrf.mxu0
  %3190 = vmatprep.mubr.f32.mxu0 0.0
  %3191 = vmatmul.mubr.f32.gmra.mxu0 %v3097
  %v3192 = vpop.f32.mrf.mxu0
  %v3193 = vadd.f32 0.0, %v3192
  %v3194 = vpop.f32.mrf.mxu0
  %3195 = vmatprep.mubr.f32.mxu0 0.0
  %3196 = vmatmul.mubr.f32.gmra.mxu0 %v3100
  %v3197 = vpop.f32.mrf.mxu0
  %v3198 = vadd.f32 0.0, %v3197
  %v3199 = vpop.f32.mrf.mxu0
  %3200 = vmatprep.mubr.f32.mxu0 0.0
  %3201 = vmatmul.mubr.f32.gmra.mxu0 %v3103
  %v3202 = vpop.f32.mrf.mxu0
  %v3203 = vadd.f32 0.0, %v3202
  %v3204 = vpop.f32.mrf.mxu0
  %3205 = vmatprep.mubr.f32.mxu0 0.0
  %3206 = vmatmul.mubr.f32.gmra.mxu0 %v3106
  %v3207 = vpop.f32.mrf.mxu0
  %v3208 = vadd.f32 0.0, %v3207
  %v3209 = vpop.f32.mrf.mxu0
  %3210 = vmatprep.mubr.f32.mxu0 0.0
  %3211 = vmatmul.mubr.f32.gmra.mxu0 %v3109
  %v3212 = vpop.f32.mrf.mxu0
  %v3213 = vadd.f32 0.0, %v3212
  %v3214 = vpop.f32.mrf.mxu0
  %3215 = vdwg.mxu0
  %v3216 = vld [vmem:[%s9] sm:$0xff]
  %v3217 = vld [vmem:[%s9 + $0x8] sm:$0xff]
  %v3218 = vld [vmem:[%s9 + $0x10] sm:$0xff]
  %v3219 = vld [vmem:[%s9 + $0x18] sm:$0xff]
  %v3220 = vld [vmem:[%s9 + $0x20] sm:$0xff]
  %v3221 = vld [vmem:[%s9 + $0x28] sm:$0xff]
  %v3222 = vld [vmem:[%s9 + $0x30] sm:$0xff]
  %v3223 = vld [vmem:[%s9 + $0x38] sm:$0xff]
  %v3224 = vld [vmem:[%s9 + $0x40] sm:$0xff]
  %v3225 = vld [vmem:[%s9 + $0x48] sm:$0xff]
  %v3226 = vld [vmem:[%s9 + $0x50] sm:$0xff]
  %v3227 = vld [vmem:[%s9 + $0x58] sm:$0xff]
  %v3228 = vld [vmem:[%s9 + $0x60] sm:$0xff]
  %v3229 = vld [vmem:[%s9 + $0x68] sm:$0xff]
  %v3230 = vld [vmem:[%s9 + $0x70] sm:$0xff]
  %v3231 = vld [vmem:[%s9 + $0x78] sm:$0xff]
  %v3232 = vld [vmem:[%s10] sm:$0xff]
  %v3233 = vld [vmem:[%s10 + $0x8] sm:$0xff]
  %v3234 = vld [vmem:[%s10 + $0x10] sm:$0xff]
  %v3235 = vld [vmem:[%s10 + $0x18] sm:$0xff]
  %v3236 = vld [vmem:[%s10 + $0x20] sm:$0xff]
  %v3237 = vld [vmem:[%s10 + $0x28] sm:$0xff]
  %v3238 = vld [vmem:[%s10 + $0x30] sm:$0xff]
  %v3239 = vld [vmem:[%s10 + $0x38] sm:$0xff]
  %v3240 = vld [vmem:[%s10 + $0x40] sm:$0xff]
  %v3241 = vld [vmem:[%s10 + $0x48] sm:$0xff]
  %v3242 = vld [vmem:[%s10 + $0x50] sm:$0xff]
  %v3243 = vld [vmem:[%s10 + $0x58] sm:$0xff]
  %v3244 = vld [vmem:[%s10 + $0x60] sm:$0xff]
  %v3245 = vld [vmem:[%s10 + $0x68] sm:$0xff]
  %v3246 = vld [vmem:[%s10 + $0x70] sm:$0xff]
  %v3247 = vld [vmem:[%s10 + $0x78] sm:$0xff]
  %3249 = vset.pattern.permute.xlu0 0
  %3250 = vperm.xlu0 %3249, %v3232
  %v3251 = vpop.permute.xlu0 %3250
  %3254 = vset.pattern.permute.xlu0 0
  %3255 = vperm.xlu0 %3254, %v3233
  %v3256 = vpop.permute.xlu0 %3255
  %3259 = vset.pattern.permute.xlu0 0
  %3260 = vperm.xlu0 %3259, %v3234
  %v3261 = vpop.permute.xlu0 %3260
  %3264 = vset.pattern.permute.xlu0 0
  %3265 = vperm.xlu0 %3264, %v3235
  %v3266 = vpop.permute.xlu0 %3265
  %3269 = vset.pattern.permute.xlu0 0
  %3270 = vperm.xlu0 %3269, %v3236
  %v3271 = vpop.permute.xlu0 %3270
  %3274 = vset.pattern.permute.xlu0 0
  %3275 = vperm.xlu0 %3274, %v3237
  %v3276 = vpop.permute.xlu0 %3275
  %3279 = vset.pattern.permute.xlu0 0
  %3280 = vperm.xlu0 %3279, %v3238
  %v3281 = vpop.permute.xlu0 %3280
  %3284 = vset.pattern.permute.xlu0 0
  %3285 = vperm.xlu0 %3284, %v3239
  %v3286 = vpop.permute.xlu0 %3285
  %3289 = vset.pattern.permute.xlu0 0
  %3290 = vperm.xlu0 %3289, %v3240
  %v3291 = vpop.permute.xlu0 %3290
  %3294 = vset.pattern.permute.xlu0 0
  %3295 = vperm.xlu0 %3294, %v3241
  %v3296 = vpop.permute.xlu0 %3295
  %3299 = vset.pattern.permute.xlu0 0
  %3300 = vperm.xlu0 %3299, %v3242
  %v3301 = vpop.permute.xlu0 %3300
  %3304 = vset.pattern.permute.xlu0 0
  %3305 = vperm.xlu0 %3304, %v3243
  %v3306 = vpop.permute.xlu0 %3305
  %3309 = vset.pattern.permute.xlu0 0
  %3310 = vperm.xlu0 %3309, %v3244
  %v3311 = vpop.permute.xlu0 %3310
  %3314 = vset.pattern.permute.xlu0 0
  %3315 = vperm.xlu0 %3314, %v3245
  %v3316 = vpop.permute.xlu0 %3315
  %3319 = vset.pattern.permute.xlu0 0
  %3320 = vperm.xlu0 %3319, %v3246
  %v3321 = vpop.permute.xlu0 %3320
  %3324 = vset.pattern.permute.xlu0 0
  %3325 = vperm.xlu0 %3324, %v3247
  %v3326 = vpop.permute.xlu0 %3325
  %v3329 = vsel %vm965, %v3216, 0
  %v3332 = vsel %vm965, %v3217, 0
  %v3335 = vsel %vm965, %v3218, 0
  %v3338 = vsel %vm965, %v3219, 0
  %v3341 = vsel %vm965, %v3220, 0
  %v3344 = vsel %vm965, %v3221, 0
  %v3347 = vsel %vm965, %v3222, 0
  %v3350 = vsel %vm965, %v3223, 0
  %v3353 = vsel %vm965, %v3224, 0
  %v3356 = vsel %vm965, %v3225, 0
  %v3359 = vsel %vm965, %v3226, 0
  %v3362 = vsel %vm965, %v3227, 0
  %v3365 = vsel %vm965, %v3228, 0
  %v3368 = vsel %vm965, %v3229, 0
  %v3371 = vsel %vm965, %v3230, 0
  %v3374 = vsel %vm965, %v3231, 0
  %3376 = vmatprep.subr.mxu0 0.0
  %3377 = vmatpush1.msra.mxu0 0.0
  %3378 = vmatprep.subr.mxu0 0.0
  %3379 = vmatpush1.msra.mxu0 0.0
  %3380 = vmatprep.subr.mxu0 0.0
  %3381 = vmatpush1.msra.mxu0 0.0
  %3382 = vmatprep.subr.mxu0 0.0
  %3383 = vmatpush1.msra.mxu0 0.0
  %3384 = vmatprep.subr.mxu0 0.0
  %3385 = vmatpush1.msra.mxu0 0.0
  %3386 = vmatprep.subr.mxu0 0.0
  %3387 = vmatpush1.msra.mxu0 0.0
  %3388 = vmatprep.subr.mxu0 0.0
  %3389 = vmatpush1.msra.mxu0 0.0
  %3390 = vmatprep.subr.mxu0 0.0
  %3391 = vmatpush1.msra.mxu0 0.0
  %3392 = vmatprep.subr.mxu0 0.0
  %3393 = vmatpush1.msra.mxu0 %v3213
  %3394 = vmatprep.subr.mxu0 0.0
  %3395 = vmatpush1.msra.mxu0 %v3208
  %3396 = vmatprep.subr.mxu0 0.0
  %3397 = vmatpush1.msra.mxu0 %v3203
  %3398 = vmatprep.subr.mxu0 0.0
  %3399 = vmatpush1.msra.mxu0 %v3198
  %3400 = vmatprep.subr.mxu0 0.0
  %3401 = vmatpush1.msra.mxu0 %v3193
  %3402 = vmatprep.subr.mxu0 0.0
  %3403 = vmatpush1.msra.mxu0 %v3188
  %3404 = vmatprep.subr.mxu0 0.0
  %3405 = vmatpush1.msra.mxu0 %v3183
  %3406 = vmatprep.subr.mxu0 0.0
  %3407 = vmatpush1.msra.mxu0 %v3178
  %3408 = vmatprep.subr.mxu0 0.0
  %3409 = vmatpush2.msra.mxu0 0.0
  %3410 = vmatprep.subr.mxu0 0.0
  %3411 = vmatpush2.msra.mxu0 0.0
  %3412 = vmatprep.subr.mxu0 0.0
  %3413 = vmatpush2.msra.mxu0 0.0
  %3414 = vmatprep.subr.mxu0 0.0
  %3415 = vmatpush2.msra.mxu0 0.0
  %3416 = vmatprep.subr.mxu0 0.0
  %3417 = vmatpush2.msra.mxu0 0.0
  %3418 = vmatprep.subr.mxu0 0.0
  %3419 = vmatpush2.msra.mxu0 0.0
  %3420 = vmatprep.subr.mxu0 0.0
  %3421 = vmatpush2.msra.mxu0 0.0
  %3422 = vmatprep.subr.mxu0 0.0
  %3423 = vmatpush2.msra.mxu0 0.0
  %3424 = vmatprep.subr.mxu0 0.0
  %3425 = vmatpush2.msra.mxu0 0.0
  %3426 = vmatprep.subr.mxu0 0.0
  %3427 = vmatpush2.msra.mxu0 0.0
  %3428 = vmatprep.subr.mxu0 0.0
  %3429 = vmatpush2.msra.mxu0 0.0
  %3430 = vmatprep.subr.mxu0 0.0
  %3431 = vmatpush2.msra.mxu0 0.0
  %3432 = vmatprep.subr.mxu0 0.0
  %3433 = vmatpush2.msra.mxu0 0.0
  %3434 = vmatprep.subr.mxu0 0.0
  %3435 = vmatpush2.msra.mxu0 0.0
  %3436 = vmatprep.subr.mxu0 0.0
  %3437 = vmatpush2.msra.mxu0 0.0
  %3438 = vmatprep.subr.mxu0 0.0
  %3439 = vmatpush2.msra.mxu0 0.0
  %3440 = vmatprep.mubr.f32.mxu0 0.0
  %3441 = vmatmul.mubr.f32.gmra.mxu0 %v3329
  %v3442 = vpop.f32.mrf.mxu0
  %v3443 = vadd.f32 %v3251, %v3442
  %v3444 = vpop.f32.mrf.mxu0
  %3445 = vmatprep.mubr.f32.mxu0 0.0
  %3446 = vmatmul.mubr.f32.gmra.mxu0 %v3332
  %v3447 = vpop.f32.mrf.mxu0
  %v3448 = vadd.f32 %v3256, %v3447
  %v3449 = vpop.f32.mrf.mxu0
  %3450 = vmatprep.mubr.f32.mxu0 0.0
  %3451 = vmatmul.mubr.f32.gmra.mxu0 %v3335
  %v3452 = vpop.f32.mrf.mxu0
  %v3453 = vadd.f32 %v3261, %v3452
  %v3454 = vpop.f32.mrf.mxu0
  %3455 = vmatprep.mubr.f32.mxu0 0.0
  %3456 = vmatmul.mubr.f32.gmra.mxu0 %v3338
  %v3457 = vpop.f32.mrf.mxu0
  %v3458 = vadd.f32 %v3266, %v3457
  %v3459 = vpop.f32.mrf.mxu0
  %3460 = vmatprep.mubr.f32.mxu0 0.0
  %3461 = vmatmul.mubr.f32.gmra.mxu0 %v3341
  %v3462 = vpop.f32.mrf.mxu0
  %v3463 = vadd.f32 %v3271, %v3462
  %v3464 = vpop.f32.mrf.mxu0
  %3465 = vmatprep.mubr.f32.mxu0 0.0
  %3466 = vmatmul.mubr.f32.gmra.mxu0 %v3344
  %v3467 = vpop.f32.mrf.mxu0
  %v3468 = vadd.f32 %v3276, %v3467
  %v3469 = vpop.f32.mrf.mxu0
  %3470 = vmatprep.mubr.f32.mxu0 0.0
  %3471 = vmatmul.mubr.f32.gmra.mxu0 %v3347
  %v3472 = vpop.f32.mrf.mxu0
  %v3473 = vadd.f32 %v3281, %v3472
  %v3474 = vpop.f32.mrf.mxu0
  %3475 = vmatprep.mubr.f32.mxu0 0.0
  %3476 = vmatmul.mubr.f32.gmra.mxu0 %v3350
  %v3477 = vpop.f32.mrf.mxu0
  %v3478 = vadd.f32 %v3286, %v3477
  %v3479 = vpop.f32.mrf.mxu0
  %3480 = vmatprep.mubr.f32.mxu0 0.0
  %3481 = vmatmul.mubr.f32.gmra.mxu0 %v3353
  %v3482 = vpop.f32.mrf.mxu0
  %v3483 = vadd.f32 %v3291, %v3482
  %v3484 = vpop.f32.mrf.mxu0
  %3485 = vmatprep.mubr.f32.mxu0 0.0
  %3486 = vmatmul.mubr.f32.gmra.mxu0 %v3356
  %v3487 = vpop.f32.mrf.mxu0
  %v3488 = vadd.f32 %v3296, %v3487
  %v3489 = vpop.f32.mrf.mxu0
  %3490 = vmatprep.mubr.f32.mxu0 0.0
  %3491 = vmatmul.mubr.f32.gmra.mxu0 %v3359
  %v3492 = vpop.f32.mrf.mxu0
  %v3493 = vadd.f32 %v3301, %v3492
  %v3494 = vpop.f32.mrf.mxu0
  %3495 = vmatprep.mubr.f32.mxu0 0.0
  %3496 = vmatmul.mubr.f32.gmra.mxu0 %v3362
  %v3497 = vpop.f32.mrf.mxu0
  %v3498 = vadd.f32 %v3306, %v3497
  %v3499 = vpop.f32.mrf.mxu0
  %3500 = vmatprep.mubr.f32.mxu0 0.0
  %3501 = vmatmul.mubr.f32.gmra.mxu0 %v3365
  %v3502 = vpop.f32.mrf.mxu0
  %v3503 = vadd.f32 %v3311, %v3502
  %v3504 = vpop.f32.mrf.mxu0
  %3505 = vmatprep.mubr.f32.mxu0 0.0
  %3506 = vmatmul.mubr.f32.gmra.mxu0 %v3368
  %v3507 = vpop.f32.mrf.mxu0
  %v3508 = vadd.f32 %v3316, %v3507
  %v3509 = vpop.f32.mrf.mxu0
  %3510 = vmatprep.mubr.f32.mxu0 0.0
  %3511 = vmatmul.mubr.f32.gmra.mxu0 %v3371
  %v3512 = vpop.f32.mrf.mxu0
  %v3513 = vadd.f32 %v3321, %v3512
  %v3514 = vpop.f32.mrf.mxu0
  %3515 = vmatprep.mubr.f32.mxu0 0.0
  %3516 = vmatmul.mubr.f32.gmra.mxu0 %v3374
  %v3517 = vpop.f32.mrf.mxu0
  %v3518 = vadd.f32 %v3326, %v3517
  %v3519 = vpop.f32.mrf.mxu0
  %3520 = vdwg.mxu0
  %vm3521 = vcmask 15360
  %3522 = vst.msk [vmem:[%s11] sm:$0xff] %vm3521, %v3443
  %3523 = vst.msk [vmem:[%s11 + $0x8] sm:$0xff] %vm3521, %v3448
  %3524 = vst.msk [vmem:[%s11 + $0x10] sm:$0xff] %vm3521, %v3453
  %3525 = vst.msk [vmem:[%s11 + $0x18] sm:$0xff] %vm3521, %v3458
  %3526 = vst.msk [vmem:[%s11 + $0x20] sm:$0xff] %vm3521, %v3463
  %3527 = vst.msk [vmem:[%s11 + $0x28] sm:$0xff] %vm3521, %v3468
  %3528 = vst.msk [vmem:[%s11 + $0x30] sm:$0xff] %vm3521, %v3473
  %3529 = vst.msk [vmem:[%s11 + $0x38] sm:$0xff] %vm3521, %v3478
  %3530 = vst.msk [vmem:[%s11 + $0x40] sm:$0xff] %vm3521, %v3483
  %3531 = vst.msk [vmem:[%s11 + $0x48] sm:$0xff] %vm3521, %v3488
  %3532 = vst.msk [vmem:[%s11 + $0x50] sm:$0xff] %vm3521, %v3493
  %3533 = vst.msk [vmem:[%s11 + $0x58] sm:$0xff] %vm3521, %v3498
  %3534 = vst.msk [vmem:[%s11 + $0x60] sm:$0xff] %vm3521, %v3503
  %3535 = vst.msk [vmem:[%s11 + $0x68] sm:$0xff] %vm3521, %v3508
  %3536 = vst.msk [vmem:[%s11 + $0x70] sm:$0xff] %vm3521, %v3513
  %3537 = vst.msk [vmem:[%s11 + $0x78] sm:$0xff] %vm3521, %v3518
  // Predicated region
  $region46: #{_lambda_.5} parent=0 // pred_check
    _
  $region47: #{_lambda_.5} parent=0 // pred_check_branch
    %3539 = sbr.rel (0) target = $region49
  $region48: #{_lambda_.5} parent=0 // pred_region
    _
  $region49: #{_lambda_.5} parent=0 // pred_fallthru
    _
  // Predicated region
  $region50: #{_lambda_.5} parent=0 // pred_check
    _
  $region51: #{_lambda_.5} parent=0 // pred_check_branch
    %3541 = sbr.rel (0) target = $region53
  $region52: #{_lambda_.5} parent=0 // pred_region
    _
  $region53: #{_lambda_.5} parent=0 // pred_fallthru
    _

</llo_original>
